<compile_context>
chip_gen: v7x
topology: tpu7x:2x2x1
jax: 0.10.0
libtpu: 0.0.40
codegen_flags: <defaults>
</compile_context>

<pallas_src>
from functools import partial

import numpy as np
import jax
import jax.numpy as jnp
from jax.experimental import pallas as pl
from jax.experimental.pallas import tpu as pltpu

MXU_DT = jnp.bfloat16      # conv-matmul operand dtype (accumulation stays f32)
EPS = 1e-5                 # BatchNorm eps (PyTorch default)
_VSPEC = pl.BlockSpec(memory_space=pltpu.MemorySpace.VMEM)


# --------------------------- in-kernel helpers ------------------------------

def _conv_taps(x, p_ref, a_ref):
    """Conv as row-selection + banded weight matmuls:  out = sum_t (P_t @ x) @ A_t.

    x:     (rows_in, W_in*Cin)  f32 activation slab.
    p_ref: (taps, rows_out, rows_in) f32 — per-tap row selection (H padding, stride,
           image boundaries).
    a_ref: (taps, W_in*Cin, W_out*Cout) MXU_DT — per-tap banded weight matrix
           (W padding, stride, channel contraction).
    """
    taps = p_ref.shape[0]
    acc = None
    for t in range(taps):                                    # static unroll (<=3)
        rows = jnp.dot(p_ref[t], x, preferred_element_type=jnp.float32)
        part = jnp.dot(rows.astype(a_ref.dtype), a_ref[t],
                       preferred_element_type=jnp.float32)
        acc = part if acc is None else acc + part
    return acc


def _bn_lanes(act, cavg_ref, g_ref, b_ref, *, relu):
    """Training-mode BatchNorm on a (rows, W_out*Cout) slab where channel = lane % Cout.

    cavg_ref is the (L, L) channel-averaging matrix: 1/count at same-channel lane pairs,
    so (row-sum @ cavg) broadcasts the per-channel batch mean back to every lane.
    """
    cavg = cavg_ref[...]
    mean = jnp.dot(jnp.sum(act, axis=0, keepdims=True), cavg,
                   preferred_element_type=jnp.float32)
    d = act - mean
    var = jnp.dot(jnp.sum(d * d, axis=0, keepdims=True), cavg,
                  preferred_element_type=jnp.float32)
    y = d * (jax.lax.rsqrt(var + EPS) * g_ref[...]) + b_ref[...]
    return jnp.maximum(y, 0.0) if relu else y


def _resnet_kernel(treedef, cfg, *refs):
    x_ref, out_ref = refs[0], refs[-1]
    plan = jax.tree_util.tree_unflatten(treedef, refs[1:-1])
    cavg = plan["cavg"]

    # stem: conv3x3(3->16, s=1, p=1) + BN + ReLU
    st = plan["stem"]
    act = _conv_taps(x_ref[...], st["p"], st["a"])
    act = _bn_lanes(act, cavg[cfg["stem_cavg"]], st["g"], st["b"], relu=True)

    # basic blocks (all intermediates stay on-chip)
    for bp, bc in zip(plan["blocks"], cfg["blocks"]):
        cv = cavg[bc["cavg"]]
        out = _conv_taps(act, bp["c1_p"], bp["c1_a"])
        out = _bn_lanes(out, cv, bp["bn1_g"], bp["bn1_b"], relu=True)
        out = _conv_taps(out, bp["c2_p"], bp["c2_a"])
        out = _bn_lanes(out, cv, bp["bn2_g"], bp["bn2_b"], relu=False)
        if bc["has_sc"]:
            sc = _conv_taps(act, bp["sc_p"], bp["sc_a"])
            sc = _bn_lanes(sc, cv, bp["scbn_g"], bp["scbn_b"], relu=False)
        else:
            sc = act
        act = jnp.maximum(out + sc, 0.0)

    # head: global average pool (two matmuls) + Linear, fused here as well
    hd = plan["head"]
    pooled = jnp.dot(hd["rowpool"][...], act, preferred_element_type=jnp.float32)
    pooled = jnp.dot(pooled, hd["lanepool"][...], preferred_element_type=jnp.float32)
    out_ref[...] = (jnp.dot(pooled, hd["fc_w"][...],
                            preferred_element_type=jnp.float32) + hd["fc_b"][...])


# ----------------------- init-time operand construction ---------------------

def _banded_A(w_oihw, W_in, W_out, stride, pad):
    """Per-tap banded weight matrix A[dy]: (W_in*Cin, W_out*Cout)."""
    w = np.asarray(w_oihw, np.float32)
    Cout, Cin, KH, KW = w.shape
    A = np.zeros((KH, W_in * Cin, W_out * Cout), np.float32)
    for dy in range(KH):
        for wo in range(W_out):
            for dx in range(KW):
                wi = stride * wo + dx - pad
                if 0 <= wi < W_in:
                    A[dy, wi * Cin:(wi + 1) * Cin,
                      wo * Cout:(wo + 1) * Cout] = w[:, :, dy, dx].T
    return jnp.asarray(A)


def _row_select_P(N, H_in, H_out, KH, stride, pad):
    """Per-tap row selection P[dy]: (N*H_out, N*H_in) picks row s*h + dy - pad of image n."""
    P = np.zeros((KH, N * H_out, N * H_in), np.float32)
    for dy in range(KH):
        for n in range(N):
            for h in range(H_out):
                r = stride * h + dy - pad
                if 0 <= r < H_in:
                    P[dy, n * H_out + h, n * H_in + r] = 1.0
    return jnp.asarray(P)


def _chan_avg(W_out, Cout, count):
    """(L, L) matrix averaging lanes that belong to the same channel (L = W_out*Cout)."""
    lane = np.arange(W_out * Cout) % Cout
    return jnp.asarray((lane[:, None] == lane[None, :]).astype(np.float32) / float(count))


def _tile_lane(v, W_out):
    """Tile a per-channel vector across the W groups of the lane axis -> (1, W_out*C)."""
    return jnp.asarray(np.tile(np.asarray(v, np.float32), W_out)[None, :])


def build_resnet_plan(key, *, N, H, W, num_blocks=(1, 1, 1), num_classes=10):
    """Pre-compute every kernel operand (weights already transposed/banded/tiled)."""
    kcnt = [0]

    def nkey():
        kcnt[0] += 1
        return jax.random.fold_in(key, kcnt[0])

    def conv_w(cout, cin, k):
        fan_in = float(cin * k * k)
        return jax.random.normal(nkey(), (cout, cin, k, k), jnp.float32) / float(np.sqrt(fan_in))

    plan = {"stem": {}, "blocks": [], "cavg": {}, "head": {}}
    cfg = {"blocks": []}

    def cavg_key(Wo, Co, cnt):
        k_ = f"w{Wo}c{Co}n{cnt}"
        if k_ not in plan["cavg"]:
            plan["cavg"][k_] = _chan_avg(Wo, Co, cnt)
        return k_

    # --- stem: conv3x3(3->16, s=1, p=1) + BN(16) ---------------------------
    plan["stem"]["p"] = _row_select_P(N, H, H, 3, 1, 1)
    plan["stem"]["a"] = _banded_A(conv_w(16, 3, 3), W, W, 1, 1).astype(MXU_DT)
    plan["stem"]["g"] = _tile_lane(np.ones(16), W)
    plan["stem"]["b"] = _tile_lane(np.zeros(16), W)
    cfg["stem_cavg"] = cavg_key(W, 16, N * H * W)

    # --- basic blocks -------------------------------------------------------
    in_planes, cur_H, cur_W = 16, H, W
    for planes, nb, stride0 in zip((16, 32, 64), num_blocks, (1, 2, 2)):
        for bi in range(nb):
            s = stride0 if bi == 0 else 1
            Ho, Wo = cur_H // s, cur_W // s
            bp = {}
            bp["c1_p"] = _row_select_P(N, cur_H, Ho, 3, s, 1)
            bp["c1_a"] = _banded_A(conv_w(planes, in_planes, 3), cur_W, Wo, s, 1).astype(MXU_DT)
            bp["bn1_g"] = _tile_lane(np.ones(planes), Wo)
            bp["bn1_b"] = _tile_lane(np.zeros(planes), Wo)
            bp["c2_p"] = _row_select_P(N, Ho, Ho, 3, 1, 1)
            bp["c2_a"] = _banded_A(conv_w(planes, planes, 3), Wo, Wo, 1, 1).astype(MXU_DT)
            bp["bn2_g"] = _tile_lane(np.ones(planes), Wo)
            bp["bn2_b"] = _tile_lane(np.zeros(planes), Wo)
            has_sc = (s != 1) or (in_planes != planes)
            if has_sc:
                bp["sc_p"] = _row_select_P(N, cur_H, Ho, 1, s, 0)
                bp["sc_a"] = _banded_A(conv_w(planes, in_planes, 1), cur_W, Wo, s, 0).astype(MXU_DT)
                bp["scbn_g"] = _tile_lane(np.ones(planes), Wo)
                bp["scbn_b"] = _tile_lane(np.zeros(planes), Wo)
            plan["blocks"].append(bp)
            cfg["blocks"].append({"cavg": cavg_key(Wo, planes, N * Ho * Wo),
                                  "has_sc": has_sc})
            in_planes, cur_H, cur_W = planes, Ho, Wo

    # --- head: global avg pool (as matmuls) + Linear (pre-transposed) -------
    rowpool = np.zeros((N, N * cur_H), np.float32)
    for n in range(N):
        rowpool[n, n * cur_H:(n + 1) * cur_H] = 1.0 / cur_H
    lanepool = np.zeros((cur_W * in_planes, in_planes), np.float32)
    for w_ in range(cur_W):
        lanepool[w_ * in_planes + np.arange(in_planes), np.arange(in_planes)] = 1.0 / cur_W
    plan["head"]["rowpool"] = jnp.asarray(rowpool)
    plan["head"]["lanepool"] = jnp.asarray(lanepool)
    plan["head"]["fc_w"] = (jax.random.normal(nkey(), (in_planes, num_classes), jnp.float32)
                            / float(np.sqrt(in_planes)))            # stored as (64, classes)
    plan["head"]["fc_b"] = jax.random.normal(nkey(), (1, num_classes), jnp.float32) * 0.01
    return plan, cfg


# --------------------------------- forward ----------------------------------

def resnet_forward(plan, cfg, x_nchw):
    N, C, H, W = x_nchw.shape
    # NCHW -> lane-dense (N*H, W*C) slab; the only per-forward layout op.
    x2d = jnp.transpose(x_nchw.astype(jnp.float32), (0, 2, 3, 1)).reshape(N * H, W * C)
    leaves, treedef = jax.tree_util.tree_flatten(plan)
    num_classes = plan["head"]["fc_w"].shape[-1]
    return pl.pallas_call(
        partial(_resnet_kernel, treedef, cfg),
        out_shape=jax.ShapeDtypeStruct((N, num_classes), jnp.float32),
        in_specs=[_VSPEC] * (1 + len(leaves)),
        out_specs=_VSPEC,
    )(x2d, *leaves)


# ----------------------------------- main ------------------------------------

if __name__ == "__main__":
    key = jax.random.PRNGKey(0)
    kx, kp = jax.random.split(key)

    N, H, W = 2, 16, 16
    x = jax.random.normal(kx, (N, 3, H, W), jnp.float32)            # NCHW input
    plan, cfg = build_resnet_plan(kp, N=N, H=H, W=W,
                                  num_blocks=(1, 1, 1), num_classes=10)

    fwd = jax.jit(lambda p, inp: resnet_forward(p, cfg, inp))
    out = jax.block_until_ready(fwd(plan, x))

    assert out.shape == (N, 10), out.shape
    assert bool(jnp.all(jnp.isfinite(out))), "non-finite logits"
    print("KERNEL_OK")
</pallas_src>

<mosaic_0001>
module attributes {stable_mosaic.version = 11 : i64} {
  func.func @_resnet_kernel(%arg0: memref<32x48xf32, #tpu.memory_space<vmem>>, %arg1: memref<1x256xf32, #tpu.memory_space<vmem>>, %arg2: memref<1x256xf32, #tpu.memory_space<vmem>>, %arg3: memref<1x256xf32, #tpu.memory_space<vmem>>, %arg4: memref<1x256xf32, #tpu.memory_space<vmem>>, %arg5: memref<3x256x256xbf16, #tpu.memory_space<vmem>>, %arg6: memref<3x32x32xf32, #tpu.memory_space<vmem>>, %arg7: memref<3x256x256xbf16, #tpu.memory_space<vmem>>, %arg8: memref<3x32x32xf32, #tpu.memory_space<vmem>>, %arg9: memref<1x256xf32, #tpu.memory_space<vmem>>, %arg10: memref<1x256xf32, #tpu.memory_space<vmem>>, %arg11: memref<1x256xf32, #tpu.memory_space<vmem>>, %arg12: memref<1x256xf32, #tpu.memory_space<vmem>>, %arg13: memref<3x256x256xbf16, #tpu.memory_space<vmem>>, %arg14: memref<3x16x32xf32, #tpu.memory_space<vmem>>, %arg15: memref<3x256x256xbf16, #tpu.memory_space<vmem>>, %arg16: memref<3x16x16xf32, #tpu.memory_space<vmem>>, %arg17: memref<1x256x256xbf16, #tpu.memory_space<vmem>>, %arg18: memref<1x16x32xf32, #tpu.memory_space<vmem>>, %arg19: memref<1x256xf32, #tpu.memory_space<vmem>>, %arg20: memref<1x256xf32, #tpu.memory_space<vmem>>, %arg21: memref<1x256xf32, #tpu.memory_space<vmem>>, %arg22: memref<1x256xf32, #tpu.memory_space<vmem>>, %arg23: memref<1x256xf32, #tpu.memory_space<vmem>>, %arg24: memref<1x256xf32, #tpu.memory_space<vmem>>, %arg25: memref<3x256x256xbf16, #tpu.memory_space<vmem>>, %arg26: memref<3x8x16xf32, #tpu.memory_space<vmem>>, %arg27: memref<3x256x256xbf16, #tpu.memory_space<vmem>>, %arg28: memref<3x8x8xf32, #tpu.memory_space<vmem>>, %arg29: memref<1x256x256xbf16, #tpu.memory_space<vmem>>, %arg30: memref<1x8x16xf32, #tpu.memory_space<vmem>>, %arg31: memref<1x256xf32, #tpu.memory_space<vmem>>, %arg32: memref<1x256xf32, #tpu.memory_space<vmem>>, %arg33: memref<256x256xf32, #tpu.memory_space<vmem>>, %arg34: memref<256x256xf32, #tpu.memory_space<vmem>>, %arg35: memref<256x256xf32, #tpu.memory_space<vmem>>, %arg36: memref<1x10xf32, #tpu.memory_space<vmem>>, %arg37: memref<64x10xf32, #tpu.memory_space<vmem>>, %arg38: memref<256x64xf32, #tpu.memory_space<vmem>>, %arg39: memref<2x8xf32, #tpu.memory_space<vmem>>, %arg40: memref<3x48x256xbf16, #tpu.memory_space<vmem>>, %arg41: memref<1x256xf32, #tpu.memory_space<vmem>>, %arg42: memref<1x256xf32, #tpu.memory_space<vmem>>, %arg43: memref<3x32x32xf32, #tpu.memory_space<vmem>>, %arg44: memref<2x10xf32, #tpu.memory_space<vmem>>) attributes {dimension_semantics = [], scalar_prefetch = 0 : i64, scratch_operands = 0 : i64, tpu.core_type = #tpu.core_type<tc>} {
    %c0 = arith.constant 0 : index
    %c0_0 = arith.constant 0 : index
    %0 = vector.load %arg0[%c0, %c0_0] : memref<32x48xf32, #tpu.memory_space<vmem>>, vector<32x48xf32>
    %c0_1 = arith.constant 0 : index
    %c0_2 = arith.constant 0 : index
    %c0_3 = arith.constant 0 : index
    %1 = vector.load %arg43[%c0_1, %c0_2, %c0_3] : memref<3x32x32xf32, #tpu.memory_space<vmem>>, vector<1x32x32xf32>
    %2 = vector.shape_cast %1 : vector<1x32x32xf32> to vector<32x32xf32>
    %cst = arith.constant dense<0.000000e+00> : vector<32x48xf32>
    %3 = tpu.matmul %2, %0, %cst {dimension_numbers = #tpu.dot_dimension_numbers<[1], [0], [0], [1], [0, 0, 1, 1], [], []>} : vector<32x32xf32>, vector<32x48xf32>, vector<32x48xf32> -> vector<32x48xf32>
    %4 = arith.truncf %3 : vector<32x48xf32> to vector<32x48xbf16>
    %c0_4 = arith.constant 0 : index
    %c0_5 = arith.constant 0 : index
    %c0_6 = arith.constant 0 : index
    %5 = vector.load %arg40[%c0_4, %c0_5, %c0_6] : memref<3x48x256xbf16, #tpu.memory_space<vmem>>, vector<1x48x256xbf16>
    %6 = vector.shape_cast %5 : vector<1x48x256xbf16> to vector<48x256xbf16>
    %cst_7 = arith.constant dense<0.000000e+00> : vector<32x256xf32>
    %7 = tpu.matmul %4, %6, %cst_7 {dimension_numbers = #tpu.dot_dimension_numbers<[1], [0], [0], [1], [0, 0, 1, 1], [], []>} : vector<32x48xbf16>, vector<48x256xbf16>, vector<32x256xf32> -> vector<32x256xf32>
    %c1 = arith.constant 1 : index
    %c0_8 = arith.constant 0 : index
    %c0_9 = arith.constant 0 : index
    %8 = vector.load %arg43[%c1, %c0_8, %c0_9] : memref<3x32x32xf32, #tpu.memory_space<vmem>>, vector<1x32x32xf32>
    %9 = vector.shape_cast %8 : vector<1x32x32xf32> to vector<32x32xf32>
    %cst_10 = arith.constant dense<0.000000e+00> : vector<32x48xf32>
    %10 = tpu.matmul %9, %0, %cst_10 {dimension_numbers = #tpu.dot_dimension_numbers<[1], [0], [0], [1], [0, 0, 1, 1], [], []>} : vector<32x32xf32>, vector<32x48xf32>, vector<32x48xf32> -> vector<32x48xf32>
    %11 = arith.truncf %10 : vector<32x48xf32> to vector<32x48xbf16>
    %c1_11 = arith.constant 1 : index
    %c0_12 = arith.constant 0 : index
    %c0_13 = arith.constant 0 : index
    %12 = vector.load %arg40[%c1_11, %c0_12, %c0_13] : memref<3x48x256xbf16, #tpu.memory_space<vmem>>, vector<1x48x256xbf16>
    %13 = vector.shape_cast %12 : vector<1x48x256xbf16> to vector<48x256xbf16>
    %cst_14 = arith.constant dense<0.000000e+00> : vector<32x256xf32>
    %14 = tpu.matmul %11, %13, %cst_14 {dimension_numbers = #tpu.dot_dimension_numbers<[1], [0], [0], [1], [0, 0, 1, 1], [], []>} : vector<32x48xbf16>, vector<48x256xbf16>, vector<32x256xf32> -> vector<32x256xf32>
    %15 = arith.addf %7, %14 : vector<32x256xf32>
    %c2 = arith.constant 2 : index
    %c0_15 = arith.constant 0 : index
    %c0_16 = arith.constant 0 : index
    %16 = vector.load %arg43[%c2, %c0_15, %c0_16] : memref<3x32x32xf32, #tpu.memory_space<vmem>>, vector<1x32x32xf32>
    %17 = vector.shape_cast %16 : vector<1x32x32xf32> to vector<32x32xf32>
    %cst_17 = arith.constant dense<0.000000e+00> : vector<32x48xf32>
    %18 = tpu.matmul %17, %0, %cst_17 {dimension_numbers = #tpu.dot_dimension_numbers<[1], [0], [0], [1], [0, 0, 1, 1], [], []>} : vector<32x32xf32>, vector<32x48xf32>, vector<32x48xf32> -> vector<32x48xf32>
    %19 = arith.truncf %18 : vector<32x48xf32> to vector<32x48xbf16>
    %c2_18 = arith.constant 2 : index
    %c0_19 = arith.constant 0 : index
    %c0_20 = arith.constant 0 : index
    %20 = vector.load %arg40[%c2_18, %c0_19, %c0_20] : memref<3x48x256xbf16, #tpu.memory_space<vmem>>, vector<1x48x256xbf16>
    %21 = vector.shape_cast %20 : vector<1x48x256xbf16> to vector<48x256xbf16>
    %cst_21 = arith.constant dense<0.000000e+00> : vector<32x256xf32>
    %22 = tpu.matmul %19, %21, %cst_21 {dimension_numbers = #tpu.dot_dimension_numbers<[1], [0], [0], [1], [0, 0, 1, 1], [], []>} : vector<32x48xbf16>, vector<48x256xbf16>, vector<32x256xf32> -> vector<32x256xf32>
    %23 = arith.addf %15, %22 : vector<32x256xf32>
    %c0_22 = arith.constant 0 : index
    %c0_23 = arith.constant 0 : index
    %24 = vector.load %arg33[%c0_22, %c0_23] : memref<256x256xf32, #tpu.memory_space<vmem>>, vector<256x256xf32>
    %cst_24 = arith.constant dense<0.000000e+00> : vector<256xf32>
    %25 = vector.multi_reduction <add>, %23, %cst_24 [0] : vector<32x256xf32> to vector<256xf32>
    %26 = vector.shape_cast %25 : vector<256xf32> to vector<1x256xf32>
    %cst_25 = arith.constant dense<0.000000e+00> : vector<1x256xf32>
    %27 = tpu.matmul %26, %24, %cst_25 {dimension_numbers = #tpu.dot_dimension_numbers<[1], [0], [0], [1], [0, 0, 1, 1], [], []>} : vector<1x256xf32>, vector<256x256xf32>, vector<1x256xf32> -> vector<1x256xf32>
    %28 = vector.broadcast %27 : vector<1x256xf32> to vector<32x256xf32>
    %29 = arith.subf %23, %28 : vector<32x256xf32>
    %30 = arith.mulf %29, %29 : vector<32x256xf32>
    %cst_26 = arith.constant dense<0.000000e+00> : vector<256xf32>
    %31 = vector.multi_reduction <add>, %30, %cst_26 [0] : vector<32x256xf32> to vector<256xf32>
    %32 = vector.shape_cast %31 : vector<256xf32> to vector<1x256xf32>
    %cst_27 = arith.constant dense<0.000000e+00> : vector<1x256xf32>
    %33 = tpu.matmul %32, %24, %cst_27 {dimension_numbers = #tpu.dot_dimension_numbers<[1], [0], [0], [1], [0, 0, 1, 1], [], []>} : vector<1x256xf32>, vector<256x256xf32>, vector<1x256xf32> -> vector<1x256xf32>
    %cst_28 = arith.constant 9.99999974E-6 : f32
    %34 = vector.broadcast %cst_28 : f32 to vector<1x256xf32>
    %35 = arith.addf %33, %34 : vector<1x256xf32>
    %36 = math.rsqrt %35 : vector<1x256xf32>
    %c0_29 = arith.constant 0 : index
    %c0_30 = arith.constant 0 : index
    %37 = vector.load %arg42[%c0_29, %c0_30] : memref<1x256xf32, #tpu.memory_space<vmem>>, vector<1x256xf32>
    %38 = arith.mulf %36, %37 : vector<1x256xf32>
    %39 = vector.broadcast %38 : vector<1x256xf32> to vector<32x256xf32>
    %40 = arith.mulf %29, %39 : vector<32x256xf32>
    %c0_31 = arith.constant 0 : index
    %c0_32 = arith.constant 0 : index
    %41 = vector.load %arg41[%c0_31, %c0_32] : memref<1x256xf32, #tpu.memory_space<vmem>>, vector<1x256xf32>
    %42 = vector.broadcast %41 : vector<1x256xf32> to vector<32x256xf32>
    %43 = arith.addf %40, %42 : vector<32x256xf32>
    %cst_33 = arith.constant 0.000000e+00 : f32
    %44 = vector.broadcast %cst_33 : f32 to vector<32x256xf32>
    %45 = arith.maximumf %43, %44 : vector<32x256xf32>
    %c0_34 = arith.constant 0 : index
    %c0_35 = arith.constant 0 : index
    %c0_36 = arith.constant 0 : index
    %46 = vector.load %arg6[%c0_34, %c0_35, %c0_36] : memref<3x32x32xf32, #tpu.memory_space<vmem>>, vector<1x32x32xf32>
    %47 = vector.shape_cast %46 : vector<1x32x32xf32> to vector<32x32xf32>
    %cst_37 = arith.constant dense<0.000000e+00> : vector<32x256xf32>
    %48 = tpu.matmul %47, %45, %cst_37 {dimension_numbers = #tpu.dot_dimension_numbers<[1], [0], [0], [1], [0, 0, 1, 1], [], []>} : vector<32x32xf32>, vector<32x256xf32>, vector<32x256xf32> -> vector<32x256xf32>
    %49 = arith.truncf %48 : vector<32x256xf32> to vector<32x256xbf16>
    %c0_38 = arith.constant 0 : index
    %c0_39 = arith.constant 0 : index
    %c0_40 = arith.constant 0 : index
    %50 = vector.load %arg5[%c0_38, %c0_39, %c0_40] : memref<3x256x256xbf16, #tpu.memory_space<vmem>>, vector<1x256x256xbf16>
    %51 = vector.shape_cast %50 : vector<1x256x256xbf16> to vector<256x256xbf16>
    %cst_41 = arith.constant dense<0.000000e+00> : vector<32x256xf32>
    %52 = tpu.matmul %49, %51, %cst_41 {dimension_numbers = #tpu.dot_dimension_numbers<[1], [0], [0], [1], [0, 0, 1, 1], [], []>} : vector<32x256xbf16>, vector<256x256xbf16>, vector<32x256xf32> -> vector<32x256xf32>
    %c1_42 = arith.constant 1 : index
    %c0_43 = arith.constant 0 : index
    %c0_44 = arith.constant 0 : index
    %53 = vector.load %arg6[%c1_42, %c0_43, %c0_44] : memref<3x32x32xf32, #tpu.memory_space<vmem>>, vector<1x32x32xf32>
    %54 = vector.shape_cast %53 : vector<1x32x32xf32> to vector<32x32xf32>
    %cst_45 = arith.constant dense<0.000000e+00> : vector<32x256xf32>
    %55 = tpu.matmul %54, %45, %cst_45 {dimension_numbers = #tpu.dot_dimension_numbers<[1], [0], [0], [1], [0, 0, 1, 1], [], []>} : vector<32x32xf32>, vector<32x256xf32>, vector<32x256xf32> -> vector<32x256xf32>
    %56 = arith.truncf %55 : vector<32x256xf32> to vector<32x256xbf16>
    %c1_46 = arith.constant 1 : index
    %c0_47 = arith.constant 0 : index
    %c0_48 = arith.constant 0 : index
    %57 = vector.load %arg5[%c1_46, %c0_47, %c0_48] : memref<3x256x256xbf16, #tpu.memory_space<vmem>>, vector<1x256x256xbf16>
    %58 = vector.shape_cast %57 : vector<1x256x256xbf16> to vector<256x256xbf16>
    %cst_49 = arith.constant dense<0.000000e+00> : vector<32x256xf32>
    %59 = tpu.matmul %56, %58, %cst_49 {dimension_numbers = #tpu.dot_dimension_numbers<[1], [0], [0], [1], [0, 0, 1, 1], [], []>} : vector<32x256xbf16>, vector<256x256xbf16>, vector<32x256xf32> -> vector<32x256xf32>
    %60 = arith.addf %52, %59 : vector<32x256xf32>
    %c2_50 = arith.constant 2 : index
    %c0_51 = arith.constant 0 : index
    %c0_52 = arith.constant 0 : index
    %61 = vector.load %arg6[%c2_50, %c0_51, %c0_52] : memref<3x32x32xf32, #tpu.memory_space<vmem>>, vector<1x32x32xf32>
    %62 = vector.shape_cast %61 : vector<1x32x32xf32> to vector<32x32xf32>
    %cst_53 = arith.constant dense<0.000000e+00> : vector<32x256xf32>
    %63 = tpu.matmul %62, %45, %cst_53 {dimension_numbers = #tpu.dot_dimension_numbers<[1], [0], [0], [1], [0, 0, 1, 1], [], []>} : vector<32x32xf32>, vector<32x256xf32>, vector<32x256xf32> -> vector<32x256xf32>
    %64 = arith.truncf %63 : vector<32x256xf32> to vector<32x256xbf16>
    %c2_54 = arith.constant 2 : index
    %c0_55 = arith.constant 0 : index
    %c0_56 = arith.constant 0 : index
    %65 = vector.load %arg5[%c2_54, %c0_55, %c0_56] : memref<3x256x256xbf16, #tpu.memory_space<vmem>>, vector<1x256x256xbf16>
    %66 = vector.shape_cast %65 : vector<1x256x256xbf16> to vector<256x256xbf16>
    %cst_57 = arith.constant dense<0.000000e+00> : vector<32x256xf32>
    %67 = tpu.matmul %64, %66, %cst_57 {dimension_numbers = #tpu.dot_dimension_numbers<[1], [0], [0], [1], [0, 0, 1, 1], [], []>} : vector<32x256xbf16>, vector<256x256xbf16>, vector<32x256xf32> -> vector<32x256xf32>
    %68 = arith.addf %60, %67 : vector<32x256xf32>
    %c0_58 = arith.constant 0 : index
    %c0_59 = arith.constant 0 : index
    %69 = vector.load %arg33[%c0_58, %c0_59] : memref<256x256xf32, #tpu.memory_space<vmem>>, vector<256x256xf32>
    %cst_60 = arith.constant dense<0.000000e+00> : vector<256xf32>
    %70 = vector.multi_reduction <add>, %68, %cst_60 [0] : vector<32x256xf32> to vector<256xf32>
    %71 = vector.shape_cast %70 : vector<256xf32> to vector<1x256xf32>
    %cst_61 = arith.constant dense<0.000000e+00> : vector<1x256xf32>
    %72 = tpu.matmul %71, %69, %cst_61 {dimension_numbers = #tpu.dot_dimension_numbers<[1], [0], [0], [1], [0, 0, 1, 1], [], []>} : vector<1x256xf32>, vector<256x256xf32>, vector<1x256xf32> -> vector<1x256xf32>
    %73 = vector.broadcast %72 : vector<1x256xf32> to vector<32x256xf32>
    %74 = arith.subf %68, %73 : vector<32x256xf32>
    %75 = arith.mulf %74, %74 : vector<32x256xf32>
    %cst_62 = arith.constant dense<0.000000e+00> : vector<256xf32>
    %76 = vector.multi_reduction <add>, %75, %cst_62 [0] : vector<32x256xf32> to vector<256xf32>
    %77 = vector.shape_cast %76 : vector<256xf32> to vector<1x256xf32>
    %cst_63 = arith.constant dense<0.000000e+00> : vector<1x256xf32>
    %78 = tpu.matmul %77, %69, %cst_63 {dimension_numbers = #tpu.dot_dimension_numbers<[1], [0], [0], [1], [0, 0, 1, 1], [], []>} : vector<1x256xf32>, vector<256x256xf32>, vector<1x256xf32> -> vector<1x256xf32>
    %cst_64 = arith.constant 9.99999974E-6 : f32
    %79 = vector.broadcast %cst_64 : f32 to vector<1x256xf32>
    %80 = arith.addf %78, %79 : vector<1x256xf32>
    %81 = math.rsqrt %80 : vector<1x256xf32>
    %c0_65 = arith.constant 0 : index
    %c0_66 = arith.constant 0 : index
    %82 = vector.load %arg2[%c0_65, %c0_66] : memref<1x256xf32, #tpu.memory_space<vmem>>, vector<1x256xf32>
    %83 = arith.mulf %81, %82 : vector<1x256xf32>
    %84 = vector.broadcast %83 : vector<1x256xf32> to vector<32x256xf32>
    %85 = arith.mulf %74, %84 : vector<32x256xf32>
    %c0_67 = arith.constant 0 : index
    %c0_68 = arith.constant 0 : index
    %86 = vector.load %arg1[%c0_67, %c0_68] : memref<1x256xf32, #tpu.memory_space<vmem>>, vector<1x256xf32>
    %87 = vector.broadcast %86 : vector<1x256xf32> to vector<32x256xf32>
    %88 = arith.addf %85, %87 : vector<32x256xf32>
    %cst_69 = arith.constant 0.000000e+00 : f32
    %89 = vector.broadcast %cst_69 : f32 to vector<32x256xf32>
    %90 = arith.maximumf %88, %89 : vector<32x256xf32>
    %c0_70 = arith.constant 0 : index
    %c0_71 = arith.constant 0 : index
    %c0_72 = arith.constant 0 : index
    %91 = vector.load %arg8[%c0_70, %c0_71, %c0_72] : memref<3x32x32xf32, #tpu.memory_space<vmem>>, vector<1x32x32xf32>
    %92 = vector.shape_cast %91 : vector<1x32x32xf32> to vector<32x32xf32>
    %cst_73 = arith.constant dense<0.000000e+00> : vector<32x256xf32>
    %93 = tpu.matmul %92, %90, %cst_73 {dimension_numbers = #tpu.dot_dimension_numbers<[1], [0], [0], [1], [0, 0, 1, 1], [], []>} : vector<32x32xf32>, vector<32x256xf32>, vector<32x256xf32> -> vector<32x256xf32>
    %94 = arith.truncf %93 : vector<32x256xf32> to vector<32x256xbf16>
    %c0_74 = arith.constant 0 : index
    %c0_75 = arith.constant 0 : index
    %c0_76 = arith.constant 0 : index
    %95 = vector.load %arg7[%c0_74, %c0_75, %c0_76] : memref<3x256x256xbf16, #tpu.memory_space<vmem>>, vector<1x256x256xbf16>
    %96 = vector.shape_cast %95 : vector<1x256x256xbf16> to vector<256x256xbf16>
    %cst_77 = arith.constant dense<0.000000e+00> : vector<32x256xf32>
    %97 = tpu.matmul %94, %96, %cst_77 {dimension_numbers = #tpu.dot_dimension_numbers<[1], [0], [0], [1], [0, 0, 1, 1], [], []>} : vector<32x256xbf16>, vector<256x256xbf16>, vector<32x256xf32> -> vector<32x256xf32>
    %c1_78 = arith.constant 1 : index
    %c0_79 = arith.constant 0 : index
    %c0_80 = arith.constant 0 : index
    %98 = vector.load %arg8[%c1_78, %c0_79, %c0_80] : memref<3x32x32xf32, #tpu.memory_space<vmem>>, vector<1x32x32xf32>
    %99 = vector.shape_cast %98 : vector<1x32x32xf32> to vector<32x32xf32>
    %cst_81 = arith.constant dense<0.000000e+00> : vector<32x256xf32>
    %100 = tpu.matmul %99, %90, %cst_81 {dimension_numbers = #tpu.dot_dimension_numbers<[1], [0], [0], [1], [0, 0, 1, 1], [], []>} : vector<32x32xf32>, vector<32x256xf32>, vector<32x256xf32> -> vector<32x256xf32>
    %101 = arith.truncf %100 : vector<32x256xf32> to vector<32x256xbf16>
    %c1_82 = arith.constant 1 : index
    %c0_83 = arith.constant 0 : index
    %c0_84 = arith.constant 0 : index
    %102 = vector.load %arg7[%c1_82, %c0_83, %c0_84] : memref<3x256x256xbf16, #tpu.memory_space<vmem>>, vector<1x256x256xbf16>
    %103 = vector.shape_cast %102 : vector<1x256x256xbf16> to vector<256x256xbf16>
    %cst_85 = arith.constant dense<0.000000e+00> : vector<32x256xf32>
    %104 = tpu.matmul %101, %103, %cst_85 {dimension_numbers = #tpu.dot_dimension_numbers<[1], [0], [0], [1], [0, 0, 1, 1], [], []>} : vector<32x256xbf16>, vector<256x256xbf16>, vector<32x256xf32> -> vector<32x256xf32>
    %105 = arith.addf %97, %104 : vector<32x256xf32>
    %c2_86 = arith.constant 2 : index
    %c0_87 = arith.constant 0 : index
    %c0_88 = arith.constant 0 : index
    %106 = vector.load %arg8[%c2_86, %c0_87, %c0_88] : memref<3x32x32xf32, #tpu.memory_space<vmem>>, vector<1x32x32xf32>
    %107 = vector.shape_cast %106 : vector<1x32x32xf32> to vector<32x32xf32>
    %cst_89 = arith.constant dense<0.000000e+00> : vector<32x256xf32>
    %108 = tpu.matmul %107, %90, %cst_89 {dimension_numbers = #tpu.dot_dimension_numbers<[1], [0], [0], [1], [0, 0, 1, 1], [], []>} : vector<32x32xf32>, vector<32x256xf32>, vector<32x256xf32> -> vector<32x256xf32>
    %109 = arith.truncf %108 : vector<32x256xf32> to vector<32x256xbf16>
    %c2_90 = arith.constant 2 : index
    %c0_91 = arith.constant 0 : index
    %c0_92 = arith.constant 0 : index
    %110 = vector.load %arg7[%c2_90, %c0_91, %c0_92] : memref<3x256x256xbf16, #tpu.memory_space<vmem>>, vector<1x256x256xbf16>
    %111 = vector.shape_cast %110 : vector<1x256x256xbf16> to vector<256x256xbf16>
    %cst_93 = arith.constant dense<0.000000e+00> : vector<32x256xf32>
    %112 = tpu.matmul %109, %111, %cst_93 {dimension_numbers = #tpu.dot_dimension_numbers<[1], [0], [0], [1], [0, 0, 1, 1], [], []>} : vector<32x256xbf16>, vector<256x256xbf16>, vector<32x256xf32> -> vector<32x256xf32>
    %113 = arith.addf %105, %112 : vector<32x256xf32>
    %c0_94 = arith.constant 0 : index
    %c0_95 = arith.constant 0 : index
    %114 = vector.load %arg33[%c0_94, %c0_95] : memref<256x256xf32, #tpu.memory_space<vmem>>, vector<256x256xf32>
    %cst_96 = arith.constant dense<0.000000e+00> : vector<256xf32>
    %115 = vector.multi_reduction <add>, %113, %cst_96 [0] : vector<32x256xf32> to vector<256xf32>
    %116 = vector.shape_cast %115 : vector<256xf32> to vector<1x256xf32>
    %cst_97 = arith.constant dense<0.000000e+00> : vector<1x256xf32>
    %117 = tpu.matmul %116, %114, %cst_97 {dimension_numbers = #tpu.dot_dimension_numbers<[1], [0], [0], [1], [0, 0, 1, 1], [], []>} : vector<1x256xf32>, vector<256x256xf32>, vector<1x256xf32> -> vector<1x256xf32>
    %118 = vector.broadcast %117 : vector<1x256xf32> to vector<32x256xf32>
    %119 = arith.subf %113, %118 : vector<32x256xf32>
    %120 = arith.mulf %119, %119 : vector<32x256xf32>
    %cst_98 = arith.constant dense<0.000000e+00> : vector<256xf32>
    %121 = vector.multi_reduction <add>, %120, %cst_98 [0] : vector<32x256xf32> to vector<256xf32>
    %122 = vector.shape_cast %121 : vector<256xf32> to vector<1x256xf32>
    %cst_99 = arith.constant dense<0.000000e+00> : vector<1x256xf32>
    %123 = tpu.matmul %122, %114, %cst_99 {dimension_numbers = #tpu.dot_dimension_numbers<[1], [0], [0], [1], [0, 0, 1, 1], [], []>} : vector<1x256xf32>, vector<256x256xf32>, vector<1x256xf32> -> vector<1x256xf32>
    %cst_100 = arith.constant 9.99999974E-6 : f32
    %124 = vector.broadcast %cst_100 : f32 to vector<1x256xf32>
    %125 = arith.addf %123, %124 : vector<1x256xf32>
    %126 = math.rsqrt %125 : vector<1x256xf32>
    %c0_101 = arith.constant 0 : index
    %c0_102 = arith.constant 0 : index
    %127 = vector.load %arg4[%c0_101, %c0_102] : memref<1x256xf32, #tpu.memory_space<vmem>>, vector<1x256xf32>
    %128 = arith.mulf %126, %127 : vector<1x256xf32>
    %129 = vector.broadcast %128 : vector<1x256xf32> to vector<32x256xf32>
    %130 = arith.mulf %119, %129 : vector<32x256xf32>
    %c0_103 = arith.constant 0 : index
    %c0_104 = arith.constant 0 : index
    %131 = vector.load %arg3[%c0_103, %c0_104] : memref<1x256xf32, #tpu.memory_space<vmem>>, vector<1x256xf32>
    %132 = vector.broadcast %131 : vector<1x256xf32> to vector<32x256xf32>
    %133 = arith.addf %130, %132 : vector<32x256xf32>
    %134 = arith.addf %133, %45 : vector<32x256xf32>
    %cst_105 = arith.constant 0.000000e+00 : f32
    %135 = vector.broadcast %cst_105 : f32 to vector<32x256xf32>
    %136 = arith.maximumf %134, %135 : vector<32x256xf32>
    %c0_106 = arith.constant 0 : index
    %c0_107 = arith.constant 0 : index
    %c0_108 = arith.constant 0 : index
    %137 = vector.load %arg14[%c0_106, %c0_107, %c0_108] : memref<3x16x32xf32, #tpu.memory_space<vmem>>, vector<1x16x32xf32>
    %138 = vector.shape_cast %137 : vector<1x16x32xf32> to vector<16x32xf32>
    %cst_109 = arith.constant dense<0.000000e+00> : vector<16x256xf32>
    %139 = tpu.matmul %138, %136, %cst_109 {dimension_numbers = #tpu.dot_dimension_numbers<[1], [0], [0], [1], [0, 0, 1, 1], [], []>} : vector<16x32xf32>, vector<32x256xf32>, vector<16x256xf32> -> vector<16x256xf32>
    %140 = arith.truncf %139 : vector<16x256xf32> to vector<16x256xbf16>
    %c0_110 = arith.constant 0 : index
    %c0_111 = arith.constant 0 : index
    %c0_112 = arith.constant 0 : index
    %141 = vector.load %arg13[%c0_110, %c0_111, %c0_112] : memref<3x256x256xbf16, #tpu.memory_space<vmem>>, vector<1x256x256xbf16>
    %142 = vector.shape_cast %141 : vector<1x256x256xbf16> to vector<256x256xbf16>
    %cst_113 = arith.constant dense<0.000000e+00> : vector<16x256xf32>
    %143 = tpu.matmul %140, %142, %cst_113 {dimension_numbers = #tpu.dot_dimension_numbers<[1], [0], [0], [1], [0, 0, 1, 1], [], []>} : vector<16x256xbf16>, vector<256x256xbf16>, vector<16x256xf32> -> vector<16x256xf32>
    %c1_114 = arith.constant 1 : index
    %c0_115 = arith.constant 0 : index
    %c0_116 = arith.constant 0 : index
    %144 = vector.load %arg14[%c1_114, %c0_115, %c0_116] : memref<3x16x32xf32, #tpu.memory_space<vmem>>, vector<1x16x32xf32>
    %145 = vector.shape_cast %144 : vector<1x16x32xf32> to vector<16x32xf32>
    %cst_117 = arith.constant dense<0.000000e+00> : vector<16x256xf32>
    %146 = tpu.matmul %145, %136, %cst_117 {dimension_numbers = #tpu.dot_dimension_numbers<[1], [0], [0], [1], [0, 0, 1, 1], [], []>} : vector<16x32xf32>, vector<32x256xf32>, vector<16x256xf32> -> vector<16x256xf32>
    %147 = arith.truncf %146 : vector<16x256xf32> to vector<16x256xbf16>
    %c1_118 = arith.constant 1 : index
    %c0_119 = arith.constant 0 : index
    %c0_120 = arith.constant 0 : index
    %148 = vector.load %arg13[%c1_118, %c0_119, %c0_120] : memref<3x256x256xbf16, #tpu.memory_space<vmem>>, vector<1x256x256xbf16>
    %149 = vector.shape_cast %148 : vector<1x256x256xbf16> to vector<256x256xbf16>
    %cst_121 = arith.constant dense<0.000000e+00> : vector<16x256xf32>
    %150 = tpu.matmul %147, %149, %cst_121 {dimension_numbers = #tpu.dot_dimension_numbers<[1], [0], [0], [1], [0, 0, 1, 1], [], []>} : vector<16x256xbf16>, vector<256x256xbf16>, vector<16x256xf32> -> vector<16x256xf32>
    %151 = arith.addf %143, %150 : vector<16x256xf32>
    %c2_122 = arith.constant 2 : index
    %c0_123 = arith.constant 0 : index
    %c0_124 = arith.constant 0 : index
    %152 = vector.load %arg14[%c2_122, %c0_123, %c0_124] : memref<3x16x32xf32, #tpu.memory_space<vmem>>, vector<1x16x32xf32>
    %153 = vector.shape_cast %152 : vector<1x16x32xf32> to vector<16x32xf32>
    %cst_125 = arith.constant dense<0.000000e+00> : vector<16x256xf32>
    %154 = tpu.matmul %153, %136, %cst_125 {dimension_numbers = #tpu.dot_dimension_numbers<[1], [0], [0], [1], [0, 0, 1, 1], [], []>} : vector<16x32xf32>, vector<32x256xf32>, vector<16x256xf32> -> vector<16x256xf32>
    %155 = arith.truncf %154 : vector<16x256xf32> to vector<16x256xbf16>
    %c2_126 = arith.constant 2 : index
    %c0_127 = arith.constant 0 : index
    %c0_128 = arith.constant 0 : index
    %156 = vector.load %arg13[%c2_126, %c0_127, %c0_128] : memref<3x256x256xbf16, #tpu.memory_space<vmem>>, vector<1x256x256xbf16>
    %157 = vector.shape_cast %156 : vector<1x256x256xbf16> to vector<256x256xbf16>
    %cst_129 = arith.constant dense<0.000000e+00> : vector<16x256xf32>
    %158 = tpu.matmul %155, %157, %cst_129 {dimension_numbers = #tpu.dot_dimension_numbers<[1], [0], [0], [1], [0, 0, 1, 1], [], []>} : vector<16x256xbf16>, vector<256x256xbf16>, vector<16x256xf32> -> vector<16x256xf32>
    %159 = arith.addf %151, %158 : vector<16x256xf32>
    %c0_130 = arith.constant 0 : index
    %c0_131 = arith.constant 0 : index
    %160 = vector.load %arg35[%c0_130, %c0_131] : memref<256x256xf32, #tpu.memory_space<vmem>>, vector<256x256xf32>
    %cst_132 = arith.constant dense<0.000000e+00> : vector<256xf32>
    %161 = vector.multi_reduction <add>, %159, %cst_132 [0] : vector<16x256xf32> to vector<256xf32>
    %162 = vector.shape_cast %161 : vector<256xf32> to vector<1x256xf32>
    %cst_133 = arith.constant dense<0.000000e+00> : vector<1x256xf32>
    %163 = tpu.matmul %162, %160, %cst_133 {dimension_numbers = #tpu.dot_dimension_numbers<[1], [0], [0], [1], [0, 0, 1, 1], [], []>} : vector<1x256xf32>, vector<256x256xf32>, vector<1x256xf32> -> vector<1x256xf32>
    %164 = vector.broadcast %163 : vector<1x256xf32> to vector<16x256xf32>
    %165 = arith.subf %159, %164 : vector<16x256xf32>
    %166 = arith.mulf %165, %165 : vector<16x256xf32>
    %cst_134 = arith.constant dense<0.000000e+00> : vector<256xf32>
    %167 = vector.multi_reduction <add>, %166, %cst_134 [0] : vector<16x256xf32> to vector<256xf32>
    %168 = vector.shape_cast %167 : vector<256xf32> to vector<1x256xf32>
    %cst_135 = arith.constant dense<0.000000e+00> : vector<1x256xf32>
    %169 = tpu.matmul %168, %160, %cst_135 {dimension_numbers = #tpu.dot_dimension_numbers<[1], [0], [0], [1], [0, 0, 1, 1], [], []>} : vector<1x256xf32>, vector<256x256xf32>, vector<1x256xf32> -> vector<1x256xf32>
    %cst_136 = arith.constant 9.99999974E-6 : f32
    %170 = vector.broadcast %cst_136 : f32 to vector<1x256xf32>
    %171 = arith.addf %169, %170 : vector<1x256xf32>
    %172 = math.rsqrt %171 : vector<1x256xf32>
    %c0_137 = arith.constant 0 : index
    %c0_138 = arith.constant 0 : index
    %173 = vector.load %arg10[%c0_137, %c0_138] : memref<1x256xf32, #tpu.memory_space<vmem>>, vector<1x256xf32>
    %174 = arith.mulf %172, %173 : vector<1x256xf32>
    %175 = vector.broadcast %174 : vector<1x256xf32> to vector<16x256xf32>
    %176 = arith.mulf %165, %175 : vector<16x256xf32>
    %c0_139 = arith.constant 0 : index
    %c0_140 = arith.constant 0 : index
    %177 = vector.load %arg9[%c0_139, %c0_140] : memref<1x256xf32, #tpu.memory_space<vmem>>, vector<1x256xf32>
    %178 = vector.broadcast %177 : vector<1x256xf32> to vector<16x256xf32>
    %179 = arith.addf %176, %178 : vector<16x256xf32>
    %cst_141 = arith.constant 0.000000e+00 : f32
    %180 = vector.broadcast %cst_141 : f32 to vector<16x256xf32>
    %181 = arith.maximumf %179, %180 : vector<16x256xf32>
    %c0_142 = arith.constant 0 : index
    %c0_143 = arith.constant 0 : index
    %c0_144 = arith.constant 0 : index
    %182 = vector.load %arg16[%c0_142, %c0_143, %c0_144] : memref<3x16x16xf32, #tpu.memory_space<vmem>>, vector<1x16x16xf32>
    %183 = vector.shape_cast %182 : vector<1x16x16xf32> to vector<16x16xf32>
    %cst_145 = arith.constant dense<0.000000e+00> : vector<16x256xf32>
    %184 = tpu.matmul %183, %181, %cst_145 {dimension_numbers = #tpu.dot_dimension_numbers<[1], [0], [0], [1], [0, 0, 1, 1], [], []>} : vector<16x16xf32>, vector<16x256xf32>, vector<16x256xf32> -> vector<16x256xf32>
    %185 = arith.truncf %184 : vector<16x256xf32> to vector<16x256xbf16>
    %c0_146 = arith.constant 0 : index
    %c0_147 = arith.constant 0 : index
    %c0_148 = arith.constant 0 : index
    %186 = vector.load %arg15[%c0_146, %c0_147, %c0_148] : memref<3x256x256xbf16, #tpu.memory_space<vmem>>, vector<1x256x256xbf16>
    %187 = vector.shape_cast %186 : vector<1x256x256xbf16> to vector<256x256xbf16>
    %cst_149 = arith.constant dense<0.000000e+00> : vector<16x256xf32>
    %188 = tpu.matmul %185, %187, %cst_149 {dimension_numbers = #tpu.dot_dimension_numbers<[1], [0], [0], [1], [0, 0, 1, 1], [], []>} : vector<16x256xbf16>, vector<256x256xbf16>, vector<16x256xf32> -> vector<16x256xf32>
    %c1_150 = arith.constant 1 : index
    %c0_151 = arith.constant 0 : index
    %c0_152 = arith.constant 0 : index
    %189 = vector.load %arg16[%c1_150, %c0_151, %c0_152] : memref<3x16x16xf32, #tpu.memory_space<vmem>>, vector<1x16x16xf32>
    %190 = vector.shape_cast %189 : vector<1x16x16xf32> to vector<16x16xf32>
    %cst_153 = arith.constant dense<0.000000e+00> : vector<16x256xf32>
    %191 = tpu.matmul %190, %181, %cst_153 {dimension_numbers = #tpu.dot_dimension_numbers<[1], [0], [0], [1], [0, 0, 1, 1], [], []>} : vector<16x16xf32>, vector<16x256xf32>, vector<16x256xf32> -> vector<16x256xf32>
    %192 = arith.truncf %191 : vector<16x256xf32> to vector<16x256xbf16>
    %c1_154 = arith.constant 1 : index
    %c0_155 = arith.constant 0 : index
    %c0_156 = arith.constant 0 : index
    %193 = vector.load %arg15[%c1_154, %c0_155, %c0_156] : memref<3x256x256xbf16, #tpu.memory_space<vmem>>, vector<1x256x256xbf16>
    %194 = vector.shape_cast %193 : vector<1x256x256xbf16> to vector<256x256xbf16>
    %cst_157 = arith.constant dense<0.000000e+00> : vector<16x256xf32>
    %195 = tpu.matmul %192, %194, %cst_157 {dimension_numbers = #tpu.dot_dimension_numbers<[1], [0], [0], [1], [0, 0, 1, 1], [], []>} : vector<16x256xbf16>, vector<256x256xbf16>, vector<16x256xf32> -> vector<16x256xf32>
    %196 = arith.addf %188, %195 : vector<16x256xf32>
    %c2_158 = arith.constant 2 : index
    %c0_159 = arith.constant 0 : index
    %c0_160 = arith.constant 0 : index
    %197 = vector.load %arg16[%c2_158, %c0_159, %c0_160] : memref<3x16x16xf32, #tpu.memory_space<vmem>>, vector<1x16x16xf32>
    %198 = vector.shape_cast %197 : vector<1x16x16xf32> to vector<16x16xf32>
    %cst_161 = arith.constant dense<0.000000e+00> : vector<16x256xf32>
    %199 = tpu.matmul %198, %181, %cst_161 {dimension_numbers = #tpu.dot_dimension_numbers<[1], [0], [0], [1], [0, 0, 1, 1], [], []>} : vector<16x16xf32>, vector<16x256xf32>, vector<16x256xf32> -> vector<16x256xf32>
    %200 = arith.truncf %199 : vector<16x256xf32> to vector<16x256xbf16>
    %c2_162 = arith.constant 2 : index
    %c0_163 = arith.constant 0 : index
    %c0_164 = arith.constant 0 : index
    %201 = vector.load %arg15[%c2_162, %c0_163, %c0_164] : memref<3x256x256xbf16, #tpu.memory_space<vmem>>, vector<1x256x256xbf16>
    %202 = vector.shape_cast %201 : vector<1x256x256xbf16> to vector<256x256xbf16>
    %cst_165 = arith.constant dense<0.000000e+00> : vector<16x256xf32>
    %203 = tpu.matmul %200, %202, %cst_165 {dimension_numbers = #tpu.dot_dimension_numbers<[1], [0], [0], [1], [0, 0, 1, 1], [], []>} : vector<16x256xbf16>, vector<256x256xbf16>, vector<16x256xf32> -> vector<16x256xf32>
    %204 = arith.addf %196, %203 : vector<16x256xf32>
    %c0_166 = arith.constant 0 : index
    %c0_167 = arith.constant 0 : index
    %205 = vector.load %arg35[%c0_166, %c0_167] : memref<256x256xf32, #tpu.memory_space<vmem>>, vector<256x256xf32>
    %cst_168 = arith.constant dense<0.000000e+00> : vector<256xf32>
    %206 = vector.multi_reduction <add>, %204, %cst_168 [0] : vector<16x256xf32> to vector<256xf32>
    %207 = vector.shape_cast %206 : vector<256xf32> to vector<1x256xf32>
    %cst_169 = arith.constant dense<0.000000e+00> : vector<1x256xf32>
    %208 = tpu.matmul %207, %205, %cst_169 {dimension_numbers = #tpu.dot_dimension_numbers<[1], [0], [0], [1], [0, 0, 1, 1], [], []>} : vector<1x256xf32>, vector<256x256xf32>, vector<1x256xf32> -> vector<1x256xf32>
    %209 = vector.broadcast %208 : vector<1x256xf32> to vector<16x256xf32>
    %210 = arith.subf %204, %209 : vector<16x256xf32>
    %211 = arith.mulf %210, %210 : vector<16x256xf32>
    %cst_170 = arith.constant dense<0.000000e+00> : vector<256xf32>
    %212 = vector.multi_reduction <add>, %211, %cst_170 [0] : vector<16x256xf32> to vector<256xf32>
    %213 = vector.shape_cast %212 : vector<256xf32> to vector<1x256xf32>
    %cst_171 = arith.constant dense<0.000000e+00> : vector<1x256xf32>
    %214 = tpu.matmul %213, %205, %cst_171 {dimension_numbers = #tpu.dot_dimension_numbers<[1], [0], [0], [1], [0, 0, 1, 1], [], []>} : vector<1x256xf32>, vector<256x256xf32>, vector<1x256xf32> -> vector<1x256xf32>
    %cst_172 = arith.constant 9.99999974E-6 : f32
    %215 = vector.broadcast %cst_172 : f32 to vector<1x256xf32>
    %216 = arith.addf %214, %215 : vector<1x256xf32>
    %217 = math.rsqrt %216 : vector<1x256xf32>
    %c0_173 = arith.constant 0 : index
    %c0_174 = arith.constant 0 : index
    %218 = vector.load %arg12[%c0_173, %c0_174] : memref<1x256xf32, #tpu.memory_space<vmem>>, vector<1x256xf32>
    %219 = arith.mulf %217, %218 : vector<1x256xf32>
    %220 = vector.broadcast %219 : vector<1x256xf32> to vector<16x256xf32>
    %221 = arith.mulf %210, %220 : vector<16x256xf32>
    %c0_175 = arith.constant 0 : index
    %c0_176 = arith.constant 0 : index
    %222 = vector.load %arg11[%c0_175, %c0_176] : memref<1x256xf32, #tpu.memory_space<vmem>>, vector<1x256xf32>
    %223 = vector.broadcast %222 : vector<1x256xf32> to vector<16x256xf32>
    %224 = arith.addf %221, %223 : vector<16x256xf32>
    %c0_177 = arith.constant 0 : index
    %c0_178 = arith.constant 0 : index
    %c0_179 = arith.constant 0 : index
    %225 = vector.load %arg18[%c0_177, %c0_178, %c0_179] : memref<1x16x32xf32, #tpu.memory_space<vmem>>, vector<1x16x32xf32>
    %226 = vector.shape_cast %225 : vector<1x16x32xf32> to vector<16x32xf32>
    %cst_180 = arith.constant dense<0.000000e+00> : vector<16x256xf32>
    %227 = tpu.matmul %226, %136, %cst_180 {dimension_numbers = #tpu.dot_dimension_numbers<[1], [0], [0], [1], [0, 0, 1, 1], [], []>} : vector<16x32xf32>, vector<32x256xf32>, vector<16x256xf32> -> vector<16x256xf32>
    %228 = arith.truncf %227 : vector<16x256xf32> to vector<16x256xbf16>
    %c0_181 = arith.constant 0 : index
    %c0_182 = arith.constant 0 : index
    %c0_183 = arith.constant 0 : index
    %229 = vector.load %arg17[%c0_181, %c0_182, %c0_183] : memref<1x256x256xbf16, #tpu.memory_space<vmem>>, vector<1x256x256xbf16>
    %230 = vector.shape_cast %229 : vector<1x256x256xbf16> to vector<256x256xbf16>
    %cst_184 = arith.constant dense<0.000000e+00> : vector<16x256xf32>
    %231 = tpu.matmul %228, %230, %cst_184 {dimension_numbers = #tpu.dot_dimension_numbers<[1], [0], [0], [1], [0, 0, 1, 1], [], []>} : vector<16x256xbf16>, vector<256x256xbf16>, vector<16x256xf32> -> vector<16x256xf32>
    %c0_185 = arith.constant 0 : index
    %c0_186 = arith.constant 0 : index
    %232 = vector.load %arg35[%c0_185, %c0_186] : memref<256x256xf32, #tpu.memory_space<vmem>>, vector<256x256xf32>
    %cst_187 = arith.constant dense<0.000000e+00> : vector<256xf32>
    %233 = vector.multi_reduction <add>, %231, %cst_187 [0] : vector<16x256xf32> to vector<256xf32>
    %234 = vector.shape_cast %233 : vector<256xf32> to vector<1x256xf32>
    %cst_188 = arith.constant dense<0.000000e+00> : vector<1x256xf32>
    %235 = tpu.matmul %234, %232, %cst_188 {dimension_numbers = #tpu.dot_dimension_numbers<[1], [0], [0], [1], [0, 0, 1, 1], [], []>} : vector<1x256xf32>, vector<256x256xf32>, vector<1x256xf32> -> vector<1x256xf32>
    %236 = vector.broadcast %235 : vector<1x256xf32> to vector<16x256xf32>
    %237 = arith.subf %231, %236 : vector<16x256xf32>
    %238 = arith.mulf %237, %237 : vector<16x256xf32>
    %cst_189 = arith.constant dense<0.000000e+00> : vector<256xf32>
    %239 = vector.multi_reduction <add>, %238, %cst_189 [0] : vector<16x256xf32> to vector<256xf32>
    %240 = vector.shape_cast %239 : vector<256xf32> to vector<1x256xf32>
    %cst_190 = arith.constant dense<0.000000e+00> : vector<1x256xf32>
    %241 = tpu.matmul %240, %232, %cst_190 {dimension_numbers = #tpu.dot_dimension_numbers<[1], [0], [0], [1], [0, 0, 1, 1], [], []>} : vector<1x256xf32>, vector<256x256xf32>, vector<1x256xf32> -> vector<1x256xf32>
    %cst_191 = arith.constant 9.99999974E-6 : f32
    %242 = vector.broadcast %cst_191 : f32 to vector<1x256xf32>
    %243 = arith.addf %241, %242 : vector<1x256xf32>
    %244 = math.rsqrt %243 : vector<1x256xf32>
    %c0_192 = arith.constant 0 : index
    %c0_193 = arith.constant 0 : index
    %245 = vector.load %arg20[%c0_192, %c0_193] : memref<1x256xf32, #tpu.memory_space<vmem>>, vector<1x256xf32>
    %246 = arith.mulf %244, %245 : vector<1x256xf32>
    %247 = vector.broadcast %246 : vector<1x256xf32> to vector<16x256xf32>
    %248 = arith.mulf %237, %247 : vector<16x256xf32>
    %c0_194 = arith.constant 0 : index
    %c0_195 = arith.constant 0 : index
    %249 = vector.load %arg19[%c0_194, %c0_195] : memref<1x256xf32, #tpu.memory_space<vmem>>, vector<1x256xf32>
    %250 = vector.broadcast %249 : vector<1x256xf32> to vector<16x256xf32>
    %251 = arith.addf %248, %250 : vector<16x256xf32>
    %252 = arith.addf %224, %251 : vector<16x256xf32>
    %cst_196 = arith.constant 0.000000e+00 : f32
    %253 = vector.broadcast %cst_196 : f32 to vector<16x256xf32>
    %254 = arith.maximumf %252, %253 : vector<16x256xf32>
    %c0_197 = arith.constant 0 : index
    %c0_198 = arith.constant 0 : index
    %c0_199 = arith.constant 0 : index
    %255 = vector.load %arg26[%c0_197, %c0_198, %c0_199] : memref<3x8x16xf32, #tpu.memory_space<vmem>>, vector<1x8x16xf32>
    %256 = vector.shape_cast %255 : vector<1x8x16xf32> to vector<8x16xf32>
    %cst_200 = arith.constant dense<0.000000e+00> : vector<8x256xf32>
    %257 = tpu.matmul %256, %254, %cst_200 {dimension_numbers = #tpu.dot_dimension_numbers<[1], [0], [0], [1], [0, 0, 1, 1], [], []>} : vector<8x16xf32>, vector<16x256xf32>, vector<8x256xf32> -> vector<8x256xf32>
    %258 = arith.truncf %257 : vector<8x256xf32> to vector<8x256xbf16>
    %c0_201 = arith.constant 0 : index
    %c0_202 = arith.constant 0 : index
    %c0_203 = arith.constant 0 : index
    %259 = vector.load %arg25[%c0_201, %c0_202, %c0_203] : memref<3x256x256xbf16, #tpu.memory_space<vmem>>, vector<1x256x256xbf16>
    %260 = vector.shape_cast %259 : vector<1x256x256xbf16> to vector<256x256xbf16>
    %cst_204 = arith.constant dense<0.000000e+00> : vector<8x256xf32>
    %261 = tpu.matmul %258, %260, %cst_204 {dimension_numbers = #tpu.dot_dimension_numbers<[1], [0], [0], [1], [0, 0, 1, 1], [], []>} : vector<8x256xbf16>, vector<256x256xbf16>, vector<8x256xf32> -> vector<8x256xf32>
    %c1_205 = arith.constant 1 : index
    %c0_206 = arith.constant 0 : index
    %c0_207 = arith.constant 0 : index
    %262 = vector.load %arg26[%c1_205, %c0_206, %c0_207] : memref<3x8x16xf32, #tpu.memory_space<vmem>>, vector<1x8x16xf32>
    %263 = vector.shape_cast %262 : vector<1x8x16xf32> to vector<8x16xf32>
    %cst_208 = arith.constant dense<0.000000e+00> : vector<8x256xf32>
    %264 = tpu.matmul %263, %254, %cst_208 {dimension_numbers = #tpu.dot_dimension_numbers<[1], [0], [0], [1], [0, 0, 1, 1], [], []>} : vector<8x16xf32>, vector<16x256xf32>, vector<8x256xf32> -> vector<8x256xf32>
    %265 = arith.truncf %264 : vector<8x256xf32> to vector<8x256xbf16>
    %c1_209 = arith.constant 1 : index
    %c0_210 = arith.constant 0 : index
    %c0_211 = arith.constant 0 : index
    %266 = vector.load %arg25[%c1_209, %c0_210, %c0_211] : memref<3x256x256xbf16, #tpu.memory_space<vmem>>, vector<1x256x256xbf16>
    %267 = vector.shape_cast %266 : vector<1x256x256xbf16> to vector<256x256xbf16>
    %cst_212 = arith.constant dense<0.000000e+00> : vector<8x256xf32>
    %268 = tpu.matmul %265, %267, %cst_212 {dimension_numbers = #tpu.dot_dimension_numbers<[1], [0], [0], [1], [0, 0, 1, 1], [], []>} : vector<8x256xbf16>, vector<256x256xbf16>, vector<8x256xf32> -> vector<8x256xf32>
    %269 = arith.addf %261, %268 : vector<8x256xf32>
    %c2_213 = arith.constant 2 : index
    %c0_214 = arith.constant 0 : index
    %c0_215 = arith.constant 0 : index
    %270 = vector.load %arg26[%c2_213, %c0_214, %c0_215] : memref<3x8x16xf32, #tpu.memory_space<vmem>>, vector<1x8x16xf32>
    %271 = vector.shape_cast %270 : vector<1x8x16xf32> to vector<8x16xf32>
    %cst_216 = arith.constant dense<0.000000e+00> : vector<8x256xf32>
    %272 = tpu.matmul %271, %254, %cst_216 {dimension_numbers = #tpu.dot_dimension_numbers<[1], [0], [0], [1], [0, 0, 1, 1], [], []>} : vector<8x16xf32>, vector<16x256xf32>, vector<8x256xf32> -> vector<8x256xf32>
    %273 = arith.truncf %272 : vector<8x256xf32> to vector<8x256xbf16>
    %c2_217 = arith.constant 2 : index
    %c0_218 = arith.constant 0 : index
    %c0_219 = arith.constant 0 : index
    %274 = vector.load %arg25[%c2_217, %c0_218, %c0_219] : memref<3x256x256xbf16, #tpu.memory_space<vmem>>, vector<1x256x256xbf16>
    %275 = vector.shape_cast %274 : vector<1x256x256xbf16> to vector<256x256xbf16>
    %cst_220 = arith.constant dense<0.000000e+00> : vector<8x256xf32>
    %276 = tpu.matmul %273, %275, %cst_220 {dimension_numbers = #tpu.dot_dimension_numbers<[1], [0], [0], [1], [0, 0, 1, 1], [], []>} : vector<8x256xbf16>, vector<256x256xbf16>, vector<8x256xf32> -> vector<8x256xf32>
    %277 = arith.addf %269, %276 : vector<8x256xf32>
    %c0_221 = arith.constant 0 : index
    %c0_222 = arith.constant 0 : index
    %278 = vector.load %arg34[%c0_221, %c0_222] : memref<256x256xf32, #tpu.memory_space<vmem>>, vector<256x256xf32>
    %cst_223 = arith.constant dense<0.000000e+00> : vector<256xf32>
    %279 = vector.multi_reduction <add>, %277, %cst_223 [0] : vector<8x256xf32> to vector<256xf32>
    %280 = vector.shape_cast %279 : vector<256xf32> to vector<1x256xf32>
    %cst_224 = arith.constant dense<0.000000e+00> : vector<1x256xf32>
    %281 = tpu.matmul %280, %278, %cst_224 {dimension_numbers = #tpu.dot_dimension_numbers<[1], [0], [0], [1], [0, 0, 1, 1], [], []>} : vector<1x256xf32>, vector<256x256xf32>, vector<1x256xf32> -> vector<1x256xf32>
    %282 = vector.broadcast %281 : vector<1x256xf32> to vector<8x256xf32>
    %283 = arith.subf %277, %282 : vector<8x256xf32>
    %284 = arith.mulf %283, %283 : vector<8x256xf32>
    %cst_225 = arith.constant dense<0.000000e+00> : vector<256xf32>
    %285 = vector.multi_reduction <add>, %284, %cst_225 [0] : vector<8x256xf32> to vector<256xf32>
    %286 = vector.shape_cast %285 : vector<256xf32> to vector<1x256xf32>
    %cst_226 = arith.constant dense<0.000000e+00> : vector<1x256xf32>
    %287 = tpu.matmul %286, %278, %cst_226 {dimension_numbers = #tpu.dot_dimension_numbers<[1], [0], [0], [1], [0, 0, 1, 1], [], []>} : vector<1x256xf32>, vector<256x256xf32>, vector<1x256xf32> -> vector<1x256xf32>
    %cst_227 = arith.constant 9.99999974E-6 : f32
    %288 = vector.broadcast %cst_227 : f32 to vector<1x256xf32>
    %289 = arith.addf %287, %288 : vector<1x256xf32>
    %290 = math.rsqrt %289 : vector<1x256xf32>
    %c0_228 = arith.constant 0 : index
    %c0_229 = arith.constant 0 : index
    %291 = vector.load %arg22[%c0_228, %c0_229] : memref<1x256xf32, #tpu.memory_space<vmem>>, vector<1x256xf32>
    %292 = arith.mulf %290, %291 : vector<1x256xf32>
    %293 = vector.broadcast %292 : vector<1x256xf32> to vector<8x256xf32>
    %294 = arith.mulf %283, %293 : vector<8x256xf32>
    %c0_230 = arith.constant 0 : index
    %c0_231 = arith.constant 0 : index
    %295 = vector.load %arg21[%c0_230, %c0_231] : memref<1x256xf32, #tpu.memory_space<vmem>>, vector<1x256xf32>
    %296 = vector.broadcast %295 : vector<1x256xf32> to vector<8x256xf32>
    %297 = arith.addf %294, %296 : vector<8x256xf32>
    %cst_232 = arith.constant 0.000000e+00 : f32
    %298 = vector.broadcast %cst_232 : f32 to vector<8x256xf32>
    %299 = arith.maximumf %297, %298 : vector<8x256xf32>
    %c0_233 = arith.constant 0 : index
    %c0_234 = arith.constant 0 : index
    %c0_235 = arith.constant 0 : index
    %300 = vector.load %arg28[%c0_233, %c0_234, %c0_235] : memref<3x8x8xf32, #tpu.memory_space<vmem>>, vector<1x8x8xf32>
    %301 = vector.shape_cast %300 : vector<1x8x8xf32> to vector<8x8xf32>
    %cst_236 = arith.constant dense<0.000000e+00> : vector<8x256xf32>
    %302 = tpu.matmul %301, %299, %cst_236 {dimension_numbers = #tpu.dot_dimension_numbers<[1], [0], [0], [1], [0, 0, 1, 1], [], []>} : vector<8x8xf32>, vector<8x256xf32>, vector<8x256xf32> -> vector<8x256xf32>
    %303 = arith.truncf %302 : vector<8x256xf32> to vector<8x256xbf16>
    %c0_237 = arith.constant 0 : index
    %c0_238 = arith.constant 0 : index
    %c0_239 = arith.constant 0 : index
    %304 = vector.load %arg27[%c0_237, %c0_238, %c0_239] : memref<3x256x256xbf16, #tpu.memory_space<vmem>>, vector<1x256x256xbf16>
    %305 = vector.shape_cast %304 : vector<1x256x256xbf16> to vector<256x256xbf16>
    %cst_240 = arith.constant dense<0.000000e+00> : vector<8x256xf32>
    %306 = tpu.matmul %303, %305, %cst_240 {dimension_numbers = #tpu.dot_dimension_numbers<[1], [0], [0], [1], [0, 0, 1, 1], [], []>} : vector<8x256xbf16>, vector<256x256xbf16>, vector<8x256xf32> -> vector<8x256xf32>
    %c1_241 = arith.constant 1 : index
    %c0_242 = arith.constant 0 : index
    %c0_243 = arith.constant 0 : index
    %307 = vector.load %arg28[%c1_241, %c0_242, %c0_243] : memref<3x8x8xf32, #tpu.memory_space<vmem>>, vector<1x8x8xf32>
    %308 = vector.shape_cast %307 : vector<1x8x8xf32> to vector<8x8xf32>
    %cst_244 = arith.constant dense<0.000000e+00> : vector<8x256xf32>
    %309 = tpu.matmul %308, %299, %cst_244 {dimension_numbers = #tpu.dot_dimension_numbers<[1], [0], [0], [1], [0, 0, 1, 1], [], []>} : vector<8x8xf32>, vector<8x256xf32>, vector<8x256xf32> -> vector<8x256xf32>
    %310 = arith.truncf %309 : vector<8x256xf32> to vector<8x256xbf16>
    %c1_245 = arith.constant 1 : index
    %c0_246 = arith.constant 0 : index
    %c0_247 = arith.constant 0 : index
    %311 = vector.load %arg27[%c1_245, %c0_246, %c0_247] : memref<3x256x256xbf16, #tpu.memory_space<vmem>>, vector<1x256x256xbf16>
    %312 = vector.shape_cast %311 : vector<1x256x256xbf16> to vector<256x256xbf16>
    %cst_248 = arith.constant dense<0.000000e+00> : vector<8x256xf32>
    %313 = tpu.matmul %310, %312, %cst_248 {dimension_numbers = #tpu.dot_dimension_numbers<[1], [0], [0], [1], [0, 0, 1, 1], [], []>} : vector<8x256xbf16>, vector<256x256xbf16>, vector<8x256xf32> -> vector<8x256xf32>
    %314 = arith.addf %306, %313 : vector<8x256xf32>
    %c2_249 = arith.constant 2 : index
    %c0_250 = arith.constant 0 : index
    %c0_251 = arith.constant 0 : index
    %315 = vector.load %arg28[%c2_249, %c0_250, %c0_251] : memref<3x8x8xf32, #tpu.memory_space<vmem>>, vector<1x8x8xf32>
    %316 = vector.shape_cast %315 : vector<1x8x8xf32> to vector<8x8xf32>
    %cst_252 = arith.constant dense<0.000000e+00> : vector<8x256xf32>
    %317 = tpu.matmul %316, %299, %cst_252 {dimension_numbers = #tpu.dot_dimension_numbers<[1], [0], [0], [1], [0, 0, 1, 1], [], []>} : vector<8x8xf32>, vector<8x256xf32>, vector<8x256xf32> -> vector<8x256xf32>
    %318 = arith.truncf %317 : vector<8x256xf32> to vector<8x256xbf16>
    %c2_253 = arith.constant 2 : index
    %c0_254 = arith.constant 0 : index
    %c0_255 = arith.constant 0 : index
    %319 = vector.load %arg27[%c2_253, %c0_254, %c0_255] : memref<3x256x256xbf16, #tpu.memory_space<vmem>>, vector<1x256x256xbf16>
    %320 = vector.shape_cast %319 : vector<1x256x256xbf16> to vector<256x256xbf16>
    %cst_256 = arith.constant dense<0.000000e+00> : vector<8x256xf32>
    %321 = tpu.matmul %318, %320, %cst_256 {dimension_numbers = #tpu.dot_dimension_numbers<[1], [0], [0], [1], [0, 0, 1, 1], [], []>} : vector<8x256xbf16>, vector<256x256xbf16>, vector<8x256xf32> -> vector<8x256xf32>
    %322 = arith.addf %314, %321 : vector<8x256xf32>
    %c0_257 = arith.constant 0 : index
    %c0_258 = arith.constant 0 : index
    %323 = vector.load %arg34[%c0_257, %c0_258] : memref<256x256xf32, #tpu.memory_space<vmem>>, vector<256x256xf32>
    %cst_259 = arith.constant dense<0.000000e+00> : vector<256xf32>
    %324 = vector.multi_reduction <add>, %322, %cst_259 [0] : vector<8x256xf32> to vector<256xf32>
    %325 = vector.shape_cast %324 : vector<256xf32> to vector<1x256xf32>
    %cst_260 = arith.constant dense<0.000000e+00> : vector<1x256xf32>
    %326 = tpu.matmul %325, %323, %cst_260 {dimension_numbers = #tpu.dot_dimension_numbers<[1], [0], [0], [1], [0, 0, 1, 1], [], []>} : vector<1x256xf32>, vector<256x256xf32>, vector<1x256xf32> -> vector<1x256xf32>
    %327 = vector.broadcast %326 : vector<1x256xf32> to vector<8x256xf32>
    %328 = arith.subf %322, %327 : vector<8x256xf32>
    %329 = arith.mulf %328, %328 : vector<8x256xf32>
    %cst_261 = arith.constant dense<0.000000e+00> : vector<256xf32>
    %330 = vector.multi_reduction <add>, %329, %cst_261 [0] : vector<8x256xf32> to vector<256xf32>
    %331 = vector.shape_cast %330 : vector<256xf32> to vector<1x256xf32>
    %cst_262 = arith.constant dense<0.000000e+00> : vector<1x256xf32>
    %332 = tpu.matmul %331, %323, %cst_262 {dimension_numbers = #tpu.dot_dimension_numbers<[1], [0], [0], [1], [0, 0, 1, 1], [], []>} : vector<1x256xf32>, vector<256x256xf32>, vector<1x256xf32> -> vector<1x256xf32>
    %cst_263 = arith.constant 9.99999974E-6 : f32
    %333 = vector.broadcast %cst_263 : f32 to vector<1x256xf32>
    %334 = arith.addf %332, %333 : vector<1x256xf32>
    %335 = math.rsqrt %334 : vector<1x256xf32>
    %c0_264 = arith.constant 0 : index
    %c0_265 = arith.constant 0 : index
    %336 = vector.load %arg24[%c0_264, %c0_265] : memref<1x256xf32, #tpu.memory_space<vmem>>, vector<1x256xf32>
    %337 = arith.mulf %335, %336 : vector<1x256xf32>
    %338 = vector.broadcast %337 : vector<1x256xf32> to vector<8x256xf32>
    %339 = arith.mulf %328, %338 : vector<8x256xf32>
    %c0_266 = arith.constant 0 : index
    %c0_267 = arith.constant 0 : index
    %340 = vector.load %arg23[%c0_266, %c0_267] : memref<1x256xf32, #tpu.memory_space<vmem>>, vector<1x256xf32>
    %341 = vector.broadcast %340 : vector<1x256xf32> to vector<8x256xf32>
    %342 = arith.addf %339, %341 : vector<8x256xf32>
    %c0_268 = arith.constant 0 : index
    %c0_269 = arith.constant 0 : index
    %c0_270 = arith.constant 0 : index
    %343 = vector.load %arg30[%c0_268, %c0_269, %c0_270] : memref<1x8x16xf32, #tpu.memory_space<vmem>>, vector<1x8x16xf32>
    %344 = vector.shape_cast %343 : vector<1x8x16xf32> to vector<8x16xf32>
    %cst_271 = arith.constant dense<0.000000e+00> : vector<8x256xf32>
    %345 = tpu.matmul %344, %254, %cst_271 {dimension_numbers = #tpu.dot_dimension_numbers<[1], [0], [0], [1], [0, 0, 1, 1], [], []>} : vector<8x16xf32>, vector<16x256xf32>, vector<8x256xf32> -> vector<8x256xf32>
    %346 = arith.truncf %345 : vector<8x256xf32> to vector<8x256xbf16>
    %c0_272 = arith.constant 0 : index
    %c0_273 = arith.constant 0 : index
    %c0_274 = arith.constant 0 : index
    %347 = vector.load %arg29[%c0_272, %c0_273, %c0_274] : memref<1x256x256xbf16, #tpu.memory_space<vmem>>, vector<1x256x256xbf16>
    %348 = vector.shape_cast %347 : vector<1x256x256xbf16> to vector<256x256xbf16>
    %cst_275 = arith.constant dense<0.000000e+00> : vector<8x256xf32>
    %349 = tpu.matmul %346, %348, %cst_275 {dimension_numbers = #tpu.dot_dimension_numbers<[1], [0], [0], [1], [0, 0, 1, 1], [], []>} : vector<8x256xbf16>, vector<256x256xbf16>, vector<8x256xf32> -> vector<8x256xf32>
    %c0_276 = arith.constant 0 : index
    %c0_277 = arith.constant 0 : index
    %350 = vector.load %arg34[%c0_276, %c0_277] : memref<256x256xf32, #tpu.memory_space<vmem>>, vector<256x256xf32>
    %cst_278 = arith.constant dense<0.000000e+00> : vector<256xf32>
    %351 = vector.multi_reduction <add>, %349, %cst_278 [0] : vector<8x256xf32> to vector<256xf32>
    %352 = vector.shape_cast %351 : vector<256xf32> to vector<1x256xf32>
    %cst_279 = arith.constant dense<0.000000e+00> : vector<1x256xf32>
    %353 = tpu.matmul %352, %350, %cst_279 {dimension_numbers = #tpu.dot_dimension_numbers<[1], [0], [0], [1], [0, 0, 1, 1], [], []>} : vector<1x256xf32>, vector<256x256xf32>, vector<1x256xf32> -> vector<1x256xf32>
    %354 = vector.broadcast %353 : vector<1x256xf32> to vector<8x256xf32>
    %355 = arith.subf %349, %354 : vector<8x256xf32>
    %356 = arith.mulf %355, %355 : vector<8x256xf32>
    %cst_280 = arith.constant dense<0.000000e+00> : vector<256xf32>
    %357 = vector.multi_reduction <add>, %356, %cst_280 [0] : vector<8x256xf32> to vector<256xf32>
    %358 = vector.shape_cast %357 : vector<256xf32> to vector<1x256xf32>
    %cst_281 = arith.constant dense<0.000000e+00> : vector<1x256xf32>
    %359 = tpu.matmul %358, %350, %cst_281 {dimension_numbers = #tpu.dot_dimension_numbers<[1], [0], [0], [1], [0, 0, 1, 1], [], []>} : vector<1x256xf32>, vector<256x256xf32>, vector<1x256xf32> -> vector<1x256xf32>
    %cst_282 = arith.constant 9.99999974E-6 : f32
    %360 = vector.broadcast %cst_282 : f32 to vector<1x256xf32>
    %361 = arith.addf %359, %360 : vector<1x256xf32>
    %362 = math.rsqrt %361 : vector<1x256xf32>
    %c0_283 = arith.constant 0 : index
    %c0_284 = arith.constant 0 : index
    %363 = vector.load %arg32[%c0_283, %c0_284] : memref<1x256xf32, #tpu.memory_space<vmem>>, vector<1x256xf32>
    %364 = arith.mulf %362, %363 : vector<1x256xf32>
    %365 = vector.broadcast %364 : vector<1x256xf32> to vector<8x256xf32>
    %366 = arith.mulf %355, %365 : vector<8x256xf32>
    %c0_285 = arith.constant 0 : index
    %c0_286 = arith.constant 0 : index
    %367 = vector.load %arg31[%c0_285, %c0_286] : memref<1x256xf32, #tpu.memory_space<vmem>>, vector<1x256xf32>
    %368 = vector.broadcast %367 : vector<1x256xf32> to vector<8x256xf32>
    %369 = arith.addf %366, %368 : vector<8x256xf32>
    %370 = arith.addf %342, %369 : vector<8x256xf32>
    %cst_287 = arith.constant 0.000000e+00 : f32
    %371 = vector.broadcast %cst_287 : f32 to vector<8x256xf32>
    %372 = arith.maximumf %370, %371 : vector<8x256xf32>
    %c0_288 = arith.constant 0 : index
    %c0_289 = arith.constant 0 : index
    %373 = vector.load %arg39[%c0_288, %c0_289] : memref<2x8xf32, #tpu.memory_space<vmem>>, vector<2x8xf32>
    %cst_290 = arith.constant dense<0.000000e+00> : vector<2x256xf32>
    %374 = tpu.matmul %373, %372, %cst_290 {dimension_numbers = #tpu.dot_dimension_numbers<[1], [0], [0], [1], [0, 0, 1, 1], [], []>} : vector<2x8xf32>, vector<8x256xf32>, vector<2x256xf32> -> vector<2x256xf32>
    %c0_291 = arith.constant 0 : index
    %c0_292 = arith.constant 0 : index
    %375 = vector.load %arg38[%c0_291, %c0_292] : memref<256x64xf32, #tpu.memory_space<vmem>>, vector<256x64xf32>
    %cst_293 = arith.constant dense<0.000000e+00> : vector<2x64xf32>
    %376 = tpu.matmul %374, %375, %cst_293 {dimension_numbers = #tpu.dot_dimension_numbers<[1], [0], [0], [1], [0, 0, 1, 1], [], []>} : vector<2x256xf32>, vector<256x64xf32>, vector<2x64xf32> -> vector<2x64xf32>
    %c0_294 = arith.constant 0 : index
    %c0_295 = arith.constant 0 : index
    %377 = vector.load %arg37[%c0_294, %c0_295] : memref<64x10xf32, #tpu.memory_space<vmem>>, vector<64x10xf32>
    %cst_296 = arith.constant dense<0.000000e+00> : vector<2x10xf32>
    %378 = tpu.matmul %376, %377, %cst_296 {dimension_numbers = #tpu.dot_dimension_numbers<[1], [0], [0], [1], [0, 0, 1, 1], [], []>} : vector<2x64xf32>, vector<64x10xf32>, vector<2x10xf32> -> vector<2x10xf32>
    %c0_297 = arith.constant 0 : index
    %c0_298 = arith.constant 0 : index
    %379 = vector.load %arg36[%c0_297, %c0_298] : memref<1x10xf32, #tpu.memory_space<vmem>>, vector<1x10xf32>
    %380 = vector.broadcast %379 : vector<1x10xf32> to vector<2x10xf32>
    %381 = arith.addf %378, %380 : vector<2x10xf32>
    %c0_299 = arith.constant 0 : index
    %c0_300 = arith.constant 0 : index
    %382 = vector.load %arg44[%c0_299, %c0_300] : memref<2x10xf32, #tpu.memory_space<vmem>>, vector<2x10xf32>
    tpu.vector_store %arg44[%c0_299, %c0_300], %381 {strides = array<i32>} : memref<2x10xf32, #tpu.memory_space<vmem>>, vector<2x10xf32>,
    return
  }
}

</mosaic_0001>

<llo_original>
// kernel: _lambda_.1
$region0: #{_lambda_.1}
  #allocation0 [shape = 'u32[]', space=smem, size = 0x4, offset = 0x4, fixed_abs, tag = 'smem constant byte address 0x4 - core index']
  #allocation1 [shape = 'u32[144,128]{1,0:T(1,128)}', space=vmem, size = 0x12000, scoped, tag = 'internal scratch']
  %s0 = inlined_call_operand.smem [shape: u32[45], index: -1, kind: input, shape index: {}]
  %s1 = sld [smem:[%s0]]
  %s2 = scalar_lea.smem %s0, 1
  %s3 = sld [smem:[%s2]]
  %s4 = scalar_lea.smem %s0, 2
  %s5 = sld [smem:[%s4]]
  %s6 = scalar_lea.smem %s0, 3
  %s7 = sld [smem:[%s6]]
  %s8 = scalar_lea.smem %s0, 4
  %s9 = sld [smem:[%s8]]
  %s10 = scalar_lea.smem %s0, 5
  %s11 = sld [smem:[%s10]]
  %s12 = scalar_lea.smem %s0, 6
  %s13 = sld [smem:[%s12]]
  %s14 = scalar_lea.smem %s0, 7
  %s15 = sld [smem:[%s14]]
  %s16 = scalar_lea.smem %s0, 8
  %s17 = sld [smem:[%s16]]
  %s18 = scalar_lea.smem %s0, 9
  %s19 = sld [smem:[%s18]]
  %s20 = scalar_lea.smem %s0, 10
  %s21 = sld [smem:[%s20]]
  %s22 = scalar_lea.smem %s0, 11
  %s23 = sld [smem:[%s22]]
  %s24 = scalar_lea.smem %s0, 12
  %s25 = sld [smem:[%s24]]
  %s26 = scalar_lea.smem %s0, 13
  %s27 = sld [smem:[%s26]]
  %s28 = scalar_lea.smem %s0, 14
  %s29 = sld [smem:[%s28]]
  %s30 = scalar_lea.smem %s0, 15
  %s31 = sld [smem:[%s30]]
  %s32 = scalar_lea.smem %s0, 16
  %s33 = sld [smem:[%s32]]
  %s34 = scalar_lea.smem %s0, 17
  %s35 = sld [smem:[%s34]]
  %s36 = scalar_lea.smem %s0, 18
  %s37 = sld [smem:[%s36]]
  %s38 = scalar_lea.smem %s0, 19
  %s39 = sld [smem:[%s38]]
  %s40 = scalar_lea.smem %s0, 20
  %s41 = sld [smem:[%s40]]
  %s42 = scalar_lea.smem %s0, 21
  %s43 = sld [smem:[%s42]]
  %s44 = scalar_lea.smem %s0, 22
  %s45 = sld [smem:[%s44]]
  %s46 = scalar_lea.smem %s0, 23
  %s47 = sld [smem:[%s46]]
  %s48 = scalar_lea.smem %s0, 24
  %s49 = sld [smem:[%s48]]
  %s50 = scalar_lea.smem %s0, 25
  %s51 = sld [smem:[%s50]]
  %s52 = scalar_lea.smem %s0, 26
  %s53 = sld [smem:[%s52]]
  %s54 = scalar_lea.smem %s0, 27
  %s55 = sld [smem:[%s54]]
  %s56 = scalar_lea.smem %s0, 28
  %s57 = sld [smem:[%s56]]
  %s58 = scalar_lea.smem %s0, 29
  %s59 = sld [smem:[%s58]]
  %s60 = scalar_lea.smem %s0, 30
  %s61 = sld [smem:[%s60]]
  %s62 = scalar_lea.smem %s0, 31
  %s63 = sld [smem:[%s62]]
  %s64 = scalar_lea.smem %s0, 32
  %s65 = sld [smem:[%s64]]
  %s66 = scalar_lea.smem %s0, 33
  %s67 = sld [smem:[%s66]]
  %s68 = scalar_lea.smem %s0, 34
  %s69 = sld [smem:[%s68]]
  %s70 = scalar_lea.smem %s0, 35
  %s71 = sld [smem:[%s70]]
  %s72 = scalar_lea.smem %s0, 36
  %s73 = sld [smem:[%s72]]
  %s74 = scalar_lea.smem %s0, 37
  %s75 = sld [smem:[%s74]]
  %s76 = scalar_lea.smem %s0, 38
  %s77 = sld [smem:[%s76]]
  %s78 = scalar_lea.smem %s0, 39
  %s79 = sld [smem:[%s78]]
  %s80 = scalar_lea.smem %s0, 40
  %s81 = sld [smem:[%s80]]
  %s82 = scalar_lea.smem %s0, 41
  %s83 = sld [smem:[%s82]]
  %s84 = scalar_lea.smem %s0, 42
  %s85 = sld [smem:[%s84]]
  %s86 = scalar_lea.smem %s0, 43
  %s87 = sld [smem:[%s86]]
  %s88 = scalar_lea.smem %s0, 44
  %s89 = sld [smem:[%s88]]
  %s90 = sld [smem:[#allocation0]]
  $region322: #{_lambda_.1} parent=0
    _
  %s92 = ssub.s32 1, %s90
  %s93 = scalar_select 0, %s92, %s90
  $region1: #{_lambda_.1} parent=0
    #allocation2 [shape = 'u8[1024]{0}', space=vmem, size = 0x400, scoped, tag = 'input window, operand 1, single buffered']
    #allocation3 [shape = 's32[1]{0}', space=sflag, size = 0x4, scoped, tag = 'scoped memory for _lambda_.1']
    #allocation4 [shape = 's32[1]{0}', space=sflag, size = 0x4, scoped, tag = 'scoped memory for _lambda_.1']
    #allocation5 [shape = 'u8[1024]{0}', space=vmem, size = 0x400, scoped, tag = 'input window, operand 2, single buffered']
    #allocation6 [shape = 's32[1]{0}', space=sflag, size = 0x4, scoped, tag = 'scoped memory for _lambda_.1']
    #allocation7 [shape = 'u8[1024]{0}', space=vmem, size = 0x400, scoped, tag = 'input window, operand 3, single buffered']
    #allocation8 [shape = 'u8[1024]{0}', space=vmem, size = 0x400, scoped, tag = 'input window, operand 4, single buffered']
    #allocation9 [shape = 's32[1]{0}', space=sflag, size = 0x4, scoped, tag = 'scoped memory for _lambda_.1']
    #allocation10 [shape = 'u8[49152]{0}', space=vmem, size = 0xc000, scoped, tag = 'input window, operand 6, single buffered']
    #allocation11 [shape = 'u8[393216]{0}', space=vmem, size = 0x60000, scoped, tag = 'input window, operand 7, single buffered']
    #allocation12 [shape = 's32[1]{0}', space=sflag, size = 0x4, scoped, tag = 'scoped memory for _lambda_.1']
    #allocation13 [shape = 'u8[49152]{0}', space=vmem, size = 0xc000, scoped, tag = 'input window, operand 8, single buffered']
    #allocation14 [shape = 'u8[1024]{0}', space=vmem, size = 0x400, scoped, tag = 'input window, operand 9, single buffered']
    #allocation15 [shape = 's32[1]{0}', space=sflag, size = 0x4, scoped, tag = 'scoped memory for _lambda_.1']
    #allocation16 [shape = 'u8[1024]{0}', space=vmem, size = 0x400, scoped, tag = 'input window, operand 10, single buffered']
    #allocation17 [shape = 'u8[1024]{0}', space=vmem, size = 0x400, scoped, tag = 'input window, operand 11, single buffered']
    #allocation18 [shape = 's32[1]{0}', space=sflag, size = 0x4, scoped, tag = 'scoped memory for _lambda_.1']
    #allocation19 [shape = 'u8[1024]{0}', space=vmem, size = 0x400, scoped, tag = 'input window, operand 12, single buffered']
    #allocation20 [shape = 'u8[393216]{0}', space=vmem, size = 0x60000, scoped, tag = 'input window, operand 13, single buffered']
    #allocation21 [shape = 's32[1]{0}', space=sflag, size = 0x4, scoped, tag = 'scoped memory for _lambda_.1']
    #allocation22 [shape = 'u8[24576]{0}', space=vmem, size = 0x6000, scoped, tag = 'input window, operand 14, single buffered']
    #allocation23 [shape = 'u8[393216]{0}', space=vmem, size = 0x60000, scoped, tag = 'input window, operand 15, single buffered']
    #allocation24 [shape = 's32[1]{0}', space=sflag, size = 0x4, scoped, tag = 'scoped memory for _lambda_.1']
    #allocation25 [shape = 'u8[24576]{0}', space=vmem, size = 0x6000, scoped, tag = 'input window, operand 16, single buffered']
    #allocation26 [shape = 'u8[131072]{0}', space=vmem, size = 0x20000, scoped, tag = 'input window, operand 17, single buffered']
    #allocation27 [shape = 's32[1]{0}', space=sflag, size = 0x4, scoped, tag = 'scoped memory for _lambda_.1']
    #allocation28 [shape = 'u8[8192]{0}', space=vmem, size = 0x2000, scoped, tag = 'input window, operand 18, single buffered']
    #allocation29 [shape = 'u8[1024]{0}', space=vmem, size = 0x400, scoped, tag = 'input window, operand 19, single buffered']
    #allocation30 [shape = 's32[1]{0}', space=sflag, size = 0x4, scoped, tag = 'scoped memory for _lambda_.1']
    #allocation31 [shape = 'u8[1024]{0}', space=vmem, size = 0x400, scoped, tag = 'input window, operand 20, single buffered']
    #allocation32 [shape = 'u8[1024]{0}', space=vmem, size = 0x400, scoped, tag = 'input window, operand 21, single buffered']
    #allocation33 [shape = 's32[1]{0}', space=sflag, size = 0x4, scoped, tag = 'scoped memory for _lambda_.1']
    #allocation34 [shape = 'u8[1024]{0}', space=vmem, size = 0x400, scoped, tag = 'input window, operand 22, single buffered']
    #allocation35 [shape = 'u8[1024]{0}', space=vmem, size = 0x400, scoped, tag = 'input window, operand 23, single buffered']
    #allocation36 [shape = 's32[1]{0}', space=sflag, size = 0x4, scoped, tag = 'scoped memory for _lambda_.1']
    #allocation37 [shape = 'u8[1024]{0}', space=vmem, size = 0x400, scoped, tag = 'input window, operand 24, single buffered']
    #allocation38 [shape = 'u8[393216]{0}', space=vmem, size = 0x60000, scoped, tag = 'input window, operand 25, single buffered']
    #allocation39 [shape = 's32[1]{0}', space=sflag, size = 0x4, scoped, tag = 'scoped memory for _lambda_.1']
    #allocation40 [shape = 'u8[12288]{0}', space=vmem, size = 0x3000, scoped, tag = 'input window, operand 26, single buffered']
    #allocation41 [shape = 'u8[393216]{0}', space=vmem, size = 0x60000, scoped, tag = 'input window, operand 27, single buffered']
    #allocation42 [shape = 's32[1]{0}', space=sflag, size = 0x4, scoped, tag = 'scoped memory for _lambda_.1']
    #allocation43 [shape = 'u8[12288]{0}', space=vmem, size = 0x3000, scoped, tag = 'input window, operand 28, single buffered']
    #allocation44 [shape = 'u8[131072]{0}', space=vmem, size = 0x20000, scoped, tag = 'input window, operand 29, single buffered']
    #allocation45 [shape = 's32[1]{0}', space=sflag, size = 0x4, scoped, tag = 'scoped memory for _lambda_.1']
    #allocation46 [shape = 'u8[1024]{0}', space=vmem, size = 0x400, scoped, tag = 'input window, operand 31, single buffered']
    #allocation47 [shape = 'u8[1024]{0}', space=vmem, size = 0x400, scoped, tag = 'input window, operand 32, single buffered']
    #allocation48 [shape = 's32[1]{0}', space=sflag, size = 0x4, scoped, tag = 'scoped memory for _lambda_.1']
    #allocation49 [shape = 'u8[262144]{0}', space=vmem, size = 0x40000, scoped, tag = 'input window, operand 33, single buffered']
    #allocation50 [shape = 'u8[262144]{0}', space=vmem, size = 0x40000, scoped, tag = 'input window, operand 34, single buffered']
    #allocation51 [shape = 's32[1]{0}', space=sflag, size = 0x4, scoped, tag = 'scoped memory for _lambda_.1']
    #allocation52 [shape = 'u8[262144]{0}', space=vmem, size = 0x40000, scoped, tag = 'input window, operand 35, single buffered']
    #allocation53 [shape = 'u8[512]{0}', space=vmem, size = 0x400, scoped, tag = 'input window, operand 36, single buffered']
    #allocation54 [shape = 's32[1]{0}', space=sflag, size = 0x4, scoped, tag = 'scoped memory for _lambda_.1']
    #allocation55 [shape = 'u8[1024]{0}', space=vmem, size = 0x400, scoped, tag = 'output window, operand 0, single buffered']
    %94 = vsyncpa [#allocation3], 0
    %95 = vsyncpa [#allocation6], 0
    %96 = vsyncpa [#allocation9], 0
    %97 = vsyncpa [#allocation12], 0
    %98 = vsyncpa [#allocation15], 0
    %99 = vsyncpa [#allocation18], 0
    %100 = vsyncpa [#allocation21], 0
    %101 = vsyncpa [#allocation24], 0
    %102 = vsyncpa [#allocation27], 0
    %103 = vsyncpa [#allocation30], 0
    %104 = vsyncpa [#allocation33], 0
    %105 = vsyncpa [#allocation36], 0
    %106 = vsyncpa [#allocation39], 0
    %107 = vsyncpa [#allocation42], 0
    %108 = vsyncpa [#allocation45], 0
    %109 = vsyncpa [#allocation48], 0
    %110 = vsyncpa [#allocation51], 0
    %111 = vsyncpa [#allocation54], 0
    %112 = vsyncpa [#allocation4], 0
    // Predicated region
    $region2: #{_lambda_.1} parent=1 // pred_check
      _
    $region3: #{_lambda_.1} parent=1 // pred_check_branch
      %114 = sbr.rel (0) target = $region5
    $region4: #{_lambda_.1} parent=1 // pred_region
      _
    $region5: #{_lambda_.1} parent=1 // pred_fallthru
      _
    // Predicated region
    $region6: #{_lambda_.1} parent=1 // pred_check
      _
    $region7: #{_lambda_.1} parent=1 // pred_check_branch
      %116 = sbr.rel (0) target = $region9
    $region8: #{_lambda_.1} parent=1 // pred_region
      %s118 = ssub.s32 32, 32
      %119 = vsyncadd [#allocation3], %s118
      %s121 = sshll.u32 [#allocation2], 4
      %s122 = int_to_ptr.vmem [resolvable:$true] %s121
      %124 = dma.hbm_to_vmem [thread:$0]  %s3, 32, %s122, [#allocation3]
    $region9: #{_lambda_.1} parent=1 // pred_fallthru
      _
    // Predicated region
    $region10: #{_lambda_.1} parent=1 // pred_check
      _
    $region11: #{_lambda_.1} parent=1 // pred_check_branch
      %126 = sbr.rel (0) target = $region13
    $region12: #{_lambda_.1} parent=1 // pred_region
      %s128 = ssub.s32 32, 32
      %129 = vsyncadd [#allocation6], %s128
      %s131 = sshll.u32 [#allocation5], 4
      %s132 = int_to_ptr.vmem [resolvable:$true] %s131
      %134 = dma.hbm_to_vmem [thread:$0]  %s5, 32, %s132, [#allocation6]
    $region13: #{_lambda_.1} parent=1 // pred_fallthru
      _
    // Predicated region
    $region14: #{_lambda_.1} parent=1 // pred_check
      _
    $region15: #{_lambda_.1} parent=1 // pred_check_branch
      %136 = sbr.rel (0) target = $region17
    $region16: #{_lambda_.1} parent=1 // pred_region
      %s138 = ssub.s32 32, 32
      %139 = vsyncadd [#allocation6], %s138
      %s141 = sshll.u32 [#allocation7], 4
      %s142 = int_to_ptr.vmem [resolvable:$true] %s141
      %144 = dma.hbm_to_vmem [thread:$0]  %s7, 32, %s142, [#allocation6]
    $region17: #{_lambda_.1} parent=1 // pred_fallthru
      _
    // Predicated region
    $region18: #{_lambda_.1} parent=1 // pred_check
      _
    $region19: #{_lambda_.1} parent=1 // pred_check_branch
      %146 = sbr.rel (0) target = $region21
    $region20: #{_lambda_.1} parent=1 // pred_region
      %s148 = ssub.s32 32, 32
      %149 = vsyncadd [#allocation9], %s148
      %s151 = sshll.u32 [#allocation8], 4
      %s152 = int_to_ptr.vmem [resolvable:$true] %s151
      %154 = dma.hbm_to_vmem [thread:$0]  %s9, 32, %s152, [#allocation9]
    $region21: #{_lambda_.1} parent=1 // pred_fallthru
      _
    // Predicated region
    $region22: #{_lambda_.1} parent=1 // pred_check
      _
    $region23: #{_lambda_.1} parent=1 // pred_check_branch
      %156 = sbr.rel (0) target = $region25
    $region24: #{_lambda_.1} parent=1 // pred_region
      _
    $region25: #{_lambda_.1} parent=1 // pred_fallthru
      _
    // Predicated region
    $region26: #{_lambda_.1} parent=1 // pred_check
      _
    $region27: #{_lambda_.1} parent=1 // pred_check_branch
      %158 = sbr.rel (0) target = $region29
    $region28: #{_lambda_.1} parent=1 // pred_region
      %s160 = ssub.s32 1536, 1536
      %161 = vsyncadd [#allocation9], %s160
      %s162 = sshll.u32 [#allocation10], 4
      %s163 = int_to_ptr.vmem [resolvable:$true] %s162
      %168 = dma.hbm_to_vmem [thread:$0]  %s13, 1536, %s163, [#allocation9], 128, 128, 8
    $region29: #{_lambda_.1} parent=1 // pred_fallthru
      _
    // Predicated region
    $region30: #{_lambda_.1} parent=1 // pred_check
      _
    $region31: #{_lambda_.1} parent=1 // pred_check_branch
      %170 = sbr.rel (0) target = $region33
    $region32: #{_lambda_.1} parent=1 // pred_region
      %s172 = ssub.s32 12288, 12288
      %173 = vsyncadd [#allocation12], %s172
      %s174 = sshll.u32 [#allocation11], 4
      %s175 = int_to_ptr.vmem [resolvable:$true] %s174
      %180 = dma.hbm_to_vmem [thread:$0]  %s15, 12288, %s175, [#allocation12], 128, 128, 8
    $region33: #{_lambda_.1} parent=1 // pred_fallthru
      _
    // Predicated region
    $region34: #{_lambda_.1} parent=1 // pred_check
      _
    $region35: #{_lambda_.1} parent=1 // pred_check_branch
      %182 = sbr.rel (0) target = $region37
    $region36: #{_lambda_.1} parent=1 // pred_region
      %s184 = ssub.s32 1536, 1536
      %185 = vsyncadd [#allocation12], %s184
      %s186 = sshll.u32 [#allocation13], 4
      %s187 = int_to_ptr.vmem [resolvable:$true] %s186
      %192 = dma.hbm_to_vmem [thread:$0]  %s17, 1536, %s187, [#allocation12], 128, 128, 8
    $region37: #{_lambda_.1} parent=1 // pred_fallthru
      _
    // Predicated region
    $region38: #{_lambda_.1} parent=1 // pred_check
      _
    $region39: #{_lambda_.1} parent=1 // pred_check_branch
      %194 = sbr.rel (0) target = $region41
    $region40: #{_lambda_.1} parent=1 // pred_region
      %s196 = ssub.s32 32, 32
      %197 = vsyncadd [#allocation15], %s196
      %s199 = sshll.u32 [#allocation14], 4
      %s200 = int_to_ptr.vmem [resolvable:$true] %s199
      %202 = dma.hbm_to_vmem [thread:$0]  %s19, 32, %s200, [#allocation15]
    $region41: #{_lambda_.1} parent=1 // pred_fallthru
      _
    // Predicated region
    $region42: #{_lambda_.1} parent=1 // pred_check
      _
    $region43: #{_lambda_.1} parent=1 // pred_check_branch
      %204 = sbr.rel (0) target = $region45
    $region44: #{_lambda_.1} parent=1 // pred_region
      %s206 = ssub.s32 32, 32
      %207 = vsyncadd [#allocation15], %s206
      %s209 = sshll.u32 [#allocation16], 4
      %s210 = int_to_ptr.vmem [resolvable:$true] %s209
      %212 = dma.hbm_to_vmem [thread:$0]  %s21, 32, %s210, [#allocation15]
    $region45: #{_lambda_.1} parent=1 // pred_fallthru
      _
    // Predicated region
    $region46: #{_lambda_.1} parent=1 // pred_check
      _
    $region47: #{_lambda_.1} parent=1 // pred_check_branch
      %214 = sbr.rel (0) target = $region49
    $region48: #{_lambda_.1} parent=1 // pred_region
      %s216 = ssub.s32 32, 32
      %217 = vsyncadd [#allocation18], %s216
      %s219 = sshll.u32 [#allocation17], 4
      %s220 = int_to_ptr.vmem [resolvable:$true] %s219
      %222 = dma.hbm_to_vmem [thread:$0]  %s23, 32, %s220, [#allocation18]
    $region49: #{_lambda_.1} parent=1 // pred_fallthru
      _
    // Predicated region
    $region50: #{_lambda_.1} parent=1 // pred_check
      _
    $region51: #{_lambda_.1} parent=1 // pred_check_branch
      %224 = sbr.rel (0) target = $region53
    $region52: #{_lambda_.1} parent=1 // pred_region
      %s226 = ssub.s32 32, 32
      %227 = vsyncadd [#allocation18], %s226
      %s229 = sshll.u32 [#allocation19], 4
      %s230 = int_to_ptr.vmem [resolvable:$true] %s229
      %232 = dma.hbm_to_vmem [thread:$0]  %s25, 32, %s230, [#allocation18]
    $region53: #{_lambda_.1} parent=1 // pred_fallthru
      _
    // Predicated region
    $region54: #{_lambda_.1} parent=1 // pred_check
      _
    $region55: #{_lambda_.1} parent=1 // pred_check_branch
      %234 = sbr.rel (0) target = $region57
    $region56: #{_lambda_.1} parent=1 // pred_region
      %s236 = ssub.s32 12288, 12288
      %237 = vsyncadd [#allocation21], %s236
      %s238 = sshll.u32 [#allocation20], 4
      %s239 = int_to_ptr.vmem [resolvable:$true] %s238
      %244 = dma.hbm_to_vmem [thread:$0]  %s27, 12288, %s239, [#allocation21], 128, 128, 8
    $region57: #{_lambda_.1} parent=1 // pred_fallthru
      _
    // Predicated region
    $region58: #{_lambda_.1} parent=1 // pred_check
      _
    $region59: #{_lambda_.1} parent=1 // pred_check_branch
      %246 = sbr.rel (0) target = $region61
    $region60: #{_lambda_.1} parent=1 // pred_region
      %s248 = ssub.s32 768, 768
      %249 = vsyncadd [#allocation21], %s248
      %s250 = sshll.u32 [#allocation22], 4
      %s251 = int_to_ptr.vmem [resolvable:$true] %s250
      %256 = dma.hbm_to_vmem [thread:$0]  %s29, 768, %s251, [#allocation21], 128, 128, 8
    $region61: #{_lambda_.1} parent=1 // pred_fallthru
      _
    // Predicated region
    $region62: #{_lambda_.1} parent=1 // pred_check
      _
    $region63: #{_lambda_.1} parent=1 // pred_check_branch
      %258 = sbr.rel (0) target = $region65
    $region64: #{_lambda_.1} parent=1 // pred_region
      %s260 = ssub.s32 12288, 12288
      %261 = vsyncadd [#allocation24], %s260
      %s262 = sshll.u32 [#allocation23], 4
      %s263 = int_to_ptr.vmem [resolvable:$true] %s262
      %268 = dma.hbm_to_vmem [thread:$0]  %s31, 12288, %s263, [#allocation24], 128, 128, 8
    $region65: #{_lambda_.1} parent=1 // pred_fallthru
      _
    // Predicated region
    $region66: #{_lambda_.1} parent=1 // pred_check
      _
    $region67: #{_lambda_.1} parent=1 // pred_check_branch
      %270 = sbr.rel (0) target = $region69
    $region68: #{_lambda_.1} parent=1 // pred_region
      %s272 = ssub.s32 768, 768
      %273 = vsyncadd [#allocation24], %s272
      %s274 = sshll.u32 [#allocation25], 4
      %s275 = int_to_ptr.vmem [resolvable:$true] %s274
      %280 = dma.hbm_to_vmem [thread:$0]  %s33, 768, %s275, [#allocation24], 128, 128, 8
    $region69: #{_lambda_.1} parent=1 // pred_fallthru
      _
    // Predicated region
    $region70: #{_lambda_.1} parent=1 // pred_check
      _
    $region71: #{_lambda_.1} parent=1 // pred_check_branch
      %282 = sbr.rel (0) target = $region73
    $region72: #{_lambda_.1} parent=1 // pred_region
      %s284 = ssub.s32 4096, 4096
      %285 = vsyncadd [#allocation27], %s284
      %s286 = sshll.u32 [#allocation26], 4
      %s287 = int_to_ptr.vmem [resolvable:$true] %s286
      %292 = dma.hbm_to_vmem [thread:$0]  %s35, 4096, %s287, [#allocation27], 128, 128, 8
    $region73: #{_lambda_.1} parent=1 // pred_fallthru
      _
    // Predicated region
    $region74: #{_lambda_.1} parent=1 // pred_check
      _
    $region75: #{_lambda_.1} parent=1 // pred_check_branch
      %294 = sbr.rel (0) target = $region77
    $region76: #{_lambda_.1} parent=1 // pred_region
      %s296 = ssub.s32 256, 256
      %297 = vsyncadd [#allocation27], %s296
      %s298 = sshll.u32 [#allocation28], 4
      %s299 = int_to_ptr.vmem [resolvable:$true] %s298
      %304 = dma.hbm_to_vmem [thread:$0]  %s37, 256, %s299, [#allocation27], 128, 128, 8
    $region77: #{_lambda_.1} parent=1 // pred_fallthru
      _
    // Predicated region
    $region78: #{_lambda_.1} parent=1 // pred_check
      _
    $region79: #{_lambda_.1} parent=1 // pred_check_branch
      %306 = sbr.rel (0) target = $region81
    $region80: #{_lambda_.1} parent=1 // pred_region
      %s308 = ssub.s32 32, 32
      %309 = vsyncadd [#allocation30], %s308
      %s311 = sshll.u32 [#allocation29], 4
      %s312 = int_to_ptr.vmem [resolvable:$true] %s311
      %314 = dma.hbm_to_vmem [thread:$0]  %s39, 32, %s312, [#allocation30]
    $region81: #{_lambda_.1} parent=1 // pred_fallthru
      _
    // Predicated region
    $region82: #{_lambda_.1} parent=1 // pred_check
      _
    $region83: #{_lambda_.1} parent=1 // pred_check_branch
      %316 = sbr.rel (0) target = $region85
    $region84: #{_lambda_.1} parent=1 // pred_region
      %s318 = ssub.s32 32, 32
      %319 = vsyncadd [#allocation30], %s318
      %s321 = sshll.u32 [#allocation31], 4
      %s322 = int_to_ptr.vmem [resolvable:$true] %s321
      %324 = dma.hbm_to_vmem [thread:$0]  %s41, 32, %s322, [#allocation30]
    $region85: #{_lambda_.1} parent=1 // pred_fallthru
      _
    // Predicated region
    $region86: #{_lambda_.1} parent=1 // pred_check
      _
    $region87: #{_lambda_.1} parent=1 // pred_check_branch
      %326 = sbr.rel (0) target = $region89
    $region88: #{_lambda_.1} parent=1 // pred_region
      %s328 = ssub.s32 32, 32
      %329 = vsyncadd [#allocation33], %s328
      %s331 = sshll.u32 [#allocation32], 4
      %s332 = int_to_ptr.vmem [resolvable:$true] %s331
      %334 = dma.hbm_to_vmem [thread:$0]  %s43, 32, %s332, [#allocation33]
    $region89: #{_lambda_.1} parent=1 // pred_fallthru
      _
    // Predicated region
    $region90: #{_lambda_.1} parent=1 // pred_check
      _
    $region91: #{_lambda_.1} parent=1 // pred_check_branch
      %336 = sbr.rel (0) target = $region93
    $region92: #{_lambda_.1} parent=1 // pred_region
      %s338 = ssub.s32 32, 32
      %339 = vsyncadd [#allocation33], %s338
      %s341 = sshll.u32 [#allocation34], 4
      %s342 = int_to_ptr.vmem [resolvable:$true] %s341
      %344 = dma.hbm_to_vmem [thread:$0]  %s45, 32, %s342, [#allocation33]
    $region93: #{_lambda_.1} parent=1 // pred_fallthru
      _
    // Predicated region
    $region94: #{_lambda_.1} parent=1 // pred_check
      _
    $region95: #{_lambda_.1} parent=1 // pred_check_branch
      %346 = sbr.rel (0) target = $region97
    $region96: #{_lambda_.1} parent=1 // pred_region
      %s348 = ssub.s32 32, 32
      %349 = vsyncadd [#allocation36], %s348
      %s351 = sshll.u32 [#allocation35], 4
      %s352 = int_to_ptr.vmem [resolvable:$true] %s351
      %354 = dma.hbm_to_vmem [thread:$0]  %s47, 32, %s352, [#allocation36]
    $region97: #{_lambda_.1} parent=1 // pred_fallthru
      _
    // Predicated region
    $region98: #{_lambda_.1} parent=1 // pred_check
      _
    $region99: #{_lambda_.1} parent=1 // pred_check_branch
      %356 = sbr.rel (0) target = $region101
    $region100: #{_lambda_.1} parent=1 // pred_region
      %s358 = ssub.s32 32, 32
      %359 = vsyncadd [#allocation36], %s358
      %s361 = sshll.u32 [#allocation37], 4
      %s362 = int_to_ptr.vmem [resolvable:$true] %s361
      %364 = dma.hbm_to_vmem [thread:$0]  %s49, 32, %s362, [#allocation36]
    $region101: #{_lambda_.1} parent=1 // pred_fallthru
      _
    // Predicated region
    $region102: #{_lambda_.1} parent=1 // pred_check
      _
    $region103: #{_lambda_.1} parent=1 // pred_check_branch
      %366 = sbr.rel (0) target = $region105
    $region104: #{_lambda_.1} parent=1 // pred_region
      %s368 = ssub.s32 12288, 12288
      %369 = vsyncadd [#allocation39], %s368
      %s370 = sshll.u32 [#allocation38], 4
      %s371 = int_to_ptr.vmem [resolvable:$true] %s370
      %376 = dma.hbm_to_vmem [thread:$0]  %s51, 12288, %s371, [#allocation39], 128, 128, 8
    $region105: #{_lambda_.1} parent=1 // pred_fallthru
      _
    // Predicated region
    $region106: #{_lambda_.1} parent=1 // pred_check
      _
    $region107: #{_lambda_.1} parent=1 // pred_check_branch
      %378 = sbr.rel (0) target = $region109
    $region108: #{_lambda_.1} parent=1 // pred_region
      %s380 = ssub.s32 384, 384
      %381 = vsyncadd [#allocation39], %s380
      %s382 = sshll.u32 [#allocation40], 4
      %s383 = int_to_ptr.vmem [resolvable:$true] %s382
      %388 = dma.hbm_to_vmem [thread:$0]  %s53, 384, %s383, [#allocation39], 128, 128, 8
    $region109: #{_lambda_.1} parent=1 // pred_fallthru
      _
    // Predicated region
    $region110: #{_lambda_.1} parent=1 // pred_check
      _
    $region111: #{_lambda_.1} parent=1 // pred_check_branch
      %390 = sbr.rel (0) target = $region113
    $region112: #{_lambda_.1} parent=1 // pred_region
      %s392 = ssub.s32 12288, 12288
      %393 = vsyncadd [#allocation42], %s392
      %s394 = sshll.u32 [#allocation41], 4
      %s395 = int_to_ptr.vmem [resolvable:$true] %s394
      %400 = dma.hbm_to_vmem [thread:$0]  %s55, 12288, %s395, [#allocation42], 128, 128, 8
    $region113: #{_lambda_.1} parent=1 // pred_fallthru
      _
    // Predicated region
    $region114: #{_lambda_.1} parent=1 // pred_check
      _
    $region115: #{_lambda_.1} parent=1 // pred_check_branch
      %402 = sbr.rel (0) target = $region117
    $region116: #{_lambda_.1} parent=1 // pred_region
      %s404 = ssub.s32 384, 384
      %405 = vsyncadd [#allocation42], %s404
      %s406 = sshll.u32 [#allocation43], 4
      %s407 = int_to_ptr.vmem [resolvable:$true] %s406
      %412 = dma.hbm_to_vmem [thread:$0]  %s57, 384, %s407, [#allocation42], 128, 128, 8
    $region117: #{_lambda_.1} parent=1 // pred_fallthru
      _
    // Predicated region
    $region118: #{_lambda_.1} parent=1 // pred_check
      _
    $region119: #{_lambda_.1} parent=1 // pred_check_branch
      %414 = sbr.rel (0) target = $region121
    $region120: #{_lambda_.1} parent=1 // pred_region
      %s416 = ssub.s32 4096, 4096
      %417 = vsyncadd [#allocation45], %s416
      %s418 = sshll.u32 [#allocation44], 4
      %s419 = int_to_ptr.vmem [resolvable:$true] %s418
      %424 = dma.hbm_to_vmem [thread:$0]  %s59, 4096, %s419, [#allocation45], 128, 128, 8
    $region121: #{_lambda_.1} parent=1 // pred_fallthru
      _
    // Predicated region
    $region122: #{_lambda_.1} parent=1 // pred_check
      _
    $region123: #{_lambda_.1} parent=1 // pred_check_branch
      %426 = sbr.rel (0) target = $region125
    $region124: #{_lambda_.1} parent=1 // pred_region
      _
    $region125: #{_lambda_.1} parent=1 // pred_fallthru
      _
    // Predicated region
    $region126: #{_lambda_.1} parent=1 // pred_check
      _
    $region127: #{_lambda_.1} parent=1 // pred_check_branch
      %428 = sbr.rel (0) target = $region129
    $region128: #{_lambda_.1} parent=1 // pred_region
      %s430 = ssub.s32 32, 32
      %431 = vsyncadd [#allocation45], %s430
      %s433 = sshll.u32 [#allocation46], 4
      %s434 = int_to_ptr.vmem [resolvable:$true] %s433
      %436 = dma.hbm_to_vmem [thread:$0]  %s63, 32, %s434, [#allocation45]
    $region129: #{_lambda_.1} parent=1 // pred_fallthru
      _
    // Predicated region
    $region130: #{_lambda_.1} parent=1 // pred_check
      _
    $region131: #{_lambda_.1} parent=1 // pred_check_branch
      %438 = sbr.rel (0) target = $region133
    $region132: #{_lambda_.1} parent=1 // pred_region
      %s440 = ssub.s32 32, 32
      %441 = vsyncadd [#allocation48], %s440
      %s443 = sshll.u32 [#allocation47], 4
      %s444 = int_to_ptr.vmem [resolvable:$true] %s443
      %446 = dma.hbm_to_vmem [thread:$0]  %s65, 32, %s444, [#allocation48]
    $region133: #{_lambda_.1} parent=1 // pred_fallthru
      _
    // Predicated region
    $region134: #{_lambda_.1} parent=1 // pred_check
      _
    $region135: #{_lambda_.1} parent=1 // pred_check_branch
      %448 = sbr.rel (0) target = $region137
    $region136: #{_lambda_.1} parent=1 // pred_region
      %s450 = ssub.s32 8192, 8192
      %451 = vsyncadd [#allocation48], %s450
      %s452 = sshll.u32 [#allocation49], 4
      %s453 = int_to_ptr.vmem [resolvable:$true] %s452
      %458 = dma.hbm_to_vmem [thread:$0]  %s67, 8192, %s453, [#allocation48], 256, 256, 16
    $region137: #{_lambda_.1} parent=1 // pred_fallthru
      _
    // Predicated region
    $region138: #{_lambda_.1} parent=1 // pred_check
      _
    $region139: #{_lambda_.1} parent=1 // pred_check_branch
      %460 = sbr.rel (0) target = $region141
    $region140: #{_lambda_.1} parent=1 // pred_region
      %s462 = ssub.s32 8192, 8192
      %463 = vsyncadd [#allocation51], %s462
      %s464 = sshll.u32 [#allocation50], 4
      %s465 = int_to_ptr.vmem [resolvable:$true] %s464
      %470 = dma.hbm_to_vmem [thread:$0]  %s69, 8192, %s465, [#allocation51], 256, 256, 16
    $region141: #{_lambda_.1} parent=1 // pred_fallthru
      _
    // Predicated region
    $region142: #{_lambda_.1} parent=1 // pred_check
      _
    $region143: #{_lambda_.1} parent=1 // pred_check_branch
      %472 = sbr.rel (0) target = $region145
    $region144: #{_lambda_.1} parent=1 // pred_region
      %s474 = ssub.s32 8192, 8192
      %475 = vsyncadd [#allocation51], %s474
      %s476 = sshll.u32 [#allocation52], 4
      %s477 = int_to_ptr.vmem [resolvable:$true] %s476
      %482 = dma.hbm_to_vmem [thread:$0]  %s71, 8192, %s477, [#allocation51], 256, 256, 16
    $region145: #{_lambda_.1} parent=1 // pred_fallthru
      _
    // Predicated region
    $region146: #{_lambda_.1} parent=1 // pred_check
      _
    $region147: #{_lambda_.1} parent=1 // pred_check_branch
      %484 = sbr.rel (0) target = $region149
    $region148: #{_lambda_.1} parent=1 // pred_region
      %s486 = ssub.s32 16, 16
      %487 = vsyncadd [#allocation54], %s486
      %s489 = sshll.u32 [#allocation53], 4
      %s490 = int_to_ptr.vmem [resolvable:$true] %s489
      %492 = dma.hbm_to_vmem [thread:$0]  %s73, 16, %s490, [#allocation54]
    $region149: #{_lambda_.1} parent=1 // pred_fallthru
      _
    // Predicated region
    $region150: #{_lambda_.1} parent=1 // pred_check
      _
    $region151: #{_lambda_.1} parent=1 // pred_check_branch
      %494 = sbr.rel (0) target = $region153
    $region152: #{_lambda_.1} parent=1 // pred_region
      _
    $region153: #{_lambda_.1} parent=1 // pred_fallthru
      _
    // Predicated region
    $region154: #{_lambda_.1} parent=1 // pred_check
      _
    $region155: #{_lambda_.1} parent=1 // pred_check_branch
      %496 = sbr.rel (0) target = $region157
    $region156: #{_lambda_.1} parent=1 // pred_region
      _
    $region157: #{_lambda_.1} parent=1 // pred_fallthru
      _
    // Predicated region
    $region158: #{_lambda_.1} parent=1 // pred_check
      _
    $region159: #{_lambda_.1} parent=1 // pred_check_branch
      %498 = sbr.rel (0) target = $region161
    $region160: #{_lambda_.1} parent=1 // pred_region
      _
    $region161: #{_lambda_.1} parent=1 // pred_fallthru
      _
    // Predicated region
    $region162: #{_lambda_.1} parent=1 // pred_check
      _
    $region163: #{_lambda_.1} parent=1 // pred_check_branch
      %500 = sbr.rel (0) target = $region165
    $region164: #{_lambda_.1} parent=1 // pred_region
      _
    $region165: #{_lambda_.1} parent=1 // pred_fallthru
      _
    // Predicated region
    $region166: #{_lambda_.1} parent=1 // pred_check
      _
    $region167: #{_lambda_.1} parent=1 // pred_check_branch
      %502 = sbr.rel (0) target = $region169
    $region168: #{_lambda_.1} parent=1 // pred_region
      _
    $region169: #{_lambda_.1} parent=1 // pred_fallthru
      _
    // Predicated region
    $region170: #{_lambda_.1} parent=1 // pred_check
      _
    $region171: #{_lambda_.1} parent=1 // pred_check_branch
      %504 = sbr.rel (0) target = $region173
    $region172: #{_lambda_.1} parent=1 // pred_region
      _
    $region173: #{_lambda_.1} parent=1 // pred_fallthru
      _
    // Predicated region
    $region174: #{_lambda_.1} parent=1 // pred_check
      _
    $region175: #{_lambda_.1} parent=1 // pred_check_branch
      %506 = sbr.rel (0) target = $region177
    $region176: #{_lambda_.1} parent=1 // pred_region
      _
    $region177: #{_lambda_.1} parent=1 // pred_fallthru
      _
    // Predicated region
    $region178: #{_lambda_.1} parent=1 // pred_check
      _
    $region179: #{_lambda_.1} parent=1 // pred_check_branch
      %508 = sbr.rel (0) target = $region181
    $region180: #{_lambda_.1} parent=1 // pred_region
      %509 = dma.done [#allocation3], 32
    $region181: #{_lambda_.1} parent=1 // pred_fallthru
      _
    // Predicated region
    $region182: #{_lambda_.1} parent=1 // pred_check
      _
    $region183: #{_lambda_.1} parent=1 // pred_check_branch
      %511 = sbr.rel (0) target = $region185
    $region184: #{_lambda_.1} parent=1 // pred_region
      %512 = dma.done [#allocation6], 32
    $region185: #{_lambda_.1} parent=1 // pred_fallthru
      _
    // Predicated region
    $region186: #{_lambda_.1} parent=1 // pred_check
      _
    $region187: #{_lambda_.1} parent=1 // pred_check_branch
      %514 = sbr.rel (0) target = $region189
    $region188: #{_lambda_.1} parent=1 // pred_region
      %515 = dma.done [#allocation6], 32
    $region189: #{_lambda_.1} parent=1 // pred_fallthru
      _
    // Predicated region
    $region190: #{_lambda_.1} parent=1 // pred_check
      _
    $region191: #{_lambda_.1} parent=1 // pred_check_branch
      %517 = sbr.rel (0) target = $region193
    $region192: #{_lambda_.1} parent=1 // pred_region
      %518 = dma.done [#allocation9], 32
    $region193: #{_lambda_.1} parent=1 // pred_fallthru
      _
    // Predicated region
    $region194: #{_lambda_.1} parent=1 // pred_check
      _
    $region195: #{_lambda_.1} parent=1 // pred_check_branch
      %520 = sbr.rel (0) target = $region197
    $region196: #{_lambda_.1} parent=1 // pred_region
      %521 = dma.done [#allocation9], 1536
    $region197: #{_lambda_.1} parent=1 // pred_fallthru
      _
    // Predicated region
    $region198: #{_lambda_.1} parent=1 // pred_check
      _
    $region199: #{_lambda_.1} parent=1 // pred_check_branch
      %523 = sbr.rel (0) target = $region201
    $region200: #{_lambda_.1} parent=1 // pred_region
      %524 = dma.done [#allocation12], 12288
    $region201: #{_lambda_.1} parent=1 // pred_fallthru
      _
    // Predicated region
    $region202: #{_lambda_.1} parent=1 // pred_check
      _
    $region203: #{_lambda_.1} parent=1 // pred_check_branch
      %526 = sbr.rel (0) target = $region205
    $region204: #{_lambda_.1} parent=1 // pred_region
      %527 = dma.done [#allocation12], 1536
    $region205: #{_lambda_.1} parent=1 // pred_fallthru
      _
    // Predicated region
    $region206: #{_lambda_.1} parent=1 // pred_check
      _
    $region207: #{_lambda_.1} parent=1 // pred_check_branch
      %529 = sbr.rel (0) target = $region209
    $region208: #{_lambda_.1} parent=1 // pred_region
      %530 = dma.done [#allocation15], 32
    $region209: #{_lambda_.1} parent=1 // pred_fallthru
      _
    // Predicated region
    $region210: #{_lambda_.1} parent=1 // pred_check
      _
    $region211: #{_lambda_.1} parent=1 // pred_check_branch
      %532 = sbr.rel (0) target = $region213
    $region212: #{_lambda_.1} parent=1 // pred_region
      %533 = dma.done [#allocation15], 32
    $region213: #{_lambda_.1} parent=1 // pred_fallthru
      _
    // Predicated region
    $region214: #{_lambda_.1} parent=1 // pred_check
      _
    $region215: #{_lambda_.1} parent=1 // pred_check_branch
      %535 = sbr.rel (0) target = $region217
    $region216: #{_lambda_.1} parent=1 // pred_region
      %536 = dma.done [#allocation18], 32
    $region217: #{_lambda_.1} parent=1 // pred_fallthru
      _
    // Predicated region
    $region218: #{_lambda_.1} parent=1 // pred_check
      _
    $region219: #{_lambda_.1} parent=1 // pred_check_branch
      %538 = sbr.rel (0) target = $region221
    $region220: #{_lambda_.1} parent=1 // pred_region
      %539 = dma.done [#allocation18], 32
    $region221: #{_lambda_.1} parent=1 // pred_fallthru
      _
    // Predicated region
    $region222: #{_lambda_.1} parent=1 // pred_check
      _
    $region223: #{_lambda_.1} parent=1 // pred_check_branch
      %541 = sbr.rel (0) target = $region225
    $region224: #{_lambda_.1} parent=1 // pred_region
      %542 = dma.done [#allocation21], 12288
    $region225: #{_lambda_.1} parent=1 // pred_fallthru
      _
    // Predicated region
    $region226: #{_lambda_.1} parent=1 // pred_check
      _
    $region227: #{_lambda_.1} parent=1 // pred_check_branch
      %544 = sbr.rel (0) target = $region229
    $region228: #{_lambda_.1} parent=1 // pred_region
      %545 = dma.done [#allocation21], 768
    $region229: #{_lambda_.1} parent=1 // pred_fallthru
      _
    // Predicated region
    $region230: #{_lambda_.1} parent=1 // pred_check
      _
    $region231: #{_lambda_.1} parent=1 // pred_check_branch
      %547 = sbr.rel (0) target = $region233
    $region232: #{_lambda_.1} parent=1 // pred_region
      %548 = dma.done [#allocation24], 12288
    $region233: #{_lambda_.1} parent=1 // pred_fallthru
      _
    // Predicated region
    $region234: #{_lambda_.1} parent=1 // pred_check
      _
    $region235: #{_lambda_.1} parent=1 // pred_check_branch
      %550 = sbr.rel (0) target = $region237
    $region236: #{_lambda_.1} parent=1 // pred_region
      %551 = dma.done [#allocation24], 768
    $region237: #{_lambda_.1} parent=1 // pred_fallthru
      _
    // Predicated region
    $region238: #{_lambda_.1} parent=1 // pred_check
      _
    $region239: #{_lambda_.1} parent=1 // pred_check_branch
      %553 = sbr.rel (0) target = $region241
    $region240: #{_lambda_.1} parent=1 // pred_region
      %554 = dma.done [#allocation27], 4096
    $region241: #{_lambda_.1} parent=1 // pred_fallthru
      _
    // Predicated region
    $region242: #{_lambda_.1} parent=1 // pred_check
      _
    $region243: #{_lambda_.1} parent=1 // pred_check_branch
      %556 = sbr.rel (0) target = $region245
    $region244: #{_lambda_.1} parent=1 // pred_region
      %557 = dma.done [#allocation27], 256
    $region245: #{_lambda_.1} parent=1 // pred_fallthru
      _
    // Predicated region
    $region246: #{_lambda_.1} parent=1 // pred_check
      _
    $region247: #{_lambda_.1} parent=1 // pred_check_branch
      %559 = sbr.rel (0) target = $region249
    $region248: #{_lambda_.1} parent=1 // pred_region
      %560 = dma.done [#allocation30], 32
    $region249: #{_lambda_.1} parent=1 // pred_fallthru
      _
    // Predicated region
    $region250: #{_lambda_.1} parent=1 // pred_check
      _
    $region251: #{_lambda_.1} parent=1 // pred_check_branch
      %562 = sbr.rel (0) target = $region253
    $region252: #{_lambda_.1} parent=1 // pred_region
      %563 = dma.done [#allocation30], 32
    $region253: #{_lambda_.1} parent=1 // pred_fallthru
      _
    // Predicated region
    $region254: #{_lambda_.1} parent=1 // pred_check
      _
    $region255: #{_lambda_.1} parent=1 // pred_check_branch
      %565 = sbr.rel (0) target = $region257
    $region256: #{_lambda_.1} parent=1 // pred_region
      %566 = dma.done [#allocation33], 32
    $region257: #{_lambda_.1} parent=1 // pred_fallthru
      _
    // Predicated region
    $region258: #{_lambda_.1} parent=1 // pred_check
      _
    $region259: #{_lambda_.1} parent=1 // pred_check_branch
      %568 = sbr.rel (0) target = $region261
    $region260: #{_lambda_.1} parent=1 // pred_region
      %569 = dma.done [#allocation33], 32
    $region261: #{_lambda_.1} parent=1 // pred_fallthru
      _
    // Predicated region
    $region262: #{_lambda_.1} parent=1 // pred_check
      _
    $region263: #{_lambda_.1} parent=1 // pred_check_branch
      %571 = sbr.rel (0) target = $region265
    $region264: #{_lambda_.1} parent=1 // pred_region
      %572 = dma.done [#allocation36], 32
    $region265: #{_lambda_.1} parent=1 // pred_fallthru
      _
    // Predicated region
    $region266: #{_lambda_.1} parent=1 // pred_check
      _
    $region267: #{_lambda_.1} parent=1 // pred_check_branch
      %574 = sbr.rel (0) target = $region269
    $region268: #{_lambda_.1} parent=1 // pred_region
      %575 = dma.done [#allocation36], 32
    $region269: #{_lambda_.1} parent=1 // pred_fallthru
      _
    // Predicated region
    $region270: #{_lambda_.1} parent=1 // pred_check
      _
    $region271: #{_lambda_.1} parent=1 // pred_check_branch
      %577 = sbr.rel (0) target = $region273
    $region272: #{_lambda_.1} parent=1 // pred_region
      %578 = dma.done [#allocation39], 12288
    $region273: #{_lambda_.1} parent=1 // pred_fallthru
      _
    // Predicated region
    $region274: #{_lambda_.1} parent=1 // pred_check
      _
    $region275: #{_lambda_.1} parent=1 // pred_check_branch
      %580 = sbr.rel (0) target = $region277
    $region276: #{_lambda_.1} parent=1 // pred_region
      %581 = dma.done [#allocation39], 384
    $region277: #{_lambda_.1} parent=1 // pred_fallthru
      _
    // Predicated region
    $region278: #{_lambda_.1} parent=1 // pred_check
      _
    $region279: #{_lambda_.1} parent=1 // pred_check_branch
      %583 = sbr.rel (0) target = $region281
    $region280: #{_lambda_.1} parent=1 // pred_region
      %584 = dma.done [#allocation42], 12288
    $region281: #{_lambda_.1} parent=1 // pred_fallthru
      _
    // Predicated region
    $region282: #{_lambda_.1} parent=1 // pred_check
      _
    $region283: #{_lambda_.1} parent=1 // pred_check_branch
      %586 = sbr.rel (0) target = $region285
    $region284: #{_lambda_.1} parent=1 // pred_region
      %587 = dma.done [#allocation42], 384
    $region285: #{_lambda_.1} parent=1 // pred_fallthru
      _
    // Predicated region
    $region286: #{_lambda_.1} parent=1 // pred_check
      _
    $region287: #{_lambda_.1} parent=1 // pred_check_branch
      %589 = sbr.rel (0) target = $region289
    $region288: #{_lambda_.1} parent=1 // pred_region
      %590 = dma.done [#allocation45], 4096
    $region289: #{_lambda_.1} parent=1 // pred_fallthru
      _
    // Predicated region
    $region290: #{_lambda_.1} parent=1 // pred_check
      _
    $region291: #{_lambda_.1} parent=1 // pred_check_branch
      %592 = sbr.rel (0) target = $region293
    $region292: #{_lambda_.1} parent=1 // pred_region
      %593 = dma.done [#allocation45], 32
    $region293: #{_lambda_.1} parent=1 // pred_fallthru
      _
    // Predicated region
    $region294: #{_lambda_.1} parent=1 // pred_check
      _
    $region295: #{_lambda_.1} parent=1 // pred_check_branch
      %595 = sbr.rel (0) target = $region297
    $region296: #{_lambda_.1} parent=1 // pred_region
      %596 = dma.done [#allocation48], 32
    $region297: #{_lambda_.1} parent=1 // pred_fallthru
      _
    // Predicated region
    $region298: #{_lambda_.1} parent=1 // pred_check
      _
    $region299: #{_lambda_.1} parent=1 // pred_check_branch
      %598 = sbr.rel (0) target = $region301
    $region300: #{_lambda_.1} parent=1 // pred_region
      %599 = dma.done [#allocation48], 8192
    $region301: #{_lambda_.1} parent=1 // pred_fallthru
      _
    // Predicated region
    $region302: #{_lambda_.1} parent=1 // pred_check
      _
    $region303: #{_lambda_.1} parent=1 // pred_check_branch
      %601 = sbr.rel (0) target = $region305
    $region304: #{_lambda_.1} parent=1 // pred_region
      %602 = dma.done [#allocation51], 8192
    $region305: #{_lambda_.1} parent=1 // pred_fallthru
      _
    // Predicated region
    $region306: #{_lambda_.1} parent=1 // pred_check
      _
    $region307: #{_lambda_.1} parent=1 // pred_check_branch
      %604 = sbr.rel (0) target = $region309
    $region308: #{_lambda_.1} parent=1 // pred_region
      %605 = dma.done [#allocation51], 8192
    $region309: #{_lambda_.1} parent=1 // pred_fallthru
      _
    // Predicated region
    $region310: #{_lambda_.1} parent=1 // pred_check
      _
    $region311: #{_lambda_.1} parent=1 // pred_check_branch
      %607 = sbr.rel (0) target = $region313
    $region312: #{_lambda_.1} parent=1 // pred_region
      %608 = dma.done [#allocation54], 16
    $region313: #{_lambda_.1} parent=1 // pred_fallthru
      _
    %v610 = vld [vmem:[%s1] sm:$0xff]
    %v611 = vld [vmem:[%s1 + $0x8] sm:$0xff]
    %v612 = vld [vmem:[%s1 + $0x10] sm:$0xff]
    %v613 = vld [vmem:[%s1 + $0x18] sm:$0xff]
    %v614 = vld [vmem:[%s87] sm:$0xff]
    %v615 = vld [vmem:[%s87 + $0x8] sm:$0xff]
    %v616 = vld [vmem:[%s87 + $0x10] sm:$0xff]
    %v617 = vld [vmem:[%s87 + $0x18] sm:$0xff]
    %vm618 = vcmask 261120
    %v620 = vsel %vm618, %v614, 0
    %v623 = vsel %vm618, %v615, 0
    %v626 = vsel %vm618, %v616, 0
    %v629 = vsel %vm618, %v617, 0
    %631 = vmatprep.subr.mxu0 0.0
    %632 = vmatpush1.msra.mxu0 %v610
    %633 = vmatprep.subr.mxu0 0.0
    %634 = vmatpush1.msra.mxu0 %v611
    %635 = vmatprep.subr.mxu0 0.0
    %636 = vmatpush1.msra.mxu0 %v612
    %637 = vmatprep.subr.mxu0 0.0
    %638 = vmatpush1.msra.mxu0 %v613
    %639 = vmatprep.subr.mxu0 0.0
    %640 = vmatpush1.msra.mxu0 0.0
    %641 = vmatprep.subr.mxu0 0.0
    %642 = vmatpush1.msra.mxu0 0.0
    %643 = vmatprep.subr.mxu0 0.0
    %644 = vmatpush1.msra.mxu0 0.0
    %645 = vmatprep.subr.mxu0 0.0
    %646 = vmatpush1.msra.mxu0 0.0
    %647 = vmatprep.subr.mxu0 0.0
    %648 = vmatpush1.msra.mxu0 0.0
    %649 = vmatprep.subr.mxu0 0.0
    %650 = vmatpush1.msra.mxu0 0.0
    %651 = vmatprep.subr.mxu0 0.0
    %652 = vmatpush1.msra.mxu0 0.0
    %653 = vmatprep.subr.mxu0 0.0
    %654 = vmatpush1.msra.mxu0 0.0
    %655 = vmatprep.subr.mxu0 0.0
    %656 = vmatpush1.msra.mxu0 0.0
    %657 = vmatprep.subr.mxu0 0.0
    %658 = vmatpush1.msra.mxu0 0.0
    %659 = vmatprep.subr.mxu0 0.0
    %660 = vmatpush1.msra.mxu0 0.0
    %661 = vmatprep.subr.mxu0 0.0
    %662 = vmatpush1.msra.mxu0 0.0
    %663 = vmatprep.subr.mxu0 0.0
    %664 = vmatpush1.msra.mxu0 0.0
    %665 = vmatprep.subr.mxu0 0.0
    %666 = vmatpush1.msra.mxu0 0.0
    %667 = vmatprep.subr.mxu0 0.0
    %668 = vmatpush1.msra.mxu0 0.0
    %669 = vmatprep.subr.mxu0 0.0
    %670 = vmatpush1.msra.mxu0 0.0
    %671 = vmatprep.subr.mxu0 0.0
    %672 = vmatpush1.msra.mxu0 0.0
    %673 = vmatprep.subr.mxu0 0.0
    %674 = vmatpush1.msra.mxu0 0.0
    %675 = vmatprep.subr.mxu0 0.0
    %676 = vmatpush1.msra.mxu0 0.0
    %677 = vmatprep.subr.mxu0 0.0
    %678 = vmatpush1.msra.mxu0 0.0
    %679 = vmatprep.subr.mxu0 0.0
    %680 = vmatpush1.msra.mxu0 0.0
    %681 = vmatprep.subr.mxu0 0.0
    %682 = vmatpush1.msra.mxu0 0.0
    %683 = vmatprep.subr.mxu0 0.0
    %684 = vmatpush1.msra.mxu0 0.0
    %685 = vmatprep.subr.mxu0 0.0
    %686 = vmatpush1.msra.mxu0 0.0
    %687 = vmatprep.subr.mxu0 0.0
    %688 = vmatpush1.msra.mxu0 0.0
    %689 = vmatprep.subr.mxu0 0.0
    %690 = vmatpush1.msra.mxu0 0.0
    %691 = vmatprep.subr.mxu0 0.0
    %692 = vmatpush1.msra.mxu0 0.0
    %693 = vmatprep.subr.mxu0 0.0
    %694 = vmatpush1.msra.mxu0 0.0
    %695 = vmatprep.mubr.f32.mxu0 0.0
    %696 = vmatmul.mubr.f32.gmra.mrb[0].mxu0 %v620
    %v697 = vpop.f32.mrb[0].mxu0
    %v698 = vadd.f32 0.0, %v697
    %v699 = vpop.f32.mrb[0].mxu0
    %700 = vmatprep.mubr.f32.mxu0 0.0
    %701 = vmatmul.mubr.f32.gmra.mrb[0].mxu0 %v623
    %v702 = vpop.f32.mrb[0].mxu0
    %v703 = vadd.f32 0.0, %v702
    %v704 = vpop.f32.mrb[0].mxu0
    %705 = vmatprep.mubr.f32.mxu0 0.0
    %706 = vmatmul.mubr.f32.gmra.mrb[0].mxu0 %v626
    %v707 = vpop.f32.mrb[0].mxu0
    %v708 = vadd.f32 0.0, %v707
    %v709 = vpop.f32.mrb[0].mxu0
    %710 = vmatprep.mubr.f32.mxu0 0.0
    %711 = vmatmul.mubr.f32.gmra.mrb[0].mxu0 %v629
    %v712 = vpop.f32.mrb[0].mxu0
    %v713 = vadd.f32 0.0, %v712
    %v714 = vpop.f32.mrb[0].mxu0
    %715 = vdwg.mxu0
    %v716 = vpack.c.bf16 %v703, %v698
    %v717 = vpack.c.bf16 %v713, %v708
    %v718 = vld [vmem:[%s81] sm:$0xff]
    %v719 = vld [vmem:[%s81 + $0x8] sm:$0xff]
    %v720 = vld [vmem:[%s81 + $0x10] sm:$0xff]
    %v721 = vld [vmem:[%s81 + $0x18] sm:$0xff]
    %v722 = vld [vmem:[%s81 + $0x20] sm:$0xff]
    %v723 = vld [vmem:[%s81 + $0x28] sm:$0xff]
    %s724 = scalar_lea.vmem %s87, 32
    %v725 = vld [vmem:[%s724] sm:$0xff]
    %v726 = vld [vmem:[%s724 + $0x8] sm:$0xff]
    %v727 = vld [vmem:[%s724 + $0x10] sm:$0xff]
    %v728 = vld [vmem:[%s724 + $0x18] sm:$0xff]
    %v730 = vsel %vm618, %v725, 0
    %v733 = vsel %vm618, %v726, 0
    %v736 = vsel %vm618, %v727, 0
    %v739 = vsel %vm618, %v728, 0
    %741 = vmatprep.subr.mxu0 0.0
    %742 = vmatpush1.msra.mxu0 %v610
    %743 = vmatprep.subr.mxu0 0.0
    %744 = vmatpush1.msra.mxu0 %v611
    %745 = vmatprep.subr.mxu0 0.0
    %746 = vmatpush1.msra.mxu0 %v612
    %747 = vmatprep.subr.mxu0 0.0
    %748 = vmatpush1.msra.mxu0 %v613
    %749 = vmatprep.subr.mxu0 0.0
    %750 = vmatpush1.msra.mxu0 0.0
    %751 = vmatprep.subr.mxu0 0.0
    %752 = vmatpush1.msra.mxu0 0.0
    %753 = vmatprep.subr.mxu0 0.0
    %754 = vmatpush1.msra.mxu0 0.0
    %755 = vmatprep.subr.mxu0 0.0
    %756 = vmatpush1.msra.mxu0 0.0
    %757 = vmatprep.subr.mxu0 0.0
    %758 = vmatpush1.msra.mxu0 0.0
    %759 = vmatprep.subr.mxu0 0.0
    %760 = vmatpush1.msra.mxu0 0.0
    %761 = vmatprep.subr.mxu0 0.0
    %762 = vmatpush1.msra.mxu0 0.0
    %763 = vmatprep.subr.mxu0 0.0
    %764 = vmatpush1.msra.mxu0 0.0
    %765 = vmatprep.subr.mxu0 0.0
    %766 = vmatpush1.msra.mxu0 0.0
    %767 = vmatprep.subr.mxu0 0.0
    %768 = vmatpush1.msra.mxu0 0.0
    %769 = vmatprep.subr.mxu0 0.0
    %770 = vmatpush1.msra.mxu0 0.0
    %771 = vmatprep.subr.mxu0 0.0
    %772 = vmatpush1.msra.mxu0 0.0
    %773 = vmatprep.subr.mxu0 0.0
    %774 = vmatpush1.msra.mxu0 0.0
    %775 = vmatprep.subr.mxu0 0.0
    %776 = vmatpush1.msra.mxu0 0.0
    %777 = vmatprep.subr.mxu0 0.0
    %778 = vmatpush1.msra.mxu0 0.0
    %779 = vmatprep.subr.mxu0 0.0
    %780 = vmatpush1.msra.mxu0 0.0
    %781 = vmatprep.subr.mxu0 0.0
    %782 = vmatpush1.msra.mxu0 0.0
    %783 = vmatprep.subr.mxu0 0.0
    %784 = vmatpush1.msra.mxu0 0.0
    %785 = vmatprep.subr.mxu0 0.0
    %786 = vmatpush1.msra.mxu0 0.0
    %787 = vmatprep.subr.mxu0 0.0
    %788 = vmatpush1.msra.mxu0 0.0
    %789 = vmatprep.subr.mxu0 0.0
    %790 = vmatpush1.msra.mxu0 0.0
    %791 = vmatprep.subr.mxu0 0.0
    %792 = vmatpush1.msra.mxu0 0.0
    %793 = vmatprep.subr.mxu0 0.0
    %794 = vmatpush1.msra.mxu0 0.0
    %795 = vmatprep.subr.mxu0 0.0
    %796 = vmatpush1.msra.mxu0 0.0
    %797 = vmatprep.subr.mxu0 0.0
    %798 = vmatpush1.msra.mxu0 0.0
    %799 = vmatprep.subr.mxu0 0.0
    %800 = vmatpush1.msra.mxu0 0.0
    %801 = vmatprep.subr.mxu0 0.0
    %802 = vmatpush1.msra.mxu0 0.0
    %803 = vmatprep.subr.mxu0 0.0
    %804 = vmatpush1.msra.mxu0 0.0
    %805 = vmatprep.mubr.f32.mxu0 0.0
    %806 = vmatmul.mubr.f32.gmra.mrb[0].mxu0 %v730
    %v807 = vpop.f32.mrb[0].mxu0
    %v808 = vadd.f32 0.0, %v807
    %v809 = vpop.f32.mrb[0].mxu0
    %810 = vmatprep.mubr.f32.mxu0 0.0
    %811 = vmatmul.mubr.f32.gmra.mrb[0].mxu0 %v733
    %v812 = vpop.f32.mrb[0].mxu0
    %v813 = vadd.f32 0.0, %v812
    %v814 = vpop.f32.mrb[0].mxu0
    %815 = vmatprep.mubr.f32.mxu0 0.0
    %816 = vmatmul.mubr.f32.gmra.mrb[0].mxu0 %v736
    %v817 = vpop.f32.mrb[0].mxu0
    %v818 = vadd.f32 0.0, %v817
    %v819 = vpop.f32.mrb[0].mxu0
    %820 = vmatprep.mubr.f32.mxu0 0.0
    %821 = vmatmul.mubr.f32.gmra.mrb[0].mxu0 %v739
    %v822 = vpop.f32.mrb[0].mxu0
    %v823 = vadd.f32 0.0, %v822
    %v824 = vpop.f32.mrb[0].mxu0
    %825 = vdwg.mxu0
    %v826 = vpack.c.bf16 %v813, %v808
    %v827 = vpack.c.bf16 %v823, %v818
    %s828 = scalar_lea.vmem %s81, 48
    %v829 = vld [vmem:[%s828] sm:$0xff]
    %v830 = vld [vmem:[%s828 + $0x8] sm:$0xff]
    %v831 = vld [vmem:[%s828 + $0x10] sm:$0xff]
    %v832 = vld [vmem:[%s828 + $0x18] sm:$0xff]
    %v833 = vld [vmem:[%s828 + $0x20] sm:$0xff]
    %v834 = vld [vmem:[%s828 + $0x28] sm:$0xff]
    %v841 = vunpack.c.l.b16 %v829
    %v842 = vunpack.c.h.b16 %v829
    %v843 = vunpack.c.l.b16 %v830
    %v844 = vunpack.c.h.b16 %v830
    %v845 = vunpack.c.l.b16 %v831
    %v846 = vunpack.c.h.b16 %v831
    %v847 = vunpack.c.l.b16 %v832
    %v848 = vunpack.c.h.b16 %v832
    %v849 = vunpack.c.l.b16 %v833
    %v850 = vunpack.c.h.b16 %v833
    %v851 = vunpack.c.l.b16 %v834
    %v852 = vunpack.c.h.b16 %v834
    %v853 = vpack.c.b16 %v843, %v841
    %v854 = vpack.c.b16 %v844, %v842
    %v855 = vpack.c.b16 %v847, %v845
    %v856 = vpack.c.b16 %v848, %v846
    %v857 = vpack.c.b16 %v851, %v849
    %v858 = vpack.c.b16 %v852, %v850
    %vm865 = vcmask 392192
    %v867 = vsel %vm865, %v826, 0
    %v870 = vsel %vm865, %v827, 0
    %872 = vmatprep.subr.bf16.mxu0 %v854
    %873 = vmatpush1.bf16.msra.mxu0 %v853
    %874 = vmatprep.subr.bf16.mxu0 %v856
    %875 = vmatpush1.bf16.msra.mxu0 %v855
    %876 = vmatprep.subr.bf16.mxu0 %v858
    %877 = vmatpush1.bf16.msra.mxu0 %v857
    %878 = vmatprep.subr.bf16.mxu0 0
    %879 = vmatpush1.bf16.msra.mxu0 0
    %880 = vmatprep.subr.bf16.mxu0 0
    %881 = vmatpush1.bf16.msra.mxu0 0
    %882 = vmatprep.subr.bf16.mxu0 0
    %883 = vmatpush1.bf16.msra.mxu0 0
    %884 = vmatprep.subr.bf16.mxu0 0
    %885 = vmatpush1.bf16.msra.mxu0 0
    %886 = vmatprep.subr.bf16.mxu0 0
    %887 = vmatpush1.bf16.msra.mxu0 0
    %888 = vmatprep.subr.bf16.mxu0 0
    %889 = vmatpush1.bf16.msra.mxu0 0
    %890 = vmatprep.subr.bf16.mxu0 0
    %891 = vmatpush1.bf16.msra.mxu0 0
    %892 = vmatprep.subr.bf16.mxu0 0
    %893 = vmatpush1.bf16.msra.mxu0 0
    %894 = vmatprep.subr.bf16.mxu0 0
    %895 = vmatpush1.bf16.msra.mxu0 0
    %896 = vmatprep.subr.bf16.mxu0 0
    %897 = vmatpush1.bf16.msra.mxu0 0
    %898 = vmatprep.subr.bf16.mxu0 0
    %899 = vmatpush1.bf16.msra.mxu0 0
    %900 = vmatprep.subr.bf16.mxu0 0
    %901 = vmatpush1.bf16.msra.mxu0 0
    %902 = vmatprep.subr.bf16.mxu0 0
    %903 = vmatpush1.bf16.msra.mxu0 0
    %904 = vmatprep.mubr.bf16.mxu0 0
    %905 = vmatmul.mubr.bf16.gmra.mrb[0].mxu0 %v867
    %v906 = vpop.f32.mrb[0].mxu0
    %v907 = vadd.f32 0.0, %v906
    %v908 = vpop.f32.mrb[0].mxu0
    %v909 = vadd.f32 0.0, %v908
    %v910 = vpop.f32.mrb[0].mxu0
    %v911 = vadd.f32 0.0, %v910
    %v912 = vpop.f32.mrb[0].mxu0
    %v913 = vadd.f32 0.0, %v912
    %914 = vmatprep.mubr.bf16.mxu0 0
    %915 = vmatmul.mubr.bf16.gmra.mrb[0].mxu0 %v870
    %v916 = vpop.f32.mrb[0].mxu0
    %v917 = vadd.f32 0.0, %v916
    %v918 = vpop.f32.mrb[0].mxu0
    %v919 = vadd.f32 0.0, %v918
    %v920 = vpop.f32.mrb[0].mxu0
    %v921 = vadd.f32 0.0, %v920
    %v922 = vpop.f32.mrb[0].mxu0
    %v923 = vadd.f32 0.0, %v922
    %924 = vdwg.mxu0
    %v931 = vunpack.c.l.b16 %v718
    %v932 = vunpack.c.h.b16 %v718
    %v933 = vunpack.c.l.b16 %v719
    %v934 = vunpack.c.h.b16 %v719
    %v935 = vunpack.c.l.b16 %v720
    %v936 = vunpack.c.h.b16 %v720
    %v937 = vunpack.c.l.b16 %v721
    %v938 = vunpack.c.h.b16 %v721
    %v939 = vunpack.c.l.b16 %v722
    %v940 = vunpack.c.h.b16 %v722
    %v941 = vunpack.c.l.b16 %v723
    %v942 = vunpack.c.h.b16 %v723
    %v943 = vpack.c.b16 %v933, %v931
    %v944 = vpack.c.b16 %v934, %v932
    %v945 = vpack.c.b16 %v937, %v935
    %v946 = vpack.c.b16 %v938, %v936
    %v947 = vpack.c.b16 %v941, %v939
    %v948 = vpack.c.b16 %v942, %v940
    %v956 = vsel %vm865, %v716, 0
    %v959 = vsel %vm865, %v717, 0
    %961 = vmatprep.subr.bf16.mxu0 %v944
    %962 = vmatpush1.bf16.msra.mxu0 %v943
    %963 = vmatprep.subr.bf16.mxu0 %v946
    %964 = vmatpush1.bf16.msra.mxu0 %v945
    %965 = vmatprep.subr.bf16.mxu0 %v948
    %966 = vmatpush1.bf16.msra.mxu0 %v947
    %967 = vmatprep.subr.bf16.mxu0 0
    %968 = vmatpush1.bf16.msra.mxu0 0
    %969 = vmatprep.subr.bf16.mxu0 0
    %970 = vmatpush1.bf16.msra.mxu0 0
    %971 = vmatprep.subr.bf16.mxu0 0
    %972 = vmatpush1.bf16.msra.mxu0 0
    %973 = vmatprep.subr.bf16.mxu0 0
    %974 = vmatpush1.bf16.msra.mxu0 0
    %975 = vmatprep.subr.bf16.mxu0 0
    %976 = vmatpush1.bf16.msra.mxu0 0
    %977 = vmatprep.subr.bf16.mxu0 0
    %978 = vmatpush1.bf16.msra.mxu0 0
    %979 = vmatprep.subr.bf16.mxu0 0
    %980 = vmatpush1.bf16.msra.mxu0 0
    %981 = vmatprep.subr.bf16.mxu0 0
    %982 = vmatpush1.bf16.msra.mxu0 0
    %983 = vmatprep.subr.bf16.mxu0 0
    %984 = vmatpush1.bf16.msra.mxu0 0
    %985 = vmatprep.subr.bf16.mxu0 0
    %986 = vmatpush1.bf16.msra.mxu0 0
    %987 = vmatprep.subr.bf16.mxu0 0
    %988 = vmatpush1.bf16.msra.mxu0 0
    %989 = vmatprep.subr.bf16.mxu0 0
    %990 = vmatpush1.bf16.msra.mxu0 0
    %991 = vmatprep.subr.bf16.mxu0 0
    %992 = vmatpush1.bf16.msra.mxu0 0
    %993 = vmatprep.mubr.bf16.mxu0 0
    %994 = vmatmul.mubr.bf16.gmra.mrb[0].mxu0 %v956
    %v995 = vpop.f32.mrb[0].mxu0
    %v996 = vadd.f32 %v907, %v995
    %v997 = vpop.f32.mrb[0].mxu0
    %v998 = vadd.f32 %v909, %v997
    %v999 = vpop.f32.mrb[0].mxu0
    %v1000 = vadd.f32 %v911, %v999
    %v1001 = vpop.f32.mrb[0].mxu0
    %v1002 = vadd.f32 %v913, %v1001
    %1003 = vmatprep.mubr.bf16.mxu0 0
    %1004 = vmatmul.mubr.bf16.gmra.mrb[0].mxu0 %v959
    %v1005 = vpop.f32.mrb[0].mxu0
    %v1006 = vadd.f32 %v917, %v1005
    %v1007 = vpop.f32.mrb[0].mxu0
    %v1008 = vadd.f32 %v919, %v1007
    %v1009 = vpop.f32.mrb[0].mxu0
    %v1010 = vadd.f32 %v921, %v1009
    %v1011 = vpop.f32.mrb[0].mxu0
    %v1012 = vadd.f32 %v923, %v1011
    %1013 = vdwg.mxu0
    %s1014 = scalar_lea.vmem %s87, 64
    %v1015 = vld [vmem:[%s1014] sm:$0xff]
    %v1016 = vld [vmem:[%s1014 + $0x8] sm:$0xff]
    %v1017 = vld [vmem:[%s1014 + $0x10] sm:$0xff]
    %v1018 = vld [vmem:[%s1014 + $0x18] sm:$0xff]
    %v1020 = vsel %vm618, %v1015, 0
    %v1023 = vsel %vm618, %v1016, 0
    %v1026 = vsel %vm618, %v1017, 0
    %v1029 = vsel %vm618, %v1018, 0
    %1031 = vmatprep.subr.mxu0 0.0
    %1032 = vmatpush1.msra.mxu0 %v610
    %1033 = vmatprep.subr.mxu0 0.0
    %1034 = vmatpush1.msra.mxu0 %v611
    %1035 = vmatprep.subr.mxu0 0.0
    %1036 = vmatpush1.msra.mxu0 %v612
    %1037 = vmatprep.subr.mxu0 0.0
    %1038 = vmatpush1.msra.mxu0 %v613
    %1039 = vmatprep.subr.mxu0 0.0
    %1040 = vmatpush1.msra.mxu0 0.0
    %1041 = vmatprep.subr.mxu0 0.0
    %1042 = vmatpush1.msra.mxu0 0.0
    %1043 = vmatprep.subr.mxu0 0.0
    %1044 = vmatpush1.msra.mxu0 0.0
    %1045 = vmatprep.subr.mxu0 0.0
    %1046 = vmatpush1.msra.mxu0 0.0
    %1047 = vmatprep.subr.mxu0 0.0
    %1048 = vmatpush1.msra.mxu0 0.0
    %1049 = vmatprep.subr.mxu0 0.0
    %1050 = vmatpush1.msra.mxu0 0.0
    %1051 = vmatprep.subr.mxu0 0.0
    %1052 = vmatpush1.msra.mxu0 0.0
    %1053 = vmatprep.subr.mxu0 0.0
    %1054 = vmatpush1.msra.mxu0 0.0
    %1055 = vmatprep.subr.mxu0 0.0
    %1056 = vmatpush1.msra.mxu0 0.0
    %1057 = vmatprep.subr.mxu0 0.0
    %1058 = vmatpush1.msra.mxu0 0.0
    %1059 = vmatprep.subr.mxu0 0.0
    %1060 = vmatpush1.msra.mxu0 0.0
    %1061 = vmatprep.subr.mxu0 0.0
    %1062 = vmatpush1.msra.mxu0 0.0
    %1063 = vmatprep.subr.mxu0 0.0
    %1064 = vmatpush1.msra.mxu0 0.0
    %1065 = vmatprep.subr.mxu0 0.0
    %1066 = vmatpush1.msra.mxu0 0.0
    %1067 = vmatprep.subr.mxu0 0.0
    %1068 = vmatpush1.msra.mxu0 0.0
    %1069 = vmatprep.subr.mxu0 0.0
    %1070 = vmatpush1.msra.mxu0 0.0
    %1071 = vmatprep.subr.mxu0 0.0
    %1072 = vmatpush1.msra.mxu0 0.0
    %1073 = vmatprep.subr.mxu0 0.0
    %1074 = vmatpush1.msra.mxu0 0.0
    %1075 = vmatprep.subr.mxu0 0.0
    %1076 = vmatpush1.msra.mxu0 0.0
    %1077 = vmatprep.subr.mxu0 0.0
    %1078 = vmatpush1.msra.mxu0 0.0
    %1079 = vmatprep.subr.mxu0 0.0
    %1080 = vmatpush1.msra.mxu0 0.0
    %1081 = vmatprep.subr.mxu0 0.0
    %1082 = vmatpush1.msra.mxu0 0.0
    %1083 = vmatprep.subr.mxu0 0.0
    %1084 = vmatpush1.msra.mxu0 0.0
    %1085 = vmatprep.subr.mxu0 0.0
    %1086 = vmatpush1.msra.mxu0 0.0
    %1087 = vmatprep.subr.mxu0 0.0
    %1088 = vmatpush1.msra.mxu0 0.0
    %1089 = vmatprep.subr.mxu0 0.0
    %1090 = vmatpush1.msra.mxu0 0.0
    %1091 = vmatprep.subr.mxu0 0.0
    %1092 = vmatpush1.msra.mxu0 0.0
    %1093 = vmatprep.subr.mxu0 0.0
    %1094 = vmatpush1.msra.mxu0 0.0
    %1095 = vmatprep.mubr.f32.mxu0 0.0
    %1096 = vmatmul.mubr.f32.gmra.mrb[0].mxu0 %v1020
    %v1097 = vpop.f32.mrb[0].mxu0
    %v1098 = vadd.f32 0.0, %v1097
    %v1099 = vpop.f32.mrb[0].mxu0
    %1100 = vmatprep.mubr.f32.mxu0 0.0
    %1101 = vmatmul.mubr.f32.gmra.mrb[0].mxu0 %v1023
    %v1102 = vpop.f32.mrb[0].mxu0
    %v1103 = vadd.f32 0.0, %v1102
    %v1104 = vpop.f32.mrb[0].mxu0
    %1105 = vmatprep.mubr.f32.mxu0 0.0
    %1106 = vmatmul.mubr.f32.gmra.mrb[0].mxu0 %v1026
    %v1107 = vpop.f32.mrb[0].mxu0
    %v1108 = vadd.f32 0.0, %v1107
    %v1109 = vpop.f32.mrb[0].mxu0
    %1110 = vmatprep.mubr.f32.mxu0 0.0
    %1111 = vmatmul.mubr.f32.gmra.mrb[0].mxu0 %v1029
    %v1112 = vpop.f32.mrb[0].mxu0
    %v1113 = vadd.f32 0.0, %v1112
    %v1114 = vpop.f32.mrb[0].mxu0
    %1115 = vdwg.mxu0
    %v1116 = vpack.c.bf16 %v1103, %v1098
    %v1117 = vpack.c.bf16 %v1113, %v1108
    %s1118 = scalar_lea.vmem %s81, 96
    %v1119 = vld [vmem:[%s1118] sm:$0xff]
    %v1120 = vld [vmem:[%s1118 + $0x8] sm:$0xff]
    %v1121 = vld [vmem:[%s1118 + $0x10] sm:$0xff]
    %v1122 = vld [vmem:[%s1118 + $0x18] sm:$0xff]
    %v1123 = vld [vmem:[%s1118 + $0x20] sm:$0xff]
    %v1124 = vld [vmem:[%s1118 + $0x28] sm:$0xff]
    %v1131 = vunpack.c.l.b16 %v1119
    %v1132 = vunpack.c.h.b16 %v1119
    %v1133 = vunpack.c.l.b16 %v1120
    %v1134 = vunpack.c.h.b16 %v1120
    %v1135 = vunpack.c.l.b16 %v1121
    %v1136 = vunpack.c.h.b16 %v1121
    %v1137 = vunpack.c.l.b16 %v1122
    %v1138 = vunpack.c.h.b16 %v1122
    %v1139 = vunpack.c.l.b16 %v1123
    %v1140 = vunpack.c.h.b16 %v1123
    %v1141 = vunpack.c.l.b16 %v1124
    %v1142 = vunpack.c.h.b16 %v1124
    %v1143 = vpack.c.b16 %v1133, %v1131
    %v1144 = vpack.c.b16 %v1134, %v1132
    %v1145 = vpack.c.b16 %v1137, %v1135
    %v1146 = vpack.c.b16 %v1138, %v1136
    %v1147 = vpack.c.b16 %v1141, %v1139
    %v1148 = vpack.c.b16 %v1142, %v1140
    %v1156 = vsel %vm865, %v1116, 0
    %v1159 = vsel %vm865, %v1117, 0
    %1161 = vmatprep.subr.bf16.mxu0 %v1144
    %1162 = vmatpush1.bf16.msra.mxu0 %v1143
    %1163 = vmatprep.subr.bf16.mxu0 %v1146
    %1164 = vmatpush1.bf16.msra.mxu0 %v1145
    %1165 = vmatprep.subr.bf16.mxu0 %v1148
    %1166 = vmatpush1.bf16.msra.mxu0 %v1147
    %1167 = vmatprep.subr.bf16.mxu0 0
    %1168 = vmatpush1.bf16.msra.mxu0 0
    %1169 = vmatprep.subr.bf16.mxu0 0
    %1170 = vmatpush1.bf16.msra.mxu0 0
    %1171 = vmatprep.subr.bf16.mxu0 0
    %1172 = vmatpush1.bf16.msra.mxu0 0
    %1173 = vmatprep.subr.bf16.mxu0 0
    %1174 = vmatpush1.bf16.msra.mxu0 0
    %1175 = vmatprep.subr.bf16.mxu0 0
    %1176 = vmatpush1.bf16.msra.mxu0 0
    %1177 = vmatprep.subr.bf16.mxu0 0
    %1178 = vmatpush1.bf16.msra.mxu0 0
    %1179 = vmatprep.subr.bf16.mxu0 0
    %1180 = vmatpush1.bf16.msra.mxu0 0
    %1181 = vmatprep.subr.bf16.mxu0 0
    %1182 = vmatpush1.bf16.msra.mxu0 0
    %1183 = vmatprep.subr.bf16.mxu0 0
    %1184 = vmatpush1.bf16.msra.mxu0 0
    %1185 = vmatprep.subr.bf16.mxu0 0
    %1186 = vmatpush1.bf16.msra.mxu0 0
    %1187 = vmatprep.subr.bf16.mxu0 0
    %1188 = vmatpush1.bf16.msra.mxu0 0
    %1189 = vmatprep.subr.bf16.mxu0 0
    %1190 = vmatpush1.bf16.msra.mxu0 0
    %1191 = vmatprep.subr.bf16.mxu0 0
    %1192 = vmatpush1.bf16.msra.mxu0 0
    %1193 = vmatprep.mubr.bf16.mxu0 0
    %1194 = vmatmul.mubr.bf16.gmra.mrb[0].mxu0 %v1156
    %v1195 = vpop.f32.mrb[0].mxu0
    %v1196 = vadd.f32 0.0, %v1195
    %v1197 = vpop.f32.mrb[0].mxu0
    %v1198 = vadd.f32 0.0, %v1197
    %v1199 = vpop.f32.mrb[0].mxu0
    %v1200 = vadd.f32 0.0, %v1199
    %v1201 = vpop.f32.mrb[0].mxu0
    %v1202 = vadd.f32 0.0, %v1201
    %1203 = vmatprep.mubr.bf16.mxu0 0
    %1204 = vmatmul.mubr.bf16.gmra.mrb[0].mxu0 %v1159
    %v1205 = vpop.f32.mrb[0].mxu0
    %v1206 = vadd.f32 0.0, %v1205
    %v1207 = vpop.f32.mrb[0].mxu0
    %v1208 = vadd.f32 0.0, %v1207
    %v1209 = vpop.f32.mrb[0].mxu0
    %v1210 = vadd.f32 0.0, %v1209
    %v1211 = vpop.f32.mrb[0].mxu0
    %v1212 = vadd.f32 0.0, %v1211
    %1213 = vdwg.mxu0
    %v1214 = vadd.f32 %v996, %v1196
    %v1215 = vadd.f32 %v998, %v1198
    %v1216 = vadd.f32 %v1000, %v1200
    %v1217 = vadd.f32 %v1002, %v1202
    %v1218 = vadd.f32 %v1006, %v1206
    %v1219 = vadd.f32 %v1008, %v1208
    %v1220 = vadd.f32 %v1010, %v1210
    %v1221 = vadd.f32 %v1012, %v1212
    %v1222 = vld [vmem:[#allocation49] sm:$0xff]
    %v1223 = vld [vmem:[#allocation49 + $0x8] sm:$0xff]
    %v1224 = vld [vmem:[#allocation49 + $0x10] sm:$0xff]
    %v1225 = vld [vmem:[#allocation49 + $0x18] sm:$0xff]
    %v1226 = vld [vmem:[#allocation49 + $0x20] sm:$0xff]
    %v1227 = vld [vmem:[#allocation49 + $0x28] sm:$0xff]
    %v1228 = vld [vmem:[#allocation49 + $0x30] sm:$0xff]
    %v1229 = vld [vmem:[#allocation49 + $0x38] sm:$0xff]
    %v1230 = vld [vmem:[#allocation49 + $0x40] sm:$0xff]
    %v1231 = vld [vmem:[#allocation49 + $0x48] sm:$0xff]
    %v1232 = vld [vmem:[#allocation49 + $0x50] sm:$0xff]
    %v1233 = vld [vmem:[#allocation49 + $0x58] sm:$0xff]
    %v1234 = vld [vmem:[#allocation49 + $0x60] sm:$0xff]
    %v1235 = vld [vmem:[#allocation49 + $0x68] sm:$0xff]
    %v1236 = vld [vmem:[#allocation49 + $0x70] sm:$0xff]
    %v1237 = vld [vmem:[#allocation49 + $0x78] sm:$0xff]
    %v1238 = vld [vmem:[#allocation49 + $0x80] sm:$0xff]
    %v1239 = vld [vmem:[#allocation49 + $0x88] sm:$0xff]
    %v1240 = vld [vmem:[#allocation49 + $0x90] sm:$0xff]
    %v1241 = vld [vmem:[#allocation49 + $0x98] sm:$0xff]
    %v1242 = vld [vmem:[#allocation49 + $0xa0] sm:$0xff]
    %v1243 = vld [vmem:[#allocation49 + $0xa8] sm:$0xff]
    %v1244 = vld [vmem:[#allocation49 + $0xb0] sm:$0xff]
    %v1245 = vld [vmem:[#allocation49 + $0xb8] sm:$0xff]
    %v1246 = vld [vmem:[#allocation49 + $0xc0] sm:$0xff]
    %v1247 = vld [vmem:[#allocation49 + $0xc8] sm:$0xff]
    %v1248 = vld [vmem:[#allocation49 + $0xd0] sm:$0xff]
    %v1249 = vld [vmem:[#allocation49 + $0xd8] sm:$0xff]
    %v1250 = vld [vmem:[#allocation49 + $0xe0] sm:$0xff]
    %v1251 = vld [vmem:[#allocation49 + $0xe8] sm:$0xff]
    %v1252 = vld [vmem:[#allocation49 + $0xf0] sm:$0xff]
    %v1253 = vld [vmem:[#allocation49 + $0xf8] sm:$0xff]
    %v1254 = vld [vmem:[#allocation49 + $0x100] sm:$0xff]
    %v1255 = vld [vmem:[#allocation49 + $0x108] sm:$0xff]
    %v1256 = vld [vmem:[#allocation49 + $0x110] sm:$0xff]
    %v1257 = vld [vmem:[#allocation49 + $0x118] sm:$0xff]
    %v1258 = vld [vmem:[#allocation49 + $0x120] sm:$0xff]
    %v1259 = vld [vmem:[#allocation49 + $0x128] sm:$0xff]
    %v1260 = vld [vmem:[#allocation49 + $0x130] sm:$0xff]
    %v1261 = vld [vmem:[#allocation49 + $0x138] sm:$0xff]
    %v1262 = vld [vmem:[#allocation49 + $0x140] sm:$0xff]
    %v1263 = vld [vmem:[#allocation49 + $0x148] sm:$0xff]
    %v1264 = vld [vmem:[#allocation49 + $0x150] sm:$0xff]
    %v1265 = vld [vmem:[#allocation49 + $0x158] sm:$0xff]
    %v1266 = vld [vmem:[#allocation49 + $0x160] sm:$0xff]
    %v1267 = vld [vmem:[#allocation49 + $0x168] sm:$0xff]
    %v1268 = vld [vmem:[#allocation49 + $0x170] sm:$0xff]
    %v1269 = vld [vmem:[#allocation49 + $0x178] sm:$0xff]
    %v1270 = vld [vmem:[#allocation49 + $0x180] sm:$0xff]
    %v1271 = vld [vmem:[#allocation49 + $0x188] sm:$0xff]
    %v1272 = vld [vmem:[#allocation49 + $0x190] sm:$0xff]
    %v1273 = vld [vmem:[#allocation49 + $0x198] sm:$0xff]
    %v1274 = vld [vmem:[#allocation49 + $0x1a0] sm:$0xff]
    %v1275 = vld [vmem:[#allocation49 + $0x1a8] sm:$0xff]
    %v1276 = vld [vmem:[#allocation49 + $0x1b0] sm:$0xff]
    %v1277 = vld [vmem:[#allocation49 + $0x1b8] sm:$0xff]
    %v1278 = vld [vmem:[#allocation49 + $0x1c0] sm:$0xff]
    %v1279 = vld [vmem:[#allocation49 + $0x1c8] sm:$0xff]
    %v1280 = vld [vmem:[#allocation49 + $0x1d0] sm:$0xff]
    %v1281 = vld [vmem:[#allocation49 + $0x1d8] sm:$0xff]
    %v1282 = vld [vmem:[#allocation49 + $0x1e0] sm:$0xff]
    %v1283 = vld [vmem:[#allocation49 + $0x1e8] sm:$0xff]
    %v1284 = vld [vmem:[#allocation49 + $0x1f0] sm:$0xff]
    %v1285 = vld [vmem:[#allocation49 + $0x1f8] sm:$0xff]
    %v1286 = vadd.f32 %v1214, %v1216
    %v1287 = vadd.f32 %v1286, %v1218
    %v1288 = vadd.f32 %v1287, %v1220
    %v1289 = vrot.slane %v1288, 4
    %v1290 = vadd.f32 %v1288, %v1289
    %v1291 = vrot.slane %v1290, 2
    %v1292 = vadd.f32 %v1290, %v1291
    %v1293 = vrot.slane %v1292, 1
    %v1294 = vadd.f32 %v1292, %v1293
    %v1295 = vadd.f32 %v1215, %v1217
    %v1296 = vadd.f32 %v1295, %v1219
    %v1297 = vadd.f32 %v1296, %v1221
    %v1298 = vrot.slane %v1297, 4
    %v1299 = vadd.f32 %v1297, %v1298
    %v1300 = vrot.slane %v1299, 2
    %v1301 = vadd.f32 %v1299, %v1300
    %v1302 = vrot.slane %v1301, 1
    %v1303 = vadd.f32 %v1301, %v1302
    %1304 = vmatprep.subr.mxu0 %v1223
    %1305 = vmatpush1.msra.mxu0 %v1222
    %1306 = vmatprep.subr.mxu0 %v1225
    %1307 = vmatpush1.msra.mxu0 %v1224
    %1308 = vmatprep.subr.mxu0 %v1227
    %1309 = vmatpush1.msra.mxu0 %v1226
    %1310 = vmatprep.subr.mxu0 %v1229
    %1311 = vmatpush1.msra.mxu0 %v1228
    %1312 = vmatprep.subr.mxu0 %v1231
    %1313 = vmatpush1.msra.mxu0 %v1230
    %1314 = vmatprep.subr.mxu0 %v1233
    %1315 = vmatpush1.msra.mxu0 %v1232
    %1316 = vmatprep.subr.mxu0 %v1235
    %1317 = vmatpush1.msra.mxu0 %v1234
    %1318 = vmatprep.subr.mxu0 %v1237
    %1319 = vmatpush1.msra.mxu0 %v1236
    %1320 = vmatprep.subr.mxu0 %v1239
    %1321 = vmatpush1.msra.mxu0 %v1238
    %1322 = vmatprep.subr.mxu0 %v1241
    %1323 = vmatpush1.msra.mxu0 %v1240
    %1324 = vmatprep.subr.mxu0 %v1243
    %1325 = vmatpush1.msra.mxu0 %v1242
    %1326 = vmatprep.subr.mxu0 %v1245
    %1327 = vmatpush1.msra.mxu0 %v1244
    %1328 = vmatprep.subr.mxu0 %v1247
    %1329 = vmatpush1.msra.mxu0 %v1246
    %1330 = vmatprep.subr.mxu0 %v1249
    %1331 = vmatpush1.msra.mxu0 %v1248
    %1332 = vmatprep.subr.mxu0 %v1251
    %1333 = vmatpush1.msra.mxu0 %v1250
    %1334 = vmatprep.subr.mxu0 %v1253
    %1335 = vmatpush1.msra.mxu0 %v1252
    %1336 = vmatprep.subr.mxu0 %v1255
    %1337 = vmatpush1.msra.mxu0 %v1254
    %1338 = vmatprep.subr.mxu0 %v1257
    %1339 = vmatpush1.msra.mxu0 %v1256
    %1340 = vmatprep.subr.mxu0 %v1259
    %1341 = vmatpush1.msra.mxu0 %v1258
    %1342 = vmatprep.subr.mxu0 %v1261
    %1343 = vmatpush1.msra.mxu0 %v1260
    %1344 = vmatprep.subr.mxu0 %v1263
    %1345 = vmatpush1.msra.mxu0 %v1262
    %1346 = vmatprep.subr.mxu0 %v1265
    %1347 = vmatpush1.msra.mxu0 %v1264
    %1348 = vmatprep.subr.mxu0 %v1267
    %1349 = vmatpush1.msra.mxu0 %v1266
    %1350 = vmatprep.subr.mxu0 %v1269
    %1351 = vmatpush1.msra.mxu0 %v1268
    %1352 = vmatprep.subr.mxu0 %v1271
    %1353 = vmatpush1.msra.mxu0 %v1270
    %1354 = vmatprep.subr.mxu0 %v1273
    %1355 = vmatpush1.msra.mxu0 %v1272
    %1356 = vmatprep.subr.mxu0 %v1275
    %1357 = vmatpush1.msra.mxu0 %v1274
    %1358 = vmatprep.subr.mxu0 %v1277
    %1359 = vmatpush1.msra.mxu0 %v1276
    %1360 = vmatprep.subr.mxu0 %v1279
    %1361 = vmatpush1.msra.mxu0 %v1278
    %1362 = vmatprep.subr.mxu0 %v1281
    %1363 = vmatpush1.msra.mxu0 %v1280
    %1364 = vmatprep.subr.mxu0 %v1283
    %1365 = vmatpush1.msra.mxu0 %v1282
    %1366 = vmatprep.subr.mxu0 %v1285
    %1367 = vmatpush1.msra.mxu0 %v1284
    %1368 = vmatprep.mubr.f32.mxu0 %v1303
    %1369 = vmatmul.mubr.f32.gmra.mrb[0].mxu0 %v1294
    %v1370 = vpop.f32.mrb[0].mxu0
    %v1371 = vadd.f32 0.0, %v1370
    %v1372 = vpop.f32.mrb[0].mxu0
    %v1373 = vadd.f32 0.0, %v1372
    %1374 = vdwg.mxu0
    %v1375 = vlaneseq
    %v1376 = vshrl.u32 %v1375, 7
    %v1377 = vsub.s32 0, %v1376
    %v1378 = vrot.slane %v1371, %v1377
    %v1379 = vlaneseq
    %v1380 = vshrl.u32 %v1379, 7
    %v1381 = vsub.s32 0, %v1380
    %v1382 = vrot.slane %v1373, %v1381
    %v1383 = vsub.f32 %v1214, %v1378
    %v1384 = vsub.f32 %v1215, %v1382
    %v1385 = vsub.f32 %v1216, %v1378
    %v1386 = vsub.f32 %v1217, %v1382
    %v1387 = vsub.f32 %v1218, %v1378
    %v1388 = vsub.f32 %v1219, %v1382
    %v1389 = vsub.f32 %v1220, %v1378
    %v1390 = vsub.f32 %v1221, %v1382
    %v1391 = vmul.f32 %v1383, %v1383
    %v1392 = vmul.f32 %v1384, %v1384
    %v1393 = vmul.f32 %v1385, %v1385
    %v1394 = vmul.f32 %v1386, %v1386
    %v1395 = vmul.f32 %v1387, %v1387
    %v1396 = vmul.f32 %v1388, %v1388
    %v1397 = vmul.f32 %v1389, %v1389
    %v1398 = vmul.f32 %v1390, %v1390
    %v1399 = vadd.f32 %v1391, %v1393
    %v1400 = vadd.f32 %v1399, %v1395
    %v1401 = vadd.f32 %v1400, %v1397
    %v1402 = vrot.slane %v1401, 4
    %v1403 = vadd.f32 %v1401, %v1402
    %v1404 = vrot.slane %v1403, 2
    %v1405 = vadd.f32 %v1403, %v1404
    %v1406 = vrot.slane %v1405, 1
    %v1407 = vadd.f32 %v1405, %v1406
    %v1408 = vadd.f32 %v1392, %v1394
    %v1409 = vadd.f32 %v1408, %v1396
    %v1410 = vadd.f32 %v1409, %v1398
    %v1411 = vrot.slane %v1410, 4
    %v1412 = vadd.f32 %v1410, %v1411
    %v1413 = vrot.slane %v1412, 2
    %v1414 = vadd.f32 %v1412, %v1413
    %v1415 = vrot.slane %v1414, 1
    %v1416 = vadd.f32 %v1414, %v1415
    %1417 = vmatprep.subr.mxu0 %v1223
    %1418 = vmatpush1.msra.mxu0 %v1222
    %1419 = vmatprep.subr.mxu0 %v1225
    %1420 = vmatpush1.msra.mxu0 %v1224
    %1421 = vmatprep.subr.mxu0 %v1227
    %1422 = vmatpush1.msra.mxu0 %v1226
    %1423 = vmatprep.subr.mxu0 %v1229
    %1424 = vmatpush1.msra.mxu0 %v1228
    %1425 = vmatprep.subr.mxu0 %v1231
    %1426 = vmatpush1.msra.mxu0 %v1230
    %1427 = vmatprep.subr.mxu0 %v1233
    %1428 = vmatpush1.msra.mxu0 %v1232
    %1429 = vmatprep.subr.mxu0 %v1235
    %1430 = vmatpush1.msra.mxu0 %v1234
    %1431 = vmatprep.subr.mxu0 %v1237
    %1432 = vmatpush1.msra.mxu0 %v1236
    %1433 = vmatprep.subr.mxu0 %v1239
    %1434 = vmatpush1.msra.mxu0 %v1238
    %1435 = vmatprep.subr.mxu0 %v1241
    %1436 = vmatpush1.msra.mxu0 %v1240
    %1437 = vmatprep.subr.mxu0 %v1243
    %1438 = vmatpush1.msra.mxu0 %v1242
    %1439 = vmatprep.subr.mxu0 %v1245
    %1440 = vmatpush1.msra.mxu0 %v1244
    %1441 = vmatprep.subr.mxu0 %v1247
    %1442 = vmatpush1.msra.mxu0 %v1246
    %1443 = vmatprep.subr.mxu0 %v1249
    %1444 = vmatpush1.msra.mxu0 %v1248
    %1445 = vmatprep.subr.mxu0 %v1251
    %1446 = vmatpush1.msra.mxu0 %v1250
    %1447 = vmatprep.subr.mxu0 %v1253
    %1448 = vmatpush1.msra.mxu0 %v1252
    %1449 = vmatprep.subr.mxu0 %v1255
    %1450 = vmatpush1.msra.mxu0 %v1254
    %1451 = vmatprep.subr.mxu0 %v1257
    %1452 = vmatpush1.msra.mxu0 %v1256
    %1453 = vmatprep.subr.mxu0 %v1259
    %1454 = vmatpush1.msra.mxu0 %v1258
    %1455 = vmatprep.subr.mxu0 %v1261
    %1456 = vmatpush1.msra.mxu0 %v1260
    %1457 = vmatprep.subr.mxu0 %v1263
    %1458 = vmatpush1.msra.mxu0 %v1262
    %1459 = vmatprep.subr.mxu0 %v1265
    %1460 = vmatpush1.msra.mxu0 %v1264
    %1461 = vmatprep.subr.mxu0 %v1267
    %1462 = vmatpush1.msra.mxu0 %v1266
    %1463 = vmatprep.subr.mxu0 %v1269
    %1464 = vmatpush1.msra.mxu0 %v1268
    %1465 = vmatprep.subr.mxu0 %v1271
    %1466 = vmatpush1.msra.mxu0 %v1270
    %1467 = vmatprep.subr.mxu0 %v1273
    %1468 = vmatpush1.msra.mxu0 %v1272
    %1469 = vmatprep.subr.mxu0 %v1275
    %1470 = vmatpush1.msra.mxu0 %v1274
    %1471 = vmatprep.subr.mxu0 %v1277
    %1472 = vmatpush1.msra.mxu0 %v1276
    %1473 = vmatprep.subr.mxu0 %v1279
    %1474 = vmatpush1.msra.mxu0 %v1278
    %1475 = vmatprep.subr.mxu0 %v1281
    %1476 = vmatpush1.msra.mxu0 %v1280
    %1477 = vmatprep.subr.mxu0 %v1283
    %1478 = vmatpush1.msra.mxu0 %v1282
    %1479 = vmatprep.subr.mxu0 %v1285
    %1480 = vmatpush1.msra.mxu0 %v1284
    %1481 = vmatprep.mubr.f32.mxu0 %v1416
    %1482 = vmatmul.mubr.f32.gmra.mrb[0].mxu0 %v1407
    %v1483 = vpop.f32.mrb[0].mxu0
    %v1484 = vadd.f32 1e-05, %v1483
    %v1485 = vpop.f32.mrb[0].mxu0
    %v1486 = vadd.f32 1e-05, %v1485
    %1487 = vdwg.mxu0
    %v1488 = vrsqrt.pop %v1484
    %v1489 = vrsqrt.pop %v1486
    %v1490 = vld [vmem:[%s85] sm:$0x3]
    %v1492 = vlaneseq
    %v1493 = vshrl.u32 %v1492, 7
    %v1494 = vsub.s32 0, %v1493
    %v1495 = vrot.slane %v1490, %v1494
    %v1496 = vlaneseq
    %v1497 = vshrl.u32 %v1496, 7
    %v1498 = vsub.s32 1, %v1497
    %v1499 = vrot.slane %v1490, %v1498
    %v1502 = vmul.f32 %v1488, %v1495
    %v1503 = vmul.f32 %v1489, %v1499
    %v1504 = vlaneseq
    %v1505 = vshrl.u32 %v1504, 7
    %v1506 = vsub.s32 0, %v1505
    %v1507 = vrot.slane %v1502, %v1506
    %v1508 = vlaneseq
    %v1509 = vshrl.u32 %v1508, 7
    %v1510 = vsub.s32 0, %v1509
    %v1511 = vrot.slane %v1503, %v1510
    %v1512 = vmul.f32 %v1383, %v1507
    %v1513 = vmul.f32 %v1384, %v1511
    %v1514 = vmul.f32 %v1385, %v1507
    %v1515 = vmul.f32 %v1386, %v1511
    %v1516 = vmul.f32 %v1387, %v1507
    %v1517 = vmul.f32 %v1388, %v1511
    %v1518 = vmul.f32 %v1389, %v1507
    %v1519 = vmul.f32 %v1390, %v1511
    %v1520 = vld [vmem:[%s83] sm:$0x3]
    %v1522 = vlaneseq
    %v1523 = vshrl.u32 %v1522, 7
    %v1524 = vsub.s32 0, %v1523
    %v1525 = vrot.slane %v1520, %v1524
    %v1526 = vlaneseq
    %v1527 = vshrl.u32 %v1526, 7
    %v1528 = vsub.s32 1, %v1527
    %v1529 = vrot.slane %v1520, %v1528
    %v1532 = vadd.f32 %v1512, %v1525
    %v1533 = vadd.f32 %v1513, %v1529
    %v1534 = vadd.f32 %v1514, %v1525
    %v1535 = vadd.f32 %v1515, %v1529
    %v1536 = vadd.f32 %v1516, %v1525
    %v1537 = vadd.f32 %v1517, %v1529
    %v1538 = vadd.f32 %v1518, %v1525
    %v1539 = vadd.f32 %v1519, %v1529
    %v1540 = vmax.f32 %v1532, 0.0
    %v1541 = vmax.f32 %v1533, 0.0
    %v1542 = vmax.f32 %v1534, 0.0
    %v1543 = vmax.f32 %v1535, 0.0
    %v1544 = vmax.f32 %v1536, 0.0
    %v1545 = vmax.f32 %v1537, 0.0
    %v1546 = vmax.f32 %v1538, 0.0
    %v1547 = vmax.f32 %v1539, 0.0
    %v1548 = vld [vmem:[#allocation10] sm:$0xff]
    %v1549 = vld [vmem:[#allocation10 + $0x8] sm:$0xff]
    %v1550 = vld [vmem:[#allocation10 + $0x10] sm:$0xff]
    %v1551 = vld [vmem:[#allocation10 + $0x18] sm:$0xff]
    %v1553 = vsel %vm618, %v1548, 0
    %v1556 = vsel %vm618, %v1549, 0
    %v1559 = vsel %vm618, %v1550, 0
    %v1562 = vsel %vm618, %v1551, 0
    %1564 = vmatprep.subr.mxu0 %v1541
    %1565 = vmatpush1.msra.mxu0 %v1540
    %1566 = vmatprep.subr.mxu0 %v1543
    %1567 = vmatpush1.msra.mxu0 %v1542
    %1568 = vmatprep.subr.mxu0 %v1545
    %1569 = vmatpush1.msra.mxu0 %v1544
    %1570 = vmatprep.subr.mxu0 %v1547
    %1571 = vmatpush1.msra.mxu0 %v1546
    %1572 = vmatprep.subr.mxu0 0.0
    %1573 = vmatpush1.msra.mxu0 0.0
    %1574 = vmatprep.subr.mxu0 0.0
    %1575 = vmatpush1.msra.mxu0 0.0
    %1576 = vmatprep.subr.mxu0 0.0
    %1577 = vmatpush1.msra.mxu0 0.0
    %1578 = vmatprep.subr.mxu0 0.0
    %1579 = vmatpush1.msra.mxu0 0.0
    %1580 = vmatprep.subr.mxu0 0.0
    %1581 = vmatpush1.msra.mxu0 0.0
    %1582 = vmatprep.subr.mxu0 0.0
    %1583 = vmatpush1.msra.mxu0 0.0
    %1584 = vmatprep.subr.mxu0 0.0
    %1585 = vmatpush1.msra.mxu0 0.0
    %1586 = vmatprep.subr.mxu0 0.0
    %1587 = vmatpush1.msra.mxu0 0.0
    %1588 = vmatprep.subr.mxu0 0.0
    %1589 = vmatpush1.msra.mxu0 0.0
    %1590 = vmatprep.subr.mxu0 0.0
    %1591 = vmatpush1.msra.mxu0 0.0
    %1592 = vmatprep.subr.mxu0 0.0
    %1593 = vmatpush1.msra.mxu0 0.0
    %1594 = vmatprep.subr.mxu0 0.0
    %1595 = vmatpush1.msra.mxu0 0.0
    %1596 = vmatprep.subr.mxu0 0.0
    %1597 = vmatpush1.msra.mxu0 0.0
    %1598 = vmatprep.subr.mxu0 0.0
    %1599 = vmatpush1.msra.mxu0 0.0
    %1600 = vmatprep.subr.mxu0 0.0
    %1601 = vmatpush1.msra.mxu0 0.0
    %1602 = vmatprep.subr.mxu0 0.0
    %1603 = vmatpush1.msra.mxu0 0.0
    %1604 = vmatprep.subr.mxu0 0.0
    %1605 = vmatpush1.msra.mxu0 0.0
    %1606 = vmatprep.subr.mxu0 0.0
    %1607 = vmatpush1.msra.mxu0 0.0
    %1608 = vmatprep.subr.mxu0 0.0
    %1609 = vmatpush1.msra.mxu0 0.0
    %1610 = vmatprep.subr.mxu0 0.0
    %1611 = vmatpush1.msra.mxu0 0.0
    %1612 = vmatprep.subr.mxu0 0.0
    %1613 = vmatpush1.msra.mxu0 0.0
    %1614 = vmatprep.subr.mxu0 0.0
    %1615 = vmatpush1.msra.mxu0 0.0
    %1616 = vmatprep.subr.mxu0 0.0
    %1617 = vmatpush1.msra.mxu0 0.0
    %1618 = vmatprep.subr.mxu0 0.0
    %1619 = vmatpush1.msra.mxu0 0.0
    %1620 = vmatprep.subr.mxu0 0.0
    %1621 = vmatpush1.msra.mxu0 0.0
    %1622 = vmatprep.subr.mxu0 0.0
    %1623 = vmatpush1.msra.mxu0 0.0
    %1624 = vmatprep.subr.mxu0 0.0
    %1625 = vmatpush1.msra.mxu0 0.0
    %1626 = vmatprep.subr.mxu0 0.0
    %1627 = vmatpush1.msra.mxu0 0.0
    %1628 = vmatprep.mubr.f32.mxu0 0.0
    %1629 = vmatmul.mubr.f32.gmra.mrb[0].mxu0 %v1553
    %v1630 = vpop.f32.mrb[0].mxu0
    %v1631 = vadd.f32 0.0, %v1630
    %v1632 = vpop.f32.mrb[0].mxu0
    %v1633 = vadd.f32 0.0, %v1632
    %1634 = vmatprep.mubr.f32.mxu0 0.0
    %1635 = vmatmul.mubr.f32.gmra.mrb[0].mxu0 %v1556
    %v1636 = vpop.f32.mrb[0].mxu0
    %v1637 = vadd.f32 0.0, %v1636
    %v1638 = vpop.f32.mrb[0].mxu0
    %v1639 = vadd.f32 0.0, %v1638
    %1640 = vmatprep.mubr.f32.mxu0 0.0
    %1641 = vmatmul.mubr.f32.gmra.mrb[0].mxu0 %v1559
    %v1642 = vpop.f32.mrb[0].mxu0
    %v1643 = vadd.f32 0.0, %v1642
    %v1644 = vpop.f32.mrb[0].mxu0
    %v1645 = vadd.f32 0.0, %v1644
    %1646 = vmatprep.mubr.f32.mxu0 0.0
    %1647 = vmatmul.mubr.f32.gmra.mrb[0].mxu0 %v1562
    %v1648 = vpop.f32.mrb[0].mxu0
    %v1649 = vadd.f32 0.0, %v1648
    %v1650 = vpop.f32.mrb[0].mxu0
    %v1651 = vadd.f32 0.0, %v1650
    %1652 = vdwg.mxu0
    %v1653 = vpack.c.bf16 %v1637, %v1631
    %v1654 = vpack.c.bf16 %v1639, %v1633
    %v1655 = vpack.c.bf16 %v1649, %v1643
    %v1656 = vpack.c.bf16 %v1651, %v1645
    %v1657 = vld [vmem:[%s11] sm:$0xff]
    %v1658 = vld [vmem:[%s11 + $0x8] sm:$0xff]
    %v1659 = vld [vmem:[%s11 + $0x10] sm:$0xff]
    %v1660 = vld [vmem:[%s11 + $0x18] sm:$0xff]
    %v1661 = vld [vmem:[%s11 + $0x20] sm:$0xff]
    %v1662 = vld [vmem:[%s11 + $0x28] sm:$0xff]
    %v1663 = vld [vmem:[%s11 + $0x30] sm:$0xff]
    %v1664 = vld [vmem:[%s11 + $0x38] sm:$0xff]
    %v1665 = vld [vmem:[%s11 + $0x40] sm:$0xff]
    %v1666 = vld [vmem:[%s11 + $0x48] sm:$0xff]
    %v1667 = vld [vmem:[%s11 + $0x50] sm:$0xff]
    %v1668 = vld [vmem:[%s11 + $0x58] sm:$0xff]
    %v1669 = vld [vmem:[%s11 + $0x60] sm:$0xff]
    %v1670 = vld [vmem:[%s11 + $0x68] sm:$0xff]
    %v1671 = vld [vmem:[%s11 + $0x70] sm:$0xff]
    %v1672 = vld [vmem:[%s11 + $0x78] sm:$0xff]
    %v1673 = vld [vmem:[%s11 + $0x80] sm:$0xff]
    %v1674 = vld [vmem:[%s11 + $0x88] sm:$0xff]
    %v1675 = vld [vmem:[%s11 + $0x90] sm:$0xff]
    %v1676 = vld [vmem:[%s11 + $0x98] sm:$0xff]
    %v1677 = vld [vmem:[%s11 + $0xa0] sm:$0xff]
    %v1678 = vld [vmem:[%s11 + $0xa8] sm:$0xff]
    %v1679 = vld [vmem:[%s11 + $0xb0] sm:$0xff]
    %v1680 = vld [vmem:[%s11 + $0xb8] sm:$0xff]
    %v1681 = vld [vmem:[%s11 + $0xc0] sm:$0xff]
    %v1682 = vld [vmem:[%s11 + $0xc8] sm:$0xff]
    %v1683 = vld [vmem:[%s11 + $0xd0] sm:$0xff]
    %v1684 = vld [vmem:[%s11 + $0xd8] sm:$0xff]
    %v1685 = vld [vmem:[%s11 + $0xe0] sm:$0xff]
    %v1686 = vld [vmem:[%s11 + $0xe8] sm:$0xff]
    %v1687 = vld [vmem:[%s11 + $0xf0] sm:$0xff]
    %v1688 = vld [vmem:[%s11 + $0xf8] sm:$0xff]
    %s1689 = scalar_lea.vmem [#allocation10], 32
    %v1690 = vld [vmem:[%s1689] sm:$0xff]
    %v1691 = vld [vmem:[%s1689 + $0x8] sm:$0xff]
    %v1692 = vld [vmem:[%s1689 + $0x10] sm:$0xff]
    %v1693 = vld [vmem:[%s1689 + $0x18] sm:$0xff]
    %v1695 = vsel %vm618, %v1690, 0
    %v1698 = vsel %vm618, %v1691, 0
    %v1701 = vsel %vm618, %v1692, 0
    %v1704 = vsel %vm618, %v1693, 0
    %1706 = vmatprep.subr.mxu0 %v1541
    %1707 = vmatpush1.msra.mxu0 %v1540
    %1708 = vmatprep.subr.mxu0 %v1543
    %1709 = vmatpush1.msra.mxu0 %v1542
    %1710 = vmatprep.subr.mxu0 %v1545
    %1711 = vmatpush1.msra.mxu0 %v1544
    %1712 = vmatprep.subr.mxu0 %v1547
    %1713 = vmatpush1.msra.mxu0 %v1546
    %1714 = vmatprep.subr.mxu0 0.0
    %1715 = vmatpush1.msra.mxu0 0.0
    %1716 = vmatprep.subr.mxu0 0.0
    %1717 = vmatpush1.msra.mxu0 0.0
    %1718 = vmatprep.subr.mxu0 0.0
    %1719 = vmatpush1.msra.mxu0 0.0
    %1720 = vmatprep.subr.mxu0 0.0
    %1721 = vmatpush1.msra.mxu0 0.0
    %1722 = vmatprep.subr.mxu0 0.0
    %1723 = vmatpush1.msra.mxu0 0.0
    %1724 = vmatprep.subr.mxu0 0.0
    %1725 = vmatpush1.msra.mxu0 0.0
    %1726 = vmatprep.subr.mxu0 0.0
    %1727 = vmatpush1.msra.mxu0 0.0
    %1728 = vmatprep.subr.mxu0 0.0
    %1729 = vmatpush1.msra.mxu0 0.0
    %1730 = vmatprep.subr.mxu0 0.0
    %1731 = vmatpush1.msra.mxu0 0.0
    %1732 = vmatprep.subr.mxu0 0.0
    %1733 = vmatpush1.msra.mxu0 0.0
    %1734 = vmatprep.subr.mxu0 0.0
    %1735 = vmatpush1.msra.mxu0 0.0
    %1736 = vmatprep.subr.mxu0 0.0
    %1737 = vmatpush1.msra.mxu0 0.0
    %1738 = vmatprep.subr.mxu0 0.0
    %1739 = vmatpush1.msra.mxu0 0.0
    %1740 = vmatprep.subr.mxu0 0.0
    %1741 = vmatpush1.msra.mxu0 0.0
    %1742 = vmatprep.subr.mxu0 0.0
    %1743 = vmatpush1.msra.mxu0 0.0
    %1744 = vmatprep.subr.mxu0 0.0
    %1745 = vmatpush1.msra.mxu0 0.0
    %1746 = vmatprep.subr.mxu0 0.0
    %1747 = vmatpush1.msra.mxu0 0.0
    %1748 = vmatprep.subr.mxu0 0.0
    %1749 = vmatpush1.msra.mxu0 0.0
    %1750 = vmatprep.subr.mxu0 0.0
    %1751 = vmatpush1.msra.mxu0 0.0
    %1752 = vmatprep.subr.mxu0 0.0
    %1753 = vmatpush1.msra.mxu0 0.0
    %1754 = vmatprep.subr.mxu0 0.0
    %1755 = vmatpush1.msra.mxu0 0.0
    %1756 = vmatprep.subr.mxu0 0.0
    %1757 = vmatpush1.msra.mxu0 0.0
    %1758 = vmatprep.subr.mxu0 0.0
    %1759 = vmatpush1.msra.mxu0 0.0
    %1760 = vmatprep.subr.mxu0 0.0
    %1761 = vmatpush1.msra.mxu0 0.0
    %1762 = vmatprep.subr.mxu0 0.0
    %1763 = vmatpush1.msra.mxu0 0.0
    %1764 = vmatprep.subr.mxu0 0.0
    %1765 = vmatpush1.msra.mxu0 0.0
    %1766 = vmatprep.subr.mxu0 0.0
    %1767 = vmatpush1.msra.mxu0 0.0
    %1768 = vmatprep.subr.mxu0 0.0
    %1769 = vmatpush1.msra.mxu0 0.0
    %1770 = vmatprep.mubr.f32.mxu0 0.0
    %1771 = vmatmul.mubr.f32.gmra.mrb[0].mxu0 %v1695
    %v1772 = vpop.f32.mrb[0].mxu0
    %v1773 = vadd.f32 0.0, %v1772
    %v1774 = vpop.f32.mrb[0].mxu0
    %v1775 = vadd.f32 0.0, %v1774
    %1776 = vmatprep.mubr.f32.mxu0 0.0
    %1777 = vmatmul.mubr.f32.gmra.mrb[0].mxu0 %v1698
    %v1778 = vpop.f32.mrb[0].mxu0
    %v1779 = vadd.f32 0.0, %v1778
    %v1780 = vpop.f32.mrb[0].mxu0
    %v1781 = vadd.f32 0.0, %v1780
    %1782 = vmatprep.mubr.f32.mxu0 0.0
    %1783 = vmatmul.mubr.f32.gmra.mrb[0].mxu0 %v1701
    %v1784 = vpop.f32.mrb[0].mxu0
    %v1785 = vadd.f32 0.0, %v1784
    %v1786 = vpop.f32.mrb[0].mxu0
    %v1787 = vadd.f32 0.0, %v1786
    %1788 = vmatprep.mubr.f32.mxu0 0.0
    %1789 = vmatmul.mubr.f32.gmra.mrb[0].mxu0 %v1704
    %v1790 = vpop.f32.mrb[0].mxu0
    %v1791 = vadd.f32 0.0, %v1790
    %v1792 = vpop.f32.mrb[0].mxu0
    %v1793 = vadd.f32 0.0, %v1792
    %1794 = vdwg.mxu0
    %v1795 = vpack.c.bf16 %v1779, %v1773
    %v1796 = vpack.c.bf16 %v1781, %v1775
    %v1797 = vpack.c.bf16 %v1791, %v1785
    %v1798 = vpack.c.bf16 %v1793, %v1787
    %s1799 = scalar_lea.vmem %s11, 256
    %v1800 = vld [vmem:[%s1799] sm:$0xff]
    %v1801 = vld [vmem:[%s1799 + $0x8] sm:$0xff]
    %v1802 = vld [vmem:[%s1799 + $0x10] sm:$0xff]
    %v1803 = vld [vmem:[%s1799 + $0x18] sm:$0xff]
    %v1804 = vld [vmem:[%s1799 + $0x20] sm:$0xff]
    %v1805 = vld [vmem:[%s1799 + $0x28] sm:$0xff]
    %v1806 = vld [vmem:[%s1799 + $0x30] sm:$0xff]
    %v1807 = vld [vmem:[%s1799 + $0x38] sm:$0xff]
    %v1808 = vld [vmem:[%s1799 + $0x40] sm:$0xff]
    %v1809 = vld [vmem:[%s1799 + $0x48] sm:$0xff]
    %v1810 = vld [vmem:[%s1799 + $0x50] sm:$0xff]
    %v1811 = vld [vmem:[%s1799 + $0x58] sm:$0xff]
    %v1812 = vld [vmem:[%s1799 + $0x60] sm:$0xff]
    %v1813 = vld [vmem:[%s1799 + $0x68] sm:$0xff]
    %v1814 = vld [vmem:[%s1799 + $0x70] sm:$0xff]
    %v1815 = vld [vmem:[%s1799 + $0x78] sm:$0xff]
    %v1816 = vld [vmem:[%s1799 + $0x80] sm:$0xff]
    %v1817 = vld [vmem:[%s1799 + $0x88] sm:$0xff]
    %v1818 = vld [vmem:[%s1799 + $0x90] sm:$0xff]
    %v1819 = vld [vmem:[%s1799 + $0x98] sm:$0xff]
    %v1820 = vld [vmem:[%s1799 + $0xa0] sm:$0xff]
    %v1821 = vld [vmem:[%s1799 + $0xa8] sm:$0xff]
    %v1822 = vld [vmem:[%s1799 + $0xb0] sm:$0xff]
    %v1823 = vld [vmem:[%s1799 + $0xb8] sm:$0xff]
    %v1824 = vld [vmem:[%s1799 + $0xc0] sm:$0xff]
    %v1825 = vld [vmem:[%s1799 + $0xc8] sm:$0xff]
    %v1826 = vld [vmem:[%s1799 + $0xd0] sm:$0xff]
    %v1827 = vld [vmem:[%s1799 + $0xd8] sm:$0xff]
    %v1828 = vld [vmem:[%s1799 + $0xe0] sm:$0xff]
    %v1829 = vld [vmem:[%s1799 + $0xe8] sm:$0xff]
    %v1830 = vld [vmem:[%s1799 + $0xf0] sm:$0xff]
    %v1831 = vld [vmem:[%s1799 + $0xf8] sm:$0xff]
    %v1864 = vunpack.c.l.b16 %v1800
    %v1865 = vunpack.c.h.b16 %v1800
    %v1866 = vunpack.c.l.b16 %v1801
    %v1867 = vunpack.c.h.b16 %v1801
    %v1868 = vunpack.c.l.b16 %v1802
    %v1869 = vunpack.c.h.b16 %v1802
    %v1870 = vunpack.c.l.b16 %v1803
    %v1871 = vunpack.c.h.b16 %v1803
    %v1872 = vunpack.c.l.b16 %v1804
    %v1873 = vunpack.c.h.b16 %v1804
    %v1874 = vunpack.c.l.b16 %v1805
    %v1875 = vunpack.c.h.b16 %v1805
    %v1876 = vunpack.c.l.b16 %v1806
    %v1877 = vunpack.c.h.b16 %v1806
    %v1878 = vunpack.c.l.b16 %v1807
    %v1879 = vunpack.c.h.b16 %v1807
    %v1880 = vunpack.c.l.b16 %v1808
    %v1881 = vunpack.c.h.b16 %v1808
    %v1882 = vunpack.c.l.b16 %v1809
    %v1883 = vunpack.c.h.b16 %v1809
    %v1884 = vunpack.c.l.b16 %v1810
    %v1885 = vunpack.c.h.b16 %v1810
    %v1886 = vunpack.c.l.b16 %v1811
    %v1887 = vunpack.c.h.b16 %v1811
    %v1888 = vunpack.c.l.b16 %v1812
    %v1889 = vunpack.c.h.b16 %v1812
    %v1890 = vunpack.c.l.b16 %v1813
    %v1891 = vunpack.c.h.b16 %v1813
    %v1892 = vunpack.c.l.b16 %v1814
    %v1893 = vunpack.c.h.b16 %v1814
    %v1894 = vunpack.c.l.b16 %v1815
    %v1895 = vunpack.c.h.b16 %v1815
    %v1896 = vunpack.c.l.b16 %v1816
    %v1897 = vunpack.c.h.b16 %v1816
    %v1898 = vunpack.c.l.b16 %v1817
    %v1899 = vunpack.c.h.b16 %v1817
    %v1900 = vunpack.c.l.b16 %v1818
    %v1901 = vunpack.c.h.b16 %v1818
    %v1902 = vunpack.c.l.b16 %v1819
    %v1903 = vunpack.c.h.b16 %v1819
    %v1904 = vunpack.c.l.b16 %v1820
    %v1905 = vunpack.c.h.b16 %v1820
    %v1906 = vunpack.c.l.b16 %v1821
    %v1907 = vunpack.c.h.b16 %v1821
    %v1908 = vunpack.c.l.b16 %v1822
    %v1909 = vunpack.c.h.b16 %v1822
    %v1910 = vunpack.c.l.b16 %v1823
    %v1911 = vunpack.c.h.b16 %v1823
    %v1912 = vunpack.c.l.b16 %v1824
    %v1913 = vunpack.c.h.b16 %v1824
    %v1914 = vunpack.c.l.b16 %v1825
    %v1915 = vunpack.c.h.b16 %v1825
    %v1916 = vunpack.c.l.b16 %v1826
    %v1917 = vunpack.c.h.b16 %v1826
    %v1918 = vunpack.c.l.b16 %v1827
    %v1919 = vunpack.c.h.b16 %v1827
    %v1920 = vunpack.c.l.b16 %v1828
    %v1921 = vunpack.c.h.b16 %v1828
    %v1922 = vunpack.c.l.b16 %v1829
    %v1923 = vunpack.c.h.b16 %v1829
    %v1924 = vunpack.c.l.b16 %v1830
    %v1925 = vunpack.c.h.b16 %v1830
    %v1926 = vunpack.c.l.b16 %v1831
    %v1927 = vunpack.c.h.b16 %v1831
    %v1928 = vpack.c.b16 %v1866, %v1864
    %v1929 = vpack.c.b16 %v1867, %v1865
    %v1930 = vpack.c.b16 %v1870, %v1868
    %v1931 = vpack.c.b16 %v1871, %v1869
    %v1932 = vpack.c.b16 %v1874, %v1872
    %v1933 = vpack.c.b16 %v1875, %v1873
    %v1934 = vpack.c.b16 %v1878, %v1876
    %v1935 = vpack.c.b16 %v1879, %v1877
    %v1936 = vpack.c.b16 %v1882, %v1880
    %v1937 = vpack.c.b16 %v1883, %v1881
    %v1938 = vpack.c.b16 %v1886, %v1884
    %v1939 = vpack.c.b16 %v1887, %v1885
    %v1940 = vpack.c.b16 %v1890, %v1888
    %v1941 = vpack.c.b16 %v1891, %v1889
    %v1942 = vpack.c.b16 %v1894, %v1892
    %v1943 = vpack.c.b16 %v1895, %v1893
    %v1944 = vpack.c.b16 %v1898, %v1896
    %v1945 = vpack.c.b16 %v1899, %v1897
    %v1946 = vpack.c.b16 %v1902, %v1900
    %v1947 = vpack.c.b16 %v1903, %v1901
    %v1948 = vpack.c.b16 %v1906, %v1904
    %v1949 = vpack.c.b16 %v1907, %v1905
    %v1950 = vpack.c.b16 %v1910, %v1908
    %v1951 = vpack.c.b16 %v1911, %v1909
    %v1952 = vpack.c.b16 %v1914, %v1912
    %v1953 = vpack.c.b16 %v1915, %v1913
    %v1954 = vpack.c.b16 %v1918, %v1916
    %v1955 = vpack.c.b16 %v1919, %v1917
    %v1956 = vpack.c.b16 %v1922, %v1920
    %v1957 = vpack.c.b16 %v1923, %v1921
    %v1958 = vpack.c.b16 %v1926, %v1924
    %v1959 = vpack.c.b16 %v1927, %v1925
    %1992 = vmatprep.subr.bf16.mxu0 %v1929
    %1993 = vmatpush1.bf16.msra.mxu0 %v1928
    %1994 = vmatprep.subr.bf16.mxu0 %v1931
    %1995 = vmatpush1.bf16.msra.mxu0 %v1930
    %1996 = vmatprep.subr.bf16.mxu0 %v1933
    %1997 = vmatpush1.bf16.msra.mxu0 %v1932
    %1998 = vmatprep.subr.bf16.mxu0 %v1935
    %1999 = vmatpush1.bf16.msra.mxu0 %v1934
    %2000 = vmatprep.subr.bf16.mxu0 %v1937
    %2001 = vmatpush1.bf16.msra.mxu0 %v1936
    %2002 = vmatprep.subr.bf16.mxu0 %v1939
    %2003 = vmatpush1.bf16.msra.mxu0 %v1938
    %2004 = vmatprep.subr.bf16.mxu0 %v1941
    %2005 = vmatpush1.bf16.msra.mxu0 %v1940
    %2006 = vmatprep.subr.bf16.mxu0 %v1943
    %2007 = vmatpush1.bf16.msra.mxu0 %v1942
    %2008 = vmatprep.subr.bf16.mxu0 %v1945
    %2009 = vmatpush1.bf16.msra.mxu0 %v1944
    %2010 = vmatprep.subr.bf16.mxu0 %v1947
    %2011 = vmatpush1.bf16.msra.mxu0 %v1946
    %2012 = vmatprep.subr.bf16.mxu0 %v1949
    %2013 = vmatpush1.bf16.msra.mxu0 %v1948
    %2014 = vmatprep.subr.bf16.mxu0 %v1951
    %2015 = vmatpush1.bf16.msra.mxu0 %v1950
    %2016 = vmatprep.subr.bf16.mxu0 %v1953
    %2017 = vmatpush1.bf16.msra.mxu0 %v1952
    %2018 = vmatprep.subr.bf16.mxu0 %v1955
    %2019 = vmatpush1.bf16.msra.mxu0 %v1954
    %2020 = vmatprep.subr.bf16.mxu0 %v1957
    %2021 = vmatpush1.bf16.msra.mxu0 %v1956
    %2022 = vmatprep.subr.bf16.mxu0 %v1959
    %2023 = vmatpush1.bf16.msra.mxu0 %v1958
    %2024 = vmatprep.mubr.bf16.mxu0 %v1796
    %2025 = vmatmul.mubr.bf16.gmra.mrb[0].mxu0 %v1795
    %v2026 = vpop.f32.mrb[0].mxu0
    %v2027 = vadd.f32 0.0, %v2026
    %v2028 = vpop.f32.mrb[0].mxu0
    %v2029 = vadd.f32 0.0, %v2028
    %v2030 = vpop.f32.mrb[0].mxu0
    %v2031 = vadd.f32 0.0, %v2030
    %v2032 = vpop.f32.mrb[0].mxu0
    %v2033 = vadd.f32 0.0, %v2032
    %2034 = vmatprep.mubr.bf16.mxu0 %v1798
    %2035 = vmatmul.mubr.bf16.gmra.mrb[0].mxu0 %v1797
    %v2036 = vpop.f32.mrb[0].mxu0
    %v2037 = vadd.f32 0.0, %v2036
    %v2038 = vpop.f32.mrb[0].mxu0
    %v2039 = vadd.f32 0.0, %v2038
    %v2040 = vpop.f32.mrb[0].mxu0
    %v2041 = vadd.f32 0.0, %v2040
    %v2042 = vpop.f32.mrb[0].mxu0
    %v2043 = vadd.f32 0.0, %v2042
    %2044 = vdwg.mxu0
    %v2077 = vunpack.c.l.b16 %v1657
    %v2078 = vunpack.c.h.b16 %v1657
    %v2079 = vunpack.c.l.b16 %v1658
    %v2080 = vunpack.c.h.b16 %v1658
    %v2081 = vunpack.c.l.b16 %v1659
    %v2082 = vunpack.c.h.b16 %v1659
    %v2083 = vunpack.c.l.b16 %v1660
    %v2084 = vunpack.c.h.b16 %v1660
    %v2085 = vunpack.c.l.b16 %v1661
    %v2086 = vunpack.c.h.b16 %v1661
    %v2087 = vunpack.c.l.b16 %v1662
    %v2088 = vunpack.c.h.b16 %v1662
    %v2089 = vunpack.c.l.b16 %v1663
    %v2090 = vunpack.c.h.b16 %v1663
    %v2091 = vunpack.c.l.b16 %v1664
    %v2092 = vunpack.c.h.b16 %v1664
    %v2093 = vunpack.c.l.b16 %v1665
    %v2094 = vunpack.c.h.b16 %v1665
    %v2095 = vunpack.c.l.b16 %v1666
    %v2096 = vunpack.c.h.b16 %v1666
    %v2097 = vunpack.c.l.b16 %v1667
    %v2098 = vunpack.c.h.b16 %v1667
    %v2099 = vunpack.c.l.b16 %v1668
    %v2100 = vunpack.c.h.b16 %v1668
    %v2101 = vunpack.c.l.b16 %v1669
    %v2102 = vunpack.c.h.b16 %v1669
    %v2103 = vunpack.c.l.b16 %v1670
    %v2104 = vunpack.c.h.b16 %v1670
    %v2105 = vunpack.c.l.b16 %v1671
    %v2106 = vunpack.c.h.b16 %v1671
    %v2107 = vunpack.c.l.b16 %v1672
    %v2108 = vunpack.c.h.b16 %v1672
    %v2109 = vunpack.c.l.b16 %v1673
    %v2110 = vunpack.c.h.b16 %v1673
    %v2111 = vunpack.c.l.b16 %v1674
    %v2112 = vunpack.c.h.b16 %v1674
    %v2113 = vunpack.c.l.b16 %v1675
    %v2114 = vunpack.c.h.b16 %v1675
    %v2115 = vunpack.c.l.b16 %v1676
    %v2116 = vunpack.c.h.b16 %v1676
    %v2117 = vunpack.c.l.b16 %v1677
    %v2118 = vunpack.c.h.b16 %v1677
    %v2119 = vunpack.c.l.b16 %v1678
    %v2120 = vunpack.c.h.b16 %v1678
    %v2121 = vunpack.c.l.b16 %v1679
    %v2122 = vunpack.c.h.b16 %v1679
    %v2123 = vunpack.c.l.b16 %v1680
    %v2124 = vunpack.c.h.b16 %v1680
    %v2125 = vunpack.c.l.b16 %v1681
    %v2126 = vunpack.c.h.b16 %v1681
    %v2127 = vunpack.c.l.b16 %v1682
    %v2128 = vunpack.c.h.b16 %v1682
    %v2129 = vunpack.c.l.b16 %v1683
    %v2130 = vunpack.c.h.b16 %v1683
    %v2131 = vunpack.c.l.b16 %v1684
    %v2132 = vunpack.c.h.b16 %v1684
    %v2133 = vunpack.c.l.b16 %v1685
    %v2134 = vunpack.c.h.b16 %v1685
    %v2135 = vunpack.c.l.b16 %v1686
    %v2136 = vunpack.c.h.b16 %v1686
    %v2137 = vunpack.c.l.b16 %v1687
    %v2138 = vunpack.c.h.b16 %v1687
    %v2139 = vunpack.c.l.b16 %v1688
    %v2140 = vunpack.c.h.b16 %v1688
    %v2141 = vpack.c.b16 %v2079, %v2077
    %v2142 = vpack.c.b16 %v2080, %v2078
    %v2143 = vpack.c.b16 %v2083, %v2081
    %v2144 = vpack.c.b16 %v2084, %v2082
    %v2145 = vpack.c.b16 %v2087, %v2085
    %v2146 = vpack.c.b16 %v2088, %v2086
    %v2147 = vpack.c.b16 %v2091, %v2089
    %v2148 = vpack.c.b16 %v2092, %v2090
    %v2149 = vpack.c.b16 %v2095, %v2093
    %v2150 = vpack.c.b16 %v2096, %v2094
    %v2151 = vpack.c.b16 %v2099, %v2097
    %v2152 = vpack.c.b16 %v2100, %v2098
    %v2153 = vpack.c.b16 %v2103, %v2101
    %v2154 = vpack.c.b16 %v2104, %v2102
    %v2155 = vpack.c.b16 %v2107, %v2105
    %v2156 = vpack.c.b16 %v2108, %v2106
    %v2157 = vpack.c.b16 %v2111, %v2109
    %v2158 = vpack.c.b16 %v2112, %v2110
    %v2159 = vpack.c.b16 %v2115, %v2113
    %v2160 = vpack.c.b16 %v2116, %v2114
    %v2161 = vpack.c.b16 %v2119, %v2117
    %v2162 = vpack.c.b16 %v2120, %v2118
    %v2163 = vpack.c.b16 %v2123, %v2121
    %v2164 = vpack.c.b16 %v2124, %v2122
    %v2165 = vpack.c.b16 %v2127, %v2125
    %v2166 = vpack.c.b16 %v2128, %v2126
    %v2167 = vpack.c.b16 %v2131, %v2129
    %v2168 = vpack.c.b16 %v2132, %v2130
    %v2169 = vpack.c.b16 %v2135, %v2133
    %v2170 = vpack.c.b16 %v2136, %v2134
    %v2171 = vpack.c.b16 %v2139, %v2137
    %v2172 = vpack.c.b16 %v2140, %v2138
    %2205 = vmatprep.subr.bf16.mxu0 %v2142
    %2206 = vmatpush1.bf16.msra.mxu0 %v2141
    %2207 = vmatprep.subr.bf16.mxu0 %v2144
    %2208 = vmatpush1.bf16.msra.mxu0 %v2143
    %2209 = vmatprep.subr.bf16.mxu0 %v2146
    %2210 = vmatpush1.bf16.msra.mxu0 %v2145
    %2211 = vmatprep.subr.bf16.mxu0 %v2148
    %2212 = vmatpush1.bf16.msra.mxu0 %v2147
    %2213 = vmatprep.subr.bf16.mxu0 %v2150
    %2214 = vmatpush1.bf16.msra.mxu0 %v2149
    %2215 = vmatprep.subr.bf16.mxu0 %v2152
    %2216 = vmatpush1.bf16.msra.mxu0 %v2151
    %2217 = vmatprep.subr.bf16.mxu0 %v2154
    %2218 = vmatpush1.bf16.msra.mxu0 %v2153
    %2219 = vmatprep.subr.bf16.mxu0 %v2156
    %2220 = vmatpush1.bf16.msra.mxu0 %v2155
    %2221 = vmatprep.subr.bf16.mxu0 %v2158
    %2222 = vmatpush1.bf16.msra.mxu0 %v2157
    %2223 = vmatprep.subr.bf16.mxu0 %v2160
    %2224 = vmatpush1.bf16.msra.mxu0 %v2159
    %2225 = vmatprep.subr.bf16.mxu0 %v2162
    %2226 = vmatpush1.bf16.msra.mxu0 %v2161
    %2227 = vmatprep.subr.bf16.mxu0 %v2164
    %2228 = vmatpush1.bf16.msra.mxu0 %v2163
    %2229 = vmatprep.subr.bf16.mxu0 %v2166
    %2230 = vmatpush1.bf16.msra.mxu0 %v2165
    %2231 = vmatprep.subr.bf16.mxu0 %v2168
    %2232 = vmatpush1.bf16.msra.mxu0 %v2167
    %2233 = vmatprep.subr.bf16.mxu0 %v2170
    %2234 = vmatpush1.bf16.msra.mxu0 %v2169
    %2235 = vmatprep.subr.bf16.mxu0 %v2172
    %2236 = vmatpush1.bf16.msra.mxu0 %v2171
    %2237 = vmatprep.mubr.bf16.mxu0 %v1654
    %2238 = vmatmul.mubr.bf16.gmra.mrb[0].mxu0 %v1653
    %v2239 = vpop.f32.mrb[0].mxu0
    %v2240 = vadd.f32 %v2027, %v2239
    %v2241 = vpop.f32.mrb[0].mxu0
    %v2242 = vadd.f32 %v2029, %v2241
    %v2243 = vpop.f32.mrb[0].mxu0
    %v2244 = vadd.f32 %v2031, %v2243
    %v2245 = vpop.f32.mrb[0].mxu0
    %v2246 = vadd.f32 %v2033, %v2245
    %2247 = vmatprep.mubr.bf16.mxu0 %v1656
    %2248 = vmatmul.mubr.bf16.gmra.mrb[0].mxu0 %v1655
    %v2249 = vpop.f32.mrb[0].mxu0
    %v2250 = vadd.f32 %v2037, %v2249
    %v2251 = vpop.f32.mrb[0].mxu0
    %v2252 = vadd.f32 %v2039, %v2251
    %v2253 = vpop.f32.mrb[0].mxu0
    %v2254 = vadd.f32 %v2041, %v2253
    %v2255 = vpop.f32.mrb[0].mxu0
    %v2256 = vadd.f32 %v2043, %v2255
    %2257 = vdwg.mxu0
    %s2258 = scalar_lea.vmem [#allocation10], 64
    %v2259 = vld [vmem:[%s2258] sm:$0xff]
    %v2260 = vld [vmem:[%s2258 + $0x8] sm:$0xff]
    %v2261 = vld [vmem:[%s2258 + $0x10] sm:$0xff]
    %v2262 = vld [vmem:[%s2258 + $0x18] sm:$0xff]
    %v2264 = vsel %vm618, %v2259, 0
    %v2267 = vsel %vm618, %v2260, 0
    %v2270 = vsel %vm618, %v2261, 0
    %v2273 = vsel %vm618, %v2262, 0
    %2275 = vmatprep.subr.mxu0 %v1541
    %2276 = vmatpush1.msra.mxu0 %v1540
    %2277 = vmatprep.subr.mxu0 %v1543
    %2278 = vmatpush1.msra.mxu0 %v1542
    %2279 = vmatprep.subr.mxu0 %v1545
    %2280 = vmatpush1.msra.mxu0 %v1544
    %2281 = vmatprep.subr.mxu0 %v1547
    %2282 = vmatpush1.msra.mxu0 %v1546
    %2283 = vmatprep.subr.mxu0 0.0
    %2284 = vmatpush1.msra.mxu0 0.0
    %2285 = vmatprep.subr.mxu0 0.0
    %2286 = vmatpush1.msra.mxu0 0.0
    %2287 = vmatprep.subr.mxu0 0.0
    %2288 = vmatpush1.msra.mxu0 0.0
    %2289 = vmatprep.subr.mxu0 0.0
    %2290 = vmatpush1.msra.mxu0 0.0
    %2291 = vmatprep.subr.mxu0 0.0
    %2292 = vmatpush1.msra.mxu0 0.0
    %2293 = vmatprep.subr.mxu0 0.0
    %2294 = vmatpush1.msra.mxu0 0.0
    %2295 = vmatprep.subr.mxu0 0.0
    %2296 = vmatpush1.msra.mxu0 0.0
    %2297 = vmatprep.subr.mxu0 0.0
    %2298 = vmatpush1.msra.mxu0 0.0
    %2299 = vmatprep.subr.mxu0 0.0
    %2300 = vmatpush1.msra.mxu0 0.0
    %2301 = vmatprep.subr.mxu0 0.0
    %2302 = vmatpush1.msra.mxu0 0.0
    %2303 = vmatprep.subr.mxu0 0.0
    %2304 = vmatpush1.msra.mxu0 0.0
    %2305 = vmatprep.subr.mxu0 0.0
    %2306 = vmatpush1.msra.mxu0 0.0
    %2307 = vmatprep.subr.mxu0 0.0
    %2308 = vmatpush1.msra.mxu0 0.0
    %2309 = vmatprep.subr.mxu0 0.0
    %2310 = vmatpush1.msra.mxu0 0.0
    %2311 = vmatprep.subr.mxu0 0.0
    %2312 = vmatpush1.msra.mxu0 0.0
    %2313 = vmatprep.subr.mxu0 0.0
    %2314 = vmatpush1.msra.mxu0 0.0
    %2315 = vmatprep.subr.mxu0 0.0
    %2316 = vmatpush1.msra.mxu0 0.0
    %2317 = vmatprep.subr.mxu0 0.0
    %2318 = vmatpush1.msra.mxu0 0.0
    %2319 = vmatprep.subr.mxu0 0.0
    %2320 = vmatpush1.msra.mxu0 0.0
    %2321 = vmatprep.subr.mxu0 0.0
    %2322 = vmatpush1.msra.mxu0 0.0
    %2323 = vmatprep.subr.mxu0 0.0
    %2324 = vmatpush1.msra.mxu0 0.0
    %2325 = vmatprep.subr.mxu0 0.0
    %2326 = vmatpush1.msra.mxu0 0.0
    %2327 = vmatprep.subr.mxu0 0.0
    %2328 = vmatpush1.msra.mxu0 0.0
    %2329 = vmatprep.subr.mxu0 0.0
    %2330 = vmatpush1.msra.mxu0 0.0
    %2331 = vmatprep.subr.mxu0 0.0
    %2332 = vmatpush1.msra.mxu0 0.0
    %2333 = vmatprep.subr.mxu0 0.0
    %2334 = vmatpush1.msra.mxu0 0.0
    %2335 = vmatprep.subr.mxu0 0.0
    %2336 = vmatpush1.msra.mxu0 0.0
    %2337 = vmatprep.subr.mxu0 0.0
    %2338 = vmatpush1.msra.mxu0 0.0
    %2339 = vmatprep.mubr.f32.mxu0 0.0
    %2340 = vmatmul.mubr.f32.gmra.mrb[0].mxu0 %v2264
    %v2341 = vpop.f32.mrb[0].mxu0
    %v2342 = vadd.f32 0.0, %v2341
    %v2343 = vpop.f32.mrb[0].mxu0
    %v2344 = vadd.f32 0.0, %v2343
    %2345 = vmatprep.mubr.f32.mxu0 0.0
    %2346 = vmatmul.mubr.f32.gmra.mrb[0].mxu0 %v2267
    %v2347 = vpop.f32.mrb[0].mxu0
    %v2348 = vadd.f32 0.0, %v2347
    %v2349 = vpop.f32.mrb[0].mxu0
    %v2350 = vadd.f32 0.0, %v2349
    %2351 = vmatprep.mubr.f32.mxu0 0.0
    %2352 = vmatmul.mubr.f32.gmra.mrb[0].mxu0 %v2270
    %v2353 = vpop.f32.mrb[0].mxu0
    %v2354 = vadd.f32 0.0, %v2353
    %v2355 = vpop.f32.mrb[0].mxu0
    %v2356 = vadd.f32 0.0, %v2355
    %2357 = vmatprep.mubr.f32.mxu0 0.0
    %2358 = vmatmul.mubr.f32.gmra.mrb[0].mxu0 %v2273
    %v2359 = vpop.f32.mrb[0].mxu0
    %v2360 = vadd.f32 0.0, %v2359
    %v2361 = vpop.f32.mrb[0].mxu0
    %v2362 = vadd.f32 0.0, %v2361
    %2363 = vdwg.mxu0
    %v2364 = vpack.c.bf16 %v2348, %v2342
    %v2365 = vpack.c.bf16 %v2350, %v2344
    %v2366 = vpack.c.bf16 %v2360, %v2354
    %v2367 = vpack.c.bf16 %v2362, %v2356
    %s2368 = scalar_lea.vmem %s11, 512
    %v2369 = vld [vmem:[%s2368] sm:$0xff]
    %v2370 = vld [vmem:[%s2368 + $0x8] sm:$0xff]
    %v2371 = vld [vmem:[%s2368 + $0x10] sm:$0xff]
    %v2372 = vld [vmem:[%s2368 + $0x18] sm:$0xff]
    %v2373 = vld [vmem:[%s2368 + $0x20] sm:$0xff]
    %v2374 = vld [vmem:[%s2368 + $0x28] sm:$0xff]
    %v2375 = vld [vmem:[%s2368 + $0x30] sm:$0xff]
    %v2376 = vld [vmem:[%s2368 + $0x38] sm:$0xff]
    %v2377 = vld [vmem:[%s2368 + $0x40] sm:$0xff]
    %v2378 = vld [vmem:[%s2368 + $0x48] sm:$0xff]
    %v2379 = vld [vmem:[%s2368 + $0x50] sm:$0xff]
    %v2380 = vld [vmem:[%s2368 + $0x58] sm:$0xff]
    %v2381 = vld [vmem:[%s2368 + $0x60] sm:$0xff]
    %v2382 = vld [vmem:[%s2368 + $0x68] sm:$0xff]
    %v2383 = vld [vmem:[%s2368 + $0x70] sm:$0xff]
    %v2384 = vld [vmem:[%s2368 + $0x78] sm:$0xff]
    %v2385 = vld [vmem:[%s2368 + $0x80] sm:$0xff]
    %v2386 = vld [vmem:[%s2368 + $0x88] sm:$0xff]
    %v2387 = vld [vmem:[%s2368 + $0x90] sm:$0xff]
    %v2388 = vld [vmem:[%s2368 + $0x98] sm:$0xff]
    %v2389 = vld [vmem:[%s2368 + $0xa0] sm:$0xff]
    %v2390 = vld [vmem:[%s2368 + $0xa8] sm:$0xff]
    %v2391 = vld [vmem:[%s2368 + $0xb0] sm:$0xff]
    %v2392 = vld [vmem:[%s2368 + $0xb8] sm:$0xff]
    %v2393 = vld [vmem:[%s2368 + $0xc0] sm:$0xff]
    %v2394 = vld [vmem:[%s2368 + $0xc8] sm:$0xff]
    %v2395 = vld [vmem:[%s2368 + $0xd0] sm:$0xff]
    %v2396 = vld [vmem:[%s2368 + $0xd8] sm:$0xff]
    %v2397 = vld [vmem:[%s2368 + $0xe0] sm:$0xff]
    %v2398 = vld [vmem:[%s2368 + $0xe8] sm:$0xff]
    %v2399 = vld [vmem:[%s2368 + $0xf0] sm:$0xff]
    %v2400 = vld [vmem:[%s2368 + $0xf8] sm:$0xff]
    %v2433 = vunpack.c.l.b16 %v2369
    %v2434 = vunpack.c.h.b16 %v2369
    %v2435 = vunpack.c.l.b16 %v2370
    %v2436 = vunpack.c.h.b16 %v2370
    %v2437 = vunpack.c.l.b16 %v2371
    %v2438 = vunpack.c.h.b16 %v2371
    %v2439 = vunpack.c.l.b16 %v2372
    %v2440 = vunpack.c.h.b16 %v2372
    %v2441 = vunpack.c.l.b16 %v2373
    %v2442 = vunpack.c.h.b16 %v2373
    %v2443 = vunpack.c.l.b16 %v2374
    %v2444 = vunpack.c.h.b16 %v2374
    %v2445 = vunpack.c.l.b16 %v2375
    %v2446 = vunpack.c.h.b16 %v2375
    %v2447 = vunpack.c.l.b16 %v2376
    %v2448 = vunpack.c.h.b16 %v2376
    %v2449 = vunpack.c.l.b16 %v2377
    %v2450 = vunpack.c.h.b16 %v2377
    %v2451 = vunpack.c.l.b16 %v2378
    %v2452 = vunpack.c.h.b16 %v2378
    %v2453 = vunpack.c.l.b16 %v2379
    %v2454 = vunpack.c.h.b16 %v2379
    %v2455 = vunpack.c.l.b16 %v2380
    %v2456 = vunpack.c.h.b16 %v2380
    %v2457 = vunpack.c.l.b16 %v2381
    %v2458 = vunpack.c.h.b16 %v2381
    %v2459 = vunpack.c.l.b16 %v2382
    %v2460 = vunpack.c.h.b16 %v2382
    %v2461 = vunpack.c.l.b16 %v2383
    %v2462 = vunpack.c.h.b16 %v2383
    %v2463 = vunpack.c.l.b16 %v2384
    %v2464 = vunpack.c.h.b16 %v2384
    %v2465 = vunpack.c.l.b16 %v2385
    %v2466 = vunpack.c.h.b16 %v2385
    %v2467 = vunpack.c.l.b16 %v2386
    %v2468 = vunpack.c.h.b16 %v2386
    %v2469 = vunpack.c.l.b16 %v2387
    %v2470 = vunpack.c.h.b16 %v2387
    %v2471 = vunpack.c.l.b16 %v2388
    %v2472 = vunpack.c.h.b16 %v2388
    %v2473 = vunpack.c.l.b16 %v2389
    %v2474 = vunpack.c.h.b16 %v2389
    %v2475 = vunpack.c.l.b16 %v2390
    %v2476 = vunpack.c.h.b16 %v2390
    %v2477 = vunpack.c.l.b16 %v2391
    %v2478 = vunpack.c.h.b16 %v2391
    %v2479 = vunpack.c.l.b16 %v2392
    %v2480 = vunpack.c.h.b16 %v2392
    %v2481 = vunpack.c.l.b16 %v2393
    %v2482 = vunpack.c.h.b16 %v2393
    %v2483 = vunpack.c.l.b16 %v2394
    %v2484 = vunpack.c.h.b16 %v2394
    %v2485 = vunpack.c.l.b16 %v2395
    %v2486 = vunpack.c.h.b16 %v2395
    %v2487 = vunpack.c.l.b16 %v2396
    %v2488 = vunpack.c.h.b16 %v2396
    %v2489 = vunpack.c.l.b16 %v2397
    %v2490 = vunpack.c.h.b16 %v2397
    %v2491 = vunpack.c.l.b16 %v2398
    %v2492 = vunpack.c.h.b16 %v2398
    %v2493 = vunpack.c.l.b16 %v2399
    %v2494 = vunpack.c.h.b16 %v2399
    %v2495 = vunpack.c.l.b16 %v2400
    %v2496 = vunpack.c.h.b16 %v2400
    %v2497 = vpack.c.b16 %v2435, %v2433
    %v2498 = vpack.c.b16 %v2436, %v2434
    %v2499 = vpack.c.b16 %v2439, %v2437
    %v2500 = vpack.c.b16 %v2440, %v2438
    %v2501 = vpack.c.b16 %v2443, %v2441
    %v2502 = vpack.c.b16 %v2444, %v2442
    %v2503 = vpack.c.b16 %v2447, %v2445
    %v2504 = vpack.c.b16 %v2448, %v2446
    %v2505 = vpack.c.b16 %v2451, %v2449
    %v2506 = vpack.c.b16 %v2452, %v2450
    %v2507 = vpack.c.b16 %v2455, %v2453
    %v2508 = vpack.c.b16 %v2456, %v2454
    %v2509 = vpack.c.b16 %v2459, %v2457
    %v2510 = vpack.c.b16 %v2460, %v2458
    %v2511 = vpack.c.b16 %v2463, %v2461
    %v2512 = vpack.c.b16 %v2464, %v2462
    %v2513 = vpack.c.b16 %v2467, %v2465
    %v2514 = vpack.c.b16 %v2468, %v2466
    %v2515 = vpack.c.b16 %v2471, %v2469
    %v2516 = vpack.c.b16 %v2472, %v2470
    %v2517 = vpack.c.b16 %v2475, %v2473
    %v2518 = vpack.c.b16 %v2476, %v2474
    %v2519 = vpack.c.b16 %v2479, %v2477
    %v2520 = vpack.c.b16 %v2480, %v2478
    %v2521 = vpack.c.b16 %v2483, %v2481
    %v2522 = vpack.c.b16 %v2484, %v2482
    %v2523 = vpack.c.b16 %v2487, %v2485
    %v2524 = vpack.c.b16 %v2488, %v2486
    %v2525 = vpack.c.b16 %v2491, %v2489
    %v2526 = vpack.c.b16 %v2492, %v2490
    %v2527 = vpack.c.b16 %v2495, %v2493
    %v2528 = vpack.c.b16 %v2496, %v2494
    %2561 = vmatprep.subr.bf16.mxu0 %v2498
    %2562 = vmatpush1.bf16.msra.mxu0 %v2497
    %2563 = vmatprep.subr.bf16.mxu0 %v2500
    %2564 = vmatpush1.bf16.msra.mxu0 %v2499
    %2565 = vmatprep.subr.bf16.mxu0 %v2502
    %2566 = vmatpush1.bf16.msra.mxu0 %v2501
    %2567 = vmatprep.subr.bf16.mxu0 %v2504
    %2568 = vmatpush1.bf16.msra.mxu0 %v2503
    %2569 = vmatprep.subr.bf16.mxu0 %v2506
    %2570 = vmatpush1.bf16.msra.mxu0 %v2505
    %2571 = vmatprep.subr.bf16.mxu0 %v2508
    %2572 = vmatpush1.bf16.msra.mxu0 %v2507
    %2573 = vmatprep.subr.bf16.mxu0 %v2510
    %2574 = vmatpush1.bf16.msra.mxu0 %v2509
    %2575 = vmatprep.subr.bf16.mxu0 %v2512
    %2576 = vmatpush1.bf16.msra.mxu0 %v2511
    %2577 = vmatprep.subr.bf16.mxu0 %v2514
    %2578 = vmatpush1.bf16.msra.mxu0 %v2513
    %2579 = vmatprep.subr.bf16.mxu0 %v2516
    %2580 = vmatpush1.bf16.msra.mxu0 %v2515
    %2581 = vmatprep.subr.bf16.mxu0 %v2518
    %2582 = vmatpush1.bf16.msra.mxu0 %v2517
    %2583 = vmatprep.subr.bf16.mxu0 %v2520
    %2584 = vmatpush1.bf16.msra.mxu0 %v2519
    %2585 = vmatprep.subr.bf16.mxu0 %v2522
    %2586 = vmatpush1.bf16.msra.mxu0 %v2521
    %2587 = vmatprep.subr.bf16.mxu0 %v2524
    %2588 = vmatpush1.bf16.msra.mxu0 %v2523
    %2589 = vmatprep.subr.bf16.mxu0 %v2526
    %2590 = vmatpush1.bf16.msra.mxu0 %v2525
    %2591 = vmatprep.subr.bf16.mxu0 %v2528
    %2592 = vmatpush1.bf16.msra.mxu0 %v2527
    %2593 = vmatprep.mubr.bf16.mxu0 %v2365
    %2594 = vmatmul.mubr.bf16.gmra.mrb[0].mxu0 %v2364
    %v2595 = vpop.f32.mrb[0].mxu0
    %v2596 = vadd.f32 0.0, %v2595
    %v2597 = vpop.f32.mrb[0].mxu0
    %v2598 = vadd.f32 0.0, %v2597
    %v2599 = vpop.f32.mrb[0].mxu0
    %v2600 = vadd.f32 0.0, %v2599
    %v2601 = vpop.f32.mrb[0].mxu0
    %v2602 = vadd.f32 0.0, %v2601
    %2603 = vmatprep.mubr.bf16.mxu0 %v2367
    %2604 = vmatmul.mubr.bf16.gmra.mrb[0].mxu0 %v2366
    %v2605 = vpop.f32.mrb[0].mxu0
    %v2606 = vadd.f32 0.0, %v2605
    %v2607 = vpop.f32.mrb[0].mxu0
    %v2608 = vadd.f32 0.0, %v2607
    %v2609 = vpop.f32.mrb[0].mxu0
    %v2610 = vadd.f32 0.0, %v2609
    %v2611 = vpop.f32.mrb[0].mxu0
    %v2612 = vadd.f32 0.0, %v2611
    %2613 = vdwg.mxu0
    %v2614 = vadd.f32 %v2240, %v2596
    %v2615 = vadd.f32 %v2242, %v2598
    %v2616 = vadd.f32 %v2244, %v2600
    %v2617 = vadd.f32 %v2246, %v2602
    %v2618 = vadd.f32 %v2250, %v2606
    %v2619 = vadd.f32 %v2252, %v2608
    %v2620 = vadd.f32 %v2254, %v2610
    %v2621 = vadd.f32 %v2256, %v2612
    %v2622 = vadd.f32 %v2614, %v2616
    %v2623 = vadd.f32 %v2622, %v2618
    %v2624 = vadd.f32 %v2623, %v2620
    %v2625 = vrot.slane %v2624, 4
    %v2626 = vadd.f32 %v2624, %v2625
    %v2627 = vrot.slane %v2626, 2
    %v2628 = vadd.f32 %v2626, %v2627
    %v2629 = vrot.slane %v2628, 1
    %v2630 = vadd.f32 %v2628, %v2629
    %v2631 = vadd.f32 %v2615, %v2617
    %v2632 = vadd.f32 %v2631, %v2619
    %v2633 = vadd.f32 %v2632, %v2621
    %v2634 = vrot.slane %v2633, 4
    %v2635 = vadd.f32 %v2633, %v2634
    %v2636 = vrot.slane %v2635, 2
    %v2637 = vadd.f32 %v2635, %v2636
    %v2638 = vrot.slane %v2637, 1
    %v2639 = vadd.f32 %v2637, %v2638
    %2640 = vmatprep.subr.mxu0 %v1223
    %2641 = vmatpush1.msra.mxu0 %v1222
    %2642 = vmatprep.subr.mxu0 %v1225
    %2643 = vmatpush1.msra.mxu0 %v1224
    %2644 = vmatprep.subr.mxu0 %v1227
    %2645 = vmatpush1.msra.mxu0 %v1226
    %2646 = vmatprep.subr.mxu0 %v1229
    %2647 = vmatpush1.msra.mxu0 %v1228
    %2648 = vmatprep.subr.mxu0 %v1231
    %2649 = vmatpush1.msra.mxu0 %v1230
    %2650 = vmatprep.subr.mxu0 %v1233
    %2651 = vmatpush1.msra.mxu0 %v1232
    %2652 = vmatprep.subr.mxu0 %v1235
    %2653 = vmatpush1.msra.mxu0 %v1234
    %2654 = vmatprep.subr.mxu0 %v1237
    %2655 = vmatpush1.msra.mxu0 %v1236
    %2656 = vmatprep.subr.mxu0 %v1239
    %2657 = vmatpush1.msra.mxu0 %v1238
    %2658 = vmatprep.subr.mxu0 %v1241
    %2659 = vmatpush1.msra.mxu0 %v1240
    %2660 = vmatprep.subr.mxu0 %v1243
    %2661 = vmatpush1.msra.mxu0 %v1242
    %2662 = vmatprep.subr.mxu0 %v1245
    %2663 = vmatpush1.msra.mxu0 %v1244
    %2664 = vmatprep.subr.mxu0 %v1247
    %2665 = vmatpush1.msra.mxu0 %v1246
    %2666 = vmatprep.subr.mxu0 %v1249
    %2667 = vmatpush1.msra.mxu0 %v1248
    %2668 = vmatprep.subr.mxu0 %v1251
    %2669 = vmatpush1.msra.mxu0 %v1250
    %2670 = vmatprep.subr.mxu0 %v1253
    %2671 = vmatpush1.msra.mxu0 %v1252
    %2672 = vmatprep.subr.mxu0 %v1255
    %2673 = vmatpush1.msra.mxu0 %v1254
    %2674 = vmatprep.subr.mxu0 %v1257
    %2675 = vmatpush1.msra.mxu0 %v1256
    %2676 = vmatprep.subr.mxu0 %v1259
    %2677 = vmatpush1.msra.mxu0 %v1258
    %2678 = vmatprep.subr.mxu0 %v1261
    %2679 = vmatpush1.msra.mxu0 %v1260
    %2680 = vmatprep.subr.mxu0 %v1263
    %2681 = vmatpush1.msra.mxu0 %v1262
    %2682 = vmatprep.subr.mxu0 %v1265
    %2683 = vmatpush1.msra.mxu0 %v1264
    %2684 = vmatprep.subr.mxu0 %v1267
    %2685 = vmatpush1.msra.mxu0 %v1266
    %2686 = vmatprep.subr.mxu0 %v1269
    %2687 = vmatpush1.msra.mxu0 %v1268
    %2688 = vmatprep.subr.mxu0 %v1271
    %2689 = vmatpush1.msra.mxu0 %v1270
    %2690 = vmatprep.subr.mxu0 %v1273
    %2691 = vmatpush1.msra.mxu0 %v1272
    %2692 = vmatprep.subr.mxu0 %v1275
    %2693 = vmatpush1.msra.mxu0 %v1274
    %2694 = vmatprep.subr.mxu0 %v1277
    %2695 = vmatpush1.msra.mxu0 %v1276
    %2696 = vmatprep.subr.mxu0 %v1279
    %2697 = vmatpush1.msra.mxu0 %v1278
    %2698 = vmatprep.subr.mxu0 %v1281
    %2699 = vmatpush1.msra.mxu0 %v1280
    %2700 = vmatprep.subr.mxu0 %v1283
    %2701 = vmatpush1.msra.mxu0 %v1282
    %2702 = vmatprep.subr.mxu0 %v1285
    %2703 = vmatpush1.msra.mxu0 %v1284
    %2704 = vmatprep.mubr.f32.mxu0 %v2639
    %2705 = vmatmul.mubr.f32.gmra.mrb[0].mxu0 %v2630
    %v2706 = vpop.f32.mrb[0].mxu0
    %v2707 = vadd.f32 0.0, %v2706
    %v2708 = vpop.f32.mrb[0].mxu0
    %v2709 = vadd.f32 0.0, %v2708
    %2710 = vdwg.mxu0
    %v2711 = vlaneseq
    %v2712 = vshrl.u32 %v2711, 7
    %v2713 = vsub.s32 0, %v2712
    %v2714 = vrot.slane %v2707, %v2713
    %v2715 = vlaneseq
    %v2716 = vshrl.u32 %v2715, 7
    %v2717 = vsub.s32 0, %v2716
    %v2718 = vrot.slane %v2709, %v2717
    %v2719 = vsub.f32 %v2614, %v2714
    %v2720 = vsub.f32 %v2615, %v2718
    %v2721 = vsub.f32 %v2616, %v2714
    %v2722 = vsub.f32 %v2617, %v2718
    %v2723 = vsub.f32 %v2618, %v2714
    %v2724 = vsub.f32 %v2619, %v2718
    %v2725 = vsub.f32 %v2620, %v2714
    %v2726 = vsub.f32 %v2621, %v2718
    %v2727 = vmul.f32 %v2719, %v2719
    %v2728 = vmul.f32 %v2720, %v2720
    %v2729 = vmul.f32 %v2721, %v2721
    %v2730 = vmul.f32 %v2722, %v2722
    %v2731 = vmul.f32 %v2723, %v2723
    %v2732 = vmul.f32 %v2724, %v2724
    %v2733 = vmul.f32 %v2725, %v2725
    %v2734 = vmul.f32 %v2726, %v2726
    %v2735 = vadd.f32 %v2727, %v2729
    %v2736 = vadd.f32 %v2735, %v2731
    %v2737 = vadd.f32 %v2736, %v2733
    %v2738 = vrot.slane %v2737, 4
    %v2739 = vadd.f32 %v2737, %v2738
    %v2740 = vrot.slane %v2739, 2
    %v2741 = vadd.f32 %v2739, %v2740
    %v2742 = vrot.slane %v2741, 1
    %v2743 = vadd.f32 %v2741, %v2742
    %v2744 = vadd.f32 %v2728, %v2730
    %v2745 = vadd.f32 %v2744, %v2732
    %v2746 = vadd.f32 %v2745, %v2734
    %v2747 = vrot.slane %v2746, 4
    %v2748 = vadd.f32 %v2746, %v2747
    %v2749 = vrot.slane %v2748, 2
    %v2750 = vadd.f32 %v2748, %v2749
    %v2751 = vrot.slane %v2750, 1
    %v2752 = vadd.f32 %v2750, %v2751
    %2753 = vmatprep.subr.mxu0 %v1223
    %2754 = vmatpush1.msra.mxu0 %v1222
    %2755 = vmatprep.subr.mxu0 %v1225
    %2756 = vmatpush1.msra.mxu0 %v1224
    %2757 = vmatprep.subr.mxu0 %v1227
    %2758 = vmatpush1.msra.mxu0 %v1226
    %2759 = vmatprep.subr.mxu0 %v1229
    %2760 = vmatpush1.msra.mxu0 %v1228
    %2761 = vmatprep.subr.mxu0 %v1231
    %2762 = vmatpush1.msra.mxu0 %v1230
    %2763 = vmatprep.subr.mxu0 %v1233
    %2764 = vmatpush1.msra.mxu0 %v1232
    %2765 = vmatprep.subr.mxu0 %v1235
    %2766 = vmatpush1.msra.mxu0 %v1234
    %2767 = vmatprep.subr.mxu0 %v1237
    %2768 = vmatpush1.msra.mxu0 %v1236
    %2769 = vmatprep.subr.mxu0 %v1239
    %2770 = vmatpush1.msra.mxu0 %v1238
    %2771 = vmatprep.subr.mxu0 %v1241
    %2772 = vmatpush1.msra.mxu0 %v1240
    %2773 = vmatprep.subr.mxu0 %v1243
    %2774 = vmatpush1.msra.mxu0 %v1242
    %2775 = vmatprep.subr.mxu0 %v1245
    %2776 = vmatpush1.msra.mxu0 %v1244
    %2777 = vmatprep.subr.mxu0 %v1247
    %2778 = vmatpush1.msra.mxu0 %v1246
    %2779 = vmatprep.subr.mxu0 %v1249
    %2780 = vmatpush1.msra.mxu0 %v1248
    %2781 = vmatprep.subr.mxu0 %v1251
    %2782 = vmatpush1.msra.mxu0 %v1250
    %2783 = vmatprep.subr.mxu0 %v1253
    %2784 = vmatpush1.msra.mxu0 %v1252
    %2785 = vmatprep.subr.mxu0 %v1255
    %2786 = vmatpush1.msra.mxu0 %v1254
    %2787 = vmatprep.subr.mxu0 %v1257
    %2788 = vmatpush1.msra.mxu0 %v1256
    %2789 = vmatprep.subr.mxu0 %v1259
    %2790 = vmatpush1.msra.mxu0 %v1258
    %2791 = vmatprep.subr.mxu0 %v1261
    %2792 = vmatpush1.msra.mxu0 %v1260
    %2793 = vmatprep.subr.mxu0 %v1263
    %2794 = vmatpush1.msra.mxu0 %v1262
    %2795 = vmatprep.subr.mxu0 %v1265
    %2796 = vmatpush1.msra.mxu0 %v1264
    %2797 = vmatprep.subr.mxu0 %v1267
    %2798 = vmatpush1.msra.mxu0 %v1266
    %2799 = vmatprep.subr.mxu0 %v1269
    %2800 = vmatpush1.msra.mxu0 %v1268
    %2801 = vmatprep.subr.mxu0 %v1271
    %2802 = vmatpush1.msra.mxu0 %v1270
    %2803 = vmatprep.subr.mxu0 %v1273
    %2804 = vmatpush1.msra.mxu0 %v1272
    %2805 = vmatprep.subr.mxu0 %v1275
    %2806 = vmatpush1.msra.mxu0 %v1274
    %2807 = vmatprep.subr.mxu0 %v1277
    %2808 = vmatpush1.msra.mxu0 %v1276
    %2809 = vmatprep.subr.mxu0 %v1279
    %2810 = vmatpush1.msra.mxu0 %v1278
    %2811 = vmatprep.subr.mxu0 %v1281
    %2812 = vmatpush1.msra.mxu0 %v1280
    %2813 = vmatprep.subr.mxu0 %v1283
    %2814 = vmatpush1.msra.mxu0 %v1282
    %2815 = vmatprep.subr.mxu0 %v1285
    %2816 = vmatpush1.msra.mxu0 %v1284
    %2817 = vmatprep.mubr.f32.mxu0 %v2752
    %2818 = vmatmul.mubr.f32.gmra.mrb[0].mxu0 %v2743
    %v2819 = vpop.f32.mrb[0].mxu0
    %v2820 = vadd.f32 1e-05, %v2819
    %v2821 = vpop.f32.mrb[0].mxu0
    %v2822 = vadd.f32 1e-05, %v2821
    %2823 = vdwg.mxu0
    %v2824 = vrsqrt.pop %v2820
    %v2825 = vrsqrt.pop %v2822
    %v2826 = vld [vmem:[#allocation5] sm:$0x3]
    %v2828 = vlaneseq
    %v2829 = vshrl.u32 %v2828, 7
    %v2830 = vsub.s32 0, %v2829
    %v2831 = vrot.slane %v2826, %v2830
    %v2832 = vlaneseq
    %v2833 = vshrl.u32 %v2832, 7
    %v2834 = vsub.s32 1, %v2833
    %v2835 = vrot.slane %v2826, %v2834
    %v2838 = vmul.f32 %v2824, %v2831
    %v2839 = vmul.f32 %v2825, %v2835
    %v2840 = vlaneseq
    %v2841 = vshrl.u32 %v2840, 7
    %v2842 = vsub.s32 0, %v2841
    %v2843 = vrot.slane %v2838, %v2842
    %v2844 = vlaneseq
    %v2845 = vshrl.u32 %v2844, 7
    %v2846 = vsub.s32 0, %v2845
    %v2847 = vrot.slane %v2839, %v2846
    %v2848 = vmul.f32 %v2719, %v2843
    %v2849 = vmul.f32 %v2720, %v2847
    %v2850 = vmul.f32 %v2721, %v2843
    %v2851 = vmul.f32 %v2722, %v2847
    %v2852 = vmul.f32 %v2723, %v2843
    %v2853 = vmul.f32 %v2724, %v2847
    %v2854 = vmul.f32 %v2725, %v2843
    %v2855 = vmul.f32 %v2726, %v2847
    %v2856 = vld [vmem:[#allocation2] sm:$0x3]
    %v2858 = vlaneseq
    %v2859 = vshrl.u32 %v2858, 7
    %v2860 = vsub.s32 0, %v2859
    %v2861 = vrot.slane %v2856, %v2860
    %v2862 = vlaneseq
    %v2863 = vshrl.u32 %v2862, 7
    %v2864 = vsub.s32 1, %v2863
    %v2865 = vrot.slane %v2856, %v2864
    %v2868 = vadd.f32 %v2848, %v2861
    %v2869 = vadd.f32 %v2849, %v2865
    %v2870 = vadd.f32 %v2850, %v2861
    %v2871 = vadd.f32 %v2851, %v2865
    %v2872 = vadd.f32 %v2852, %v2861
    %v2873 = vadd.f32 %v2853, %v2865
    %v2874 = vadd.f32 %v2854, %v2861
    %v2875 = vadd.f32 %v2855, %v2865
    %v2876 = vmax.f32 %v2868, 0.0
    %v2877 = vmax.f32 %v2869, 0.0
    %v2878 = vmax.f32 %v2870, 0.0
    %v2879 = vmax.f32 %v2871, 0.0
    %v2880 = vmax.f32 %v2872, 0.0
    %v2881 = vmax.f32 %v2873, 0.0
    %v2882 = vmax.f32 %v2874, 0.0
    %v2883 = vmax.f32 %v2875, 0.0
    %v2884 = vld [vmem:[#allocation13] sm:$0xff]
    %v2885 = vld [vmem:[#allocation13 + $0x8] sm:$0xff]
    %v2886 = vld [vmem:[#allocation13 + $0x10] sm:$0xff]
    %v2887 = vld [vmem:[#allocation13 + $0x18] sm:$0xff]
    %v2889 = vsel %vm618, %v2884, 0
    %v2892 = vsel %vm618, %v2885, 0
    %v2895 = vsel %vm618, %v2886, 0
    %v2898 = vsel %vm618, %v2887, 0
    %2900 = vmatprep.subr.mxu0 %v2877
    %2901 = vmatpush1.msra.mxu0 %v2876
    %2902 = vmatprep.subr.mxu0 %v2879
    %2903 = vmatpush1.msra.mxu0 %v2878
    %2904 = vmatprep.subr.mxu0 %v2881
    %2905 = vmatpush1.msra.mxu0 %v2880
    %2906 = vmatprep.subr.mxu0 %v2883
    %2907 = vmatpush1.msra.mxu0 %v2882
    %2908 = vmatprep.subr.mxu0 0.0
    %2909 = vmatpush1.msra.mxu0 0.0
    %2910 = vmatprep.subr.mxu0 0.0
    %2911 = vmatpush1.msra.mxu0 0.0
    %2912 = vmatprep.subr.mxu0 0.0
    %2913 = vmatpush1.msra.mxu0 0.0
    %2914 = vmatprep.subr.mxu0 0.0
    %2915 = vmatpush1.msra.mxu0 0.0
    %2916 = vmatprep.subr.mxu0 0.0
    %2917 = vmatpush1.msra.mxu0 0.0
    %2918 = vmatprep.subr.mxu0 0.0
    %2919 = vmatpush1.msra.mxu0 0.0
    %2920 = vmatprep.subr.mxu0 0.0
    %2921 = vmatpush1.msra.mxu0 0.0
    %2922 = vmatprep.subr.mxu0 0.0
    %2923 = vmatpush1.msra.mxu0 0.0
    %2924 = vmatprep.subr.mxu0 0.0
    %2925 = vmatpush1.msra.mxu0 0.0
    %2926 = vmatprep.subr.mxu0 0.0
    %2927 = vmatpush1.msra.mxu0 0.0
    %2928 = vmatprep.subr.mxu0 0.0
    %2929 = vmatpush1.msra.mxu0 0.0
    %2930 = vmatprep.subr.mxu0 0.0
    %2931 = vmatpush1.msra.mxu0 0.0
    %2932 = vmatprep.subr.mxu0 0.0
    %2933 = vmatpush1.msra.mxu0 0.0
    %2934 = vmatprep.subr.mxu0 0.0
    %2935 = vmatpush1.msra.mxu0 0.0
    %2936 = vmatprep.subr.mxu0 0.0
    %2937 = vmatpush1.msra.mxu0 0.0
    %2938 = vmatprep.subr.mxu0 0.0
    %2939 = vmatpush1.msra.mxu0 0.0
    %2940 = vmatprep.subr.mxu0 0.0
    %2941 = vmatpush1.msra.mxu0 0.0
    %2942 = vmatprep.subr.mxu0 0.0
    %2943 = vmatpush1.msra.mxu0 0.0
    %2944 = vmatprep.subr.mxu0 0.0
    %2945 = vmatpush1.msra.mxu0 0.0
    %2946 = vmatprep.subr.mxu0 0.0
    %2947 = vmatpush1.msra.mxu0 0.0
    %2948 = vmatprep.subr.mxu0 0.0
    %2949 = vmatpush1.msra.mxu0 0.0
    %2950 = vmatprep.subr.mxu0 0.0
    %2951 = vmatpush1.msra.mxu0 0.0
    %2952 = vmatprep.subr.mxu0 0.0
    %2953 = vmatpush1.msra.mxu0 0.0
    %2954 = vmatprep.subr.mxu0 0.0
    %2955 = vmatpush1.msra.mxu0 0.0
    %2956 = vmatprep.subr.mxu0 0.0
    %2957 = vmatpush1.msra.mxu0 0.0
    %2958 = vmatprep.subr.mxu0 0.0
    %2959 = vmatpush1.msra.mxu0 0.0
    %2960 = vmatprep.subr.mxu0 0.0
    %2961 = vmatpush1.msra.mxu0 0.0
    %2962 = vmatprep.subr.mxu0 0.0
    %2963 = vmatpush1.msra.mxu0 0.0
    %2964 = vmatprep.mubr.f32.mxu0 0.0
    %2965 = vmatmul.mubr.f32.gmra.mrb[0].mxu0 %v2889
    %v2966 = vpop.f32.mrb[0].mxu0
    %v2967 = vadd.f32 0.0, %v2966
    %v2968 = vpop.f32.mrb[0].mxu0
    %v2969 = vadd.f32 0.0, %v2968
    %2970 = vmatprep.mubr.f32.mxu0 0.0
    %2971 = vmatmul.mubr.f32.gmra.mrb[0].mxu0 %v2892
    %v2972 = vpop.f32.mrb[0].mxu0
    %v2973 = vadd.f32 0.0, %v2972
    %v2974 = vpop.f32.mrb[0].mxu0
    %v2975 = vadd.f32 0.0, %v2974
    %2976 = vmatprep.mubr.f32.mxu0 0.0
    %2977 = vmatmul.mubr.f32.gmra.mrb[0].mxu0 %v2895
    %v2978 = vpop.f32.mrb[0].mxu0
    %v2979 = vadd.f32 0.0, %v2978
    %v2980 = vpop.f32.mrb[0].mxu0
    %v2981 = vadd.f32 0.0, %v2980
    %2982 = vmatprep.mubr.f32.mxu0 0.0
    %2983 = vmatmul.mubr.f32.gmra.mrb[0].mxu0 %v2898
    %v2984 = vpop.f32.mrb[0].mxu0
    %v2985 = vadd.f32 0.0, %v2984
    %v2986 = vpop.f32.mrb[0].mxu0
    %v2987 = vadd.f32 0.0, %v2986
    %2988 = vdwg.mxu0
    %v2989 = vpack.c.bf16 %v2973, %v2967
    %v2990 = vpack.c.bf16 %v2975, %v2969
    %v2991 = vpack.c.bf16 %v2985, %v2979
    %v2992 = vpack.c.bf16 %v2987, %v2981
    %v2993 = vld [vmem:[#allocation11] sm:$0xff]
    %v2994 = vld [vmem:[#allocation11 + $0x8] sm:$0xff]
    %v2995 = vld [vmem:[#allocation11 + $0x10] sm:$0xff]
    %v2996 = vld [vmem:[#allocation11 + $0x18] sm:$0xff]
    %v2997 = vld [vmem:[#allocation11 + $0x20] sm:$0xff]
    %v2998 = vld [vmem:[#allocation11 + $0x28] sm:$0xff]
    %v2999 = vld [vmem:[#allocation11 + $0x30] sm:$0xff]
    %v3000 = vld [vmem:[#allocation11 + $0x38] sm:$0xff]
    %v3001 = vld [vmem:[#allocation11 + $0x40] sm:$0xff]
    %v3002 = vld [vmem:[#allocation11 + $0x48] sm:$0xff]
    %v3003 = vld [vmem:[#allocation11 + $0x50] sm:$0xff]
    %v3004 = vld [vmem:[#allocation11 + $0x58] sm:$0xff]
    %v3005 = vld [vmem:[#allocation11 + $0x60] sm:$0xff]
    %v3006 = vld [vmem:[#allocation11 + $0x68] sm:$0xff]
    %v3007 = vld [vmem:[#allocation11 + $0x70] sm:$0xff]
    %v3008 = vld [vmem:[#allocation11 + $0x78] sm:$0xff]
    %v3009 = vld [vmem:[#allocation11 + $0x80] sm:$0xff]
    %v3010 = vld [vmem:[#allocation11 + $0x88] sm:$0xff]
    %v3011 = vld [vmem:[#allocation11 + $0x90] sm:$0xff]
    %v3012 = vld [vmem:[#allocation11 + $0x98] sm:$0xff]
    %v3013 = vld [vmem:[#allocation11 + $0xa0] sm:$0xff]
    %v3014 = vld [vmem:[#allocation11 + $0xa8] sm:$0xff]
    %v3015 = vld [vmem:[#allocation11 + $0xb0] sm:$0xff]
    %v3016 = vld [vmem:[#allocation11 + $0xb8] sm:$0xff]
    %v3017 = vld [vmem:[#allocation11 + $0xc0] sm:$0xff]
    %v3018 = vld [vmem:[#allocation11 + $0xc8] sm:$0xff]
    %v3019 = vld [vmem:[#allocation11 + $0xd0] sm:$0xff]
    %v3020 = vld [vmem:[#allocation11 + $0xd8] sm:$0xff]
    %v3021 = vld [vmem:[#allocation11 + $0xe0] sm:$0xff]
    %v3022 = vld [vmem:[#allocation11 + $0xe8] sm:$0xff]
    %v3023 = vld [vmem:[#allocation11 + $0xf0] sm:$0xff]
    %v3024 = vld [vmem:[#allocation11 + $0xf8] sm:$0xff]
    %s3025 = scalar_lea.vmem [#allocation13], 32
    %v3026 = vld [vmem:[%s3025] sm:$0xff]
    %v3027 = vld [vmem:[%s3025 + $0x8] sm:$0xff]
    %v3028 = vld [vmem:[%s3025 + $0x10] sm:$0xff]
    %v3029 = vld [vmem:[%s3025 + $0x18] sm:$0xff]
    %v3031 = vsel %vm618, %v3026, 0
    %v3034 = vsel %vm618, %v3027, 0
    %v3037 = vsel %vm618, %v3028, 0
    %v3040 = vsel %vm618, %v3029, 0
    %3042 = vmatprep.subr.mxu0 %v2877
    %3043 = vmatpush1.msra.mxu0 %v2876
    %3044 = vmatprep.subr.mxu0 %v2879
    %3045 = vmatpush1.msra.mxu0 %v2878
    %3046 = vmatprep.subr.mxu0 %v2881
    %3047 = vmatpush1.msra.mxu0 %v2880
    %3048 = vmatprep.subr.mxu0 %v2883
    %3049 = vmatpush1.msra.mxu0 %v2882
    %3050 = vmatprep.subr.mxu0 0.0
    %3051 = vmatpush1.msra.mxu0 0.0
    %3052 = vmatprep.subr.mxu0 0.0
    %3053 = vmatpush1.msra.mxu0 0.0
    %3054 = vmatprep.subr.mxu0 0.0
    %3055 = vmatpush1.msra.mxu0 0.0
    %3056 = vmatprep.subr.mxu0 0.0
    %3057 = vmatpush1.msra.mxu0 0.0
    %3058 = vmatprep.subr.mxu0 0.0
    %3059 = vmatpush1.msra.mxu0 0.0
    %3060 = vmatprep.subr.mxu0 0.0
    %3061 = vmatpush1.msra.mxu0 0.0
    %3062 = vmatprep.subr.mxu0 0.0
    %3063 = vmatpush1.msra.mxu0 0.0
    %3064 = vmatprep.subr.mxu0 0.0
    %3065 = vmatpush1.msra.mxu0 0.0
    %3066 = vmatprep.subr.mxu0 0.0
    %3067 = vmatpush1.msra.mxu0 0.0
    %3068 = vmatprep.subr.mxu0 0.0
    %3069 = vmatpush1.msra.mxu0 0.0
    %3070 = vmatprep.subr.mxu0 0.0
    %3071 = vmatpush1.msra.mxu0 0.0
    %3072 = vmatprep.subr.mxu0 0.0
    %3073 = vmatpush1.msra.mxu0 0.0
    %3074 = vmatprep.subr.mxu0 0.0
    %3075 = vmatpush1.msra.mxu0 0.0
    %3076 = vmatprep.subr.mxu0 0.0
    %3077 = vmatpush1.msra.mxu0 0.0
    %3078 = vmatprep.subr.mxu0 0.0
    %3079 = vmatpush1.msra.mxu0 0.0
    %3080 = vmatprep.subr.mxu0 0.0
    %3081 = vmatpush1.msra.mxu0 0.0
    %3082 = vmatprep.subr.mxu0 0.0
    %3083 = vmatpush1.msra.mxu0 0.0
    %3084 = vmatprep.subr.mxu0 0.0
    %3085 = vmatpush1.msra.mxu0 0.0
    %3086 = vmatprep.subr.mxu0 0.0
    %3087 = vmatpush1.msra.mxu0 0.0
    %3088 = vmatprep.subr.mxu0 0.0
    %3089 = vmatpush1.msra.mxu0 0.0
    %3090 = vmatprep.subr.mxu0 0.0
    %3091 = vmatpush1.msra.mxu0 0.0
    %3092 = vmatprep.subr.mxu0 0.0
    %3093 = vmatpush1.msra.mxu0 0.0
    %3094 = vmatprep.subr.mxu0 0.0
    %3095 = vmatpush1.msra.mxu0 0.0
    %3096 = vmatprep.subr.mxu0 0.0
    %3097 = vmatpush1.msra.mxu0 0.0
    %3098 = vmatprep.subr.mxu0 0.0
    %3099 = vmatpush1.msra.mxu0 0.0
    %3100 = vmatprep.subr.mxu0 0.0
    %3101 = vmatpush1.msra.mxu0 0.0
    %3102 = vmatprep.subr.mxu0 0.0
    %3103 = vmatpush1.msra.mxu0 0.0
    %3104 = vmatprep.subr.mxu0 0.0
    %3105 = vmatpush1.msra.mxu0 0.0
    %3106 = vmatprep.mubr.f32.mxu0 0.0
    %3107 = vmatmul.mubr.f32.gmra.mrb[0].mxu0 %v3031
    %v3108 = vpop.f32.mrb[0].mxu0
    %v3109 = vadd.f32 0.0, %v3108
    %v3110 = vpop.f32.mrb[0].mxu0
    %v3111 = vadd.f32 0.0, %v3110
    %3112 = vmatprep.mubr.f32.mxu0 0.0
    %3113 = vmatmul.mubr.f32.gmra.mrb[0].mxu0 %v3034
    %v3114 = vpop.f32.mrb[0].mxu0
    %v3115 = vadd.f32 0.0, %v3114
    %v3116 = vpop.f32.mrb[0].mxu0
    %v3117 = vadd.f32 0.0, %v3116
    %3118 = vmatprep.mubr.f32.mxu0 0.0
    %3119 = vmatmul.mubr.f32.gmra.mrb[0].mxu0 %v3037
    %v3120 = vpop.f32.mrb[0].mxu0
    %v3121 = vadd.f32 0.0, %v3120
    %v3122 = vpop.f32.mrb[0].mxu0
    %v3123 = vadd.f32 0.0, %v3122
    %3124 = vmatprep.mubr.f32.mxu0 0.0
    %3125 = vmatmul.mubr.f32.gmra.mrb[0].mxu0 %v3040
    %v3126 = vpop.f32.mrb[0].mxu0
    %v3127 = vadd.f32 0.0, %v3126
    %v3128 = vpop.f32.mrb[0].mxu0
    %v3129 = vadd.f32 0.0, %v3128
    %3130 = vdwg.mxu0
    %v3131 = vpack.c.bf16 %v3115, %v3109
    %v3132 = vpack.c.bf16 %v3117, %v3111
    %v3133 = vpack.c.bf16 %v3127, %v3121
    %v3134 = vpack.c.bf16 %v3129, %v3123
    %s3135 = scalar_lea.vmem [#allocation11], 256
    %v3136 = vld [vmem:[%s3135] sm:$0xff]
    %v3137 = vld [vmem:[%s3135 + $0x8] sm:$0xff]
    %v3138 = vld [vmem:[%s3135 + $0x10] sm:$0xff]
    %v3139 = vld [vmem:[%s3135 + $0x18] sm:$0xff]
    %v3140 = vld [vmem:[%s3135 + $0x20] sm:$0xff]
    %v3141 = vld [vmem:[%s3135 + $0x28] sm:$0xff]
    %v3142 = vld [vmem:[%s3135 + $0x30] sm:$0xff]
    %v3143 = vld [vmem:[%s3135 + $0x38] sm:$0xff]
    %v3144 = vld [vmem:[%s3135 + $0x40] sm:$0xff]
    %v3145 = vld [vmem:[%s3135 + $0x48] sm:$0xff]
    %v3146 = vld [vmem:[%s3135 + $0x50] sm:$0xff]
    %v3147 = vld [vmem:[%s3135 + $0x58] sm:$0xff]
    %v3148 = vld [vmem:[%s3135 + $0x60] sm:$0xff]
    %v3149 = vld [vmem:[%s3135 + $0x68] sm:$0xff]
    %v3150 = vld [vmem:[%s3135 + $0x70] sm:$0xff]
    %v3151 = vld [vmem:[%s3135 + $0x78] sm:$0xff]
    %v3152 = vld [vmem:[%s3135 + $0x80] sm:$0xff]
    %v3153 = vld [vmem:[%s3135 + $0x88] sm:$0xff]
    %v3154 = vld [vmem:[%s3135 + $0x90] sm:$0xff]
    %v3155 = vld [vmem:[%s3135 + $0x98] sm:$0xff]
    %v3156 = vld [vmem:[%s3135 + $0xa0] sm:$0xff]
    %v3157 = vld [vmem:[%s3135 + $0xa8] sm:$0xff]
    %v3158 = vld [vmem:[%s3135 + $0xb0] sm:$0xff]
    %v3159 = vld [vmem:[%s3135 + $0xb8] sm:$0xff]
    %v3160 = vld [vmem:[%s3135 + $0xc0] sm:$0xff]
    %v3161 = vld [vmem:[%s3135 + $0xc8] sm:$0xff]
    %v3162 = vld [vmem:[%s3135 + $0xd0] sm:$0xff]
    %v3163 = vld [vmem:[%s3135 + $0xd8] sm:$0xff]
    %v3164 = vld [vmem:[%s3135 + $0xe0] sm:$0xff]
    %v3165 = vld [vmem:[%s3135 + $0xe8] sm:$0xff]
    %v3166 = vld [vmem:[%s3135 + $0xf0] sm:$0xff]
    %v3167 = vld [vmem:[%s3135 + $0xf8] sm:$0xff]
    %v3200 = vunpack.c.l.b16 %v3136
    %v3201 = vunpack.c.h.b16 %v3136
    %v3202 = vunpack.c.l.b16 %v3137
    %v3203 = vunpack.c.h.b16 %v3137
    %v3204 = vunpack.c.l.b16 %v3138
    %v3205 = vunpack.c.h.b16 %v3138
    %v3206 = vunpack.c.l.b16 %v3139
    %v3207 = vunpack.c.h.b16 %v3139
    %v3208 = vunpack.c.l.b16 %v3140
    %v3209 = vunpack.c.h.b16 %v3140
    %v3210 = vunpack.c.l.b16 %v3141
    %v3211 = vunpack.c.h.b16 %v3141
    %v3212 = vunpack.c.l.b16 %v3142
    %v3213 = vunpack.c.h.b16 %v3142
    %v3214 = vunpack.c.l.b16 %v3143
    %v3215 = vunpack.c.h.b16 %v3143
    %v3216 = vunpack.c.l.b16 %v3144
    %v3217 = vunpack.c.h.b16 %v3144
    %v3218 = vunpack.c.l.b16 %v3145
    %v3219 = vunpack.c.h.b16 %v3145
    %v3220 = vunpack.c.l.b16 %v3146
    %v3221 = vunpack.c.h.b16 %v3146
    %v3222 = vunpack.c.l.b16 %v3147
    %v3223 = vunpack.c.h.b16 %v3147
    %v3224 = vunpack.c.l.b16 %v3148
    %v3225 = vunpack.c.h.b16 %v3148
    %v3226 = vunpack.c.l.b16 %v3149
    %v3227 = vunpack.c.h.b16 %v3149
    %v3228 = vunpack.c.l.b16 %v3150
    %v3229 = vunpack.c.h.b16 %v3150
    %v3230 = vunpack.c.l.b16 %v3151
    %v3231 = vunpack.c.h.b16 %v3151
    %v3232 = vunpack.c.l.b16 %v3152
    %v3233 = vunpack.c.h.b16 %v3152
    %v3234 = vunpack.c.l.b16 %v3153
    %v3235 = vunpack.c.h.b16 %v3153
    %v3236 = vunpack.c.l.b16 %v3154
    %v3237 = vunpack.c.h.b16 %v3154
    %v3238 = vunpack.c.l.b16 %v3155
    %v3239 = vunpack.c.h.b16 %v3155
    %v3240 = vunpack.c.l.b16 %v3156
    %v3241 = vunpack.c.h.b16 %v3156
    %v3242 = vunpack.c.l.b16 %v3157
    %v3243 = vunpack.c.h.b16 %v3157
    %v3244 = vunpack.c.l.b16 %v3158
    %v3245 = vunpack.c.h.b16 %v3158
    %v3246 = vunpack.c.l.b16 %v3159
    %v3247 = vunpack.c.h.b16 %v3159
    %v3248 = vunpack.c.l.b16 %v3160
    %v3249 = vunpack.c.h.b16 %v3160
    %v3250 = vunpack.c.l.b16 %v3161
    %v3251 = vunpack.c.h.b16 %v3161
    %v3252 = vunpack.c.l.b16 %v3162
    %v3253 = vunpack.c.h.b16 %v3162
    %v3254 = vunpack.c.l.b16 %v3163
    %v3255 = vunpack.c.h.b16 %v3163
    %v3256 = vunpack.c.l.b16 %v3164
    %v3257 = vunpack.c.h.b16 %v3164
    %v3258 = vunpack.c.l.b16 %v3165
    %v3259 = vunpack.c.h.b16 %v3165
    %v3260 = vunpack.c.l.b16 %v3166
    %v3261 = vunpack.c.h.b16 %v3166
    %v3262 = vunpack.c.l.b16 %v3167
    %v3263 = vunpack.c.h.b16 %v3167
    %v3264 = vpack.c.b16 %v3202, %v3200
    %v3265 = vpack.c.b16 %v3203, %v3201
    %v3266 = vpack.c.b16 %v3206, %v3204
    %v3267 = vpack.c.b16 %v3207, %v3205
    %v3268 = vpack.c.b16 %v3210, %v3208
    %v3269 = vpack.c.b16 %v3211, %v3209
    %v3270 = vpack.c.b16 %v3214, %v3212
    %v3271 = vpack.c.b16 %v3215, %v3213
    %v3272 = vpack.c.b16 %v3218, %v3216
    %v3273 = vpack.c.b16 %v3219, %v3217
    %v3274 = vpack.c.b16 %v3222, %v3220
    %v3275 = vpack.c.b16 %v3223, %v3221
    %v3276 = vpack.c.b16 %v3226, %v3224
    %v3277 = vpack.c.b16 %v3227, %v3225
    %v3278 = vpack.c.b16 %v3230, %v3228
    %v3279 = vpack.c.b16 %v3231, %v3229
    %v3280 = vpack.c.b16 %v3234, %v3232
    %v3281 = vpack.c.b16 %v3235, %v3233
    %v3282 = vpack.c.b16 %v3238, %v3236
    %v3283 = vpack.c.b16 %v3239, %v3237
    %v3284 = vpack.c.b16 %v3242, %v3240
    %v3285 = vpack.c.b16 %v3243, %v3241
    %v3286 = vpack.c.b16 %v3246, %v3244
    %v3287 = vpack.c.b16 %v3247, %v3245
    %v3288 = vpack.c.b16 %v3250, %v3248
    %v3289 = vpack.c.b16 %v3251, %v3249
    %v3290 = vpack.c.b16 %v3254, %v3252
    %v3291 = vpack.c.b16 %v3255, %v3253
    %v3292 = vpack.c.b16 %v3258, %v3256
    %v3293 = vpack.c.b16 %v3259, %v3257
    %v3294 = vpack.c.b16 %v3262, %v3260
    %v3295 = vpack.c.b16 %v3263, %v3261
    %3328 = vmatprep.subr.bf16.mxu0 %v3265
    %3329 = vmatpush1.bf16.msra.mxu0 %v3264
    %3330 = vmatprep.subr.bf16.mxu0 %v3267
    %3331 = vmatpush1.bf16.msra.mxu0 %v3266
    %3332 = vmatprep.subr.bf16.mxu0 %v3269
    %3333 = vmatpush1.bf16.msra.mxu0 %v3268
    %3334 = vmatprep.subr.bf16.mxu0 %v3271
    %3335 = vmatpush1.bf16.msra.mxu0 %v3270
    %3336 = vmatprep.subr.bf16.mxu0 %v3273
    %3337 = vmatpush1.bf16.msra.mxu0 %v3272
    %3338 = vmatprep.subr.bf16.mxu0 %v3275
    %3339 = vmatpush1.bf16.msra.mxu0 %v3274
    %3340 = vmatprep.subr.bf16.mxu0 %v3277
    %3341 = vmatpush1.bf16.msra.mxu0 %v3276
    %3342 = vmatprep.subr.bf16.mxu0 %v3279
    %3343 = vmatpush1.bf16.msra.mxu0 %v3278
    %3344 = vmatprep.subr.bf16.mxu0 %v3281
    %3345 = vmatpush1.bf16.msra.mxu0 %v3280
    %3346 = vmatprep.subr.bf16.mxu0 %v3283
    %3347 = vmatpush1.bf16.msra.mxu0 %v3282
    %3348 = vmatprep.subr.bf16.mxu0 %v3285
    %3349 = vmatpush1.bf16.msra.mxu0 %v3284
    %3350 = vmatprep.subr.bf16.mxu0 %v3287
    %3351 = vmatpush1.bf16.msra.mxu0 %v3286
    %3352 = vmatprep.subr.bf16.mxu0 %v3289
    %3353 = vmatpush1.bf16.msra.mxu0 %v3288
    %3354 = vmatprep.subr.bf16.mxu0 %v3291
    %3355 = vmatpush1.bf16.msra.mxu0 %v3290
    %3356 = vmatprep.subr.bf16.mxu0 %v3293
    %3357 = vmatpush1.bf16.msra.mxu0 %v3292
    %3358 = vmatprep.subr.bf16.mxu0 %v3295
    %3359 = vmatpush1.bf16.msra.mxu0 %v3294
    %3360 = vmatprep.mubr.bf16.mxu0 %v3132
    %3361 = vmatmul.mubr.bf16.gmra.mrb[0].mxu0 %v3131
    %v3362 = vpop.f32.mrb[0].mxu0
    %v3363 = vadd.f32 0.0, %v3362
    %v3364 = vpop.f32.mrb[0].mxu0
    %v3365 = vadd.f32 0.0, %v3364
    %v3366 = vpop.f32.mrb[0].mxu0
    %v3367 = vadd.f32 0.0, %v3366
    %v3368 = vpop.f32.mrb[0].mxu0
    %v3369 = vadd.f32 0.0, %v3368
    %3370 = vmatprep.mubr.bf16.mxu0 %v3134
    %3371 = vmatmul.mubr.bf16.gmra.mrb[0].mxu0 %v3133
    %v3372 = vpop.f32.mrb[0].mxu0
    %v3373 = vadd.f32 0.0, %v3372
    %v3374 = vpop.f32.mrb[0].mxu0
    %v3375 = vadd.f32 0.0, %v3374
    %v3376 = vpop.f32.mrb[0].mxu0
    %v3377 = vadd.f32 0.0, %v3376
    %v3378 = vpop.f32.mrb[0].mxu0
    %v3379 = vadd.f32 0.0, %v3378
    %3380 = vdwg.mxu0
    %v3413 = vunpack.c.l.b16 %v2993
    %v3414 = vunpack.c.h.b16 %v2993
    %v3415 = vunpack.c.l.b16 %v2994
    %v3416 = vunpack.c.h.b16 %v2994
    %v3417 = vunpack.c.l.b16 %v2995
    %v3418 = vunpack.c.h.b16 %v2995
    %v3419 = vunpack.c.l.b16 %v2996
    %v3420 = vunpack.c.h.b16 %v2996
    %v3421 = vunpack.c.l.b16 %v2997
    %v3422 = vunpack.c.h.b16 %v2997
    %v3423 = vunpack.c.l.b16 %v2998
    %v3424 = vunpack.c.h.b16 %v2998
    %v3425 = vunpack.c.l.b16 %v2999
    %v3426 = vunpack.c.h.b16 %v2999
    %v3427 = vunpack.c.l.b16 %v3000
    %v3428 = vunpack.c.h.b16 %v3000
    %v3429 = vunpack.c.l.b16 %v3001
    %v3430 = vunpack.c.h.b16 %v3001
    %v3431 = vunpack.c.l.b16 %v3002
    %v3432 = vunpack.c.h.b16 %v3002
    %v3433 = vunpack.c.l.b16 %v3003
    %v3434 = vunpack.c.h.b16 %v3003
    %v3435 = vunpack.c.l.b16 %v3004
    %v3436 = vunpack.c.h.b16 %v3004
    %v3437 = vunpack.c.l.b16 %v3005
    %v3438 = vunpack.c.h.b16 %v3005
    %v3439 = vunpack.c.l.b16 %v3006
    %v3440 = vunpack.c.h.b16 %v3006
    %v3441 = vunpack.c.l.b16 %v3007
    %v3442 = vunpack.c.h.b16 %v3007
    %v3443 = vunpack.c.l.b16 %v3008
    %v3444 = vunpack.c.h.b16 %v3008
    %v3445 = vunpack.c.l.b16 %v3009
    %v3446 = vunpack.c.h.b16 %v3009
    %v3447 = vunpack.c.l.b16 %v3010
    %v3448 = vunpack.c.h.b16 %v3010
    %v3449 = vunpack.c.l.b16 %v3011
    %v3450 = vunpack.c.h.b16 %v3011
    %v3451 = vunpack.c.l.b16 %v3012
    %v3452 = vunpack.c.h.b16 %v3012
    %v3453 = vunpack.c.l.b16 %v3013
    %v3454 = vunpack.c.h.b16 %v3013
    %v3455 = vunpack.c.l.b16 %v3014
    %v3456 = vunpack.c.h.b16 %v3014
    %v3457 = vunpack.c.l.b16 %v3015
    %v3458 = vunpack.c.h.b16 %v3015
    %v3459 = vunpack.c.l.b16 %v3016
    %v3460 = vunpack.c.h.b16 %v3016
    %v3461 = vunpack.c.l.b16 %v3017
    %v3462 = vunpack.c.h.b16 %v3017
    %v3463 = vunpack.c.l.b16 %v3018
    %v3464 = vunpack.c.h.b16 %v3018
    %v3465 = vunpack.c.l.b16 %v3019
    %v3466 = vunpack.c.h.b16 %v3019
    %v3467 = vunpack.c.l.b16 %v3020
    %v3468 = vunpack.c.h.b16 %v3020
    %v3469 = vunpack.c.l.b16 %v3021
    %v3470 = vunpack.c.h.b16 %v3021
    %v3471 = vunpack.c.l.b16 %v3022
    %v3472 = vunpack.c.h.b16 %v3022
    %v3473 = vunpack.c.l.b16 %v3023
    %v3474 = vunpack.c.h.b16 %v3023
    %v3475 = vunpack.c.l.b16 %v3024
    %v3476 = vunpack.c.h.b16 %v3024
    %v3477 = vpack.c.b16 %v3415, %v3413
    %v3478 = vpack.c.b16 %v3416, %v3414
    %v3479 = vpack.c.b16 %v3419, %v3417
    %v3480 = vpack.c.b16 %v3420, %v3418
    %v3481 = vpack.c.b16 %v3423, %v3421
    %v3482 = vpack.c.b16 %v3424, %v3422
    %v3483 = vpack.c.b16 %v3427, %v3425
    %v3484 = vpack.c.b16 %v3428, %v3426
    %v3485 = vpack.c.b16 %v3431, %v3429
    %v3486 = vpack.c.b16 %v3432, %v3430
    %v3487 = vpack.c.b16 %v3435, %v3433
    %v3488 = vpack.c.b16 %v3436, %v3434
    %v3489 = vpack.c.b16 %v3439, %v3437
    %v3490 = vpack.c.b16 %v3440, %v3438
    %v3491 = vpack.c.b16 %v3443, %v3441
    %v3492 = vpack.c.b16 %v3444, %v3442
    %v3493 = vpack.c.b16 %v3447, %v3445
    %v3494 = vpack.c.b16 %v3448, %v3446
    %v3495 = vpack.c.b16 %v3451, %v3449
    %v3496 = vpack.c.b16 %v3452, %v3450
    %v3497 = vpack.c.b16 %v3455, %v3453
    %v3498 = vpack.c.b16 %v3456, %v3454
    %v3499 = vpack.c.b16 %v3459, %v3457
    %v3500 = vpack.c.b16 %v3460, %v3458
    %v3501 = vpack.c.b16 %v3463, %v3461
    %v3502 = vpack.c.b16 %v3464, %v3462
    %v3503 = vpack.c.b16 %v3467, %v3465
    %v3504 = vpack.c.b16 %v3468, %v3466
    %v3505 = vpack.c.b16 %v3471, %v3469
    %v3506 = vpack.c.b16 %v3472, %v3470
    %v3507 = vpack.c.b16 %v3475, %v3473
    %v3508 = vpack.c.b16 %v3476, %v3474
    %3541 = vmatprep.subr.bf16.mxu0 %v3478
    %3542 = vmatpush1.bf16.msra.mxu0 %v3477
    %3543 = vmatprep.subr.bf16.mxu0 %v3480
    %3544 = vmatpush1.bf16.msra.mxu0 %v3479
    %3545 = vmatprep.subr.bf16.mxu0 %v3482
    %3546 = vmatpush1.bf16.msra.mxu0 %v3481
    %3547 = vmatprep.subr.bf16.mxu0 %v3484
    %3548 = vmatpush1.bf16.msra.mxu0 %v3483
    %3549 = vmatprep.subr.bf16.mxu0 %v3486
    %3550 = vmatpush1.bf16.msra.mxu0 %v3485
    %3551 = vmatprep.subr.bf16.mxu0 %v3488
    %3552 = vmatpush1.bf16.msra.mxu0 %v3487
    %3553 = vmatprep.subr.bf16.mxu0 %v3490
    %3554 = vmatpush1.bf16.msra.mxu0 %v3489
    %3555 = vmatprep.subr.bf16.mxu0 %v3492
    %3556 = vmatpush1.bf16.msra.mxu0 %v3491
    %3557 = vmatprep.subr.bf16.mxu0 %v3494
    %3558 = vmatpush1.bf16.msra.mxu0 %v3493
    %3559 = vmatprep.subr.bf16.mxu0 %v3496
    %3560 = vmatpush1.bf16.msra.mxu0 %v3495
    %3561 = vmatprep.subr.bf16.mxu0 %v3498
    %3562 = vmatpush1.bf16.msra.mxu0 %v3497
    %3563 = vmatprep.subr.bf16.mxu0 %v3500
    %3564 = vmatpush1.bf16.msra.mxu0 %v3499
    %3565 = vmatprep.subr.bf16.mxu0 %v3502
    %3566 = vmatpush1.bf16.msra.mxu0 %v3501
    %3567 = vmatprep.subr.bf16.mxu0 %v3504
    %3568 = vmatpush1.bf16.msra.mxu0 %v3503
    %3569 = vmatprep.subr.bf16.mxu0 %v3506
    %3570 = vmatpush1.bf16.msra.mxu0 %v3505
    %3571 = vmatprep.subr.bf16.mxu0 %v3508
    %3572 = vmatpush1.bf16.msra.mxu0 %v3507
    %3573 = vmatprep.mubr.bf16.mxu0 %v2990
    %3574 = vmatmul.mubr.bf16.gmra.mrb[0].mxu0 %v2989
    %v3575 = vpop.f32.mrb[0].mxu0
    %v3576 = vadd.f32 %v3363, %v3575
    %v3577 = vpop.f32.mrb[0].mxu0
    %v3578 = vadd.f32 %v3365, %v3577
    %v3579 = vpop.f32.mrb[0].mxu0
    %v3580 = vadd.f32 %v3367, %v3579
    %v3581 = vpop.f32.mrb[0].mxu0
    %v3582 = vadd.f32 %v3369, %v3581
    %3583 = vmatprep.mubr.bf16.mxu0 %v2992
    %3584 = vmatmul.mubr.bf16.gmra.mrb[0].mxu0 %v2991
    %v3585 = vpop.f32.mrb[0].mxu0
    %v3586 = vadd.f32 %v3373, %v3585
    %v3587 = vpop.f32.mrb[0].mxu0
    %v3588 = vadd.f32 %v3375, %v3587
    %v3589 = vpop.f32.mrb[0].mxu0
    %v3590 = vadd.f32 %v3377, %v3589
    %v3591 = vpop.f32.mrb[0].mxu0
    %v3592 = vadd.f32 %v3379, %v3591
    %3593 = vdwg.mxu0
    %s3594 = scalar_lea.vmem [#allocation13], 64
    %v3595 = vld [vmem:[%s3594] sm:$0xff]
    %v3596 = vld [vmem:[%s3594 + $0x8] sm:$0xff]
    %v3597 = vld [vmem:[%s3594 + $0x10] sm:$0xff]
    %v3598 = vld [vmem:[%s3594 + $0x18] sm:$0xff]
    %v3600 = vsel %vm618, %v3595, 0
    %v3603 = vsel %vm618, %v3596, 0
    %v3606 = vsel %vm618, %v3597, 0
    %v3609 = vsel %vm618, %v3598, 0
    %3611 = vmatprep.subr.mxu0 %v2877
    %3612 = vmatpush1.msra.mxu0 %v2876
    %3613 = vmatprep.subr.mxu0 %v2879
    %3614 = vmatpush1.msra.mxu0 %v2878
    %3615 = vmatprep.subr.mxu0 %v2881
    %3616 = vmatpush1.msra.mxu0 %v2880
    %3617 = vmatprep.subr.mxu0 %v2883
    %3618 = vmatpush1.msra.mxu0 %v2882
    %3619 = vmatprep.subr.mxu0 0.0
    %3620 = vmatpush1.msra.mxu0 0.0
    %3621 = vmatprep.subr.mxu0 0.0
    %3622 = vmatpush1.msra.mxu0 0.0
    %3623 = vmatprep.subr.mxu0 0.0
    %3624 = vmatpush1.msra.mxu0 0.0
    %3625 = vmatprep.subr.mxu0 0.0
    %3626 = vmatpush1.msra.mxu0 0.0
    %3627 = vmatprep.subr.mxu0 0.0
    %3628 = vmatpush1.msra.mxu0 0.0
    %3629 = vmatprep.subr.mxu0 0.0
    %3630 = vmatpush1.msra.mxu0 0.0
    %3631 = vmatprep.subr.mxu0 0.0
    %3632 = vmatpush1.msra.mxu0 0.0
    %3633 = vmatprep.subr.mxu0 0.0
    %3634 = vmatpush1.msra.mxu0 0.0
    %3635 = vmatprep.subr.mxu0 0.0
    %3636 = vmatpush1.msra.mxu0 0.0
    %3637 = vmatprep.subr.mxu0 0.0
    %3638 = vmatpush1.msra.mxu0 0.0
    %3639 = vmatprep.subr.mxu0 0.0
    %3640 = vmatpush1.msra.mxu0 0.0
    %3641 = vmatprep.subr.mxu0 0.0
    %3642 = vmatpush1.msra.mxu0 0.0
    %3643 = vmatprep.subr.mxu0 0.0
    %3644 = vmatpush1.msra.mxu0 0.0
    %3645 = vmatprep.subr.mxu0 0.0
    %3646 = vmatpush1.msra.mxu0 0.0
    %3647 = vmatprep.subr.mxu0 0.0
    %3648 = vmatpush1.msra.mxu0 0.0
    %3649 = vmatprep.subr.mxu0 0.0
    %3650 = vmatpush1.msra.mxu0 0.0
    %3651 = vmatprep.subr.mxu0 0.0
    %3652 = vmatpush1.msra.mxu0 0.0
    %3653 = vmatprep.subr.mxu0 0.0
    %3654 = vmatpush1.msra.mxu0 0.0
    %3655 = vmatprep.subr.mxu0 0.0
    %3656 = vmatpush1.msra.mxu0 0.0
    %3657 = vmatprep.subr.mxu0 0.0
    %3658 = vmatpush1.msra.mxu0 0.0
    %3659 = vmatprep.subr.mxu0 0.0
    %3660 = vmatpush1.msra.mxu0 0.0
    %3661 = vmatprep.subr.mxu0 0.0
    %3662 = vmatpush1.msra.mxu0 0.0
    %3663 = vmatprep.subr.mxu0 0.0
    %3664 = vmatpush1.msra.mxu0 0.0
    %3665 = vmatprep.subr.mxu0 0.0
    %3666 = vmatpush1.msra.mxu0 0.0
    %3667 = vmatprep.subr.mxu0 0.0
    %3668 = vmatpush1.msra.mxu0 0.0
    %3669 = vmatprep.subr.mxu0 0.0
    %3670 = vmatpush1.msra.mxu0 0.0
    %3671 = vmatprep.subr.mxu0 0.0
    %3672 = vmatpush1.msra.mxu0 0.0
    %3673 = vmatprep.subr.mxu0 0.0
    %3674 = vmatpush1.msra.mxu0 0.0
    %3675 = vmatprep.mubr.f32.mxu0 0.0
    %3676 = vmatmul.mubr.f32.gmra.mrb[0].mxu0 %v3600
    %v3677 = vpop.f32.mrb[0].mxu0
    %v3678 = vadd.f32 0.0, %v3677
    %v3679 = vpop.f32.mrb[0].mxu0
    %v3680 = vadd.f32 0.0, %v3679
    %3681 = vmatprep.mubr.f32.mxu0 0.0
    %3682 = vmatmul.mubr.f32.gmra.mrb[0].mxu0 %v3603
    %v3683 = vpop.f32.mrb[0].mxu0
    %v3684 = vadd.f32 0.0, %v3683
    %v3685 = vpop.f32.mrb[0].mxu0
    %v3686 = vadd.f32 0.0, %v3685
    %3687 = vmatprep.mubr.f32.mxu0 0.0
    %3688 = vmatmul.mubr.f32.gmra.mrb[0].mxu0 %v3606
    %v3689 = vpop.f32.mrb[0].mxu0
    %v3690 = vadd.f32 0.0, %v3689
    %v3691 = vpop.f32.mrb[0].mxu0
    %v3692 = vadd.f32 0.0, %v3691
    %3693 = vmatprep.mubr.f32.mxu0 0.0
    %3694 = vmatmul.mubr.f32.gmra.mrb[0].mxu0 %v3609
    %v3695 = vpop.f32.mrb[0].mxu0
    %v3696 = vadd.f32 0.0, %v3695
    %v3697 = vpop.f32.mrb[0].mxu0
    %v3698 = vadd.f32 0.0, %v3697
    %3699 = vdwg.mxu0
    %v3700 = vpack.c.bf16 %v3684, %v3678
    %v3701 = vpack.c.bf16 %v3686, %v3680
    %v3702 = vpack.c.bf16 %v3696, %v3690
    %v3703 = vpack.c.bf16 %v3698, %v3692
    %s3704 = scalar_lea.vmem [#allocation11], 512
    %v3705 = vld [vmem:[%s3704] sm:$0xff]
    %v3706 = vld [vmem:[%s3704 + $0x8] sm:$0xff]
    %v3707 = vld [vmem:[%s3704 + $0x10] sm:$0xff]
    %v3708 = vld [vmem:[%s3704 + $0x18] sm:$0xff]
    %v3709 = vld [vmem:[%s3704 + $0x20] sm:$0xff]
    %v3710 = vld [vmem:[%s3704 + $0x28] sm:$0xff]
    %v3711 = vld [vmem:[%s3704 + $0x30] sm:$0xff]
    %v3712 = vld [vmem:[%s3704 + $0x38] sm:$0xff]
    %v3713 = vld [vmem:[%s3704 + $0x40] sm:$0xff]
    %v3714 = vld [vmem:[%s3704 + $0x48] sm:$0xff]
    %v3715 = vld [vmem:[%s3704 + $0x50] sm:$0xff]
    %v3716 = vld [vmem:[%s3704 + $0x58] sm:$0xff]
    %v3717 = vld [vmem:[%s3704 + $0x60] sm:$0xff]
    %v3718 = vld [vmem:[%s3704 + $0x68] sm:$0xff]
    %v3719 = vld [vmem:[%s3704 + $0x70] sm:$0xff]
    %v3720 = vld [vmem:[%s3704 + $0x78] sm:$0xff]
    %v3721 = vld [vmem:[%s3704 + $0x80] sm:$0xff]
    %v3722 = vld [vmem:[%s3704 + $0x88] sm:$0xff]
    %v3723 = vld [vmem:[%s3704 + $0x90] sm:$0xff]
    %v3724 = vld [vmem:[%s3704 + $0x98] sm:$0xff]
    %v3725 = vld [vmem:[%s3704 + $0xa0] sm:$0xff]
    %v3726 = vld [vmem:[%s3704 + $0xa8] sm:$0xff]
    %v3727 = vld [vmem:[%s3704 + $0xb0] sm:$0xff]
    %v3728 = vld [vmem:[%s3704 + $0xb8] sm:$0xff]
    %v3729 = vld [vmem:[%s3704 + $0xc0] sm:$0xff]
    %v3730 = vld [vmem:[%s3704 + $0xc8] sm:$0xff]
    %v3731 = vld [vmem:[%s3704 + $0xd0] sm:$0xff]
    %v3732 = vld [vmem:[%s3704 + $0xd8] sm:$0xff]
    %v3733 = vld [vmem:[%s3704 + $0xe0] sm:$0xff]
    %v3734 = vld [vmem:[%s3704 + $0xe8] sm:$0xff]
    %v3735 = vld [vmem:[%s3704 + $0xf0] sm:$0xff]
    %v3736 = vld [vmem:[%s3704 + $0xf8] sm:$0xff]
    %v3769 = vunpack.c.l.b16 %v3705
    %v3770 = vunpack.c.h.b16 %v3705
    %v3771 = vunpack.c.l.b16 %v3706
    %v3772 = vunpack.c.h.b16 %v3706
    %v3773 = vunpack.c.l.b16 %v3707
    %v3774 = vunpack.c.h.b16 %v3707
    %v3775 = vunpack.c.l.b16 %v3708
    %v3776 = vunpack.c.h.b16 %v3708
    %v3777 = vunpack.c.l.b16 %v3709
    %v3778 = vunpack.c.h.b16 %v3709
    %v3779 = vunpack.c.l.b16 %v3710
    %v3780 = vunpack.c.h.b16 %v3710
    %v3781 = vunpack.c.l.b16 %v3711
    %v3782 = vunpack.c.h.b16 %v3711
    %v3783 = vunpack.c.l.b16 %v3712
    %v3784 = vunpack.c.h.b16 %v3712
    %v3785 = vunpack.c.l.b16 %v3713
    %v3786 = vunpack.c.h.b16 %v3713
    %v3787 = vunpack.c.l.b16 %v3714
    %v3788 = vunpack.c.h.b16 %v3714
    %v3789 = vunpack.c.l.b16 %v3715
    %v3790 = vunpack.c.h.b16 %v3715
    %v3791 = vunpack.c.l.b16 %v3716
    %v3792 = vunpack.c.h.b16 %v3716
    %v3793 = vunpack.c.l.b16 %v3717
    %v3794 = vunpack.c.h.b16 %v3717
    %v3795 = vunpack.c.l.b16 %v3718
    %v3796 = vunpack.c.h.b16 %v3718
    %v3797 = vunpack.c.l.b16 %v3719
    %v3798 = vunpack.c.h.b16 %v3719
    %v3799 = vunpack.c.l.b16 %v3720
    %v3800 = vunpack.c.h.b16 %v3720
    %v3801 = vunpack.c.l.b16 %v3721
    %v3802 = vunpack.c.h.b16 %v3721
    %v3803 = vunpack.c.l.b16 %v3722
    %v3804 = vunpack.c.h.b16 %v3722
    %v3805 = vunpack.c.l.b16 %v3723
    %v3806 = vunpack.c.h.b16 %v3723
    %v3807 = vunpack.c.l.b16 %v3724
    %v3808 = vunpack.c.h.b16 %v3724
    %v3809 = vunpack.c.l.b16 %v3725
    %v3810 = vunpack.c.h.b16 %v3725
    %v3811 = vunpack.c.l.b16 %v3726
    %v3812 = vunpack.c.h.b16 %v3726
    %v3813 = vunpack.c.l.b16 %v3727
    %v3814 = vunpack.c.h.b16 %v3727
    %v3815 = vunpack.c.l.b16 %v3728
    %v3816 = vunpack.c.h.b16 %v3728
    %v3817 = vunpack.c.l.b16 %v3729
    %v3818 = vunpack.c.h.b16 %v3729
    %v3819 = vunpack.c.l.b16 %v3730
    %v3820 = vunpack.c.h.b16 %v3730
    %v3821 = vunpack.c.l.b16 %v3731
    %v3822 = vunpack.c.h.b16 %v3731
    %v3823 = vunpack.c.l.b16 %v3732
    %v3824 = vunpack.c.h.b16 %v3732
    %v3825 = vunpack.c.l.b16 %v3733
    %v3826 = vunpack.c.h.b16 %v3733
    %v3827 = vunpack.c.l.b16 %v3734
    %v3828 = vunpack.c.h.b16 %v3734
    %v3829 = vunpack.c.l.b16 %v3735
    %v3830 = vunpack.c.h.b16 %v3735
    %v3831 = vunpack.c.l.b16 %v3736
    %v3832 = vunpack.c.h.b16 %v3736
    %v3833 = vpack.c.b16 %v3771, %v3769
    %v3834 = vpack.c.b16 %v3772, %v3770
    %v3835 = vpack.c.b16 %v3775, %v3773
    %v3836 = vpack.c.b16 %v3776, %v3774
    %v3837 = vpack.c.b16 %v3779, %v3777
    %v3838 = vpack.c.b16 %v3780, %v3778
    %v3839 = vpack.c.b16 %v3783, %v3781
    %v3840 = vpack.c.b16 %v3784, %v3782
    %v3841 = vpack.c.b16 %v3787, %v3785
    %v3842 = vpack.c.b16 %v3788, %v3786
    %v3843 = vpack.c.b16 %v3791, %v3789
    %v3844 = vpack.c.b16 %v3792, %v3790
    %v3845 = vpack.c.b16 %v3795, %v3793
    %v3846 = vpack.c.b16 %v3796, %v3794
    %v3847 = vpack.c.b16 %v3799, %v3797
    %v3848 = vpack.c.b16 %v3800, %v3798
    %v3849 = vpack.c.b16 %v3803, %v3801
    %v3850 = vpack.c.b16 %v3804, %v3802
    %v3851 = vpack.c.b16 %v3807, %v3805
    %v3852 = vpack.c.b16 %v3808, %v3806
    %v3853 = vpack.c.b16 %v3811, %v3809
    %v3854 = vpack.c.b16 %v3812, %v3810
    %v3855 = vpack.c.b16 %v3815, %v3813
    %v3856 = vpack.c.b16 %v3816, %v3814
    %v3857 = vpack.c.b16 %v3819, %v3817
    %v3858 = vpack.c.b16 %v3820, %v3818
    %v3859 = vpack.c.b16 %v3823, %v3821
    %v3860 = vpack.c.b16 %v3824, %v3822
    %v3861 = vpack.c.b16 %v3827, %v3825
    %v3862 = vpack.c.b16 %v3828, %v3826
    %v3863 = vpack.c.b16 %v3831, %v3829
    %v3864 = vpack.c.b16 %v3832, %v3830
    %3897 = vmatprep.subr.bf16.mxu0 %v3834
    %3898 = vmatpush1.bf16.msra.mxu0 %v3833
    %3899 = vmatprep.subr.bf16.mxu0 %v3836
    %3900 = vmatpush1.bf16.msra.mxu0 %v3835
    %3901 = vmatprep.subr.bf16.mxu0 %v3838
    %3902 = vmatpush1.bf16.msra.mxu0 %v3837
    %3903 = vmatprep.subr.bf16.mxu0 %v3840
    %3904 = vmatpush1.bf16.msra.mxu0 %v3839
    %3905 = vmatprep.subr.bf16.mxu0 %v3842
    %3906 = vmatpush1.bf16.msra.mxu0 %v3841
    %3907 = vmatprep.subr.bf16.mxu0 %v3844
    %3908 = vmatpush1.bf16.msra.mxu0 %v3843
    %3909 = vmatprep.subr.bf16.mxu0 %v3846
    %3910 = vmatpush1.bf16.msra.mxu0 %v3845
    %3911 = vmatprep.subr.bf16.mxu0 %v3848
    %3912 = vmatpush1.bf16.msra.mxu0 %v3847
    %3913 = vmatprep.subr.bf16.mxu0 %v3850
    %3914 = vmatpush1.bf16.msra.mxu0 %v3849
    %3915 = vmatprep.subr.bf16.mxu0 %v3852
    %3916 = vmatpush1.bf16.msra.mxu0 %v3851
    %3917 = vmatprep.subr.bf16.mxu0 %v3854
    %3918 = vmatpush1.bf16.msra.mxu0 %v3853
    %3919 = vmatprep.subr.bf16.mxu0 %v3856
    %3920 = vmatpush1.bf16.msra.mxu0 %v3855
    %3921 = vmatprep.subr.bf16.mxu0 %v3858
    %3922 = vmatpush1.bf16.msra.mxu0 %v3857
    %3923 = vmatprep.subr.bf16.mxu0 %v3860
    %3924 = vmatpush1.bf16.msra.mxu0 %v3859
    %3925 = vmatprep.subr.bf16.mxu0 %v3862
    %3926 = vmatpush1.bf16.msra.mxu0 %v3861
    %3927 = vmatprep.subr.bf16.mxu0 %v3864
    %3928 = vmatpush1.bf16.msra.mxu0 %v3863
    %3929 = vmatprep.mubr.bf16.mxu0 %v3701
    %3930 = vmatmul.mubr.bf16.gmra.mrb[0].mxu0 %v3700
    %v3931 = vpop.f32.mrb[0].mxu0
    %v3932 = vadd.f32 0.0, %v3931
    %v3933 = vpop.f32.mrb[0].mxu0
    %v3934 = vadd.f32 0.0, %v3933
    %v3935 = vpop.f32.mrb[0].mxu0
    %v3936 = vadd.f32 0.0, %v3935
    %v3937 = vpop.f32.mrb[0].mxu0
    %v3938 = vadd.f32 0.0, %v3937
    %3939 = vmatprep.mubr.bf16.mxu0 %v3703
    %3940 = vmatmul.mubr.bf16.gmra.mrb[0].mxu0 %v3702
    %v3941 = vpop.f32.mrb[0].mxu0
    %v3942 = vadd.f32 0.0, %v3941
    %v3943 = vpop.f32.mrb[0].mxu0
    %v3944 = vadd.f32 0.0, %v3943
    %v3945 = vpop.f32.mrb[0].mxu0
    %v3946 = vadd.f32 0.0, %v3945
    %v3947 = vpop.f32.mrb[0].mxu0
    %v3948 = vadd.f32 0.0, %v3947
    %3949 = vdwg.mxu0
    %v3950 = vadd.f32 %v3576, %v3932
    %v3951 = vadd.f32 %v3578, %v3934
    %v3952 = vadd.f32 %v3580, %v3936
    %v3953 = vadd.f32 %v3582, %v3938
    %v3954 = vadd.f32 %v3586, %v3942
    %v3955 = vadd.f32 %v3588, %v3944
    %v3956 = vadd.f32 %v3590, %v3946
    %v3957 = vadd.f32 %v3592, %v3948
    %v3958 = vadd.f32 %v3950, %v3952
    %v3959 = vadd.f32 %v3958, %v3954
    %v3960 = vadd.f32 %v3959, %v3956
    %v3961 = vrot.slane %v3960, 4
    %v3962 = vadd.f32 %v3960, %v3961
    %v3963 = vrot.slane %v3962, 2
    %v3964 = vadd.f32 %v3962, %v3963
    %v3965 = vrot.slane %v3964, 1
    %v3966 = vadd.f32 %v3964, %v3965
    %v3967 = vadd.f32 %v3951, %v3953
    %v3968 = vadd.f32 %v3967, %v3955
    %v3969 = vadd.f32 %v3968, %v3957
    %v3970 = vrot.slane %v3969, 4
    %v3971 = vadd.f32 %v3969, %v3970
    %v3972 = vrot.slane %v3971, 2
    %v3973 = vadd.f32 %v3971, %v3972
    %v3974 = vrot.slane %v3973, 1
    %v3975 = vadd.f32 %v3973, %v3974
    %3976 = vmatprep.subr.mxu0 %v1223
    %3977 = vmatpush1.msra.mxu0 %v1222
    %3978 = vmatprep.subr.mxu0 %v1225
    %3979 = vmatpush1.msra.mxu0 %v1224
    %3980 = vmatprep.subr.mxu0 %v1227
    %3981 = vmatpush1.msra.mxu0 %v1226
    %3982 = vmatprep.subr.mxu0 %v1229
    %3983 = vmatpush1.msra.mxu0 %v1228
    %3984 = vmatprep.subr.mxu0 %v1231
    %3985 = vmatpush1.msra.mxu0 %v1230
    %3986 = vmatprep.subr.mxu0 %v1233
    %3987 = vmatpush1.msra.mxu0 %v1232
    %3988 = vmatprep.subr.mxu0 %v1235
    %3989 = vmatpush1.msra.mxu0 %v1234
    %3990 = vmatprep.subr.mxu0 %v1237
    %3991 = vmatpush1.msra.mxu0 %v1236
    %3992 = vmatprep.subr.mxu0 %v1239
    %3993 = vmatpush1.msra.mxu0 %v1238
    %3994 = vmatprep.subr.mxu0 %v1241
    %3995 = vmatpush1.msra.mxu0 %v1240
    %3996 = vmatprep.subr.mxu0 %v1243
    %3997 = vmatpush1.msra.mxu0 %v1242
    %3998 = vmatprep.subr.mxu0 %v1245
    %3999 = vmatpush1.msra.mxu0 %v1244
    %4000 = vmatprep.subr.mxu0 %v1247
    %4001 = vmatpush1.msra.mxu0 %v1246
    %4002 = vmatprep.subr.mxu0 %v1249
    %4003 = vmatpush1.msra.mxu0 %v1248
    %4004 = vmatprep.subr.mxu0 %v1251
    %4005 = vmatpush1.msra.mxu0 %v1250
    %4006 = vmatprep.subr.mxu0 %v1253
    %4007 = vmatpush1.msra.mxu0 %v1252
    %4008 = vmatprep.subr.mxu0 %v1255
    %4009 = vmatpush1.msra.mxu0 %v1254
    %4010 = vmatprep.subr.mxu0 %v1257
    %4011 = vmatpush1.msra.mxu0 %v1256
    %4012 = vmatprep.subr.mxu0 %v1259
    %4013 = vmatpush1.msra.mxu0 %v1258
    %4014 = vmatprep.subr.mxu0 %v1261
    %4015 = vmatpush1.msra.mxu0 %v1260
    %4016 = vmatprep.subr.mxu0 %v1263
    %4017 = vmatpush1.msra.mxu0 %v1262
    %4018 = vmatprep.subr.mxu0 %v1265
    %4019 = vmatpush1.msra.mxu0 %v1264
    %4020 = vmatprep.subr.mxu0 %v1267
    %4021 = vmatpush1.msra.mxu0 %v1266
    %4022 = vmatprep.subr.mxu0 %v1269
    %4023 = vmatpush1.msra.mxu0 %v1268
    %4024 = vmatprep.subr.mxu0 %v1271
    %4025 = vmatpush1.msra.mxu0 %v1270
    %4026 = vmatprep.subr.mxu0 %v1273
    %4027 = vmatpush1.msra.mxu0 %v1272
    %4028 = vmatprep.subr.mxu0 %v1275
    %4029 = vmatpush1.msra.mxu0 %v1274
    %4030 = vmatprep.subr.mxu0 %v1277
    %4031 = vmatpush1.msra.mxu0 %v1276
    %4032 = vmatprep.subr.mxu0 %v1279
    %4033 = vmatpush1.msra.mxu0 %v1278
    %4034 = vmatprep.subr.mxu0 %v1281
    %4035 = vmatpush1.msra.mxu0 %v1280
    %4036 = vmatprep.subr.mxu0 %v1283
    %4037 = vmatpush1.msra.mxu0 %v1282
    %4038 = vmatprep.subr.mxu0 %v1285
    %4039 = vmatpush1.msra.mxu0 %v1284
    %4040 = vmatprep.mubr.f32.mxu0 %v3975
    %4041 = vmatmul.mubr.f32.gmra.mrb[0].mxu0 %v3966
    %v4042 = vpop.f32.mrb[0].mxu0
    %v4043 = vadd.f32 0.0, %v4042
    %v4044 = vpop.f32.mrb[0].mxu0
    %v4045 = vadd.f32 0.0, %v4044
    %4046 = vdwg.mxu0
    %v4047 = vlaneseq
    %v4048 = vshrl.u32 %v4047, 7
    %v4049 = vsub.s32 0, %v4048
    %v4050 = vrot.slane %v4043, %v4049
    %v4051 = vlaneseq
    %v4052 = vshrl.u32 %v4051, 7
    %v4053 = vsub.s32 0, %v4052
    %v4054 = vrot.slane %v4045, %v4053
    %v4055 = vsub.f32 %v3950, %v4050
    %v4056 = vsub.f32 %v3951, %v4054
    %v4057 = vsub.f32 %v3952, %v4050
    %v4058 = vsub.f32 %v3953, %v4054
    %v4059 = vsub.f32 %v3954, %v4050
    %v4060 = vsub.f32 %v3955, %v4054
    %v4061 = vsub.f32 %v3956, %v4050
    %v4062 = vsub.f32 %v3957, %v4054
    %v4063 = vmul.f32 %v4055, %v4055
    %v4064 = vmul.f32 %v4056, %v4056
    %v4065 = vmul.f32 %v4057, %v4057
    %v4066 = vmul.f32 %v4058, %v4058
    %v4067 = vmul.f32 %v4059, %v4059
    %v4068 = vmul.f32 %v4060, %v4060
    %v4069 = vmul.f32 %v4061, %v4061
    %v4070 = vmul.f32 %v4062, %v4062
    %v4071 = vadd.f32 %v4063, %v4065
    %v4072 = vadd.f32 %v4071, %v4067
    %v4073 = vadd.f32 %v4072, %v4069
    %v4074 = vrot.slane %v4073, 4
    %v4075 = vadd.f32 %v4073, %v4074
    %v4076 = vrot.slane %v4075, 2
    %v4077 = vadd.f32 %v4075, %v4076
    %v4078 = vrot.slane %v4077, 1
    %v4079 = vadd.f32 %v4077, %v4078
    %v4080 = vadd.f32 %v4064, %v4066
    %v4081 = vadd.f32 %v4080, %v4068
    %v4082 = vadd.f32 %v4081, %v4070
    %v4083 = vrot.slane %v4082, 4
    %v4084 = vadd.f32 %v4082, %v4083
    %v4085 = vrot.slane %v4084, 2
    %v4086 = vadd.f32 %v4084, %v4085
    %v4087 = vrot.slane %v4086, 1
    %v4088 = vadd.f32 %v4086, %v4087
    %4089 = vmatprep.subr.mxu0 %v1223
    %4090 = vmatpush1.msra.mxu0 %v1222
    %4091 = vmatprep.subr.mxu0 %v1225
    %4092 = vmatpush1.msra.mxu0 %v1224
    %4093 = vmatprep.subr.mxu0 %v1227
    %4094 = vmatpush1.msra.mxu0 %v1226
    %4095 = vmatprep.subr.mxu0 %v1229
    %4096 = vmatpush1.msra.mxu0 %v1228
    %4097 = vmatprep.subr.mxu0 %v1231
    %4098 = vmatpush1.msra.mxu0 %v1230
    %4099 = vmatprep.subr.mxu0 %v1233
    %4100 = vmatpush1.msra.mxu0 %v1232
    %4101 = vmatprep.subr.mxu0 %v1235
    %4102 = vmatpush1.msra.mxu0 %v1234
    %4103 = vmatprep.subr.mxu0 %v1237
    %4104 = vmatpush1.msra.mxu0 %v1236
    %4105 = vmatprep.subr.mxu0 %v1239
    %4106 = vmatpush1.msra.mxu0 %v1238
    %4107 = vmatprep.subr.mxu0 %v1241
    %4108 = vmatpush1.msra.mxu0 %v1240
    %4109 = vmatprep.subr.mxu0 %v1243
    %4110 = vmatpush1.msra.mxu0 %v1242
    %4111 = vmatprep.subr.mxu0 %v1245
    %4112 = vmatpush1.msra.mxu0 %v1244
    %4113 = vmatprep.subr.mxu0 %v1247
    %4114 = vmatpush1.msra.mxu0 %v1246
    %4115 = vmatprep.subr.mxu0 %v1249
    %4116 = vmatpush1.msra.mxu0 %v1248
    %4117 = vmatprep.subr.mxu0 %v1251
    %4118 = vmatpush1.msra.mxu0 %v1250
    %4119 = vmatprep.subr.mxu0 %v1253
    %4120 = vmatpush1.msra.mxu0 %v1252
    %4121 = vmatprep.subr.mxu0 %v1255
    %4122 = vmatpush1.msra.mxu0 %v1254
    %4123 = vmatprep.subr.mxu0 %v1257
    %4124 = vmatpush1.msra.mxu0 %v1256
    %4125 = vmatprep.subr.mxu0 %v1259
    %4126 = vmatpush1.msra.mxu0 %v1258
    %4127 = vmatprep.subr.mxu0 %v1261
    %4128 = vmatpush1.msra.mxu0 %v1260
    %4129 = vmatprep.subr.mxu0 %v1263
    %4130 = vmatpush1.msra.mxu0 %v1262
    %4131 = vmatprep.subr.mxu0 %v1265
    %4132 = vmatpush1.msra.mxu0 %v1264
    %4133 = vmatprep.subr.mxu0 %v1267
    %4134 = vmatpush1.msra.mxu0 %v1266
    %4135 = vmatprep.subr.mxu0 %v1269
    %4136 = vmatpush1.msra.mxu0 %v1268
    %4137 = vmatprep.subr.mxu0 %v1271
    %4138 = vmatpush1.msra.mxu0 %v1270
    %4139 = vmatprep.subr.mxu0 %v1273
    %4140 = vmatpush1.msra.mxu0 %v1272
    %4141 = vmatprep.subr.mxu0 %v1275
    %4142 = vmatpush1.msra.mxu0 %v1274
    %4143 = vmatprep.subr.mxu0 %v1277
    %4144 = vmatpush1.msra.mxu0 %v1276
    %4145 = vmatprep.subr.mxu0 %v1279
    %4146 = vmatpush1.msra.mxu0 %v1278
    %4147 = vmatprep.subr.mxu0 %v1281
    %4148 = vmatpush1.msra.mxu0 %v1280
    %4149 = vmatprep.subr.mxu0 %v1283
    %4150 = vmatpush1.msra.mxu0 %v1282
    %4151 = vmatprep.subr.mxu0 %v1285
    %4152 = vmatpush1.msra.mxu0 %v1284
    %4153 = vmatprep.mubr.f32.mxu0 %v4088
    %4154 = vmatmul.mubr.f32.gmra.mrb[0].mxu0 %v4079
    %v4155 = vpop.f32.mrb[0].mxu0
    %v4156 = vadd.f32 1e-05, %v4155
    %v4157 = vpop.f32.mrb[0].mxu0
    %v4158 = vadd.f32 1e-05, %v4157
    %4159 = vdwg.mxu0
    %v4160 = vrsqrt.pop %v4156
    %v4161 = vrsqrt.pop %v4158
    %v4162 = vld [vmem:[#allocation8] sm:$0x3]
    %v4164 = vlaneseq
    %v4165 = vshrl.u32 %v4164, 7
    %v4166 = vsub.s32 0, %v4165
    %v4167 = vrot.slane %v4162, %v4166
    %v4168 = vlaneseq
    %v4169 = vshrl.u32 %v4168, 7
    %v4170 = vsub.s32 1, %v4169
    %v4171 = vrot.slane %v4162, %v4170
    %v4174 = vmul.f32 %v4160, %v4167
    %v4175 = vmul.f32 %v4161, %v4171
    %v4176 = vlaneseq
    %v4177 = vshrl.u32 %v4176, 7
    %v4178 = vsub.s32 0, %v4177
    %v4179 = vrot.slane %v4174, %v4178
    %v4180 = vlaneseq
    %v4181 = vshrl.u32 %v4180, 7
    %v4182 = vsub.s32 0, %v4181
    %v4183 = vrot.slane %v4175, %v4182
    %v4184 = vmul.f32 %v4055, %v4179
    %v4185 = vmul.f32 %v4056, %v4183
    %v4186 = vmul.f32 %v4057, %v4179
    %v4187 = vmul.f32 %v4058, %v4183
    %v4188 = vmul.f32 %v4059, %v4179
    %v4189 = vmul.f32 %v4060, %v4183
    %v4190 = vmul.f32 %v4061, %v4179
    %v4191 = vmul.f32 %v4062, %v4183
    %v4192 = vld [vmem:[#allocation7] sm:$0x3]
    %v4194 = vlaneseq
    %v4195 = vshrl.u32 %v4194, 7
    %v4196 = vsub.s32 0, %v4195
    %v4197 = vrot.slane %v4192, %v4196
    %v4198 = vlaneseq
    %v4199 = vshrl.u32 %v4198, 7
    %v4200 = vsub.s32 1, %v4199
    %v4201 = vrot.slane %v4192, %v4200
    %v4204 = vadd.f32 %v4184, %v4197
    %v4205 = vadd.f32 %v4185, %v4201
    %v4206 = vadd.f32 %v4186, %v4197
    %v4207 = vadd.f32 %v4187, %v4201
    %v4208 = vadd.f32 %v4188, %v4197
    %v4209 = vadd.f32 %v4189, %v4201
    %v4210 = vadd.f32 %v4190, %v4197
    %v4211 = vadd.f32 %v4191, %v4201
    %v4212 = vadd.f32 %v4204, %v1540
    %v4213 = vadd.f32 %v4205, %v1541
    %v4214 = vadd.f32 %v4206, %v1542
    %v4215 = vadd.f32 %v4207, %v1543
    %v4216 = vadd.f32 %v4208, %v1544
    %v4217 = vadd.f32 %v4209, %v1545
    %v4218 = vadd.f32 %v4210, %v1546
    %v4219 = vadd.f32 %v4211, %v1547
    %v4220 = vmax.f32 %v4212, 0.0
    %v4221 = vmax.f32 %v4213, 0.0
    %v4222 = vmax.f32 %v4214, 0.0
    %v4223 = vmax.f32 %v4215, 0.0
    %v4224 = vmax.f32 %v4216, 0.0
    %v4225 = vmax.f32 %v4217, 0.0
    %v4226 = vmax.f32 %v4218, 0.0
    %v4227 = vmax.f32 %v4219, 0.0
    %v4228 = vld [vmem:[#allocation22] sm:$0xff]
    %v4229 = vld [vmem:[#allocation22 + $0x8] sm:$0xff]
    %v4231 = vsel %vm618, %v4228, 0
    %v4234 = vsel %vm618, %v4229, 0
    %4236 = vmatprep.subr.mxu0 %v4221
    %4237 = vmatpush1.msra.mxu0 %v4220
    %4238 = vmatprep.subr.mxu0 %v4223
    %4239 = vmatpush1.msra.mxu0 %v4222
    %4240 = vmatprep.subr.mxu0 %v4225
    %4241 = vmatpush1.msra.mxu0 %v4224
    %4242 = vmatprep.subr.mxu0 %v4227
    %4243 = vmatpush1.msra.mxu0 %v4226
    %4244 = vmatprep.subr.mxu0 0.0
    %4245 = vmatpush1.msra.mxu0 0.0
    %4246 = vmatprep.subr.mxu0 0.0
    %4247 = vmatpush1.msra.mxu0 0.0
    %4248 = vmatprep.subr.mxu0 0.0
    %4249 = vmatpush1.msra.mxu0 0.0
    %4250 = vmatprep.subr.mxu0 0.0
    %4251 = vmatpush1.msra.mxu0 0.0
    %4252 = vmatprep.subr.mxu0 0.0
    %4253 = vmatpush1.msra.mxu0 0.0
    %4254 = vmatprep.subr.mxu0 0.0
    %4255 = vmatpush1.msra.mxu0 0.0
    %4256 = vmatprep.subr.mxu0 0.0
    %4257 = vmatpush1.msra.mxu0 0.0
    %4258 = vmatprep.subr.mxu0 0.0
    %4259 = vmatpush1.msra.mxu0 0.0
    %4260 = vmatprep.subr.mxu0 0.0
    %4261 = vmatpush1.msra.mxu0 0.0
    %4262 = vmatprep.subr.mxu0 0.0
    %4263 = vmatpush1.msra.mxu0 0.0
    %4264 = vmatprep.subr.mxu0 0.0
    %4265 = vmatpush1.msra.mxu0 0.0
    %4266 = vmatprep.subr.mxu0 0.0
    %4267 = vmatpush1.msra.mxu0 0.0
    %4268 = vmatprep.subr.mxu0 0.0
    %4269 = vmatpush1.msra.mxu0 0.0
    %4270 = vmatprep.subr.mxu0 0.0
    %4271 = vmatpush1.msra.mxu0 0.0
    %4272 = vmatprep.subr.mxu0 0.0
    %4273 = vmatpush1.msra.mxu0 0.0
    %4274 = vmatprep.subr.mxu0 0.0
    %4275 = vmatpush1.msra.mxu0 0.0
    %4276 = vmatprep.subr.mxu0 0.0
    %4277 = vmatpush1.msra.mxu0 0.0
    %4278 = vmatprep.subr.mxu0 0.0
    %4279 = vmatpush1.msra.mxu0 0.0
    %4280 = vmatprep.subr.mxu0 0.0
    %4281 = vmatpush1.msra.mxu0 0.0
    %4282 = vmatprep.subr.mxu0 0.0
    %4283 = vmatpush1.msra.mxu0 0.0
    %4284 = vmatprep.subr.mxu0 0.0
    %4285 = vmatpush1.msra.mxu0 0.0
    %4286 = vmatprep.subr.mxu0 0.0
    %4287 = vmatpush1.msra.mxu0 0.0
    %4288 = vmatprep.subr.mxu0 0.0
    %4289 = vmatpush1.msra.mxu0 0.0
    %4290 = vmatprep.subr.mxu0 0.0
    %4291 = vmatpush1.msra.mxu0 0.0
    %4292 = vmatprep.subr.mxu0 0.0
    %4293 = vmatpush1.msra.mxu0 0.0
    %4294 = vmatprep.subr.mxu0 0.0
    %4295 = vmatpush1.msra.mxu0 0.0
    %4296 = vmatprep.subr.mxu0 0.0
    %4297 = vmatpush1.msra.mxu0 0.0
    %4298 = vmatprep.subr.mxu0 0.0
    %4299 = vmatpush1.msra.mxu0 0.0
    %4300 = vmatprep.mubr.f32.mxu0 0.0
    %4301 = vmatmul.mubr.f32.gmra.mrb[0].mxu0 %v4231
    %v4302 = vpop.f32.mrb[0].mxu0
    %v4303 = vadd.f32 0.0, %v4302
    %v4304 = vpop.f32.mrb[0].mxu0
    %v4305 = vadd.f32 0.0, %v4304
    %4306 = vmatprep.mubr.f32.mxu0 0.0
    %4307 = vmatmul.mubr.f32.gmra.mrb[0].mxu0 %v4234
    %v4308 = vpop.f32.mrb[0].mxu0
    %v4309 = vadd.f32 0.0, %v4308
    %v4310 = vpop.f32.mrb[0].mxu0
    %v4311 = vadd.f32 0.0, %v4310
    %4312 = vdwg.mxu0
    %v4313 = vpack.c.bf16 %v4309, %v4303
    %v4314 = vpack.c.bf16 %v4311, %v4305
    %v4315 = vld [vmem:[#allocation20] sm:$0xff]
    %v4316 = vld [vmem:[#allocation20 + $0x8] sm:$0xff]
    %v4317 = vld [vmem:[#allocation20 + $0x10] sm:$0xff]
    %v4318 = vld [vmem:[#allocation20 + $0x18] sm:$0xff]
    %v4319 = vld [vmem:[#allocation20 + $0x20] sm:$0xff]
    %v4320 = vld [vmem:[#allocation20 + $0x28] sm:$0xff]
    %v4321 = vld [vmem:[#allocation20 + $0x30] sm:$0xff]
    %v4322 = vld [vmem:[#allocation20 + $0x38] sm:$0xff]
    %v4323 = vld [vmem:[#allocation20 + $0x40] sm:$0xff]
    %v4324 = vld [vmem:[#allocation20 + $0x48] sm:$0xff]
    %v4325 = vld [vmem:[#allocation20 + $0x50] sm:$0xff]
    %v4326 = vld [vmem:[#allocation20 + $0x58] sm:$0xff]
    %v4327 = vld [vmem:[#allocation20 + $0x60] sm:$0xff]
    %v4328 = vld [vmem:[#allocation20 + $0x68] sm:$0xff]
    %v4329 = vld [vmem:[#allocation20 + $0x70] sm:$0xff]
    %v4330 = vld [vmem:[#allocation20 + $0x78] sm:$0xff]
    %v4331 = vld [vmem:[#allocation20 + $0x80] sm:$0xff]
    %v4332 = vld [vmem:[#allocation20 + $0x88] sm:$0xff]
    %v4333 = vld [vmem:[#allocation20 + $0x90] sm:$0xff]
    %v4334 = vld [vmem:[#allocation20 + $0x98] sm:$0xff]
    %v4335 = vld [vmem:[#allocation20 + $0xa0] sm:$0xff]
    %v4336 = vld [vmem:[#allocation20 + $0xa8] sm:$0xff]
    %v4337 = vld [vmem:[#allocation20 + $0xb0] sm:$0xff]
    %v4338 = vld [vmem:[#allocation20 + $0xb8] sm:$0xff]
    %v4339 = vld [vmem:[#allocation20 + $0xc0] sm:$0xff]
    %v4340 = vld [vmem:[#allocation20 + $0xc8] sm:$0xff]
    %v4341 = vld [vmem:[#allocation20 + $0xd0] sm:$0xff]
    %v4342 = vld [vmem:[#allocation20 + $0xd8] sm:$0xff]
    %v4343 = vld [vmem:[#allocation20 + $0xe0] sm:$0xff]
    %v4344 = vld [vmem:[#allocation20 + $0xe8] sm:$0xff]
    %v4345 = vld [vmem:[#allocation20 + $0xf0] sm:$0xff]
    %v4346 = vld [vmem:[#allocation20 + $0xf8] sm:$0xff]
    %s4347 = scalar_lea.vmem [#allocation22], 16
    %v4348 = vld [vmem:[%s4347] sm:$0xff]
    %v4349 = vld [vmem:[%s4347 + $0x8] sm:$0xff]
    %v4351 = vsel %vm618, %v4348, 0
    %v4354 = vsel %vm618, %v4349, 0
    %4356 = vmatprep.subr.mxu0 %v4221
    %4357 = vmatpush1.msra.mxu0 %v4220
    %4358 = vmatprep.subr.mxu0 %v4223
    %4359 = vmatpush1.msra.mxu0 %v4222
    %4360 = vmatprep.subr.mxu0 %v4225
    %4361 = vmatpush1.msra.mxu0 %v4224
    %4362 = vmatprep.subr.mxu0 %v4227
    %4363 = vmatpush1.msra.mxu0 %v4226
    %4364 = vmatprep.subr.mxu0 0.0
    %4365 = vmatpush1.msra.mxu0 0.0
    %4366 = vmatprep.subr.mxu0 0.0
    %4367 = vmatpush1.msra.mxu0 0.0
    %4368 = vmatprep.subr.mxu0 0.0
    %4369 = vmatpush1.msra.mxu0 0.0
    %4370 = vmatprep.subr.mxu0 0.0
    %4371 = vmatpush1.msra.mxu0 0.0
    %4372 = vmatprep.subr.mxu0 0.0
    %4373 = vmatpush1.msra.mxu0 0.0
    %4374 = vmatprep.subr.mxu0 0.0
    %4375 = vmatpush1.msra.mxu0 0.0
    %4376 = vmatprep.subr.mxu0 0.0
    %4377 = vmatpush1.msra.mxu0 0.0
    %4378 = vmatprep.subr.mxu0 0.0
    %4379 = vmatpush1.msra.mxu0 0.0
    %4380 = vmatprep.subr.mxu0 0.0
    %4381 = vmatpush1.msra.mxu0 0.0
    %4382 = vmatprep.subr.mxu0 0.0
    %4383 = vmatpush1.msra.mxu0 0.0
    %4384 = vmatprep.subr.mxu0 0.0
    %4385 = vmatpush1.msra.mxu0 0.0
    %4386 = vmatprep.subr.mxu0 0.0
    %4387 = vmatpush1.msra.mxu0 0.0
    %4388 = vmatprep.subr.mxu0 0.0
    %4389 = vmatpush1.msra.mxu0 0.0
    %4390 = vmatprep.subr.mxu0 0.0
    %4391 = vmatpush1.msra.mxu0 0.0
    %4392 = vmatprep.subr.mxu0 0.0
    %4393 = vmatpush1.msra.mxu0 0.0
    %4394 = vmatprep.subr.mxu0 0.0
    %4395 = vmatpush1.msra.mxu0 0.0
    %4396 = vmatprep.subr.mxu0 0.0
    %4397 = vmatpush1.msra.mxu0 0.0
    %4398 = vmatprep.subr.mxu0 0.0
    %4399 = vmatpush1.msra.mxu0 0.0
    %4400 = vmatprep.subr.mxu0 0.0
    %4401 = vmatpush1.msra.mxu0 0.0
    %4402 = vmatprep.subr.mxu0 0.0
    %4403 = vmatpush1.msra.mxu0 0.0
    %4404 = vmatprep.subr.mxu0 0.0
    %4405 = vmatpush1.msra.mxu0 0.0
    %4406 = vmatprep.subr.mxu0 0.0
    %4407 = vmatpush1.msra.mxu0 0.0
    %4408 = vmatprep.subr.mxu0 0.0
    %4409 = vmatpush1.msra.mxu0 0.0
    %4410 = vmatprep.subr.mxu0 0.0
    %4411 = vmatpush1.msra.mxu0 0.0
    %4412 = vmatprep.subr.mxu0 0.0
    %4413 = vmatpush1.msra.mxu0 0.0
    %4414 = vmatprep.subr.mxu0 0.0
    %4415 = vmatpush1.msra.mxu0 0.0
    %4416 = vmatprep.subr.mxu0 0.0
    %4417 = vmatpush1.msra.mxu0 0.0
    %4418 = vmatprep.subr.mxu0 0.0
    %4419 = vmatpush1.msra.mxu0 0.0
    %4420 = vmatprep.mubr.f32.mxu0 0.0
    %4421 = vmatmul.mubr.f32.gmra.mrb[0].mxu0 %v4351
    %v4422 = vpop.f32.mrb[0].mxu0
    %v4423 = vadd.f32 0.0, %v4422
    %v4424 = vpop.f32.mrb[0].mxu0
    %v4425 = vadd.f32 0.0, %v4424
    %4426 = vmatprep.mubr.f32.mxu0 0.0
    %4427 = vmatmul.mubr.f32.gmra.mrb[0].mxu0 %v4354
    %v4428 = vpop.f32.mrb[0].mxu0
    %v4429 = vadd.f32 0.0, %v4428
    %v4430 = vpop.f32.mrb[0].mxu0
    %v4431 = vadd.f32 0.0, %v4430
    %4432 = vdwg.mxu0
    %v4433 = vpack.c.bf16 %v4429, %v4423
    %v4434 = vpack.c.bf16 %v4431, %v4425
    %s4435 = scalar_lea.vmem [#allocation20], 256
    %v4436 = vld [vmem:[%s4435] sm:$0xff]
    %v4437 = vld [vmem:[%s4435 + $0x8] sm:$0xff]
    %v4438 = vld [vmem:[%s4435 + $0x10] sm:$0xff]
    %v4439 = vld [vmem:[%s4435 + $0x18] sm:$0xff]
    %v4440 = vld [vmem:[%s4435 + $0x20] sm:$0xff]
    %v4441 = vld [vmem:[%s4435 + $0x28] sm:$0xff]
    %v4442 = vld [vmem:[%s4435 + $0x30] sm:$0xff]
    %v4443 = vld [vmem:[%s4435 + $0x38] sm:$0xff]
    %v4444 = vld [vmem:[%s4435 + $0x40] sm:$0xff]
    %v4445 = vld [vmem:[%s4435 + $0x48] sm:$0xff]
    %v4446 = vld [vmem:[%s4435 + $0x50] sm:$0xff]
    %v4447 = vld [vmem:[%s4435 + $0x58] sm:$0xff]
    %v4448 = vld [vmem:[%s4435 + $0x60] sm:$0xff]
    %v4449 = vld [vmem:[%s4435 + $0x68] sm:$0xff]
    %v4450 = vld [vmem:[%s4435 + $0x70] sm:$0xff]
    %v4451 = vld [vmem:[%s4435 + $0x78] sm:$0xff]
    %v4452 = vld [vmem:[%s4435 + $0x80] sm:$0xff]
    %v4453 = vld [vmem:[%s4435 + $0x88] sm:$0xff]
    %v4454 = vld [vmem:[%s4435 + $0x90] sm:$0xff]
    %v4455 = vld [vmem:[%s4435 + $0x98] sm:$0xff]
    %v4456 = vld [vmem:[%s4435 + $0xa0] sm:$0xff]
    %v4457 = vld [vmem:[%s4435 + $0xa8] sm:$0xff]
    %v4458 = vld [vmem:[%s4435 + $0xb0] sm:$0xff]
    %v4459 = vld [vmem:[%s4435 + $0xb8] sm:$0xff]
    %v4460 = vld [vmem:[%s4435 + $0xc0] sm:$0xff]
    %v4461 = vld [vmem:[%s4435 + $0xc8] sm:$0xff]
    %v4462 = vld [vmem:[%s4435 + $0xd0] sm:$0xff]
    %v4463 = vld [vmem:[%s4435 + $0xd8] sm:$0xff]
    %v4464 = vld [vmem:[%s4435 + $0xe0] sm:$0xff]
    %v4465 = vld [vmem:[%s4435 + $0xe8] sm:$0xff]
    %v4466 = vld [vmem:[%s4435 + $0xf0] sm:$0xff]
    %v4467 = vld [vmem:[%s4435 + $0xf8] sm:$0xff]
    %v4500 = vunpack.c.l.b16 %v4436
    %v4501 = vunpack.c.h.b16 %v4436
    %v4502 = vunpack.c.l.b16 %v4437
    %v4503 = vunpack.c.h.b16 %v4437
    %v4504 = vunpack.c.l.b16 %v4438
    %v4505 = vunpack.c.h.b16 %v4438
    %v4506 = vunpack.c.l.b16 %v4439
    %v4507 = vunpack.c.h.b16 %v4439
    %v4508 = vunpack.c.l.b16 %v4440
    %v4509 = vunpack.c.h.b16 %v4440
    %v4510 = vunpack.c.l.b16 %v4441
    %v4511 = vunpack.c.h.b16 %v4441
    %v4512 = vunpack.c.l.b16 %v4442
    %v4513 = vunpack.c.h.b16 %v4442
    %v4514 = vunpack.c.l.b16 %v4443
    %v4515 = vunpack.c.h.b16 %v4443
    %v4516 = vunpack.c.l.b16 %v4444
    %v4517 = vunpack.c.h.b16 %v4444
    %v4518 = vunpack.c.l.b16 %v4445
    %v4519 = vunpack.c.h.b16 %v4445
    %v4520 = vunpack.c.l.b16 %v4446
    %v4521 = vunpack.c.h.b16 %v4446
    %v4522 = vunpack.c.l.b16 %v4447
    %v4523 = vunpack.c.h.b16 %v4447
    %v4524 = vunpack.c.l.b16 %v4448
    %v4525 = vunpack.c.h.b16 %v4448
    %v4526 = vunpack.c.l.b16 %v4449
    %v4527 = vunpack.c.h.b16 %v4449
    %v4528 = vunpack.c.l.b16 %v4450
    %v4529 = vunpack.c.h.b16 %v4450
    %v4530 = vunpack.c.l.b16 %v4451
    %v4531 = vunpack.c.h.b16 %v4451
    %v4532 = vunpack.c.l.b16 %v4452
    %v4533 = vunpack.c.h.b16 %v4452
    %v4534 = vunpack.c.l.b16 %v4453
    %v4535 = vunpack.c.h.b16 %v4453
    %v4536 = vunpack.c.l.b16 %v4454
    %v4537 = vunpack.c.h.b16 %v4454
    %v4538 = vunpack.c.l.b16 %v4455
    %v4539 = vunpack.c.h.b16 %v4455
    %v4540 = vunpack.c.l.b16 %v4456
    %v4541 = vunpack.c.h.b16 %v4456
    %v4542 = vunpack.c.l.b16 %v4457
    %v4543 = vunpack.c.h.b16 %v4457
    %v4544 = vunpack.c.l.b16 %v4458
    %v4545 = vunpack.c.h.b16 %v4458
    %v4546 = vunpack.c.l.b16 %v4459
    %v4547 = vunpack.c.h.b16 %v4459
    %v4548 = vunpack.c.l.b16 %v4460
    %v4549 = vunpack.c.h.b16 %v4460
    %v4550 = vunpack.c.l.b16 %v4461
    %v4551 = vunpack.c.h.b16 %v4461
    %v4552 = vunpack.c.l.b16 %v4462
    %v4553 = vunpack.c.h.b16 %v4462
    %v4554 = vunpack.c.l.b16 %v4463
    %v4555 = vunpack.c.h.b16 %v4463
    %v4556 = vunpack.c.l.b16 %v4464
    %v4557 = vunpack.c.h.b16 %v4464
    %v4558 = vunpack.c.l.b16 %v4465
    %v4559 = vunpack.c.h.b16 %v4465
    %v4560 = vunpack.c.l.b16 %v4466
    %v4561 = vunpack.c.h.b16 %v4466
    %v4562 = vunpack.c.l.b16 %v4467
    %v4563 = vunpack.c.h.b16 %v4467
    %v4564 = vpack.c.b16 %v4502, %v4500
    %v4565 = vpack.c.b16 %v4503, %v4501
    %v4566 = vpack.c.b16 %v4506, %v4504
    %v4567 = vpack.c.b16 %v4507, %v4505
    %v4568 = vpack.c.b16 %v4510, %v4508
    %v4569 = vpack.c.b16 %v4511, %v4509
    %v4570 = vpack.c.b16 %v4514, %v4512
    %v4571 = vpack.c.b16 %v4515, %v4513
    %v4572 = vpack.c.b16 %v4518, %v4516
    %v4573 = vpack.c.b16 %v4519, %v4517
    %v4574 = vpack.c.b16 %v4522, %v4520
    %v4575 = vpack.c.b16 %v4523, %v4521
    %v4576 = vpack.c.b16 %v4526, %v4524
    %v4577 = vpack.c.b16 %v4527, %v4525
    %v4578 = vpack.c.b16 %v4530, %v4528
    %v4579 = vpack.c.b16 %v4531, %v4529
    %v4580 = vpack.c.b16 %v4534, %v4532
    %v4581 = vpack.c.b16 %v4535, %v4533
    %v4582 = vpack.c.b16 %v4538, %v4536
    %v4583 = vpack.c.b16 %v4539, %v4537
    %v4584 = vpack.c.b16 %v4542, %v4540
    %v4585 = vpack.c.b16 %v4543, %v4541
    %v4586 = vpack.c.b16 %v4546, %v4544
    %v4587 = vpack.c.b16 %v4547, %v4545
    %v4588 = vpack.c.b16 %v4550, %v4548
    %v4589 = vpack.c.b16 %v4551, %v4549
    %v4590 = vpack.c.b16 %v4554, %v4552
    %v4591 = vpack.c.b16 %v4555, %v4553
    %v4592 = vpack.c.b16 %v4558, %v4556
    %v4593 = vpack.c.b16 %v4559, %v4557
    %v4594 = vpack.c.b16 %v4562, %v4560
    %v4595 = vpack.c.b16 %v4563, %v4561
    %4628 = vmatprep.subr.bf16.mxu0 %v4565
    %4629 = vmatpush1.bf16.msra.mxu0 %v4564
    %4630 = vmatprep.subr.bf16.mxu0 %v4567
    %4631 = vmatpush1.bf16.msra.mxu0 %v4566
    %4632 = vmatprep.subr.bf16.mxu0 %v4569
    %4633 = vmatpush1.bf16.msra.mxu0 %v4568
    %4634 = vmatprep.subr.bf16.mxu0 %v4571
    %4635 = vmatpush1.bf16.msra.mxu0 %v4570
    %4636 = vmatprep.subr.bf16.mxu0 %v4573
    %4637 = vmatpush1.bf16.msra.mxu0 %v4572
    %4638 = vmatprep.subr.bf16.mxu0 %v4575
    %4639 = vmatpush1.bf16.msra.mxu0 %v4574
    %4640 = vmatprep.subr.bf16.mxu0 %v4577
    %4641 = vmatpush1.bf16.msra.mxu0 %v4576
    %4642 = vmatprep.subr.bf16.mxu0 %v4579
    %4643 = vmatpush1.bf16.msra.mxu0 %v4578
    %4644 = vmatprep.subr.bf16.mxu0 %v4581
    %4645 = vmatpush1.bf16.msra.mxu0 %v4580
    %4646 = vmatprep.subr.bf16.mxu0 %v4583
    %4647 = vmatpush1.bf16.msra.mxu0 %v4582
    %4648 = vmatprep.subr.bf16.mxu0 %v4585
    %4649 = vmatpush1.bf16.msra.mxu0 %v4584
    %4650 = vmatprep.subr.bf16.mxu0 %v4587
    %4651 = vmatpush1.bf16.msra.mxu0 %v4586
    %4652 = vmatprep.subr.bf16.mxu0 %v4589
    %4653 = vmatpush1.bf16.msra.mxu0 %v4588
    %4654 = vmatprep.subr.bf16.mxu0 %v4591
    %4655 = vmatpush1.bf16.msra.mxu0 %v4590
    %4656 = vmatprep.subr.bf16.mxu0 %v4593
    %4657 = vmatpush1.bf16.msra.mxu0 %v4592
    %4658 = vmatprep.subr.bf16.mxu0 %v4595
    %4659 = vmatpush1.bf16.msra.mxu0 %v4594
    %4660 = vmatprep.mubr.bf16.mxu0 %v4434
    %4661 = vmatmul.mubr.bf16.gmra.mrb[0].mxu0 %v4433
    %v4662 = vpop.f32.mrb[0].mxu0
    %v4663 = vadd.f32 0.0, %v4662
    %v4664 = vpop.f32.mrb[0].mxu0
    %v4665 = vadd.f32 0.0, %v4664
    %v4666 = vpop.f32.mrb[0].mxu0
    %v4667 = vadd.f32 0.0, %v4666
    %v4668 = vpop.f32.mrb[0].mxu0
    %v4669 = vadd.f32 0.0, %v4668
    %4670 = vdwg.mxu0
    %v4703 = vunpack.c.l.b16 %v4315
    %v4704 = vunpack.c.h.b16 %v4315
    %v4705 = vunpack.c.l.b16 %v4316
    %v4706 = vunpack.c.h.b16 %v4316
    %v4707 = vunpack.c.l.b16 %v4317
    %v4708 = vunpack.c.h.b16 %v4317
    %v4709 = vunpack.c.l.b16 %v4318
    %v4710 = vunpack.c.h.b16 %v4318
    %v4711 = vunpack.c.l.b16 %v4319
    %v4712 = vunpack.c.h.b16 %v4319
    %v4713 = vunpack.c.l.b16 %v4320
    %v4714 = vunpack.c.h.b16 %v4320
    %v4715 = vunpack.c.l.b16 %v4321
    %v4716 = vunpack.c.h.b16 %v4321
    %v4717 = vunpack.c.l.b16 %v4322
    %v4718 = vunpack.c.h.b16 %v4322
    %v4719 = vunpack.c.l.b16 %v4323
    %v4720 = vunpack.c.h.b16 %v4323
    %v4721 = vunpack.c.l.b16 %v4324
    %v4722 = vunpack.c.h.b16 %v4324
    %v4723 = vunpack.c.l.b16 %v4325
    %v4724 = vunpack.c.h.b16 %v4325
    %v4725 = vunpack.c.l.b16 %v4326
    %v4726 = vunpack.c.h.b16 %v4326
    %v4727 = vunpack.c.l.b16 %v4327
    %v4728 = vunpack.c.h.b16 %v4327
    %v4729 = vunpack.c.l.b16 %v4328
    %v4730 = vunpack.c.h.b16 %v4328
    %v4731 = vunpack.c.l.b16 %v4329
    %v4732 = vunpack.c.h.b16 %v4329
    %v4733 = vunpack.c.l.b16 %v4330
    %v4734 = vunpack.c.h.b16 %v4330
    %v4735 = vunpack.c.l.b16 %v4331
    %v4736 = vunpack.c.h.b16 %v4331
    %v4737 = vunpack.c.l.b16 %v4332
    %v4738 = vunpack.c.h.b16 %v4332
    %v4739 = vunpack.c.l.b16 %v4333
    %v4740 = vunpack.c.h.b16 %v4333
    %v4741 = vunpack.c.l.b16 %v4334
    %v4742 = vunpack.c.h.b16 %v4334
    %v4743 = vunpack.c.l.b16 %v4335
    %v4744 = vunpack.c.h.b16 %v4335
    %v4745 = vunpack.c.l.b16 %v4336
    %v4746 = vunpack.c.h.b16 %v4336
    %v4747 = vunpack.c.l.b16 %v4337
    %v4748 = vunpack.c.h.b16 %v4337
    %v4749 = vunpack.c.l.b16 %v4338
    %v4750 = vunpack.c.h.b16 %v4338
    %v4751 = vunpack.c.l.b16 %v4339
    %v4752 = vunpack.c.h.b16 %v4339
    %v4753 = vunpack.c.l.b16 %v4340
    %v4754 = vunpack.c.h.b16 %v4340
    %v4755 = vunpack.c.l.b16 %v4341
    %v4756 = vunpack.c.h.b16 %v4341
    %v4757 = vunpack.c.l.b16 %v4342
    %v4758 = vunpack.c.h.b16 %v4342
    %v4759 = vunpack.c.l.b16 %v4343
    %v4760 = vunpack.c.h.b16 %v4343
    %v4761 = vunpack.c.l.b16 %v4344
    %v4762 = vunpack.c.h.b16 %v4344
    %v4763 = vunpack.c.l.b16 %v4345
    %v4764 = vunpack.c.h.b16 %v4345
    %v4765 = vunpack.c.l.b16 %v4346
    %v4766 = vunpack.c.h.b16 %v4346
    %v4767 = vpack.c.b16 %v4705, %v4703
    %v4768 = vpack.c.b16 %v4706, %v4704
    %v4769 = vpack.c.b16 %v4709, %v4707
    %v4770 = vpack.c.b16 %v4710, %v4708
    %v4771 = vpack.c.b16 %v4713, %v4711
    %v4772 = vpack.c.b16 %v4714, %v4712
    %v4773 = vpack.c.b16 %v4717, %v4715
    %v4774 = vpack.c.b16 %v4718, %v4716
    %v4775 = vpack.c.b16 %v4721, %v4719
    %v4776 = vpack.c.b16 %v4722, %v4720
    %v4777 = vpack.c.b16 %v4725, %v4723
    %v4778 = vpack.c.b16 %v4726, %v4724
    %v4779 = vpack.c.b16 %v4729, %v4727
    %v4780 = vpack.c.b16 %v4730, %v4728
    %v4781 = vpack.c.b16 %v4733, %v4731
    %v4782 = vpack.c.b16 %v4734, %v4732
    %v4783 = vpack.c.b16 %v4737, %v4735
    %v4784 = vpack.c.b16 %v4738, %v4736
    %v4785 = vpack.c.b16 %v4741, %v4739
    %v4786 = vpack.c.b16 %v4742, %v4740
    %v4787 = vpack.c.b16 %v4745, %v4743
    %v4788 = vpack.c.b16 %v4746, %v4744
    %v4789 = vpack.c.b16 %v4749, %v4747
    %v4790 = vpack.c.b16 %v4750, %v4748
    %v4791 = vpack.c.b16 %v4753, %v4751
    %v4792 = vpack.c.b16 %v4754, %v4752
    %v4793 = vpack.c.b16 %v4757, %v4755
    %v4794 = vpack.c.b16 %v4758, %v4756
    %v4795 = vpack.c.b16 %v4761, %v4759
    %v4796 = vpack.c.b16 %v4762, %v4760
    %v4797 = vpack.c.b16 %v4765, %v4763
    %v4798 = vpack.c.b16 %v4766, %v4764
    %4831 = vmatprep.subr.bf16.mxu0 %v4768
    %4832 = vmatpush1.bf16.msra.mxu0 %v4767
    %4833 = vmatprep.subr.bf16.mxu0 %v4770
    %4834 = vmatpush1.bf16.msra.mxu0 %v4769
    %4835 = vmatprep.subr.bf16.mxu0 %v4772
    %4836 = vmatpush1.bf16.msra.mxu0 %v4771
    %4837 = vmatprep.subr.bf16.mxu0 %v4774
    %4838 = vmatpush1.bf16.msra.mxu0 %v4773
    %4839 = vmatprep.subr.bf16.mxu0 %v4776
    %4840 = vmatpush1.bf16.msra.mxu0 %v4775
    %4841 = vmatprep.subr.bf16.mxu0 %v4778
    %4842 = vmatpush1.bf16.msra.mxu0 %v4777
    %4843 = vmatprep.subr.bf16.mxu0 %v4780
    %4844 = vmatpush1.bf16.msra.mxu0 %v4779
    %4845 = vmatprep.subr.bf16.mxu0 %v4782
    %4846 = vmatpush1.bf16.msra.mxu0 %v4781
    %4847 = vmatprep.subr.bf16.mxu0 %v4784
    %4848 = vmatpush1.bf16.msra.mxu0 %v4783
    %4849 = vmatprep.subr.bf16.mxu0 %v4786
    %4850 = vmatpush1.bf16.msra.mxu0 %v4785
    %4851 = vmatprep.subr.bf16.mxu0 %v4788
    %4852 = vmatpush1.bf16.msra.mxu0 %v4787
    %4853 = vmatprep.subr.bf16.mxu0 %v4790
    %4854 = vmatpush1.bf16.msra.mxu0 %v4789
    %4855 = vmatprep.subr.bf16.mxu0 %v4792
    %4856 = vmatpush1.bf16.msra.mxu0 %v4791
    %4857 = vmatprep.subr.bf16.mxu0 %v4794
    %4858 = vmatpush1.bf16.msra.mxu0 %v4793
    %4859 = vmatprep.subr.bf16.mxu0 %v4796
    %4860 = vmatpush1.bf16.msra.mxu0 %v4795
    %4861 = vmatprep.subr.bf16.mxu0 %v4798
    %4862 = vmatpush1.bf16.msra.mxu0 %v4797
    %4863 = vmatprep.mubr.bf16.mxu0 %v4314
    %4864 = vmatmul.mubr.bf16.gmra.mrb[0].mxu0 %v4313
    %v4865 = vpop.f32.mrb[0].mxu0
    %v4866 = vadd.f32 %v4663, %v4865
    %v4867 = vpop.f32.mrb[0].mxu0
    %v4868 = vadd.f32 %v4665, %v4867
    %v4869 = vpop.f32.mrb[0].mxu0
    %v4870 = vadd.f32 %v4667, %v4869
    %v4871 = vpop.f32.mrb[0].mxu0
    %v4872 = vadd.f32 %v4669, %v4871
    %4873 = vdwg.mxu0
    %s4874 = scalar_lea.vmem [#allocation22], 32
    %v4875 = vld [vmem:[%s4874] sm:$0xff]
    %v4876 = vld [vmem:[%s4874 + $0x8] sm:$0xff]
    %v4878 = vsel %vm618, %v4875, 0
    %v4881 = vsel %vm618, %v4876, 0
    %4883 = vmatprep.subr.mxu0 %v4221
    %4884 = vmatpush1.msra.mxu0 %v4220
    %4885 = vmatprep.subr.mxu0 %v4223
    %4886 = vmatpush1.msra.mxu0 %v4222
    %4887 = vmatprep.subr.mxu0 %v4225
    %4888 = vmatpush1.msra.mxu0 %v4224
    %4889 = vmatprep.subr.mxu0 %v4227
    %4890 = vmatpush1.msra.mxu0 %v4226
    %4891 = vmatprep.subr.mxu0 0.0
    %4892 = vmatpush1.msra.mxu0 0.0
    %4893 = vmatprep.subr.mxu0 0.0
    %4894 = vmatpush1.msra.mxu0 0.0
    %4895 = vmatprep.subr.mxu0 0.0
    %4896 = vmatpush1.msra.mxu0 0.0
    %4897 = vmatprep.subr.mxu0 0.0
    %4898 = vmatpush1.msra.mxu0 0.0
    %4899 = vmatprep.subr.mxu0 0.0
    %4900 = vmatpush1.msra.mxu0 0.0
    %4901 = vmatprep.subr.mxu0 0.0
    %4902 = vmatpush1.msra.mxu0 0.0
    %4903 = vmatprep.subr.mxu0 0.0
    %4904 = vmatpush1.msra.mxu0 0.0
    %4905 = vmatprep.subr.mxu0 0.0
    %4906 = vmatpush1.msra.mxu0 0.0
    %4907 = vmatprep.subr.mxu0 0.0
    %4908 = vmatpush1.msra.mxu0 0.0
    %4909 = vmatprep.subr.mxu0 0.0
    %4910 = vmatpush1.msra.mxu0 0.0
    %4911 = vmatprep.subr.mxu0 0.0
    %4912 = vmatpush1.msra.mxu0 0.0
    %4913 = vmatprep.subr.mxu0 0.0
    %4914 = vmatpush1.msra.mxu0 0.0
    %4915 = vmatprep.subr.mxu0 0.0
    %4916 = vmatpush1.msra.mxu0 0.0
    %4917 = vmatprep.subr.mxu0 0.0
    %4918 = vmatpush1.msra.mxu0 0.0
    %4919 = vmatprep.subr.mxu0 0.0
    %4920 = vmatpush1.msra.mxu0 0.0
    %4921 = vmatprep.subr.mxu0 0.0
    %4922 = vmatpush1.msra.mxu0 0.0
    %4923 = vmatprep.subr.mxu0 0.0
    %4924 = vmatpush1.msra.mxu0 0.0
    %4925 = vmatprep.subr.mxu0 0.0
    %4926 = vmatpush1.msra.mxu0 0.0
    %4927 = vmatprep.subr.mxu0 0.0
    %4928 = vmatpush1.msra.mxu0 0.0
    %4929 = vmatprep.subr.mxu0 0.0
    %4930 = vmatpush1.msra.mxu0 0.0
    %4931 = vmatprep.subr.mxu0 0.0
    %4932 = vmatpush1.msra.mxu0 0.0
    %4933 = vmatprep.subr.mxu0 0.0
    %4934 = vmatpush1.msra.mxu0 0.0
    %4935 = vmatprep.subr.mxu0 0.0
    %4936 = vmatpush1.msra.mxu0 0.0
    %4937 = vmatprep.subr.mxu0 0.0
    %4938 = vmatpush1.msra.mxu0 0.0
    %4939 = vmatprep.subr.mxu0 0.0
    %4940 = vmatpush1.msra.mxu0 0.0
    %4941 = vmatprep.subr.mxu0 0.0
    %4942 = vmatpush1.msra.mxu0 0.0
    %4943 = vmatprep.subr.mxu0 0.0
    %4944 = vmatpush1.msra.mxu0 0.0
    %4945 = vmatprep.subr.mxu0 0.0
    %4946 = vmatpush1.msra.mxu0 0.0
    %4947 = vmatprep.mubr.f32.mxu0 0.0
    %4948 = vmatmul.mubr.f32.gmra.mrb[0].mxu0 %v4878
    %v4949 = vpop.f32.mrb[0].mxu0
    %v4950 = vadd.f32 0.0, %v4949
    %v4951 = vpop.f32.mrb[0].mxu0
    %v4952 = vadd.f32 0.0, %v4951
    %4953 = vmatprep.mubr.f32.mxu0 0.0
    %4954 = vmatmul.mubr.f32.gmra.mrb[0].mxu0 %v4881
    %v4955 = vpop.f32.mrb[0].mxu0
    %v4956 = vadd.f32 0.0, %v4955
    %v4957 = vpop.f32.mrb[0].mxu0
    %v4958 = vadd.f32 0.0, %v4957
    %4959 = vdwg.mxu0
    %v4960 = vpack.c.bf16 %v4956, %v4950
    %v4961 = vpack.c.bf16 %v4958, %v4952
    %s4962 = scalar_lea.vmem [#allocation20], 512
    %v4963 = vld [vmem:[%s4962] sm:$0xff]
    %v4964 = vld [vmem:[%s4962 + $0x8] sm:$0xff]
    %v4965 = vld [vmem:[%s4962 + $0x10] sm:$0xff]
    %v4966 = vld [vmem:[%s4962 + $0x18] sm:$0xff]
    %v4967 = vld [vmem:[%s4962 + $0x20] sm:$0xff]
    %v4968 = vld [vmem:[%s4962 + $0x28] sm:$0xff]
    %v4969 = vld [vmem:[%s4962 + $0x30] sm:$0xff]
    %v4970 = vld [vmem:[%s4962 + $0x38] sm:$0xff]
    %v4971 = vld [vmem:[%s4962 + $0x40] sm:$0xff]
    %v4972 = vld [vmem:[%s4962 + $0x48] sm:$0xff]
    %v4973 = vld [vmem:[%s4962 + $0x50] sm:$0xff]
    %v4974 = vld [vmem:[%s4962 + $0x58] sm:$0xff]
    %v4975 = vld [vmem:[%s4962 + $0x60] sm:$0xff]
    %v4976 = vld [vmem:[%s4962 + $0x68] sm:$0xff]
    %v4977 = vld [vmem:[%s4962 + $0x70] sm:$0xff]
    %v4978 = vld [vmem:[%s4962 + $0x78] sm:$0xff]
    %v4979 = vld [vmem:[%s4962 + $0x80] sm:$0xff]
    %v4980 = vld [vmem:[%s4962 + $0x88] sm:$0xff]
    %v4981 = vld [vmem:[%s4962 + $0x90] sm:$0xff]
    %v4982 = vld [vmem:[%s4962 + $0x98] sm:$0xff]
    %v4983 = vld [vmem:[%s4962 + $0xa0] sm:$0xff]
    %v4984 = vld [vmem:[%s4962 + $0xa8] sm:$0xff]
    %v4985 = vld [vmem:[%s4962 + $0xb0] sm:$0xff]
    %v4986 = vld [vmem:[%s4962 + $0xb8] sm:$0xff]
    %v4987 = vld [vmem:[%s4962 + $0xc0] sm:$0xff]
    %v4988 = vld [vmem:[%s4962 + $0xc8] sm:$0xff]
    %v4989 = vld [vmem:[%s4962 + $0xd0] sm:$0xff]
    %v4990 = vld [vmem:[%s4962 + $0xd8] sm:$0xff]
    %v4991 = vld [vmem:[%s4962 + $0xe0] sm:$0xff]
    %v4992 = vld [vmem:[%s4962 + $0xe8] sm:$0xff]
    %v4993 = vld [vmem:[%s4962 + $0xf0] sm:$0xff]
    %v4994 = vld [vmem:[%s4962 + $0xf8] sm:$0xff]
    %v5027 = vunpack.c.l.b16 %v4963
    %v5028 = vunpack.c.h.b16 %v4963
    %v5029 = vunpack.c.l.b16 %v4964
    %v5030 = vunpack.c.h.b16 %v4964
    %v5031 = vunpack.c.l.b16 %v4965
    %v5032 = vunpack.c.h.b16 %v4965
    %v5033 = vunpack.c.l.b16 %v4966
    %v5034 = vunpack.c.h.b16 %v4966
    %v5035 = vunpack.c.l.b16 %v4967
    %v5036 = vunpack.c.h.b16 %v4967
    %v5037 = vunpack.c.l.b16 %v4968
    %v5038 = vunpack.c.h.b16 %v4968
    %v5039 = vunpack.c.l.b16 %v4969
    %v5040 = vunpack.c.h.b16 %v4969
    %v5041 = vunpack.c.l.b16 %v4970
    %v5042 = vunpack.c.h.b16 %v4970
    %v5043 = vunpack.c.l.b16 %v4971
    %v5044 = vunpack.c.h.b16 %v4971
    %v5045 = vunpack.c.l.b16 %v4972
    %v5046 = vunpack.c.h.b16 %v4972
    %v5047 = vunpack.c.l.b16 %v4973
    %v5048 = vunpack.c.h.b16 %v4973
    %v5049 = vunpack.c.l.b16 %v4974
    %v5050 = vunpack.c.h.b16 %v4974
    %v5051 = vunpack.c.l.b16 %v4975
    %v5052 = vunpack.c.h.b16 %v4975
    %v5053 = vunpack.c.l.b16 %v4976
    %v5054 = vunpack.c.h.b16 %v4976
    %v5055 = vunpack.c.l.b16 %v4977
    %v5056 = vunpack.c.h.b16 %v4977
    %v5057 = vunpack.c.l.b16 %v4978
    %v5058 = vunpack.c.h.b16 %v4978
    %v5059 = vunpack.c.l.b16 %v4979
    %v5060 = vunpack.c.h.b16 %v4979
    %v5061 = vunpack.c.l.b16 %v4980
    %v5062 = vunpack.c.h.b16 %v4980
    %v5063 = vunpack.c.l.b16 %v4981
    %v5064 = vunpack.c.h.b16 %v4981
    %v5065 = vunpack.c.l.b16 %v4982
    %v5066 = vunpack.c.h.b16 %v4982
    %v5067 = vunpack.c.l.b16 %v4983
    %v5068 = vunpack.c.h.b16 %v4983
    %v5069 = vunpack.c.l.b16 %v4984
    %v5070 = vunpack.c.h.b16 %v4984
    %v5071 = vunpack.c.l.b16 %v4985
    %v5072 = vunpack.c.h.b16 %v4985
    %v5073 = vunpack.c.l.b16 %v4986
    %v5074 = vunpack.c.h.b16 %v4986
    %v5075 = vunpack.c.l.b16 %v4987
    %v5076 = vunpack.c.h.b16 %v4987
    %v5077 = vunpack.c.l.b16 %v4988
    %v5078 = vunpack.c.h.b16 %v4988
    %v5079 = vunpack.c.l.b16 %v4989
    %v5080 = vunpack.c.h.b16 %v4989
    %v5081 = vunpack.c.l.b16 %v4990
    %v5082 = vunpack.c.h.b16 %v4990
    %v5083 = vunpack.c.l.b16 %v4991
    %v5084 = vunpack.c.h.b16 %v4991
    %v5085 = vunpack.c.l.b16 %v4992
    %v5086 = vunpack.c.h.b16 %v4992
    %v5087 = vunpack.c.l.b16 %v4993
    %v5088 = vunpack.c.h.b16 %v4993
    %v5089 = vunpack.c.l.b16 %v4994
    %v5090 = vunpack.c.h.b16 %v4994
    %v5091 = vpack.c.b16 %v5029, %v5027
    %v5092 = vpack.c.b16 %v5030, %v5028
    %v5093 = vpack.c.b16 %v5033, %v5031
    %v5094 = vpack.c.b16 %v5034, %v5032
    %v5095 = vpack.c.b16 %v5037, %v5035
    %v5096 = vpack.c.b16 %v5038, %v5036
    %v5097 = vpack.c.b16 %v5041, %v5039
    %v5098 = vpack.c.b16 %v5042, %v5040
    %v5099 = vpack.c.b16 %v5045, %v5043
    %v5100 = vpack.c.b16 %v5046, %v5044
    %v5101 = vpack.c.b16 %v5049, %v5047
    %v5102 = vpack.c.b16 %v5050, %v5048
    %v5103 = vpack.c.b16 %v5053, %v5051
    %v5104 = vpack.c.b16 %v5054, %v5052
    %v5105 = vpack.c.b16 %v5057, %v5055
    %v5106 = vpack.c.b16 %v5058, %v5056
    %v5107 = vpack.c.b16 %v5061, %v5059
    %v5108 = vpack.c.b16 %v5062, %v5060
    %v5109 = vpack.c.b16 %v5065, %v5063
    %v5110 = vpack.c.b16 %v5066, %v5064
    %v5111 = vpack.c.b16 %v5069, %v5067
    %v5112 = vpack.c.b16 %v5070, %v5068
    %v5113 = vpack.c.b16 %v5073, %v5071
    %v5114 = vpack.c.b16 %v5074, %v5072
    %v5115 = vpack.c.b16 %v5077, %v5075
    %v5116 = vpack.c.b16 %v5078, %v5076
    %v5117 = vpack.c.b16 %v5081, %v5079
    %v5118 = vpack.c.b16 %v5082, %v5080
    %v5119 = vpack.c.b16 %v5085, %v5083
    %v5120 = vpack.c.b16 %v5086, %v5084
    %v5121 = vpack.c.b16 %v5089, %v5087
    %v5122 = vpack.c.b16 %v5090, %v5088
    %5155 = vmatprep.subr.bf16.mxu0 %v5092
    %5156 = vmatpush1.bf16.msra.mxu0 %v5091
    %5157 = vmatprep.subr.bf16.mxu0 %v5094
    %5158 = vmatpush1.bf16.msra.mxu0 %v5093
    %5159 = vmatprep.subr.bf16.mxu0 %v5096
    %5160 = vmatpush1.bf16.msra.mxu0 %v5095
    %5161 = vmatprep.subr.bf16.mxu0 %v5098
    %5162 = vmatpush1.bf16.msra.mxu0 %v5097
    %5163 = vmatprep.subr.bf16.mxu0 %v5100
    %5164 = vmatpush1.bf16.msra.mxu0 %v5099
    %5165 = vmatprep.subr.bf16.mxu0 %v5102
    %5166 = vmatpush1.bf16.msra.mxu0 %v5101
    %5167 = vmatprep.subr.bf16.mxu0 %v5104
    %5168 = vmatpush1.bf16.msra.mxu0 %v5103
    %5169 = vmatprep.subr.bf16.mxu0 %v5106
    %5170 = vmatpush1.bf16.msra.mxu0 %v5105
    %5171 = vmatprep.subr.bf16.mxu0 %v5108
    %5172 = vmatpush1.bf16.msra.mxu0 %v5107
    %5173 = vmatprep.subr.bf16.mxu0 %v5110
    %5174 = vmatpush1.bf16.msra.mxu0 %v5109
    %5175 = vmatprep.subr.bf16.mxu0 %v5112
    %5176 = vmatpush1.bf16.msra.mxu0 %v5111
    %5177 = vmatprep.subr.bf16.mxu0 %v5114
    %5178 = vmatpush1.bf16.msra.mxu0 %v5113
    %5179 = vmatprep.subr.bf16.mxu0 %v5116
    %5180 = vmatpush1.bf16.msra.mxu0 %v5115
    %5181 = vmatprep.subr.bf16.mxu0 %v5118
    %5182 = vmatpush1.bf16.msra.mxu0 %v5117
    %5183 = vmatprep.subr.bf16.mxu0 %v5120
    %5184 = vmatpush1.bf16.msra.mxu0 %v5119
    %5185 = vmatprep.subr.bf16.mxu0 %v5122
    %5186 = vmatpush1.bf16.msra.mxu0 %v5121
    %5187 = vmatprep.mubr.bf16.mxu0 %v4961
    %5188 = vmatmul.mubr.bf16.gmra.mrb[0].mxu0 %v4960
    %v5189 = vpop.f32.mrb[0].mxu0
    %v5190 = vadd.f32 0.0, %v5189
    %v5191 = vpop.f32.mrb[0].mxu0
    %v5192 = vadd.f32 0.0, %v5191
    %v5193 = vpop.f32.mrb[0].mxu0
    %v5194 = vadd.f32 0.0, %v5193
    %v5195 = vpop.f32.mrb[0].mxu0
    %v5196 = vadd.f32 0.0, %v5195
    %5197 = vdwg.mxu0
    %v5198 = vadd.f32 %v4866, %v5190
    %v5199 = vadd.f32 %v4868, %v5192
    %v5200 = vadd.f32 %v4870, %v5194
    %v5201 = vadd.f32 %v4872, %v5196
    %v5202 = vld [vmem:[#allocation52] sm:$0xff]
    %v5203 = vld [vmem:[#allocation52 + $0x8] sm:$0xff]
    %v5204 = vld [vmem:[#allocation52 + $0x10] sm:$0xff]
    %v5205 = vld [vmem:[#allocation52 + $0x18] sm:$0xff]
    %v5206 = vld [vmem:[#allocation52 + $0x20] sm:$0xff]
    %v5207 = vld [vmem:[#allocation52 + $0x28] sm:$0xff]
    %v5208 = vld [vmem:[#allocation52 + $0x30] sm:$0xff]
    %v5209 = vld [vmem:[#allocation52 + $0x38] sm:$0xff]
    %v5210 = vld [vmem:[#allocation52 + $0x40] sm:$0xff]
    %v5211 = vld [vmem:[#allocation52 + $0x48] sm:$0xff]
    %v5212 = vld [vmem:[#allocation52 + $0x50] sm:$0xff]
    %v5213 = vld [vmem:[#allocation52 + $0x58] sm:$0xff]
    %v5214 = vld [vmem:[#allocation52 + $0x60] sm:$0xff]
    %v5215 = vld [vmem:[#allocation52 + $0x68] sm:$0xff]
    %v5216 = vld [vmem:[#allocation52 + $0x70] sm:$0xff]
    %v5217 = vld [vmem:[#allocation52 + $0x78] sm:$0xff]
    %v5218 = vld [vmem:[#allocation52 + $0x80] sm:$0xff]
    %v5219 = vld [vmem:[#allocation52 + $0x88] sm:$0xff]
    %v5220 = vld [vmem:[#allocation52 + $0x90] sm:$0xff]
    %v5221 = vld [vmem:[#allocation52 + $0x98] sm:$0xff]
    %v5222 = vld [vmem:[#allocation52 + $0xa0] sm:$0xff]
    %v5223 = vld [vmem:[#allocation52 + $0xa8] sm:$0xff]
    %v5224 = vld [vmem:[#allocation52 + $0xb0] sm:$0xff]
    %v5225 = vld [vmem:[#allocation52 + $0xb8] sm:$0xff]
    %v5226 = vld [vmem:[#allocation52 + $0xc0] sm:$0xff]
    %v5227 = vld [vmem:[#allocation52 + $0xc8] sm:$0xff]
    %v5228 = vld [vmem:[#allocation52 + $0xd0] sm:$0xff]
    %v5229 = vld [vmem:[#allocation52 + $0xd8] sm:$0xff]
    %v5230 = vld [vmem:[#allocation52 + $0xe0] sm:$0xff]
    %v5231 = vld [vmem:[#allocation52 + $0xe8] sm:$0xff]
    %v5232 = vld [vmem:[#allocation52 + $0xf0] sm:$0xff]
    %v5233 = vld [vmem:[#allocation52 + $0xf8] sm:$0xff]
    %v5234 = vld [vmem:[#allocation52 + $0x100] sm:$0xff]
    %v5235 = vld [vmem:[#allocation52 + $0x108] sm:$0xff]
    %v5236 = vld [vmem:[#allocation52 + $0x110] sm:$0xff]
    %v5237 = vld [vmem:[#allocation52 + $0x118] sm:$0xff]
    %v5238 = vld [vmem:[#allocation52 + $0x120] sm:$0xff]
    %v5239 = vld [vmem:[#allocation52 + $0x128] sm:$0xff]
    %v5240 = vld [vmem:[#allocation52 + $0x130] sm:$0xff]
    %v5241 = vld [vmem:[#allocation52 + $0x138] sm:$0xff]
    %v5242 = vld [vmem:[#allocation52 + $0x140] sm:$0xff]
    %v5243 = vld [vmem:[#allocation52 + $0x148] sm:$0xff]
    %v5244 = vld [vmem:[#allocation52 + $0x150] sm:$0xff]
    %v5245 = vld [vmem:[#allocation52 + $0x158] sm:$0xff]
    %v5246 = vld [vmem:[#allocation52 + $0x160] sm:$0xff]
    %v5247 = vld [vmem:[#allocation52 + $0x168] sm:$0xff]
    %v5248 = vld [vmem:[#allocation52 + $0x170] sm:$0xff]
    %v5249 = vld [vmem:[#allocation52 + $0x178] sm:$0xff]
    %v5250 = vld [vmem:[#allocation52 + $0x180] sm:$0xff]
    %v5251 = vld [vmem:[#allocation52 + $0x188] sm:$0xff]
    %v5252 = vld [vmem:[#allocation52 + $0x190] sm:$0xff]
    %v5253 = vld [vmem:[#allocation52 + $0x198] sm:$0xff]
    %v5254 = vld [vmem:[#allocation52 + $0x1a0] sm:$0xff]
    %v5255 = vld [vmem:[#allocation52 + $0x1a8] sm:$0xff]
    %v5256 = vld [vmem:[#allocation52 + $0x1b0] sm:$0xff]
    %v5257 = vld [vmem:[#allocation52 + $0x1b8] sm:$0xff]
    %v5258 = vld [vmem:[#allocation52 + $0x1c0] sm:$0xff]
    %v5259 = vld [vmem:[#allocation52 + $0x1c8] sm:$0xff]
    %v5260 = vld [vmem:[#allocation52 + $0x1d0] sm:$0xff]
    %v5261 = vld [vmem:[#allocation52 + $0x1d8] sm:$0xff]
    %v5262 = vld [vmem:[#allocation52 + $0x1e0] sm:$0xff]
    %v5263 = vld [vmem:[#allocation52 + $0x1e8] sm:$0xff]
    %v5264 = vld [vmem:[#allocation52 + $0x1f0] sm:$0xff]
    %v5265 = vld [vmem:[#allocation52 + $0x1f8] sm:$0xff]
    %v5266 = vadd.f32 %v5198, %v5200
    %v5267 = vrot.slane %v5266, 4
    %v5268 = vadd.f32 %v5266, %v5267
    %v5269 = vrot.slane %v5268, 2
    %v5270 = vadd.f32 %v5268, %v5269
    %v5271 = vrot.slane %v5270, 1
    %v5272 = vadd.f32 %v5270, %v5271
    %v5273 = vadd.f32 %v5199, %v5201
    %v5274 = vrot.slane %v5273, 4
    %v5275 = vadd.f32 %v5273, %v5274
    %v5276 = vrot.slane %v5275, 2
    %v5277 = vadd.f32 %v5275, %v5276
    %v5278 = vrot.slane %v5277, 1
    %v5279 = vadd.f32 %v5277, %v5278
    %5280 = vmatprep.subr.mxu0 %v5203
    %5281 = vmatpush1.msra.mxu0 %v5202
    %5282 = vmatprep.subr.mxu0 %v5205
    %5283 = vmatpush1.msra.mxu0 %v5204
    %5284 = vmatprep.subr.mxu0 %v5207
    %5285 = vmatpush1.msra.mxu0 %v5206
    %5286 = vmatprep.subr.mxu0 %v5209
    %5287 = vmatpush1.msra.mxu0 %v5208
    %5288 = vmatprep.subr.mxu0 %v5211
    %5289 = vmatpush1.msra.mxu0 %v5210
    %5290 = vmatprep.subr.mxu0 %v5213
    %5291 = vmatpush1.msra.mxu0 %v5212
    %5292 = vmatprep.subr.mxu0 %v5215
    %5293 = vmatpush1.msra.mxu0 %v5214
    %5294 = vmatprep.subr.mxu0 %v5217
    %5295 = vmatpush1.msra.mxu0 %v5216
    %5296 = vmatprep.subr.mxu0 %v5219
    %5297 = vmatpush1.msra.mxu0 %v5218
    %5298 = vmatprep.subr.mxu0 %v5221
    %5299 = vmatpush1.msra.mxu0 %v5220
    %5300 = vmatprep.subr.mxu0 %v5223
    %5301 = vmatpush1.msra.mxu0 %v5222
    %5302 = vmatprep.subr.mxu0 %v5225
    %5303 = vmatpush1.msra.mxu0 %v5224
    %5304 = vmatprep.subr.mxu0 %v5227
    %5305 = vmatpush1.msra.mxu0 %v5226
    %5306 = vmatprep.subr.mxu0 %v5229
    %5307 = vmatpush1.msra.mxu0 %v5228
    %5308 = vmatprep.subr.mxu0 %v5231
    %5309 = vmatpush1.msra.mxu0 %v5230
    %5310 = vmatprep.subr.mxu0 %v5233
    %5311 = vmatpush1.msra.mxu0 %v5232
    %5312 = vmatprep.subr.mxu0 %v5235
    %5313 = vmatpush1.msra.mxu0 %v5234
    %5314 = vmatprep.subr.mxu0 %v5237
    %5315 = vmatpush1.msra.mxu0 %v5236
    %5316 = vmatprep.subr.mxu0 %v5239
    %5317 = vmatpush1.msra.mxu0 %v5238
    %5318 = vmatprep.subr.mxu0 %v5241
    %5319 = vmatpush1.msra.mxu0 %v5240
    %5320 = vmatprep.subr.mxu0 %v5243
    %5321 = vmatpush1.msra.mxu0 %v5242
    %5322 = vmatprep.subr.mxu0 %v5245
    %5323 = vmatpush1.msra.mxu0 %v5244
    %5324 = vmatprep.subr.mxu0 %v5247
    %5325 = vmatpush1.msra.mxu0 %v5246
    %5326 = vmatprep.subr.mxu0 %v5249
    %5327 = vmatpush1.msra.mxu0 %v5248
    %5328 = vmatprep.subr.mxu0 %v5251
    %5329 = vmatpush1.msra.mxu0 %v5250
    %5330 = vmatprep.subr.mxu0 %v5253
    %5331 = vmatpush1.msra.mxu0 %v5252
    %5332 = vmatprep.subr.mxu0 %v5255
    %5333 = vmatpush1.msra.mxu0 %v5254
    %5334 = vmatprep.subr.mxu0 %v5257
    %5335 = vmatpush1.msra.mxu0 %v5256
    %5336 = vmatprep.subr.mxu0 %v5259
    %5337 = vmatpush1.msra.mxu0 %v5258
    %5338 = vmatprep.subr.mxu0 %v5261
    %5339 = vmatpush1.msra.mxu0 %v5260
    %5340 = vmatprep.subr.mxu0 %v5263
    %5341 = vmatpush1.msra.mxu0 %v5262
    %5342 = vmatprep.subr.mxu0 %v5265
    %5343 = vmatpush1.msra.mxu0 %v5264
    %5344 = vmatprep.mubr.f32.mxu0 %v5279
    %5345 = vmatmul.mubr.f32.gmra.mrb[0].mxu0 %v5272
    %v5346 = vpop.f32.mrb[0].mxu0
    %v5347 = vadd.f32 0.0, %v5346
    %v5348 = vpop.f32.mrb[0].mxu0
    %v5349 = vadd.f32 0.0, %v5348
    %5350 = vdwg.mxu0
    %v5351 = vlaneseq
    %v5352 = vshrl.u32 %v5351, 7
    %v5353 = vsub.s32 0, %v5352
    %v5354 = vrot.slane %v5347, %v5353
    %v5355 = vlaneseq
    %v5356 = vshrl.u32 %v5355, 7
    %v5357 = vsub.s32 0, %v5356
    %v5358 = vrot.slane %v5349, %v5357
    %v5359 = vsub.f32 %v5198, %v5354
    %v5360 = vsub.f32 %v5199, %v5358
    %v5361 = vsub.f32 %v5200, %v5354
    %v5362 = vsub.f32 %v5201, %v5358
    %v5363 = vmul.f32 %v5359, %v5359
    %v5364 = vmul.f32 %v5360, %v5360
    %v5365 = vmul.f32 %v5361, %v5361
    %v5366 = vmul.f32 %v5362, %v5362
    %v5367 = vadd.f32 %v5363, %v5365
    %v5368 = vrot.slane %v5367, 4
    %v5369 = vadd.f32 %v5367, %v5368
    %v5370 = vrot.slane %v5369, 2
    %v5371 = vadd.f32 %v5369, %v5370
    %v5372 = vrot.slane %v5371, 1
    %v5373 = vadd.f32 %v5371, %v5372
    %v5374 = vadd.f32 %v5364, %v5366
    %v5375 = vrot.slane %v5374, 4
    %v5376 = vadd.f32 %v5374, %v5375
    %v5377 = vrot.slane %v5376, 2
    %v5378 = vadd.f32 %v5376, %v5377
    %v5379 = vrot.slane %v5378, 1
    %v5380 = vadd.f32 %v5378, %v5379
    %5381 = vmatprep.subr.mxu0 %v5203
    %5382 = vmatpush1.msra.mxu0 %v5202
    %5383 = vmatprep.subr.mxu0 %v5205
    %5384 = vmatpush1.msra.mxu0 %v5204
    %5385 = vmatprep.subr.mxu0 %v5207
    %5386 = vmatpush1.msra.mxu0 %v5206
    %5387 = vmatprep.subr.mxu0 %v5209
    %5388 = vmatpush1.msra.mxu0 %v5208
    %5389 = vmatprep.subr.mxu0 %v5211
    %5390 = vmatpush1.msra.mxu0 %v5210
    %5391 = vmatprep.subr.mxu0 %v5213
    %5392 = vmatpush1.msra.mxu0 %v5212
    %5393 = vmatprep.subr.mxu0 %v5215
    %5394 = vmatpush1.msra.mxu0 %v5214
    %5395 = vmatprep.subr.mxu0 %v5217
    %5396 = vmatpush1.msra.mxu0 %v5216
    %5397 = vmatprep.subr.mxu0 %v5219
    %5398 = vmatpush1.msra.mxu0 %v5218
    %5399 = vmatprep.subr.mxu0 %v5221
    %5400 = vmatpush1.msra.mxu0 %v5220
    %5401 = vmatprep.subr.mxu0 %v5223
    %5402 = vmatpush1.msra.mxu0 %v5222
    %5403 = vmatprep.subr.mxu0 %v5225
    %5404 = vmatpush1.msra.mxu0 %v5224
    %5405 = vmatprep.subr.mxu0 %v5227
    %5406 = vmatpush1.msra.mxu0 %v5226
    %5407 = vmatprep.subr.mxu0 %v5229
    %5408 = vmatpush1.msra.mxu0 %v5228
    %5409 = vmatprep.subr.mxu0 %v5231
    %5410 = vmatpush1.msra.mxu0 %v5230
    %5411 = vmatprep.subr.mxu0 %v5233
    %5412 = vmatpush1.msra.mxu0 %v5232
    %5413 = vmatprep.subr.mxu0 %v5235
    %5414 = vmatpush1.msra.mxu0 %v5234
    %5415 = vmatprep.subr.mxu0 %v5237
    %5416 = vmatpush1.msra.mxu0 %v5236
    %5417 = vmatprep.subr.mxu0 %v5239
    %5418 = vmatpush1.msra.mxu0 %v5238
    %5419 = vmatprep.subr.mxu0 %v5241
    %5420 = vmatpush1.msra.mxu0 %v5240
    %5421 = vmatprep.subr.mxu0 %v5243
    %5422 = vmatpush1.msra.mxu0 %v5242
    %5423 = vmatprep.subr.mxu0 %v5245
    %5424 = vmatpush1.msra.mxu0 %v5244
    %5425 = vmatprep.subr.mxu0 %v5247
    %5426 = vmatpush1.msra.mxu0 %v5246
    %5427 = vmatprep.subr.mxu0 %v5249
    %5428 = vmatpush1.msra.mxu0 %v5248
    %5429 = vmatprep.subr.mxu0 %v5251
    %5430 = vmatpush1.msra.mxu0 %v5250
    %5431 = vmatprep.subr.mxu0 %v5253
    %5432 = vmatpush1.msra.mxu0 %v5252
    %5433 = vmatprep.subr.mxu0 %v5255
    %5434 = vmatpush1.msra.mxu0 %v5254
    %5435 = vmatprep.subr.mxu0 %v5257
    %5436 = vmatpush1.msra.mxu0 %v5256
    %5437 = vmatprep.subr.mxu0 %v5259
    %5438 = vmatpush1.msra.mxu0 %v5258
    %5439 = vmatprep.subr.mxu0 %v5261
    %5440 = vmatpush1.msra.mxu0 %v5260
    %5441 = vmatprep.subr.mxu0 %v5263
    %5442 = vmatpush1.msra.mxu0 %v5262
    %5443 = vmatprep.subr.mxu0 %v5265
    %5444 = vmatpush1.msra.mxu0 %v5264
    %5445 = vmatprep.mubr.f32.mxu0 %v5380
    %5446 = vmatmul.mubr.f32.gmra.mrb[0].mxu0 %v5373
    %v5447 = vpop.f32.mrb[0].mxu0
    %v5448 = vadd.f32 1e-05, %v5447
    %v5449 = vpop.f32.mrb[0].mxu0
    %v5450 = vadd.f32 1e-05, %v5449
    %5451 = vdwg.mxu0
    %v5452 = vrsqrt.pop %v5448
    %v5453 = vrsqrt.pop %v5450
    %v5454 = vld [vmem:[#allocation16] sm:$0x3]
    %v5456 = vlaneseq
    %v5457 = vshrl.u32 %v5456, 7
    %v5458 = vsub.s32 0, %v5457
    %v5459 = vrot.slane %v5454, %v5458
    %v5460 = vlaneseq
    %v5461 = vshrl.u32 %v5460, 7
    %v5462 = vsub.s32 1, %v5461
    %v5463 = vrot.slane %v5454, %v5462
    %v5466 = vmul.f32 %v5452, %v5459
    %v5467 = vmul.f32 %v5453, %v5463
    %v5468 = vlaneseq
    %v5469 = vshrl.u32 %v5468, 7
    %v5470 = vsub.s32 0, %v5469
    %v5471 = vrot.slane %v5466, %v5470
    %v5472 = vlaneseq
    %v5473 = vshrl.u32 %v5472, 7
    %v5474 = vsub.s32 0, %v5473
    %v5475 = vrot.slane %v5467, %v5474
    %v5476 = vmul.f32 %v5359, %v5471
    %v5477 = vmul.f32 %v5360, %v5475
    %v5478 = vmul.f32 %v5361, %v5471
    %v5479 = vmul.f32 %v5362, %v5475
    %v5480 = vld [vmem:[#allocation14] sm:$0x3]
    %v5482 = vlaneseq
    %v5483 = vshrl.u32 %v5482, 7
    %v5484 = vsub.s32 0, %v5483
    %v5485 = vrot.slane %v5480, %v5484
    %v5486 = vlaneseq
    %v5487 = vshrl.u32 %v5486, 7
    %v5488 = vsub.s32 1, %v5487
    %v5489 = vrot.slane %v5480, %v5488
    %v5492 = vadd.f32 %v5476, %v5485
    %v5493 = vadd.f32 %v5477, %v5489
    %v5494 = vadd.f32 %v5478, %v5485
    %v5495 = vadd.f32 %v5479, %v5489
    %v5496 = vmax.f32 %v5492, 0.0
    %v5497 = vmax.f32 %v5493, 0.0
    %v5498 = vmax.f32 %v5494, 0.0
    %v5499 = vmax.f32 %v5495, 0.0
    %v5500 = vld [vmem:[#allocation25] sm:$0xff]
    %v5501 = vld [vmem:[#allocation25 + $0x8] sm:$0xff]
    %vm5502 = vcmask 130048
    %v5504 = vsel %vm5502, %v5500, 0
    %v5507 = vsel %vm5502, %v5501, 0
    %5509 = vmatprep.subr.mxu0 %v5497
    %5510 = vmatpush1.msra.mxu0 %v5496
    %5511 = vmatprep.subr.mxu0 %v5499
    %5512 = vmatpush1.msra.mxu0 %v5498
    %5513 = vmatprep.subr.mxu0 0.0
    %5514 = vmatpush1.msra.mxu0 0.0
    %5515 = vmatprep.subr.mxu0 0.0
    %5516 = vmatpush1.msra.mxu0 0.0
    %5517 = vmatprep.subr.mxu0 0.0
    %5518 = vmatpush1.msra.mxu0 0.0
    %5519 = vmatprep.subr.mxu0 0.0
    %5520 = vmatpush1.msra.mxu0 0.0
    %5521 = vmatprep.subr.mxu0 0.0
    %5522 = vmatpush1.msra.mxu0 0.0
    %5523 = vmatprep.subr.mxu0 0.0
    %5524 = vmatpush1.msra.mxu0 0.0
    %5525 = vmatprep.subr.mxu0 0.0
    %5526 = vmatpush1.msra.mxu0 0.0
    %5527 = vmatprep.subr.mxu0 0.0
    %5528 = vmatpush1.msra.mxu0 0.0
    %5529 = vmatprep.subr.mxu0 0.0
    %5530 = vmatpush1.msra.mxu0 0.0
    %5531 = vmatprep.subr.mxu0 0.0
    %5532 = vmatpush1.msra.mxu0 0.0
    %5533 = vmatprep.subr.mxu0 0.0
    %5534 = vmatpush1.msra.mxu0 0.0
    %5535 = vmatprep.subr.mxu0 0.0
    %5536 = vmatpush1.msra.mxu0 0.0
    %5537 = vmatprep.subr.mxu0 0.0
    %5538 = vmatpush1.msra.mxu0 0.0
    %5539 = vmatprep.subr.mxu0 0.0
    %5540 = vmatpush1.msra.mxu0 0.0
    %5541 = vmatprep.subr.mxu0 0.0
    %5542 = vmatpush1.msra.mxu0 0.0
    %5543 = vmatprep.subr.mxu0 0.0
    %5544 = vmatpush1.msra.mxu0 0.0
    %5545 = vmatprep.subr.mxu0 0.0
    %5546 = vmatpush1.msra.mxu0 0.0
    %5547 = vmatprep.subr.mxu0 0.0
    %5548 = vmatpush1.msra.mxu0 0.0
    %5549 = vmatprep.subr.mxu0 0.0
    %5550 = vmatpush1.msra.mxu0 0.0
    %5551 = vmatprep.subr.mxu0 0.0
    %5552 = vmatpush1.msra.mxu0 0.0
    %5553 = vmatprep.subr.mxu0 0.0
    %5554 = vmatpush1.msra.mxu0 0.0
    %5555 = vmatprep.subr.mxu0 0.0
    %5556 = vmatpush1.msra.mxu0 0.0
    %5557 = vmatprep.subr.mxu0 0.0
    %5558 = vmatpush1.msra.mxu0 0.0
    %5559 = vmatprep.subr.mxu0 0.0
    %5560 = vmatpush1.msra.mxu0 0.0
    %5561 = vmatprep.subr.mxu0 0.0
    %5562 = vmatpush1.msra.mxu0 0.0
    %5563 = vmatprep.subr.mxu0 0.0
    %5564 = vmatpush1.msra.mxu0 0.0
    %5565 = vmatprep.subr.mxu0 0.0
    %5566 = vmatpush1.msra.mxu0 0.0
    %5567 = vmatprep.subr.mxu0 0.0
    %5568 = vmatpush1.msra.mxu0 0.0
    %5569 = vmatprep.subr.mxu0 0.0
    %5570 = vmatpush1.msra.mxu0 0.0
    %5571 = vmatprep.subr.mxu0 0.0
    %5572 = vmatpush1.msra.mxu0 0.0
    %5573 = vmatprep.mubr.f32.mxu0 0.0
    %5574 = vmatmul.mubr.f32.gmra.mrb[0].mxu0 %v5504
    %v5575 = vpop.f32.mrb[0].mxu0
    %v5576 = vadd.f32 0.0, %v5575
    %v5577 = vpop.f32.mrb[0].mxu0
    %v5578 = vadd.f32 0.0, %v5577
    %5579 = vmatprep.mubr.f32.mxu0 0.0
    %5580 = vmatmul.mubr.f32.gmra.mrb[0].mxu0 %v5507
    %v5581 = vpop.f32.mrb[0].mxu0
    %v5582 = vadd.f32 0.0, %v5581
    %v5583 = vpop.f32.mrb[0].mxu0
    %v5584 = vadd.f32 0.0, %v5583
    %5585 = vdwg.mxu0
    %v5586 = vpack.c.bf16 %v5582, %v5576
    %v5587 = vpack.c.bf16 %v5584, %v5578
    %v5588 = vld [vmem:[#allocation23] sm:$0xff]
    %v5589 = vld [vmem:[#allocation23 + $0x8] sm:$0xff]
    %v5590 = vld [vmem:[#allocation23 + $0x10] sm:$0xff]
    %v5591 = vld [vmem:[#allocation23 + $0x18] sm:$0xff]
    %v5592 = vld [vmem:[#allocation23 + $0x20] sm:$0xff]
    %v5593 = vld [vmem:[#allocation23 + $0x28] sm:$0xff]
    %v5594 = vld [vmem:[#allocation23 + $0x30] sm:$0xff]
    %v5595 = vld [vmem:[#allocation23 + $0x38] sm:$0xff]
    %v5596 = vld [vmem:[#allocation23 + $0x40] sm:$0xff]
    %v5597 = vld [vmem:[#allocation23 + $0x48] sm:$0xff]
    %v5598 = vld [vmem:[#allocation23 + $0x50] sm:$0xff]
    %v5599 = vld [vmem:[#allocation23 + $0x58] sm:$0xff]
    %v5600 = vld [vmem:[#allocation23 + $0x60] sm:$0xff]
    %v5601 = vld [vmem:[#allocation23 + $0x68] sm:$0xff]
    %v5602 = vld [vmem:[#allocation23 + $0x70] sm:$0xff]
    %v5603 = vld [vmem:[#allocation23 + $0x78] sm:$0xff]
    %v5604 = vld [vmem:[#allocation23 + $0x80] sm:$0xff]
    %v5605 = vld [vmem:[#allocation23 + $0x88] sm:$0xff]
    %v5606 = vld [vmem:[#allocation23 + $0x90] sm:$0xff]
    %v5607 = vld [vmem:[#allocation23 + $0x98] sm:$0xff]
    %v5608 = vld [vmem:[#allocation23 + $0xa0] sm:$0xff]
    %v5609 = vld [vmem:[#allocation23 + $0xa8] sm:$0xff]
    %v5610 = vld [vmem:[#allocation23 + $0xb0] sm:$0xff]
    %v5611 = vld [vmem:[#allocation23 + $0xb8] sm:$0xff]
    %v5612 = vld [vmem:[#allocation23 + $0xc0] sm:$0xff]
    %v5613 = vld [vmem:[#allocation23 + $0xc8] sm:$0xff]
    %v5614 = vld [vmem:[#allocation23 + $0xd0] sm:$0xff]
    %v5615 = vld [vmem:[#allocation23 + $0xd8] sm:$0xff]
    %v5616 = vld [vmem:[#allocation23 + $0xe0] sm:$0xff]
    %v5617 = vld [vmem:[#allocation23 + $0xe8] sm:$0xff]
    %v5618 = vld [vmem:[#allocation23 + $0xf0] sm:$0xff]
    %v5619 = vld [vmem:[#allocation23 + $0xf8] sm:$0xff]
    %s5620 = scalar_lea.vmem [#allocation25], 16
    %v5621 = vld [vmem:[%s5620] sm:$0xff]
    %v5622 = vld [vmem:[%s5620 + $0x8] sm:$0xff]
    %v5624 = vsel %vm5502, %v5621, 0
    %v5627 = vsel %vm5502, %v5622, 0
    %5629 = vmatprep.subr.mxu0 %v5497
    %5630 = vmatpush1.msra.mxu0 %v5496
    %5631 = vmatprep.subr.mxu0 %v5499
    %5632 = vmatpush1.msra.mxu0 %v5498
    %5633 = vmatprep.subr.mxu0 0.0
    %5634 = vmatpush1.msra.mxu0 0.0
    %5635 = vmatprep.subr.mxu0 0.0
    %5636 = vmatpush1.msra.mxu0 0.0
    %5637 = vmatprep.subr.mxu0 0.0
    %5638 = vmatpush1.msra.mxu0 0.0
    %5639 = vmatprep.subr.mxu0 0.0
    %5640 = vmatpush1.msra.mxu0 0.0
    %5641 = vmatprep.subr.mxu0 0.0
    %5642 = vmatpush1.msra.mxu0 0.0
    %5643 = vmatprep.subr.mxu0 0.0
    %5644 = vmatpush1.msra.mxu0 0.0
    %5645 = vmatprep.subr.mxu0 0.0
    %5646 = vmatpush1.msra.mxu0 0.0
    %5647 = vmatprep.subr.mxu0 0.0
    %5648 = vmatpush1.msra.mxu0 0.0
    %5649 = vmatprep.subr.mxu0 0.0
    %5650 = vmatpush1.msra.mxu0 0.0
    %5651 = vmatprep.subr.mxu0 0.0
    %5652 = vmatpush1.msra.mxu0 0.0
    %5653 = vmatprep.subr.mxu0 0.0
    %5654 = vmatpush1.msra.mxu0 0.0
    %5655 = vmatprep.subr.mxu0 0.0
    %5656 = vmatpush1.msra.mxu0 0.0
    %5657 = vmatprep.subr.mxu0 0.0
    %5658 = vmatpush1.msra.mxu0 0.0
    %5659 = vmatprep.subr.mxu0 0.0
    %5660 = vmatpush1.msra.mxu0 0.0
    %5661 = vmatprep.subr.mxu0 0.0
    %5662 = vmatpush1.msra.mxu0 0.0
    %5663 = vmatprep.subr.mxu0 0.0
    %5664 = vmatpush1.msra.mxu0 0.0
    %5665 = vmatprep.subr.mxu0 0.0
    %5666 = vmatpush1.msra.mxu0 0.0
    %5667 = vmatprep.subr.mxu0 0.0
    %5668 = vmatpush1.msra.mxu0 0.0
    %5669 = vmatprep.subr.mxu0 0.0
    %5670 = vmatpush1.msra.mxu0 0.0
    %5671 = vmatprep.subr.mxu0 0.0
    %5672 = vmatpush1.msra.mxu0 0.0
    %5673 = vmatprep.subr.mxu0 0.0
    %5674 = vmatpush1.msra.mxu0 0.0
    %5675 = vmatprep.subr.mxu0 0.0
    %5676 = vmatpush1.msra.mxu0 0.0
    %5677 = vmatprep.subr.mxu0 0.0
    %5678 = vmatpush1.msra.mxu0 0.0
    %5679 = vmatprep.subr.mxu0 0.0
    %5680 = vmatpush1.msra.mxu0 0.0
    %5681 = vmatprep.subr.mxu0 0.0
    %5682 = vmatpush1.msra.mxu0 0.0
    %5683 = vmatprep.subr.mxu0 0.0
    %5684 = vmatpush1.msra.mxu0 0.0
    %5685 = vmatprep.subr.mxu0 0.0
    %5686 = vmatpush1.msra.mxu0 0.0
    %5687 = vmatprep.subr.mxu0 0.0
    %5688 = vmatpush1.msra.mxu0 0.0
    %5689 = vmatprep.subr.mxu0 0.0
    %5690 = vmatpush1.msra.mxu0 0.0
    %5691 = vmatprep.subr.mxu0 0.0
    %5692 = vmatpush1.msra.mxu0 0.0
    %5693 = vmatprep.mubr.f32.mxu0 0.0
    %5694 = vmatmul.mubr.f32.gmra.mrb[0].mxu0 %v5624
    %v5695 = vpop.f32.mrb[0].mxu0
    %v5696 = vadd.f32 0.0, %v5695
    %v5697 = vpop.f32.mrb[0].mxu0
    %v5698 = vadd.f32 0.0, %v5697
    %5699 = vmatprep.mubr.f32.mxu0 0.0
    %5700 = vmatmul.mubr.f32.gmra.mrb[0].mxu0 %v5627
    %v5701 = vpop.f32.mrb[0].mxu0
    %v5702 = vadd.f32 0.0, %v5701
    %v5703 = vpop.f32.mrb[0].mxu0
    %v5704 = vadd.f32 0.0, %v5703
    %5705 = vdwg.mxu0
    %v5706 = vpack.c.bf16 %v5702, %v5696
    %v5707 = vpack.c.bf16 %v5704, %v5698
    %s5708 = scalar_lea.vmem [#allocation23], 256
    %v5709 = vld [vmem:[%s5708] sm:$0xff]
    %v5710 = vld [vmem:[%s5708 + $0x8] sm:$0xff]
    %v5711 = vld [vmem:[%s5708 + $0x10] sm:$0xff]
    %v5712 = vld [vmem:[%s5708 + $0x18] sm:$0xff]
    %v5713 = vld [vmem:[%s5708 + $0x20] sm:$0xff]
    %v5714 = vld [vmem:[%s5708 + $0x28] sm:$0xff]
    %v5715 = vld [vmem:[%s5708 + $0x30] sm:$0xff]
    %v5716 = vld [vmem:[%s5708 + $0x38] sm:$0xff]
    %v5717 = vld [vmem:[%s5708 + $0x40] sm:$0xff]
    %v5718 = vld [vmem:[%s5708 + $0x48] sm:$0xff]
    %v5719 = vld [vmem:[%s5708 + $0x50] sm:$0xff]
    %v5720 = vld [vmem:[%s5708 + $0x58] sm:$0xff]
    %v5721 = vld [vmem:[%s5708 + $0x60] sm:$0xff]
    %v5722 = vld [vmem:[%s5708 + $0x68] sm:$0xff]
    %v5723 = vld [vmem:[%s5708 + $0x70] sm:$0xff]
    %v5724 = vld [vmem:[%s5708 + $0x78] sm:$0xff]
    %v5725 = vld [vmem:[%s5708 + $0x80] sm:$0xff]
    %v5726 = vld [vmem:[%s5708 + $0x88] sm:$0xff]
    %v5727 = vld [vmem:[%s5708 + $0x90] sm:$0xff]
    %v5728 = vld [vmem:[%s5708 + $0x98] sm:$0xff]
    %v5729 = vld [vmem:[%s5708 + $0xa0] sm:$0xff]
    %v5730 = vld [vmem:[%s5708 + $0xa8] sm:$0xff]
    %v5731 = vld [vmem:[%s5708 + $0xb0] sm:$0xff]
    %v5732 = vld [vmem:[%s5708 + $0xb8] sm:$0xff]
    %v5733 = vld [vmem:[%s5708 + $0xc0] sm:$0xff]
    %v5734 = vld [vmem:[%s5708 + $0xc8] sm:$0xff]
    %v5735 = vld [vmem:[%s5708 + $0xd0] sm:$0xff]
    %v5736 = vld [vmem:[%s5708 + $0xd8] sm:$0xff]
    %v5737 = vld [vmem:[%s5708 + $0xe0] sm:$0xff]
    %v5738 = vld [vmem:[%s5708 + $0xe8] sm:$0xff]
    %v5739 = vld [vmem:[%s5708 + $0xf0] sm:$0xff]
    %v5740 = vld [vmem:[%s5708 + $0xf8] sm:$0xff]
    %v5773 = vunpack.c.l.b16 %v5709
    %v5774 = vunpack.c.h.b16 %v5709
    %v5775 = vunpack.c.l.b16 %v5710
    %v5776 = vunpack.c.h.b16 %v5710
    %v5777 = vunpack.c.l.b16 %v5711
    %v5778 = vunpack.c.h.b16 %v5711
    %v5779 = vunpack.c.l.b16 %v5712
    %v5780 = vunpack.c.h.b16 %v5712
    %v5781 = vunpack.c.l.b16 %v5713
    %v5782 = vunpack.c.h.b16 %v5713
    %v5783 = vunpack.c.l.b16 %v5714
    %v5784 = vunpack.c.h.b16 %v5714
    %v5785 = vunpack.c.l.b16 %v5715
    %v5786 = vunpack.c.h.b16 %v5715
    %v5787 = vunpack.c.l.b16 %v5716
    %v5788 = vunpack.c.h.b16 %v5716
    %v5789 = vunpack.c.l.b16 %v5717
    %v5790 = vunpack.c.h.b16 %v5717
    %v5791 = vunpack.c.l.b16 %v5718
    %v5792 = vunpack.c.h.b16 %v5718
    %v5793 = vunpack.c.l.b16 %v5719
    %v5794 = vunpack.c.h.b16 %v5719
    %v5795 = vunpack.c.l.b16 %v5720
    %v5796 = vunpack.c.h.b16 %v5720
    %v5797 = vunpack.c.l.b16 %v5721
    %v5798 = vunpack.c.h.b16 %v5721
    %v5799 = vunpack.c.l.b16 %v5722
    %v5800 = vunpack.c.h.b16 %v5722
    %v5801 = vunpack.c.l.b16 %v5723
    %v5802 = vunpack.c.h.b16 %v5723
    %v5803 = vunpack.c.l.b16 %v5724
    %v5804 = vunpack.c.h.b16 %v5724
    %v5805 = vunpack.c.l.b16 %v5725
    %v5806 = vunpack.c.h.b16 %v5725
    %v5807 = vunpack.c.l.b16 %v5726
    %v5808 = vunpack.c.h.b16 %v5726
    %v5809 = vunpack.c.l.b16 %v5727
    %v5810 = vunpack.c.h.b16 %v5727
    %v5811 = vunpack.c.l.b16 %v5728
    %v5812 = vunpack.c.h.b16 %v5728
    %v5813 = vunpack.c.l.b16 %v5729
    %v5814 = vunpack.c.h.b16 %v5729
    %v5815 = vunpack.c.l.b16 %v5730
    %v5816 = vunpack.c.h.b16 %v5730
    %v5817 = vunpack.c.l.b16 %v5731
    %v5818 = vunpack.c.h.b16 %v5731
    %v5819 = vunpack.c.l.b16 %v5732
    %v5820 = vunpack.c.h.b16 %v5732
    %v5821 = vunpack.c.l.b16 %v5733
    %v5822 = vunpack.c.h.b16 %v5733
    %v5823 = vunpack.c.l.b16 %v5734
    %v5824 = vunpack.c.h.b16 %v5734
    %v5825 = vunpack.c.l.b16 %v5735
    %v5826 = vunpack.c.h.b16 %v5735
    %v5827 = vunpack.c.l.b16 %v5736
    %v5828 = vunpack.c.h.b16 %v5736
    %v5829 = vunpack.c.l.b16 %v5737
    %v5830 = vunpack.c.h.b16 %v5737
    %v5831 = vunpack.c.l.b16 %v5738
    %v5832 = vunpack.c.h.b16 %v5738
    %v5833 = vunpack.c.l.b16 %v5739
    %v5834 = vunpack.c.h.b16 %v5739
    %v5835 = vunpack.c.l.b16 %v5740
    %v5836 = vunpack.c.h.b16 %v5740
    %v5837 = vpack.c.b16 %v5775, %v5773
    %v5838 = vpack.c.b16 %v5776, %v5774
    %v5839 = vpack.c.b16 %v5779, %v5777
    %v5840 = vpack.c.b16 %v5780, %v5778
    %v5841 = vpack.c.b16 %v5783, %v5781
    %v5842 = vpack.c.b16 %v5784, %v5782
    %v5843 = vpack.c.b16 %v5787, %v5785
    %v5844 = vpack.c.b16 %v5788, %v5786
    %v5845 = vpack.c.b16 %v5791, %v5789
    %v5846 = vpack.c.b16 %v5792, %v5790
    %v5847 = vpack.c.b16 %v5795, %v5793
    %v5848 = vpack.c.b16 %v5796, %v5794
    %v5849 = vpack.c.b16 %v5799, %v5797
    %v5850 = vpack.c.b16 %v5800, %v5798
    %v5851 = vpack.c.b16 %v5803, %v5801
    %v5852 = vpack.c.b16 %v5804, %v5802
    %v5853 = vpack.c.b16 %v5807, %v5805
    %v5854 = vpack.c.b16 %v5808, %v5806
    %v5855 = vpack.c.b16 %v5811, %v5809
    %v5856 = vpack.c.b16 %v5812, %v5810
    %v5857 = vpack.c.b16 %v5815, %v5813
    %v5858 = vpack.c.b16 %v5816, %v5814
    %v5859 = vpack.c.b16 %v5819, %v5817
    %v5860 = vpack.c.b16 %v5820, %v5818
    %v5861 = vpack.c.b16 %v5823, %v5821
    %v5862 = vpack.c.b16 %v5824, %v5822
    %v5863 = vpack.c.b16 %v5827, %v5825
    %v5864 = vpack.c.b16 %v5828, %v5826
    %v5865 = vpack.c.b16 %v5831, %v5829
    %v5866 = vpack.c.b16 %v5832, %v5830
    %v5867 = vpack.c.b16 %v5835, %v5833
    %v5868 = vpack.c.b16 %v5836, %v5834
    %5901 = vmatprep.subr.bf16.mxu0 %v5838
    %5902 = vmatpush1.bf16.msra.mxu0 %v5837
    %5903 = vmatprep.subr.bf16.mxu0 %v5840
    %5904 = vmatpush1.bf16.msra.mxu0 %v5839
    %5905 = vmatprep.subr.bf16.mxu0 %v5842
    %5906 = vmatpush1.bf16.msra.mxu0 %v5841
    %5907 = vmatprep.subr.bf16.mxu0 %v5844
    %5908 = vmatpush1.bf16.msra.mxu0 %v5843
    %5909 = vmatprep.subr.bf16.mxu0 %v5846
    %5910 = vmatpush1.bf16.msra.mxu0 %v5845
    %5911 = vmatprep.subr.bf16.mxu0 %v5848
    %5912 = vmatpush1.bf16.msra.mxu0 %v5847
    %5913 = vmatprep.subr.bf16.mxu0 %v5850
    %5914 = vmatpush1.bf16.msra.mxu0 %v5849
    %5915 = vmatprep.subr.bf16.mxu0 %v5852
    %5916 = vmatpush1.bf16.msra.mxu0 %v5851
    %5917 = vmatprep.subr.bf16.mxu0 %v5854
    %5918 = vmatpush1.bf16.msra.mxu0 %v5853
    %5919 = vmatprep.subr.bf16.mxu0 %v5856
    %5920 = vmatpush1.bf16.msra.mxu0 %v5855
    %5921 = vmatprep.subr.bf16.mxu0 %v5858
    %5922 = vmatpush1.bf16.msra.mxu0 %v5857
    %5923 = vmatprep.subr.bf16.mxu0 %v5860
    %5924 = vmatpush1.bf16.msra.mxu0 %v5859
    %5925 = vmatprep.subr.bf16.mxu0 %v5862
    %5926 = vmatpush1.bf16.msra.mxu0 %v5861
    %5927 = vmatprep.subr.bf16.mxu0 %v5864
    %5928 = vmatpush1.bf16.msra.mxu0 %v5863
    %5929 = vmatprep.subr.bf16.mxu0 %v5866
    %5930 = vmatpush1.bf16.msra.mxu0 %v5865
    %5931 = vmatprep.subr.bf16.mxu0 %v5868
    %5932 = vmatpush1.bf16.msra.mxu0 %v5867
    %5933 = vmatprep.mubr.bf16.mxu0 %v5707
    %5934 = vmatmul.mubr.bf16.gmra.mrb[0].mxu0 %v5706
    %v5935 = vpop.f32.mrb[0].mxu0
    %v5936 = vadd.f32 0.0, %v5935
    %v5937 = vpop.f32.mrb[0].mxu0
    %v5938 = vadd.f32 0.0, %v5937
    %v5939 = vpop.f32.mrb[0].mxu0
    %v5940 = vadd.f32 0.0, %v5939
    %v5941 = vpop.f32.mrb[0].mxu0
    %v5942 = vadd.f32 0.0, %v5941
    %5943 = vdwg.mxu0
    %v5976 = vunpack.c.l.b16 %v5588
    %v5977 = vunpack.c.h.b16 %v5588
    %v5978 = vunpack.c.l.b16 %v5589
    %v5979 = vunpack.c.h.b16 %v5589
    %v5980 = vunpack.c.l.b16 %v5590
    %v5981 = vunpack.c.h.b16 %v5590
    %v5982 = vunpack.c.l.b16 %v5591
    %v5983 = vunpack.c.h.b16 %v5591
    %v5984 = vunpack.c.l.b16 %v5592
    %v5985 = vunpack.c.h.b16 %v5592
    %v5986 = vunpack.c.l.b16 %v5593
    %v5987 = vunpack.c.h.b16 %v5593
    %v5988 = vunpack.c.l.b16 %v5594
    %v5989 = vunpack.c.h.b16 %v5594
    %v5990 = vunpack.c.l.b16 %v5595
    %v5991 = vunpack.c.h.b16 %v5595
    %v5992 = vunpack.c.l.b16 %v5596
    %v5993 = vunpack.c.h.b16 %v5596
    %v5994 = vunpack.c.l.b16 %v5597
    %v5995 = vunpack.c.h.b16 %v5597
    %v5996 = vunpack.c.l.b16 %v5598
    %v5997 = vunpack.c.h.b16 %v5598
    %v5998 = vunpack.c.l.b16 %v5599
    %v5999 = vunpack.c.h.b16 %v5599
    %v6000 = vunpack.c.l.b16 %v5600
    %v6001 = vunpack.c.h.b16 %v5600
    %v6002 = vunpack.c.l.b16 %v5601
    %v6003 = vunpack.c.h.b16 %v5601
    %v6004 = vunpack.c.l.b16 %v5602
    %v6005 = vunpack.c.h.b16 %v5602
    %v6006 = vunpack.c.l.b16 %v5603
    %v6007 = vunpack.c.h.b16 %v5603
    %v6008 = vunpack.c.l.b16 %v5604
    %v6009 = vunpack.c.h.b16 %v5604
    %v6010 = vunpack.c.l.b16 %v5605
    %v6011 = vunpack.c.h.b16 %v5605
    %v6012 = vunpack.c.l.b16 %v5606
    %v6013 = vunpack.c.h.b16 %v5606
    %v6014 = vunpack.c.l.b16 %v5607
    %v6015 = vunpack.c.h.b16 %v5607
    %v6016 = vunpack.c.l.b16 %v5608
    %v6017 = vunpack.c.h.b16 %v5608
    %v6018 = vunpack.c.l.b16 %v5609
    %v6019 = vunpack.c.h.b16 %v5609
    %v6020 = vunpack.c.l.b16 %v5610
    %v6021 = vunpack.c.h.b16 %v5610
    %v6022 = vunpack.c.l.b16 %v5611
    %v6023 = vunpack.c.h.b16 %v5611
    %v6024 = vunpack.c.l.b16 %v5612
    %v6025 = vunpack.c.h.b16 %v5612
    %v6026 = vunpack.c.l.b16 %v5613
    %v6027 = vunpack.c.h.b16 %v5613
    %v6028 = vunpack.c.l.b16 %v5614
    %v6029 = vunpack.c.h.b16 %v5614
    %v6030 = vunpack.c.l.b16 %v5615
    %v6031 = vunpack.c.h.b16 %v5615
    %v6032 = vunpack.c.l.b16 %v5616
    %v6033 = vunpack.c.h.b16 %v5616
    %v6034 = vunpack.c.l.b16 %v5617
    %v6035 = vunpack.c.h.b16 %v5617
    %v6036 = vunpack.c.l.b16 %v5618
    %v6037 = vunpack.c.h.b16 %v5618
    %v6038 = vunpack.c.l.b16 %v5619
    %v6039 = vunpack.c.h.b16 %v5619
    %v6040 = vpack.c.b16 %v5978, %v5976
    %v6041 = vpack.c.b16 %v5979, %v5977
    %v6042 = vpack.c.b16 %v5982, %v5980
    %v6043 = vpack.c.b16 %v5983, %v5981
    %v6044 = vpack.c.b16 %v5986, %v5984
    %v6045 = vpack.c.b16 %v5987, %v5985
    %v6046 = vpack.c.b16 %v5990, %v5988
    %v6047 = vpack.c.b16 %v5991, %v5989
    %v6048 = vpack.c.b16 %v5994, %v5992
    %v6049 = vpack.c.b16 %v5995, %v5993
    %v6050 = vpack.c.b16 %v5998, %v5996
    %v6051 = vpack.c.b16 %v5999, %v5997
    %v6052 = vpack.c.b16 %v6002, %v6000
    %v6053 = vpack.c.b16 %v6003, %v6001
    %v6054 = vpack.c.b16 %v6006, %v6004
    %v6055 = vpack.c.b16 %v6007, %v6005
    %v6056 = vpack.c.b16 %v6010, %v6008
    %v6057 = vpack.c.b16 %v6011, %v6009
    %v6058 = vpack.c.b16 %v6014, %v6012
    %v6059 = vpack.c.b16 %v6015, %v6013
    %v6060 = vpack.c.b16 %v6018, %v6016
    %v6061 = vpack.c.b16 %v6019, %v6017
    %v6062 = vpack.c.b16 %v6022, %v6020
    %v6063 = vpack.c.b16 %v6023, %v6021
    %v6064 = vpack.c.b16 %v6026, %v6024
    %v6065 = vpack.c.b16 %v6027, %v6025
    %v6066 = vpack.c.b16 %v6030, %v6028
    %v6067 = vpack.c.b16 %v6031, %v6029
    %v6068 = vpack.c.b16 %v6034, %v6032
    %v6069 = vpack.c.b16 %v6035, %v6033
    %v6070 = vpack.c.b16 %v6038, %v6036
    %v6071 = vpack.c.b16 %v6039, %v6037
    %6104 = vmatprep.subr.bf16.mxu0 %v6041
    %6105 = vmatpush1.bf16.msra.mxu0 %v6040
    %6106 = vmatprep.subr.bf16.mxu0 %v6043
    %6107 = vmatpush1.bf16.msra.mxu0 %v6042
    %6108 = vmatprep.subr.bf16.mxu0 %v6045
    %6109 = vmatpush1.bf16.msra.mxu0 %v6044
    %6110 = vmatprep.subr.bf16.mxu0 %v6047
    %6111 = vmatpush1.bf16.msra.mxu0 %v6046
    %6112 = vmatprep.subr.bf16.mxu0 %v6049
    %6113 = vmatpush1.bf16.msra.mxu0 %v6048
    %6114 = vmatprep.subr.bf16.mxu0 %v6051
    %6115 = vmatpush1.bf16.msra.mxu0 %v6050
    %6116 = vmatprep.subr.bf16.mxu0 %v6053
    %6117 = vmatpush1.bf16.msra.mxu0 %v6052
    %6118 = vmatprep.subr.bf16.mxu0 %v6055
    %6119 = vmatpush1.bf16.msra.mxu0 %v6054
    %6120 = vmatprep.subr.bf16.mxu0 %v6057
    %6121 = vmatpush1.bf16.msra.mxu0 %v6056
    %6122 = vmatprep.subr.bf16.mxu0 %v6059
    %6123 = vmatpush1.bf16.msra.mxu0 %v6058
    %6124 = vmatprep.subr.bf16.mxu0 %v6061
    %6125 = vmatpush1.bf16.msra.mxu0 %v6060
    %6126 = vmatprep.subr.bf16.mxu0 %v6063
    %6127 = vmatpush1.bf16.msra.mxu0 %v6062
    %6128 = vmatprep.subr.bf16.mxu0 %v6065
    %6129 = vmatpush1.bf16.msra.mxu0 %v6064
    %6130 = vmatprep.subr.bf16.mxu0 %v6067
    %6131 = vmatpush1.bf16.msra.mxu0 %v6066
    %6132 = vmatprep.subr.bf16.mxu0 %v6069
    %6133 = vmatpush1.bf16.msra.mxu0 %v6068
    %6134 = vmatprep.subr.bf16.mxu0 %v6071
    %6135 = vmatpush1.bf16.msra.mxu0 %v6070
    %6136 = vmatprep.mubr.bf16.mxu0 %v5587
    %6137 = vmatmul.mubr.bf16.gmra.mrb[0].mxu0 %v5586
    %v6138 = vpop.f32.mrb[0].mxu0
    %v6139 = vadd.f32 %v5936, %v6138
    %v6140 = vpop.f32.mrb[0].mxu0
    %v6141 = vadd.f32 %v5938, %v6140
    %v6142 = vpop.f32.mrb[0].mxu0
    %v6143 = vadd.f32 %v5940, %v6142
    %v6144 = vpop.f32.mrb[0].mxu0
    %v6145 = vadd.f32 %v5942, %v6144
    %6146 = vdwg.mxu0
    %s6147 = scalar_lea.vmem [#allocation25], 32
    %v6148 = vld [vmem:[%s6147] sm:$0xff]
    %v6149 = vld [vmem:[%s6147 + $0x8] sm:$0xff]
    %v6151 = vsel %vm5502, %v6148, 0
    %v6154 = vsel %vm5502, %v6149, 0
    %6156 = vmatprep.subr.mxu0 %v5497
    %6157 = vmatpush1.msra.mxu0 %v5496
    %6158 = vmatprep.subr.mxu0 %v5499
    %6159 = vmatpush1.msra.mxu0 %v5498
    %6160 = vmatprep.subr.mxu0 0.0
    %6161 = vmatpush1.msra.mxu0 0.0
    %6162 = vmatprep.subr.mxu0 0.0
    %6163 = vmatpush1.msra.mxu0 0.0
    %6164 = vmatprep.subr.mxu0 0.0
    %6165 = vmatpush1.msra.mxu0 0.0
    %6166 = vmatprep.subr.mxu0 0.0
    %6167 = vmatpush1.msra.mxu0 0.0
    %6168 = vmatprep.subr.mxu0 0.0
    %6169 = vmatpush1.msra.mxu0 0.0
    %6170 = vmatprep.subr.mxu0 0.0
    %6171 = vmatpush1.msra.mxu0 0.0
    %6172 = vmatprep.subr.mxu0 0.0
    %6173 = vmatpush1.msra.mxu0 0.0
    %6174 = vmatprep.subr.mxu0 0.0
    %6175 = vmatpush1.msra.mxu0 0.0
    %6176 = vmatprep.subr.mxu0 0.0
    %6177 = vmatpush1.msra.mxu0 0.0
    %6178 = vmatprep.subr.mxu0 0.0
    %6179 = vmatpush1.msra.mxu0 0.0
    %6180 = vmatprep.subr.mxu0 0.0
    %6181 = vmatpush1.msra.mxu0 0.0
    %6182 = vmatprep.subr.mxu0 0.0
    %6183 = vmatpush1.msra.mxu0 0.0
    %6184 = vmatprep.subr.mxu0 0.0
    %6185 = vmatpush1.msra.mxu0 0.0
    %6186 = vmatprep.subr.mxu0 0.0
    %6187 = vmatpush1.msra.mxu0 0.0
    %6188 = vmatprep.subr.mxu0 0.0
    %6189 = vmatpush1.msra.mxu0 0.0
    %6190 = vmatprep.subr.mxu0 0.0
    %6191 = vmatpush1.msra.mxu0 0.0
    %6192 = vmatprep.subr.mxu0 0.0
    %6193 = vmatpush1.msra.mxu0 0.0
    %6194 = vmatprep.subr.mxu0 0.0
    %6195 = vmatpush1.msra.mxu0 0.0
    %6196 = vmatprep.subr.mxu0 0.0
    %6197 = vmatpush1.msra.mxu0 0.0
    %6198 = vmatprep.subr.mxu0 0.0
    %6199 = vmatpush1.msra.mxu0 0.0
    %6200 = vmatprep.subr.mxu0 0.0
    %6201 = vmatpush1.msra.mxu0 0.0
    %6202 = vmatprep.subr.mxu0 0.0
    %6203 = vmatpush1.msra.mxu0 0.0
    %6204 = vmatprep.subr.mxu0 0.0
    %6205 = vmatpush1.msra.mxu0 0.0
    %6206 = vmatprep.subr.mxu0 0.0
    %6207 = vmatpush1.msra.mxu0 0.0
    %6208 = vmatprep.subr.mxu0 0.0
    %6209 = vmatpush1.msra.mxu0 0.0
    %6210 = vmatprep.subr.mxu0 0.0
    %6211 = vmatpush1.msra.mxu0 0.0
    %6212 = vmatprep.subr.mxu0 0.0
    %6213 = vmatpush1.msra.mxu0 0.0
    %6214 = vmatprep.subr.mxu0 0.0
    %6215 = vmatpush1.msra.mxu0 0.0
    %6216 = vmatprep.subr.mxu0 0.0
    %6217 = vmatpush1.msra.mxu0 0.0
    %6218 = vmatprep.subr.mxu0 0.0
    %6219 = vmatpush1.msra.mxu0 0.0
    %6220 = vmatprep.mubr.f32.mxu0 0.0
    %6221 = vmatmul.mubr.f32.gmra.mrb[0].mxu0 %v6151
    %v6222 = vpop.f32.mrb[0].mxu0
    %v6223 = vadd.f32 0.0, %v6222
    %v6224 = vpop.f32.mrb[0].mxu0
    %v6225 = vadd.f32 0.0, %v6224
    %6226 = vmatprep.mubr.f32.mxu0 0.0
    %6227 = vmatmul.mubr.f32.gmra.mrb[0].mxu0 %v6154
    %v6228 = vpop.f32.mrb[0].mxu0
    %v6229 = vadd.f32 0.0, %v6228
    %v6230 = vpop.f32.mrb[0].mxu0
    %v6231 = vadd.f32 0.0, %v6230
    %6232 = vdwg.mxu0
    %v6233 = vpack.c.bf16 %v6229, %v6223
    %v6234 = vpack.c.bf16 %v6231, %v6225
    %s6235 = scalar_lea.vmem [#allocation23], 512
    %v6236 = vld [vmem:[%s6235] sm:$0xff]
    %v6237 = vld [vmem:[%s6235 + $0x8] sm:$0xff]
    %v6238 = vld [vmem:[%s6235 + $0x10] sm:$0xff]
    %v6239 = vld [vmem:[%s6235 + $0x18] sm:$0xff]
    %v6240 = vld [vmem:[%s6235 + $0x20] sm:$0xff]
    %v6241 = vld [vmem:[%s6235 + $0x28] sm:$0xff]
    %v6242 = vld [vmem:[%s6235 + $0x30] sm:$0xff]
    %v6243 = vld [vmem:[%s6235 + $0x38] sm:$0xff]
    %v6244 = vld [vmem:[%s6235 + $0x40] sm:$0xff]
    %v6245 = vld [vmem:[%s6235 + $0x48] sm:$0xff]
    %v6246 = vld [vmem:[%s6235 + $0x50] sm:$0xff]
    %v6247 = vld [vmem:[%s6235 + $0x58] sm:$0xff]
    %v6248 = vld [vmem:[%s6235 + $0x60] sm:$0xff]
    %v6249 = vld [vmem:[%s6235 + $0x68] sm:$0xff]
    %v6250 = vld [vmem:[%s6235 + $0x70] sm:$0xff]
    %v6251 = vld [vmem:[%s6235 + $0x78] sm:$0xff]
    %v6252 = vld [vmem:[%s6235 + $0x80] sm:$0xff]
    %v6253 = vld [vmem:[%s6235 + $0x88] sm:$0xff]
    %v6254 = vld [vmem:[%s6235 + $0x90] sm:$0xff]
    %v6255 = vld [vmem:[%s6235 + $0x98] sm:$0xff]
    %v6256 = vld [vmem:[%s6235 + $0xa0] sm:$0xff]
    %v6257 = vld [vmem:[%s6235 + $0xa8] sm:$0xff]
    %v6258 = vld [vmem:[%s6235 + $0xb0] sm:$0xff]
    %v6259 = vld [vmem:[%s6235 + $0xb8] sm:$0xff]
    %v6260 = vld [vmem:[%s6235 + $0xc0] sm:$0xff]
    %v6261 = vld [vmem:[%s6235 + $0xc8] sm:$0xff]
    %v6262 = vld [vmem:[%s6235 + $0xd0] sm:$0xff]
    %v6263 = vld [vmem:[%s6235 + $0xd8] sm:$0xff]
    %v6264 = vld [vmem:[%s6235 + $0xe0] sm:$0xff]
    %v6265 = vld [vmem:[%s6235 + $0xe8] sm:$0xff]
    %v6266 = vld [vmem:[%s6235 + $0xf0] sm:$0xff]
    %v6267 = vld [vmem:[%s6235 + $0xf8] sm:$0xff]
    %v6300 = vunpack.c.l.b16 %v6236
    %v6301 = vunpack.c.h.b16 %v6236
    %v6302 = vunpack.c.l.b16 %v6237
    %v6303 = vunpack.c.h.b16 %v6237
    %v6304 = vunpack.c.l.b16 %v6238
    %v6305 = vunpack.c.h.b16 %v6238
    %v6306 = vunpack.c.l.b16 %v6239
    %v6307 = vunpack.c.h.b16 %v6239
    %v6308 = vunpack.c.l.b16 %v6240
    %v6309 = vunpack.c.h.b16 %v6240
    %v6310 = vunpack.c.l.b16 %v6241
    %v6311 = vunpack.c.h.b16 %v6241
    %v6312 = vunpack.c.l.b16 %v6242
    %v6313 = vunpack.c.h.b16 %v6242
    %v6314 = vunpack.c.l.b16 %v6243
    %v6315 = vunpack.c.h.b16 %v6243
    %v6316 = vunpack.c.l.b16 %v6244
    %v6317 = vunpack.c.h.b16 %v6244
    %v6318 = vunpack.c.l.b16 %v6245
    %v6319 = vunpack.c.h.b16 %v6245
    %v6320 = vunpack.c.l.b16 %v6246
    %v6321 = vunpack.c.h.b16 %v6246
    %v6322 = vunpack.c.l.b16 %v6247
    %v6323 = vunpack.c.h.b16 %v6247
    %v6324 = vunpack.c.l.b16 %v6248
    %v6325 = vunpack.c.h.b16 %v6248
    %v6326 = vunpack.c.l.b16 %v6249
    %v6327 = vunpack.c.h.b16 %v6249
    %v6328 = vunpack.c.l.b16 %v6250
    %v6329 = vunpack.c.h.b16 %v6250
    %v6330 = vunpack.c.l.b16 %v6251
    %v6331 = vunpack.c.h.b16 %v6251
    %v6332 = vunpack.c.l.b16 %v6252
    %v6333 = vunpack.c.h.b16 %v6252
    %v6334 = vunpack.c.l.b16 %v6253
    %v6335 = vunpack.c.h.b16 %v6253
    %v6336 = vunpack.c.l.b16 %v6254
    %v6337 = vunpack.c.h.b16 %v6254
    %v6338 = vunpack.c.l.b16 %v6255
    %v6339 = vunpack.c.h.b16 %v6255
    %v6340 = vunpack.c.l.b16 %v6256
    %v6341 = vunpack.c.h.b16 %v6256
    %v6342 = vunpack.c.l.b16 %v6257
    %v6343 = vunpack.c.h.b16 %v6257
    %v6344 = vunpack.c.l.b16 %v6258
    %v6345 = vunpack.c.h.b16 %v6258
    %v6346 = vunpack.c.l.b16 %v6259
    %v6347 = vunpack.c.h.b16 %v6259
    %v6348 = vunpack.c.l.b16 %v6260
    %v6349 = vunpack.c.h.b16 %v6260
    %v6350 = vunpack.c.l.b16 %v6261
    %v6351 = vunpack.c.h.b16 %v6261
    %v6352 = vunpack.c.l.b16 %v6262
    %v6353 = vunpack.c.h.b16 %v6262
    %v6354 = vunpack.c.l.b16 %v6263
    %v6355 = vunpack.c.h.b16 %v6263
    %v6356 = vunpack.c.l.b16 %v6264
    %v6357 = vunpack.c.h.b16 %v6264
    %v6358 = vunpack.c.l.b16 %v6265
    %v6359 = vunpack.c.h.b16 %v6265
    %v6360 = vunpack.c.l.b16 %v6266
    %v6361 = vunpack.c.h.b16 %v6266
    %v6362 = vunpack.c.l.b16 %v6267
    %v6363 = vunpack.c.h.b16 %v6267
    %v6364 = vpack.c.b16 %v6302, %v6300
    %v6365 = vpack.c.b16 %v6303, %v6301
    %v6366 = vpack.c.b16 %v6306, %v6304
    %v6367 = vpack.c.b16 %v6307, %v6305
    %v6368 = vpack.c.b16 %v6310, %v6308
    %v6369 = vpack.c.b16 %v6311, %v6309
    %v6370 = vpack.c.b16 %v6314, %v6312
    %v6371 = vpack.c.b16 %v6315, %v6313
    %v6372 = vpack.c.b16 %v6318, %v6316
    %v6373 = vpack.c.b16 %v6319, %v6317
    %v6374 = vpack.c.b16 %v6322, %v6320
    %v6375 = vpack.c.b16 %v6323, %v6321
    %v6376 = vpack.c.b16 %v6326, %v6324
    %v6377 = vpack.c.b16 %v6327, %v6325
    %v6378 = vpack.c.b16 %v6330, %v6328
    %v6379 = vpack.c.b16 %v6331, %v6329
    %v6380 = vpack.c.b16 %v6334, %v6332
    %v6381 = vpack.c.b16 %v6335, %v6333
    %v6382 = vpack.c.b16 %v6338, %v6336
    %v6383 = vpack.c.b16 %v6339, %v6337
    %v6384 = vpack.c.b16 %v6342, %v6340
    %v6385 = vpack.c.b16 %v6343, %v6341
    %v6386 = vpack.c.b16 %v6346, %v6344
    %v6387 = vpack.c.b16 %v6347, %v6345
    %v6388 = vpack.c.b16 %v6350, %v6348
    %v6389 = vpack.c.b16 %v6351, %v6349
    %v6390 = vpack.c.b16 %v6354, %v6352
    %v6391 = vpack.c.b16 %v6355, %v6353
    %v6392 = vpack.c.b16 %v6358, %v6356
    %v6393 = vpack.c.b16 %v6359, %v6357
    %v6394 = vpack.c.b16 %v6362, %v6360
    %v6395 = vpack.c.b16 %v6363, %v6361
    %6428 = vmatprep.subr.bf16.mxu0 %v6365
    %6429 = vmatpush1.bf16.msra.mxu0 %v6364
    %6430 = vmatprep.subr.bf16.mxu0 %v6367
    %6431 = vmatpush1.bf16.msra.mxu0 %v6366
    %6432 = vmatprep.subr.bf16.mxu0 %v6369
    %6433 = vmatpush1.bf16.msra.mxu0 %v6368
    %6434 = vmatprep.subr.bf16.mxu0 %v6371
    %6435 = vmatpush1.bf16.msra.mxu0 %v6370
    %6436 = vmatprep.subr.bf16.mxu0 %v6373
    %6437 = vmatpush1.bf16.msra.mxu0 %v6372
    %6438 = vmatprep.subr.bf16.mxu0 %v6375
    %6439 = vmatpush1.bf16.msra.mxu0 %v6374
    %6440 = vmatprep.subr.bf16.mxu0 %v6377
    %6441 = vmatpush1.bf16.msra.mxu0 %v6376
    %6442 = vmatprep.subr.bf16.mxu0 %v6379
    %6443 = vmatpush1.bf16.msra.mxu0 %v6378
    %6444 = vmatprep.subr.bf16.mxu0 %v6381
    %6445 = vmatpush1.bf16.msra.mxu0 %v6380
    %6446 = vmatprep.subr.bf16.mxu0 %v6383
    %6447 = vmatpush1.bf16.msra.mxu0 %v6382
    %6448 = vmatprep.subr.bf16.mxu0 %v6385
    %6449 = vmatpush1.bf16.msra.mxu0 %v6384
    %6450 = vmatprep.subr.bf16.mxu0 %v6387
    %6451 = vmatpush1.bf16.msra.mxu0 %v6386
    %6452 = vmatprep.subr.bf16.mxu0 %v6389
    %6453 = vmatpush1.bf16.msra.mxu0 %v6388
    %6454 = vmatprep.subr.bf16.mxu0 %v6391
    %6455 = vmatpush1.bf16.msra.mxu0 %v6390
    %6456 = vmatprep.subr.bf16.mxu0 %v6393
    %6457 = vmatpush1.bf16.msra.mxu0 %v6392
    %6458 = vmatprep.subr.bf16.mxu0 %v6395
    %6459 = vmatpush1.bf16.msra.mxu0 %v6394
    %6460 = vmatprep.mubr.bf16.mxu0 %v6234
    %6461 = vmatmul.mubr.bf16.gmra.mrb[0].mxu0 %v6233
    %v6462 = vpop.f32.mrb[0].mxu0
    %v6463 = vadd.f32 0.0, %v6462
    %v6464 = vpop.f32.mrb[0].mxu0
    %v6465 = vadd.f32 0.0, %v6464
    %v6466 = vpop.f32.mrb[0].mxu0
    %v6467 = vadd.f32 0.0, %v6466
    %v6468 = vpop.f32.mrb[0].mxu0
    %v6469 = vadd.f32 0.0, %v6468
    %6470 = vdwg.mxu0
    %v6471 = vadd.f32 %v6139, %v6463
    %v6472 = vadd.f32 %v6141, %v6465
    %v6473 = vadd.f32 %v6143, %v6467
    %v6474 = vadd.f32 %v6145, %v6469
    %v6475 = vadd.f32 %v6471, %v6473
    %v6476 = vrot.slane %v6475, 4
    %v6477 = vadd.f32 %v6475, %v6476
    %v6478 = vrot.slane %v6477, 2
    %v6479 = vadd.f32 %v6477, %v6478
    %v6480 = vrot.slane %v6479, 1
    %v6481 = vadd.f32 %v6479, %v6480
    %v6482 = vadd.f32 %v6472, %v6474
    %v6483 = vrot.slane %v6482, 4
    %v6484 = vadd.f32 %v6482, %v6483
    %v6485 = vrot.slane %v6484, 2
    %v6486 = vadd.f32 %v6484, %v6485
    %v6487 = vrot.slane %v6486, 1
    %v6488 = vadd.f32 %v6486, %v6487
    %6489 = vmatprep.subr.mxu0 %v5203
    %6490 = vmatpush1.msra.mxu0 %v5202
    %6491 = vmatprep.subr.mxu0 %v5205
    %6492 = vmatpush1.msra.mxu0 %v5204
    %6493 = vmatprep.subr.mxu0 %v5207
    %6494 = vmatpush1.msra.mxu0 %v5206
    %6495 = vmatprep.subr.mxu0 %v5209
    %6496 = vmatpush1.msra.mxu0 %v5208
    %6497 = vmatprep.subr.mxu0 %v5211
    %6498 = vmatpush1.msra.mxu0 %v5210
    %6499 = vmatprep.subr.mxu0 %v5213
    %6500 = vmatpush1.msra.mxu0 %v5212
    %6501 = vmatprep.subr.mxu0 %v5215
    %6502 = vmatpush1.msra.mxu0 %v5214
    %6503 = vmatprep.subr.mxu0 %v5217
    %6504 = vmatpush1.msra.mxu0 %v5216
    %6505 = vmatprep.subr.mxu0 %v5219
    %6506 = vmatpush1.msra.mxu0 %v5218
    %6507 = vmatprep.subr.mxu0 %v5221
    %6508 = vmatpush1.msra.mxu0 %v5220
    %6509 = vmatprep.subr.mxu0 %v5223
    %6510 = vmatpush1.msra.mxu0 %v5222
    %6511 = vmatprep.subr.mxu0 %v5225
    %6512 = vmatpush1.msra.mxu0 %v5224
    %6513 = vmatprep.subr.mxu0 %v5227
    %6514 = vmatpush1.msra.mxu0 %v5226
    %6515 = vmatprep.subr.mxu0 %v5229
    %6516 = vmatpush1.msra.mxu0 %v5228
    %6517 = vmatprep.subr.mxu0 %v5231
    %6518 = vmatpush1.msra.mxu0 %v5230
    %6519 = vmatprep.subr.mxu0 %v5233
    %6520 = vmatpush1.msra.mxu0 %v5232
    %6521 = vmatprep.subr.mxu0 %v5235
    %6522 = vmatpush1.msra.mxu0 %v5234
    %6523 = vmatprep.subr.mxu0 %v5237
    %6524 = vmatpush1.msra.mxu0 %v5236
    %6525 = vmatprep.subr.mxu0 %v5239
    %6526 = vmatpush1.msra.mxu0 %v5238
    %6527 = vmatprep.subr.mxu0 %v5241
    %6528 = vmatpush1.msra.mxu0 %v5240
    %6529 = vmatprep.subr.mxu0 %v5243
    %6530 = vmatpush1.msra.mxu0 %v5242
    %6531 = vmatprep.subr.mxu0 %v5245
    %6532 = vmatpush1.msra.mxu0 %v5244
    %6533 = vmatprep.subr.mxu0 %v5247
    %6534 = vmatpush1.msra.mxu0 %v5246
    %6535 = vmatprep.subr.mxu0 %v5249
    %6536 = vmatpush1.msra.mxu0 %v5248
    %6537 = vmatprep.subr.mxu0 %v5251
    %6538 = vmatpush1.msra.mxu0 %v5250
    %6539 = vmatprep.subr.mxu0 %v5253
    %6540 = vmatpush1.msra.mxu0 %v5252
    %6541 = vmatprep.subr.mxu0 %v5255
    %6542 = vmatpush1.msra.mxu0 %v5254
    %6543 = vmatprep.subr.mxu0 %v5257
    %6544 = vmatpush1.msra.mxu0 %v5256
    %6545 = vmatprep.subr.mxu0 %v5259
    %6546 = vmatpush1.msra.mxu0 %v5258
    %6547 = vmatprep.subr.mxu0 %v5261
    %6548 = vmatpush1.msra.mxu0 %v5260
    %6549 = vmatprep.subr.mxu0 %v5263
    %6550 = vmatpush1.msra.mxu0 %v5262
    %6551 = vmatprep.subr.mxu0 %v5265
    %6552 = vmatpush1.msra.mxu0 %v5264
    %6553 = vmatprep.mubr.f32.mxu0 %v6488
    %6554 = vmatmul.mubr.f32.gmra.mrb[0].mxu0 %v6481
    %v6555 = vpop.f32.mrb[0].mxu0
    %v6556 = vadd.f32 0.0, %v6555
    %v6557 = vpop.f32.mrb[0].mxu0
    %v6558 = vadd.f32 0.0, %v6557
    %6559 = vdwg.mxu0
    %v6560 = vlaneseq
    %v6561 = vshrl.u32 %v6560, 7
    %v6562 = vsub.s32 0, %v6561
    %v6563 = vrot.slane %v6556, %v6562
    %v6564 = vlaneseq
    %v6565 = vshrl.u32 %v6564, 7
    %v6566 = vsub.s32 0, %v6565
    %v6567 = vrot.slane %v6558, %v6566
    %v6568 = vsub.f32 %v6471, %v6563
    %v6569 = vsub.f32 %v6472, %v6567
    %v6570 = vsub.f32 %v6473, %v6563
    %v6571 = vsub.f32 %v6474, %v6567
    %v6572 = vmul.f32 %v6568, %v6568
    %v6573 = vmul.f32 %v6569, %v6569
    %v6574 = vmul.f32 %v6570, %v6570
    %v6575 = vmul.f32 %v6571, %v6571
    %v6576 = vadd.f32 %v6572, %v6574
    %v6577 = vrot.slane %v6576, 4
    %v6578 = vadd.f32 %v6576, %v6577
    %v6579 = vrot.slane %v6578, 2
    %v6580 = vadd.f32 %v6578, %v6579
    %v6581 = vrot.slane %v6580, 1
    %v6582 = vadd.f32 %v6580, %v6581
    %v6583 = vadd.f32 %v6573, %v6575
    %v6584 = vrot.slane %v6583, 4
    %v6585 = vadd.f32 %v6583, %v6584
    %v6586 = vrot.slane %v6585, 2
    %v6587 = vadd.f32 %v6585, %v6586
    %v6588 = vrot.slane %v6587, 1
    %v6589 = vadd.f32 %v6587, %v6588
    %6590 = vmatprep.subr.mxu0 %v5203
    %6591 = vmatpush1.msra.mxu0 %v5202
    %6592 = vmatprep.subr.mxu0 %v5205
    %6593 = vmatpush1.msra.mxu0 %v5204
    %6594 = vmatprep.subr.mxu0 %v5207
    %6595 = vmatpush1.msra.mxu0 %v5206
    %6596 = vmatprep.subr.mxu0 %v5209
    %6597 = vmatpush1.msra.mxu0 %v5208
    %6598 = vmatprep.subr.mxu0 %v5211
    %6599 = vmatpush1.msra.mxu0 %v5210
    %6600 = vmatprep.subr.mxu0 %v5213
    %6601 = vmatpush1.msra.mxu0 %v5212
    %6602 = vmatprep.subr.mxu0 %v5215
    %6603 = vmatpush1.msra.mxu0 %v5214
    %6604 = vmatprep.subr.mxu0 %v5217
    %6605 = vmatpush1.msra.mxu0 %v5216
    %6606 = vmatprep.subr.mxu0 %v5219
    %6607 = vmatpush1.msra.mxu0 %v5218
    %6608 = vmatprep.subr.mxu0 %v5221
    %6609 = vmatpush1.msra.mxu0 %v5220
    %6610 = vmatprep.subr.mxu0 %v5223
    %6611 = vmatpush1.msra.mxu0 %v5222
    %6612 = vmatprep.subr.mxu0 %v5225
    %6613 = vmatpush1.msra.mxu0 %v5224
    %6614 = vmatprep.subr.mxu0 %v5227
    %6615 = vmatpush1.msra.mxu0 %v5226
    %6616 = vmatprep.subr.mxu0 %v5229
    %6617 = vmatpush1.msra.mxu0 %v5228
    %6618 = vmatprep.subr.mxu0 %v5231
    %6619 = vmatpush1.msra.mxu0 %v5230
    %6620 = vmatprep.subr.mxu0 %v5233
    %6621 = vmatpush1.msra.mxu0 %v5232
    %6622 = vmatprep.subr.mxu0 %v5235
    %6623 = vmatpush1.msra.mxu0 %v5234
    %6624 = vmatprep.subr.mxu0 %v5237
    %6625 = vmatpush1.msra.mxu0 %v5236
    %6626 = vmatprep.subr.mxu0 %v5239
    %6627 = vmatpush1.msra.mxu0 %v5238
    %6628 = vmatprep.subr.mxu0 %v5241
    %6629 = vmatpush1.msra.mxu0 %v5240
    %6630 = vmatprep.subr.mxu0 %v5243
    %6631 = vmatpush1.msra.mxu0 %v5242
    %6632 = vmatprep.subr.mxu0 %v5245
    %6633 = vmatpush1.msra.mxu0 %v5244
    %6634 = vmatprep.subr.mxu0 %v5247
    %6635 = vmatpush1.msra.mxu0 %v5246
    %6636 = vmatprep.subr.mxu0 %v5249
    %6637 = vmatpush1.msra.mxu0 %v5248
    %6638 = vmatprep.subr.mxu0 %v5251
    %6639 = vmatpush1.msra.mxu0 %v5250
    %6640 = vmatprep.subr.mxu0 %v5253
    %6641 = vmatpush1.msra.mxu0 %v5252
    %6642 = vmatprep.subr.mxu0 %v5255
    %6643 = vmatpush1.msra.mxu0 %v5254
    %6644 = vmatprep.subr.mxu0 %v5257
    %6645 = vmatpush1.msra.mxu0 %v5256
    %6646 = vmatprep.subr.mxu0 %v5259
    %6647 = vmatpush1.msra.mxu0 %v5258
    %6648 = vmatprep.subr.mxu0 %v5261
    %6649 = vmatpush1.msra.mxu0 %v5260
    %6650 = vmatprep.subr.mxu0 %v5263
    %6651 = vmatpush1.msra.mxu0 %v5262
    %6652 = vmatprep.subr.mxu0 %v5265
    %6653 = vmatpush1.msra.mxu0 %v5264
    %6654 = vmatprep.mubr.f32.mxu0 %v6589
    %6655 = vmatmul.mubr.f32.gmra.mrb[0].mxu0 %v6582
    %v6656 = vpop.f32.mrb[0].mxu0
    %v6657 = vadd.f32 1e-05, %v6656
    %v6658 = vpop.f32.mrb[0].mxu0
    %v6659 = vadd.f32 1e-05, %v6658
    %6660 = vdwg.mxu0
    %v6661 = vrsqrt.pop %v6657
    %v6662 = vrsqrt.pop %v6659
    %v6663 = vld [vmem:[#allocation19] sm:$0x3]
    %v6665 = vlaneseq
    %v6666 = vshrl.u32 %v6665, 7
    %v6667 = vsub.s32 0, %v6666
    %v6668 = vrot.slane %v6663, %v6667
    %v6669 = vlaneseq
    %v6670 = vshrl.u32 %v6669, 7
    %v6671 = vsub.s32 1, %v6670
    %v6672 = vrot.slane %v6663, %v6671
    %v6675 = vmul.f32 %v6661, %v6668
    %v6676 = vmul.f32 %v6662, %v6672
    %v6677 = vlaneseq
    %v6678 = vshrl.u32 %v6677, 7
    %v6679 = vsub.s32 0, %v6678
    %v6680 = vrot.slane %v6675, %v6679
    %v6681 = vlaneseq
    %v6682 = vshrl.u32 %v6681, 7
    %v6683 = vsub.s32 0, %v6682
    %v6684 = vrot.slane %v6676, %v6683
    %v6685 = vmul.f32 %v6568, %v6680
    %v6686 = vmul.f32 %v6569, %v6684
    %v6687 = vmul.f32 %v6570, %v6680
    %v6688 = vmul.f32 %v6571, %v6684
    %v6689 = vld [vmem:[#allocation17] sm:$0x3]
    %v6691 = vlaneseq
    %v6692 = vshrl.u32 %v6691, 7
    %v6693 = vsub.s32 0, %v6692
    %v6694 = vrot.slane %v6689, %v6693
    %v6695 = vlaneseq
    %v6696 = vshrl.u32 %v6695, 7
    %v6697 = vsub.s32 1, %v6696
    %v6698 = vrot.slane %v6689, %v6697
    %v6701 = vadd.f32 %v6685, %v6694
    %v6702 = vadd.f32 %v6686, %v6698
    %v6703 = vadd.f32 %v6687, %v6694
    %v6704 = vadd.f32 %v6688, %v6698
    %v6705 = vld [vmem:[#allocation28] sm:$0xff]
    %v6706 = vld [vmem:[#allocation28 + $0x8] sm:$0xff]
    %v6708 = vsel %vm618, %v6705, 0
    %v6711 = vsel %vm618, %v6706, 0
    %6713 = vmatprep.subr.mxu0 %v4221
    %6714 = vmatpush1.msra.mxu0 %v4220
    %6715 = vmatprep.subr.mxu0 %v4223
    %6716 = vmatpush1.msra.mxu0 %v4222
    %6717 = vmatprep.subr.mxu0 %v4225
    %6718 = vmatpush1.msra.mxu0 %v4224
    %6719 = vmatprep.subr.mxu0 %v4227
    %6720 = vmatpush1.msra.mxu0 %v4226
    %6721 = vmatprep.subr.mxu0 0.0
    %6722 = vmatpush1.msra.mxu0 0.0
    %6723 = vmatprep.subr.mxu0 0.0
    %6724 = vmatpush1.msra.mxu0 0.0
    %6725 = vmatprep.subr.mxu0 0.0
    %6726 = vmatpush1.msra.mxu0 0.0
    %6727 = vmatprep.subr.mxu0 0.0
    %6728 = vmatpush1.msra.mxu0 0.0
    %6729 = vmatprep.subr.mxu0 0.0
    %6730 = vmatpush1.msra.mxu0 0.0
    %6731 = vmatprep.subr.mxu0 0.0
    %6732 = vmatpush1.msra.mxu0 0.0
    %6733 = vmatprep.subr.mxu0 0.0
    %6734 = vmatpush1.msra.mxu0 0.0
    %6735 = vmatprep.subr.mxu0 0.0
    %6736 = vmatpush1.msra.mxu0 0.0
    %6737 = vmatprep.subr.mxu0 0.0
    %6738 = vmatpush1.msra.mxu0 0.0
    %6739 = vmatprep.subr.mxu0 0.0
    %6740 = vmatpush1.msra.mxu0 0.0
    %6741 = vmatprep.subr.mxu0 0.0
    %6742 = vmatpush1.msra.mxu0 0.0
    %6743 = vmatprep.subr.mxu0 0.0
    %6744 = vmatpush1.msra.mxu0 0.0
    %6745 = vmatprep.subr.mxu0 0.0
    %6746 = vmatpush1.msra.mxu0 0.0
    %6747 = vmatprep.subr.mxu0 0.0
    %6748 = vmatpush1.msra.mxu0 0.0
    %6749 = vmatprep.subr.mxu0 0.0
    %6750 = vmatpush1.msra.mxu0 0.0
    %6751 = vmatprep.subr.mxu0 0.0
    %6752 = vmatpush1.msra.mxu0 0.0
    %6753 = vmatprep.subr.mxu0 0.0
    %6754 = vmatpush1.msra.mxu0 0.0
    %6755 = vmatprep.subr.mxu0 0.0
    %6756 = vmatpush1.msra.mxu0 0.0
    %6757 = vmatprep.subr.mxu0 0.0
    %6758 = vmatpush1.msra.mxu0 0.0
    %6759 = vmatprep.subr.mxu0 0.0
    %6760 = vmatpush1.msra.mxu0 0.0
    %6761 = vmatprep.subr.mxu0 0.0
    %6762 = vmatpush1.msra.mxu0 0.0
    %6763 = vmatprep.subr.mxu0 0.0
    %6764 = vmatpush1.msra.mxu0 0.0
    %6765 = vmatprep.subr.mxu0 0.0
    %6766 = vmatpush1.msra.mxu0 0.0
    %6767 = vmatprep.subr.mxu0 0.0
    %6768 = vmatpush1.msra.mxu0 0.0
    %6769 = vmatprep.subr.mxu0 0.0
    %6770 = vmatpush1.msra.mxu0 0.0
    %6771 = vmatprep.subr.mxu0 0.0
    %6772 = vmatpush1.msra.mxu0 0.0
    %6773 = vmatprep.subr.mxu0 0.0
    %6774 = vmatpush1.msra.mxu0 0.0
    %6775 = vmatprep.subr.mxu0 0.0
    %6776 = vmatpush1.msra.mxu0 0.0
    %6777 = vmatprep.mubr.f32.mxu0 0.0
    %6778 = vmatmul.mubr.f32.gmra.mrb[0].mxu0 %v6708
    %v6779 = vpop.f32.mrb[0].mxu0
    %v6780 = vadd.f32 0.0, %v6779
    %v6781 = vpop.f32.mrb[0].mxu0
    %v6782 = vadd.f32 0.0, %v6781
    %6783 = vmatprep.mubr.f32.mxu0 0.0
    %6784 = vmatmul.mubr.f32.gmra.mrb[0].mxu0 %v6711
    %v6785 = vpop.f32.mrb[0].mxu0
    %v6786 = vadd.f32 0.0, %v6785
    %v6787 = vpop.f32.mrb[0].mxu0
    %v6788 = vadd.f32 0.0, %v6787
    %6789 = vdwg.mxu0
    %v6790 = vpack.c.bf16 %v6786, %v6780
    %v6791 = vpack.c.bf16 %v6788, %v6782
    %v6792 = vld [vmem:[#allocation26] sm:$0xff]
    %v6793 = vld [vmem:[#allocation26 + $0x8] sm:$0xff]
    %v6794 = vld [vmem:[#allocation26 + $0x10] sm:$0xff]
    %v6795 = vld [vmem:[#allocation26 + $0x18] sm:$0xff]
    %v6796 = vld [vmem:[#allocation26 + $0x20] sm:$0xff]
    %v6797 = vld [vmem:[#allocation26 + $0x28] sm:$0xff]
    %v6798 = vld [vmem:[#allocation26 + $0x30] sm:$0xff]
    %v6799 = vld [vmem:[#allocation26 + $0x38] sm:$0xff]
    %v6800 = vld [vmem:[#allocation26 + $0x40] sm:$0xff]
    %v6801 = vld [vmem:[#allocation26 + $0x48] sm:$0xff]
    %v6802 = vld [vmem:[#allocation26 + $0x50] sm:$0xff]
    %v6803 = vld [vmem:[#allocation26 + $0x58] sm:$0xff]
    %v6804 = vld [vmem:[#allocation26 + $0x60] sm:$0xff]
    %v6805 = vld [vmem:[#allocation26 + $0x68] sm:$0xff]
    %v6806 = vld [vmem:[#allocation26 + $0x70] sm:$0xff]
    %v6807 = vld [vmem:[#allocation26 + $0x78] sm:$0xff]
    %v6808 = vld [vmem:[#allocation26 + $0x80] sm:$0xff]
    %v6809 = vld [vmem:[#allocation26 + $0x88] sm:$0xff]
    %v6810 = vld [vmem:[#allocation26 + $0x90] sm:$0xff]
    %v6811 = vld [vmem:[#allocation26 + $0x98] sm:$0xff]
    %v6812 = vld [vmem:[#allocation26 + $0xa0] sm:$0xff]
    %v6813 = vld [vmem:[#allocation26 + $0xa8] sm:$0xff]
    %v6814 = vld [vmem:[#allocation26 + $0xb0] sm:$0xff]
    %v6815 = vld [vmem:[#allocation26 + $0xb8] sm:$0xff]
    %v6816 = vld [vmem:[#allocation26 + $0xc0] sm:$0xff]
    %v6817 = vld [vmem:[#allocation26 + $0xc8] sm:$0xff]
    %v6818 = vld [vmem:[#allocation26 + $0xd0] sm:$0xff]
    %v6819 = vld [vmem:[#allocation26 + $0xd8] sm:$0xff]
    %v6820 = vld [vmem:[#allocation26 + $0xe0] sm:$0xff]
    %v6821 = vld [vmem:[#allocation26 + $0xe8] sm:$0xff]
    %v6822 = vld [vmem:[#allocation26 + $0xf0] sm:$0xff]
    %v6823 = vld [vmem:[#allocation26 + $0xf8] sm:$0xff]
    %v6856 = vunpack.c.l.b16 %v6792
    %v6857 = vunpack.c.h.b16 %v6792
    %v6858 = vunpack.c.l.b16 %v6793
    %v6859 = vunpack.c.h.b16 %v6793
    %v6860 = vunpack.c.l.b16 %v6794
    %v6861 = vunpack.c.h.b16 %v6794
    %v6862 = vunpack.c.l.b16 %v6795
    %v6863 = vunpack.c.h.b16 %v6795
    %v6864 = vunpack.c.l.b16 %v6796
    %v6865 = vunpack.c.h.b16 %v6796
    %v6866 = vunpack.c.l.b16 %v6797
    %v6867 = vunpack.c.h.b16 %v6797
    %v6868 = vunpack.c.l.b16 %v6798
    %v6869 = vunpack.c.h.b16 %v6798
    %v6870 = vunpack.c.l.b16 %v6799
    %v6871 = vunpack.c.h.b16 %v6799
    %v6872 = vunpack.c.l.b16 %v6800
    %v6873 = vunpack.c.h.b16 %v6800
    %v6874 = vunpack.c.l.b16 %v6801
    %v6875 = vunpack.c.h.b16 %v6801
    %v6876 = vunpack.c.l.b16 %v6802
    %v6877 = vunpack.c.h.b16 %v6802
    %v6878 = vunpack.c.l.b16 %v6803
    %v6879 = vunpack.c.h.b16 %v6803
    %v6880 = vunpack.c.l.b16 %v6804
    %v6881 = vunpack.c.h.b16 %v6804
    %v6882 = vunpack.c.l.b16 %v6805
    %v6883 = vunpack.c.h.b16 %v6805
    %v6884 = vunpack.c.l.b16 %v6806
    %v6885 = vunpack.c.h.b16 %v6806
    %v6886 = vunpack.c.l.b16 %v6807
    %v6887 = vunpack.c.h.b16 %v6807
    %v6888 = vunpack.c.l.b16 %v6808
    %v6889 = vunpack.c.h.b16 %v6808
    %v6890 = vunpack.c.l.b16 %v6809
    %v6891 = vunpack.c.h.b16 %v6809
    %v6892 = vunpack.c.l.b16 %v6810
    %v6893 = vunpack.c.h.b16 %v6810
    %v6894 = vunpack.c.l.b16 %v6811
    %v6895 = vunpack.c.h.b16 %v6811
    %v6896 = vunpack.c.l.b16 %v6812
    %v6897 = vunpack.c.h.b16 %v6812
    %v6898 = vunpack.c.l.b16 %v6813
    %v6899 = vunpack.c.h.b16 %v6813
    %v6900 = vunpack.c.l.b16 %v6814
    %v6901 = vunpack.c.h.b16 %v6814
    %v6902 = vunpack.c.l.b16 %v6815
    %v6903 = vunpack.c.h.b16 %v6815
    %v6904 = vunpack.c.l.b16 %v6816
    %v6905 = vunpack.c.h.b16 %v6816
    %v6906 = vunpack.c.l.b16 %v6817
    %v6907 = vunpack.c.h.b16 %v6817
    %v6908 = vunpack.c.l.b16 %v6818
    %v6909 = vunpack.c.h.b16 %v6818
    %v6910 = vunpack.c.l.b16 %v6819
    %v6911 = vunpack.c.h.b16 %v6819
    %v6912 = vunpack.c.l.b16 %v6820
    %v6913 = vunpack.c.h.b16 %v6820
    %v6914 = vunpack.c.l.b16 %v6821
    %v6915 = vunpack.c.h.b16 %v6821
    %v6916 = vunpack.c.l.b16 %v6822
    %v6917 = vunpack.c.h.b16 %v6822
    %v6918 = vunpack.c.l.b16 %v6823
    %v6919 = vunpack.c.h.b16 %v6823
    %v6920 = vpack.c.b16 %v6858, %v6856
    %v6921 = vpack.c.b16 %v6859, %v6857
    %v6922 = vpack.c.b16 %v6862, %v6860
    %v6923 = vpack.c.b16 %v6863, %v6861
    %v6924 = vpack.c.b16 %v6866, %v6864
    %v6925 = vpack.c.b16 %v6867, %v6865
    %v6926 = vpack.c.b16 %v6870, %v6868
    %v6927 = vpack.c.b16 %v6871, %v6869
    %v6928 = vpack.c.b16 %v6874, %v6872
    %v6929 = vpack.c.b16 %v6875, %v6873
    %v6930 = vpack.c.b16 %v6878, %v6876
    %v6931 = vpack.c.b16 %v6879, %v6877
    %v6932 = vpack.c.b16 %v6882, %v6880
    %v6933 = vpack.c.b16 %v6883, %v6881
    %v6934 = vpack.c.b16 %v6886, %v6884
    %v6935 = vpack.c.b16 %v6887, %v6885
    %v6936 = vpack.c.b16 %v6890, %v6888
    %v6937 = vpack.c.b16 %v6891, %v6889
    %v6938 = vpack.c.b16 %v6894, %v6892
    %v6939 = vpack.c.b16 %v6895, %v6893
    %v6940 = vpack.c.b16 %v6898, %v6896
    %v6941 = vpack.c.b16 %v6899, %v6897
    %v6942 = vpack.c.b16 %v6902, %v6900
    %v6943 = vpack.c.b16 %v6903, %v6901
    %v6944 = vpack.c.b16 %v6906, %v6904
    %v6945 = vpack.c.b16 %v6907, %v6905
    %v6946 = vpack.c.b16 %v6910, %v6908
    %v6947 = vpack.c.b16 %v6911, %v6909
    %v6948 = vpack.c.b16 %v6914, %v6912
    %v6949 = vpack.c.b16 %v6915, %v6913
    %v6950 = vpack.c.b16 %v6918, %v6916
    %v6951 = vpack.c.b16 %v6919, %v6917
    %6984 = vmatprep.subr.bf16.mxu0 %v6921
    %6985 = vmatpush1.bf16.msra.mxu0 %v6920
    %6986 = vmatprep.subr.bf16.mxu0 %v6923
    %6987 = vmatpush1.bf16.msra.mxu0 %v6922
    %6988 = vmatprep.subr.bf16.mxu0 %v6925
    %6989 = vmatpush1.bf16.msra.mxu0 %v6924
    %6990 = vmatprep.subr.bf16.mxu0 %v6927
    %6991 = vmatpush1.bf16.msra.mxu0 %v6926
    %6992 = vmatprep.subr.bf16.mxu0 %v6929
    %6993 = vmatpush1.bf16.msra.mxu0 %v6928
    %6994 = vmatprep.subr.bf16.mxu0 %v6931
    %6995 = vmatpush1.bf16.msra.mxu0 %v6930
    %6996 = vmatprep.subr.bf16.mxu0 %v6933
    %6997 = vmatpush1.bf16.msra.mxu0 %v6932
    %6998 = vmatprep.subr.bf16.mxu0 %v6935
    %6999 = vmatpush1.bf16.msra.mxu0 %v6934
    %7000 = vmatprep.subr.bf16.mxu0 %v6937
    %7001 = vmatpush1.bf16.msra.mxu0 %v6936
    %7002 = vmatprep.subr.bf16.mxu0 %v6939
    %7003 = vmatpush1.bf16.msra.mxu0 %v6938
    %7004 = vmatprep.subr.bf16.mxu0 %v6941
    %7005 = vmatpush1.bf16.msra.mxu0 %v6940
    %7006 = vmatprep.subr.bf16.mxu0 %v6943
    %7007 = vmatpush1.bf16.msra.mxu0 %v6942
    %7008 = vmatprep.subr.bf16.mxu0 %v6945
    %7009 = vmatpush1.bf16.msra.mxu0 %v6944
    %7010 = vmatprep.subr.bf16.mxu0 %v6947
    %7011 = vmatpush1.bf16.msra.mxu0 %v6946
    %7012 = vmatprep.subr.bf16.mxu0 %v6949
    %7013 = vmatpush1.bf16.msra.mxu0 %v6948
    %7014 = vmatprep.subr.bf16.mxu0 %v6951
    %7015 = vmatpush1.bf16.msra.mxu0 %v6950
    %7016 = vmatprep.mubr.bf16.mxu0 %v6791
    %7017 = vmatmul.mubr.bf16.gmra.mrb[0].mxu0 %v6790
    %v7018 = vpop.f32.mrb[0].mxu0
    %v7019 = vadd.f32 0.0, %v7018
    %v7020 = vpop.f32.mrb[0].mxu0
    %v7021 = vadd.f32 0.0, %v7020
    %v7022 = vpop.f32.mrb[0].mxu0
    %v7023 = vadd.f32 0.0, %v7022
    %v7024 = vpop.f32.mrb[0].mxu0
    %v7025 = vadd.f32 0.0, %v7024
    %7026 = vdwg.mxu0
    %v7027 = vadd.f32 %v7019, %v7023
    %v7028 = vrot.slane %v7027, 4
    %v7029 = vadd.f32 %v7027, %v7028
    %v7030 = vrot.slane %v7029, 2
    %v7031 = vadd.f32 %v7029, %v7030
    %v7032 = vrot.slane %v7031, 1
    %v7033 = vadd.f32 %v7031, %v7032
    %v7034 = vadd.f32 %v7021, %v7025
    %v7035 = vrot.slane %v7034, 4
    %v7036 = vadd.f32 %v7034, %v7035
    %v7037 = vrot.slane %v7036, 2
    %v7038 = vadd.f32 %v7036, %v7037
    %v7039 = vrot.slane %v7038, 1
    %v7040 = vadd.f32 %v7038, %v7039
    %7041 = vmatprep.subr.mxu0 %v5203
    %7042 = vmatpush1.msra.mxu0 %v5202
    %7043 = vmatprep.subr.mxu0 %v5205
    %7044 = vmatpush1.msra.mxu0 %v5204
    %7045 = vmatprep.subr.mxu0 %v5207
    %7046 = vmatpush1.msra.mxu0 %v5206
    %7047 = vmatprep.subr.mxu0 %v5209
    %7048 = vmatpush1.msra.mxu0 %v5208
    %7049 = vmatprep.subr.mxu0 %v5211
    %7050 = vmatpush1.msra.mxu0 %v5210
    %7051 = vmatprep.subr.mxu0 %v5213
    %7052 = vmatpush1.msra.mxu0 %v5212
    %7053 = vmatprep.subr.mxu0 %v5215
    %7054 = vmatpush1.msra.mxu0 %v5214
    %7055 = vmatprep.subr.mxu0 %v5217
    %7056 = vmatpush1.msra.mxu0 %v5216
    %7057 = vmatprep.subr.mxu0 %v5219
    %7058 = vmatpush1.msra.mxu0 %v5218
    %7059 = vmatprep.subr.mxu0 %v5221
    %7060 = vmatpush1.msra.mxu0 %v5220
    %7061 = vmatprep.subr.mxu0 %v5223
    %7062 = vmatpush1.msra.mxu0 %v5222
    %7063 = vmatprep.subr.mxu0 %v5225
    %7064 = vmatpush1.msra.mxu0 %v5224
    %7065 = vmatprep.subr.mxu0 %v5227
    %7066 = vmatpush1.msra.mxu0 %v5226
    %7067 = vmatprep.subr.mxu0 %v5229
    %7068 = vmatpush1.msra.mxu0 %v5228
    %7069 = vmatprep.subr.mxu0 %v5231
    %7070 = vmatpush1.msra.mxu0 %v5230
    %7071 = vmatprep.subr.mxu0 %v5233
    %7072 = vmatpush1.msra.mxu0 %v5232
    %7073 = vmatprep.subr.mxu0 %v5235
    %7074 = vmatpush1.msra.mxu0 %v5234
    %7075 = vmatprep.subr.mxu0 %v5237
    %7076 = vmatpush1.msra.mxu0 %v5236
    %7077 = vmatprep.subr.mxu0 %v5239
    %7078 = vmatpush1.msra.mxu0 %v5238
    %7079 = vmatprep.subr.mxu0 %v5241
    %7080 = vmatpush1.msra.mxu0 %v5240
    %7081 = vmatprep.subr.mxu0 %v5243
    %7082 = vmatpush1.msra.mxu0 %v5242
    %7083 = vmatprep.subr.mxu0 %v5245
    %7084 = vmatpush1.msra.mxu0 %v5244
    %7085 = vmatprep.subr.mxu0 %v5247
    %7086 = vmatpush1.msra.mxu0 %v5246
    %7087 = vmatprep.subr.mxu0 %v5249
    %7088 = vmatpush1.msra.mxu0 %v5248
    %7089 = vmatprep.subr.mxu0 %v5251
    %7090 = vmatpush1.msra.mxu0 %v5250
    %7091 = vmatprep.subr.mxu0 %v5253
    %7092 = vmatpush1.msra.mxu0 %v5252
    %7093 = vmatprep.subr.mxu0 %v5255
    %7094 = vmatpush1.msra.mxu0 %v5254
    %7095 = vmatprep.subr.mxu0 %v5257
    %7096 = vmatpush1.msra.mxu0 %v5256
    %7097 = vmatprep.subr.mxu0 %v5259
    %7098 = vmatpush1.msra.mxu0 %v5258
    %7099 = vmatprep.subr.mxu0 %v5261
    %7100 = vmatpush1.msra.mxu0 %v5260
    %7101 = vmatprep.subr.mxu0 %v5263
    %7102 = vmatpush1.msra.mxu0 %v5262
    %7103 = vmatprep.subr.mxu0 %v5265
    %7104 = vmatpush1.msra.mxu0 %v5264
    %7105 = vmatprep.mubr.f32.mxu0 %v7040
    %7106 = vmatmul.mubr.f32.gmra.mrb[0].mxu0 %v7033
    %v7107 = vpop.f32.mrb[0].mxu0
    %v7108 = vadd.f32 0.0, %v7107
    %v7109 = vpop.f32.mrb[0].mxu0
    %v7110 = vadd.f32 0.0, %v7109
    %7111 = vdwg.mxu0
    %v7112 = vlaneseq
    %v7113 = vshrl.u32 %v7112, 7
    %v7114 = vsub.s32 0, %v7113
    %v7115 = vrot.slane %v7108, %v7114
    %v7116 = vlaneseq
    %v7117 = vshrl.u32 %v7116, 7
    %v7118 = vsub.s32 0, %v7117
    %v7119 = vrot.slane %v7110, %v7118
    %v7120 = vsub.f32 %v7019, %v7115
    %v7121 = vsub.f32 %v7021, %v7119
    %v7122 = vsub.f32 %v7023, %v7115
    %v7123 = vsub.f32 %v7025, %v7119
    %v7124 = vmul.f32 %v7120, %v7120
    %v7125 = vmul.f32 %v7121, %v7121
    %v7126 = vmul.f32 %v7122, %v7122
    %v7127 = vmul.f32 %v7123, %v7123
    %v7128 = vadd.f32 %v7124, %v7126
    %v7129 = vrot.slane %v7128, 4
    %v7130 = vadd.f32 %v7128, %v7129
    %v7131 = vrot.slane %v7130, 2
    %v7132 = vadd.f32 %v7130, %v7131
    %v7133 = vrot.slane %v7132, 1
    %v7134 = vadd.f32 %v7132, %v7133
    %v7135 = vadd.f32 %v7125, %v7127
    %v7136 = vrot.slane %v7135, 4
    %v7137 = vadd.f32 %v7135, %v7136
    %v7138 = vrot.slane %v7137, 2
    %v7139 = vadd.f32 %v7137, %v7138
    %v7140 = vrot.slane %v7139, 1
    %v7141 = vadd.f32 %v7139, %v7140
    %7142 = vmatprep.subr.mxu0 %v5203
    %7143 = vmatpush1.msra.mxu0 %v5202
    %7144 = vmatprep.subr.mxu0 %v5205
    %7145 = vmatpush1.msra.mxu0 %v5204
    %7146 = vmatprep.subr.mxu0 %v5207
    %7147 = vmatpush1.msra.mxu0 %v5206
    %7148 = vmatprep.subr.mxu0 %v5209
    %7149 = vmatpush1.msra.mxu0 %v5208
    %7150 = vmatprep.subr.mxu0 %v5211
    %7151 = vmatpush1.msra.mxu0 %v5210
    %7152 = vmatprep.subr.mxu0 %v5213
    %7153 = vmatpush1.msra.mxu0 %v5212
    %7154 = vmatprep.subr.mxu0 %v5215
    %7155 = vmatpush1.msra.mxu0 %v5214
    %7156 = vmatprep.subr.mxu0 %v5217
    %7157 = vmatpush1.msra.mxu0 %v5216
    %7158 = vmatprep.subr.mxu0 %v5219
    %7159 = vmatpush1.msra.mxu0 %v5218
    %7160 = vmatprep.subr.mxu0 %v5221
    %7161 = vmatpush1.msra.mxu0 %v5220
    %7162 = vmatprep.subr.mxu0 %v5223
    %7163 = vmatpush1.msra.mxu0 %v5222
    %7164 = vmatprep.subr.mxu0 %v5225
    %7165 = vmatpush1.msra.mxu0 %v5224
    %7166 = vmatprep.subr.mxu0 %v5227
    %7167 = vmatpush1.msra.mxu0 %v5226
    %7168 = vmatprep.subr.mxu0 %v5229
    %7169 = vmatpush1.msra.mxu0 %v5228
    %7170 = vmatprep.subr.mxu0 %v5231
    %7171 = vmatpush1.msra.mxu0 %v5230
    %7172 = vmatprep.subr.mxu0 %v5233
    %7173 = vmatpush1.msra.mxu0 %v5232
    %7174 = vmatprep.subr.mxu0 %v5235
    %7175 = vmatpush1.msra.mxu0 %v5234
    %7176 = vmatprep.subr.mxu0 %v5237
    %7177 = vmatpush1.msra.mxu0 %v5236
    %7178 = vmatprep.subr.mxu0 %v5239
    %7179 = vmatpush1.msra.mxu0 %v5238
    %7180 = vmatprep.subr.mxu0 %v5241
    %7181 = vmatpush1.msra.mxu0 %v5240
    %7182 = vmatprep.subr.mxu0 %v5243
    %7183 = vmatpush1.msra.mxu0 %v5242
    %7184 = vmatprep.subr.mxu0 %v5245
    %7185 = vmatpush1.msra.mxu0 %v5244
    %7186 = vmatprep.subr.mxu0 %v5247
    %7187 = vmatpush1.msra.mxu0 %v5246
    %7188 = vmatprep.subr.mxu0 %v5249
    %7189 = vmatpush1.msra.mxu0 %v5248
    %7190 = vmatprep.subr.mxu0 %v5251
    %7191 = vmatpush1.msra.mxu0 %v5250
    %7192 = vmatprep.subr.mxu0 %v5253
    %7193 = vmatpush1.msra.mxu0 %v5252
    %7194 = vmatprep.subr.mxu0 %v5255
    %7195 = vmatpush1.msra.mxu0 %v5254
    %7196 = vmatprep.subr.mxu0 %v5257
    %7197 = vmatpush1.msra.mxu0 %v5256
    %7198 = vmatprep.subr.mxu0 %v5259
    %7199 = vmatpush1.msra.mxu0 %v5258
    %7200 = vmatprep.subr.mxu0 %v5261
    %7201 = vmatpush1.msra.mxu0 %v5260
    %7202 = vmatprep.subr.mxu0 %v5263
    %7203 = vmatpush1.msra.mxu0 %v5262
    %7204 = vmatprep.subr.mxu0 %v5265
    %7205 = vmatpush1.msra.mxu0 %v5264
    %7206 = vmatprep.mubr.f32.mxu0 %v7141
    %7207 = vmatmul.mubr.f32.gmra.mrb[0].mxu0 %v7134
    %v7208 = vpop.f32.mrb[0].mxu0
    %v7209 = vadd.f32 1e-05, %v7208
    %v7210 = vpop.f32.mrb[0].mxu0
    %v7211 = vadd.f32 1e-05, %v7210
    %7212 = vdwg.mxu0
    %v7213 = vrsqrt.pop %v7209
    %v7214 = vrsqrt.pop %v7211
    %v7215 = vld [vmem:[#allocation31] sm:$0x3]
    %v7217 = vlaneseq
    %v7218 = vshrl.u32 %v7217, 7
    %v7219 = vsub.s32 0, %v7218
    %v7220 = vrot.slane %v7215, %v7219
    %v7221 = vlaneseq
    %v7222 = vshrl.u32 %v7221, 7
    %v7223 = vsub.s32 1, %v7222
    %v7224 = vrot.slane %v7215, %v7223
    %v7227 = vmul.f32 %v7213, %v7220
    %v7228 = vmul.f32 %v7214, %v7224
    %v7229 = vlaneseq
    %v7230 = vshrl.u32 %v7229, 7
    %v7231 = vsub.s32 0, %v7230
    %v7232 = vrot.slane %v7227, %v7231
    %v7233 = vlaneseq
    %v7234 = vshrl.u32 %v7233, 7
    %v7235 = vsub.s32 0, %v7234
    %v7236 = vrot.slane %v7228, %v7235
    %v7237 = vmul.f32 %v7120, %v7232
    %v7238 = vmul.f32 %v7121, %v7236
    %v7239 = vmul.f32 %v7122, %v7232
    %v7240 = vmul.f32 %v7123, %v7236
    %v7241 = vld [vmem:[#allocation29] sm:$0x3]
    %v7243 = vlaneseq
    %v7244 = vshrl.u32 %v7243, 7
    %v7245 = vsub.s32 0, %v7244
    %v7246 = vrot.slane %v7241, %v7245
    %v7247 = vlaneseq
    %v7248 = vshrl.u32 %v7247, 7
    %v7249 = vsub.s32 1, %v7248
    %v7250 = vrot.slane %v7241, %v7249
    %v7253 = vadd.f32 %v7237, %v7246
    %v7254 = vadd.f32 %v7238, %v7250
    %v7255 = vadd.f32 %v7239, %v7246
    %v7256 = vadd.f32 %v7240, %v7250
    %v7257 = vadd.f32 %v6701, %v7253
    %v7258 = vadd.f32 %v6702, %v7254
    %v7259 = vadd.f32 %v6703, %v7255
    %v7260 = vadd.f32 %v6704, %v7256
    %v7261 = vmax.f32 %v7257, 0.0
    %v7262 = vmax.f32 %v7258, 0.0
    %v7263 = vmax.f32 %v7259, 0.0
    %v7264 = vmax.f32 %v7260, 0.0
    %v7265 = vld [vmem:[#allocation40] sm:$0xff]
    %v7267 = vsel %vm5502, %v7265, 0
    %7269 = vmatprep.subr.mxu0 %v7262
    %7270 = vmatpush1.msra.mxu0 %v7261
    %7271 = vmatprep.subr.mxu0 %v7264
    %7272 = vmatpush1.msra.mxu0 %v7263
    %7273 = vmatprep.subr.mxu0 0.0
    %7274 = vmatpush1.msra.mxu0 0.0
    %7275 = vmatprep.subr.mxu0 0.0
    %7276 = vmatpush1.msra.mxu0 0.0
    %7277 = vmatprep.subr.mxu0 0.0
    %7278 = vmatpush1.msra.mxu0 0.0
    %7279 = vmatprep.subr.mxu0 0.0
    %7280 = vmatpush1.msra.mxu0 0.0
    %7281 = vmatprep.subr.mxu0 0.0
    %7282 = vmatpush1.msra.mxu0 0.0
    %7283 = vmatprep.subr.mxu0 0.0
    %7284 = vmatpush1.msra.mxu0 0.0
    %7285 = vmatprep.subr.mxu0 0.0
    %7286 = vmatpush1.msra.mxu0 0.0
    %7287 = vmatprep.subr.mxu0 0.0
    %7288 = vmatpush1.msra.mxu0 0.0
    %7289 = vmatprep.subr.mxu0 0.0
    %7290 = vmatpush1.msra.mxu0 0.0
    %7291 = vmatprep.subr.mxu0 0.0
    %7292 = vmatpush1.msra.mxu0 0.0
    %7293 = vmatprep.subr.mxu0 0.0
    %7294 = vmatpush1.msra.mxu0 0.0
    %7295 = vmatprep.subr.mxu0 0.0
    %7296 = vmatpush1.msra.mxu0 0.0
    %7297 = vmatprep.subr.mxu0 0.0
    %7298 = vmatpush1.msra.mxu0 0.0
    %7299 = vmatprep.subr.mxu0 0.0
    %7300 = vmatpush1.msra.mxu0 0.0
    %7301 = vmatprep.subr.mxu0 0.0
    %7302 = vmatpush1.msra.mxu0 0.0
    %7303 = vmatprep.subr.mxu0 0.0
    %7304 = vmatpush1.msra.mxu0 0.0
    %7305 = vmatprep.subr.mxu0 0.0
    %7306 = vmatpush1.msra.mxu0 0.0
    %7307 = vmatprep.subr.mxu0 0.0
    %7308 = vmatpush1.msra.mxu0 0.0
    %7309 = vmatprep.subr.mxu0 0.0
    %7310 = vmatpush1.msra.mxu0 0.0
    %7311 = vmatprep.subr.mxu0 0.0
    %7312 = vmatpush1.msra.mxu0 0.0
    %7313 = vmatprep.subr.mxu0 0.0
    %7314 = vmatpush1.msra.mxu0 0.0
    %7315 = vmatprep.subr.mxu0 0.0
    %7316 = vmatpush1.msra.mxu0 0.0
    %7317 = vmatprep.subr.mxu0 0.0
    %7318 = vmatpush1.msra.mxu0 0.0
    %7319 = vmatprep.subr.mxu0 0.0
    %7320 = vmatpush1.msra.mxu0 0.0
    %7321 = vmatprep.subr.mxu0 0.0
    %7322 = vmatpush1.msra.mxu0 0.0
    %7323 = vmatprep.subr.mxu0 0.0
    %7324 = vmatpush1.msra.mxu0 0.0
    %7325 = vmatprep.subr.mxu0 0.0
    %7326 = vmatpush1.msra.mxu0 0.0
    %7327 = vmatprep.subr.mxu0 0.0
    %7328 = vmatpush1.msra.mxu0 0.0
    %7329 = vmatprep.subr.mxu0 0.0
    %7330 = vmatpush1.msra.mxu0 0.0
    %7331 = vmatprep.subr.mxu0 0.0
    %7332 = vmatpush1.msra.mxu0 0.0
    %7333 = vmatprep.mubr.f32.mxu0 0.0
    %7334 = vmatmul.mubr.f32.gmra.mrb[0].mxu0 %v7267
    %v7335 = vpop.f32.mrb[0].mxu0
    %v7336 = vadd.f32 0.0, %v7335
    %v7337 = vpop.f32.mrb[0].mxu0
    %v7338 = vadd.f32 0.0, %v7337
    %7339 = vdwg.mxu0
    %v7340 = vpack.c.bf16 %v7336, %v7336
    %v7341 = vpack.c.bf16 %v7338, %v7338
    %v7342 = vld [vmem:[#allocation38] sm:$0xff]
    %v7343 = vld [vmem:[#allocation38 + $0x8] sm:$0xff]
    %v7344 = vld [vmem:[#allocation38 + $0x10] sm:$0xff]
    %v7345 = vld [vmem:[#allocation38 + $0x18] sm:$0xff]
    %v7346 = vld [vmem:[#allocation38 + $0x20] sm:$0xff]
    %v7347 = vld [vmem:[#allocation38 + $0x28] sm:$0xff]
    %v7348 = vld [vmem:[#allocation38 + $0x30] sm:$0xff]
    %v7349 = vld [vmem:[#allocation38 + $0x38] sm:$0xff]
    %v7350 = vld [vmem:[#allocation38 + $0x40] sm:$0xff]
    %v7351 = vld [vmem:[#allocation38 + $0x48] sm:$0xff]
    %v7352 = vld [vmem:[#allocation38 + $0x50] sm:$0xff]
    %v7353 = vld [vmem:[#allocation38 + $0x58] sm:$0xff]
    %v7354 = vld [vmem:[#allocation38 + $0x60] sm:$0xff]
    %v7355 = vld [vmem:[#allocation38 + $0x68] sm:$0xff]
    %v7356 = vld [vmem:[#allocation38 + $0x70] sm:$0xff]
    %v7357 = vld [vmem:[#allocation38 + $0x78] sm:$0xff]
    %v7358 = vld [vmem:[#allocation38 + $0x80] sm:$0xff]
    %v7359 = vld [vmem:[#allocation38 + $0x88] sm:$0xff]
    %v7360 = vld [vmem:[#allocation38 + $0x90] sm:$0xff]
    %v7361 = vld [vmem:[#allocation38 + $0x98] sm:$0xff]
    %v7362 = vld [vmem:[#allocation38 + $0xa0] sm:$0xff]
    %v7363 = vld [vmem:[#allocation38 + $0xa8] sm:$0xff]
    %v7364 = vld [vmem:[#allocation38 + $0xb0] sm:$0xff]
    %v7365 = vld [vmem:[#allocation38 + $0xb8] sm:$0xff]
    %v7366 = vld [vmem:[#allocation38 + $0xc0] sm:$0xff]
    %v7367 = vld [vmem:[#allocation38 + $0xc8] sm:$0xff]
    %v7368 = vld [vmem:[#allocation38 + $0xd0] sm:$0xff]
    %v7369 = vld [vmem:[#allocation38 + $0xd8] sm:$0xff]
    %v7370 = vld [vmem:[#allocation38 + $0xe0] sm:$0xff]
    %v7371 = vld [vmem:[#allocation38 + $0xe8] sm:$0xff]
    %v7372 = vld [vmem:[#allocation38 + $0xf0] sm:$0xff]
    %v7373 = vld [vmem:[#allocation38 + $0xf8] sm:$0xff]
    %s7374 = scalar_lea.vmem [#allocation40], 8
    %v7375 = vld [vmem:[%s7374] sm:$0xff]
    %v7377 = vsel %vm5502, %v7375, 0
    %7379 = vmatprep.subr.mxu0 %v7262
    %7380 = vmatpush1.msra.mxu0 %v7261
    %7381 = vmatprep.subr.mxu0 %v7264
    %7382 = vmatpush1.msra.mxu0 %v7263
    %7383 = vmatprep.subr.mxu0 0.0
    %7384 = vmatpush1.msra.mxu0 0.0
    %7385 = vmatprep.subr.mxu0 0.0
    %7386 = vmatpush1.msra.mxu0 0.0
    %7387 = vmatprep.subr.mxu0 0.0
    %7388 = vmatpush1.msra.mxu0 0.0
    %7389 = vmatprep.subr.mxu0 0.0
    %7390 = vmatpush1.msra.mxu0 0.0
    %7391 = vmatprep.subr.mxu0 0.0
    %7392 = vmatpush1.msra.mxu0 0.0
    %7393 = vmatprep.subr.mxu0 0.0
    %7394 = vmatpush1.msra.mxu0 0.0
    %7395 = vmatprep.subr.mxu0 0.0
    %7396 = vmatpush1.msra.mxu0 0.0
    %7397 = vmatprep.subr.mxu0 0.0
    %7398 = vmatpush1.msra.mxu0 0.0
    %7399 = vmatprep.subr.mxu0 0.0
    %7400 = vmatpush1.msra.mxu0 0.0
    %7401 = vmatprep.subr.mxu0 0.0
    %7402 = vmatpush1.msra.mxu0 0.0
    %7403 = vmatprep.subr.mxu0 0.0
    %7404 = vmatpush1.msra.mxu0 0.0
    %7405 = vmatprep.subr.mxu0 0.0
    %7406 = vmatpush1.msra.mxu0 0.0
    %7407 = vmatprep.subr.mxu0 0.0
    %7408 = vmatpush1.msra.mxu0 0.0
    %7409 = vmatprep.subr.mxu0 0.0
    %7410 = vmatpush1.msra.mxu0 0.0
    %7411 = vmatprep.subr.mxu0 0.0
    %7412 = vmatpush1.msra.mxu0 0.0
    %7413 = vmatprep.subr.mxu0 0.0
    %7414 = vmatpush1.msra.mxu0 0.0
    %7415 = vmatprep.subr.mxu0 0.0
    %7416 = vmatpush1.msra.mxu0 0.0
    %7417 = vmatprep.subr.mxu0 0.0
    %7418 = vmatpush1.msra.mxu0 0.0
    %7419 = vmatprep.subr.mxu0 0.0
    %7420 = vmatpush1.msra.mxu0 0.0
    %7421 = vmatprep.subr.mxu0 0.0
    %7422 = vmatpush1.msra.mxu0 0.0
    %7423 = vmatprep.subr.mxu0 0.0
    %7424 = vmatpush1.msra.mxu0 0.0
    %7425 = vmatprep.subr.mxu0 0.0
    %7426 = vmatpush1.msra.mxu0 0.0
    %7427 = vmatprep.subr.mxu0 0.0
    %7428 = vmatpush1.msra.mxu0 0.0
    %7429 = vmatprep.subr.mxu0 0.0
    %7430 = vmatpush1.msra.mxu0 0.0
    %7431 = vmatprep.subr.mxu0 0.0
    %7432 = vmatpush1.msra.mxu0 0.0
    %7433 = vmatprep.subr.mxu0 0.0
    %7434 = vmatpush1.msra.mxu0 0.0
    %7435 = vmatprep.subr.mxu0 0.0
    %7436 = vmatpush1.msra.mxu0 0.0
    %7437 = vmatprep.subr.mxu0 0.0
    %7438 = vmatpush1.msra.mxu0 0.0
    %7439 = vmatprep.subr.mxu0 0.0
    %7440 = vmatpush1.msra.mxu0 0.0
    %7441 = vmatprep.subr.mxu0 0.0
    %7442 = vmatpush1.msra.mxu0 0.0
    %7443 = vmatprep.mubr.f32.mxu0 0.0
    %7444 = vmatmul.mubr.f32.gmra.mrb[0].mxu0 %v7377
    %v7445 = vpop.f32.mrb[0].mxu0
    %v7446 = vadd.f32 0.0, %v7445
    %v7447 = vpop.f32.mrb[0].mxu0
    %v7448 = vadd.f32 0.0, %v7447
    %7449 = vdwg.mxu0
    %v7450 = vpack.c.bf16 %v7446, %v7446
    %v7451 = vpack.c.bf16 %v7448, %v7448
    %s7452 = scalar_lea.vmem [#allocation38], 256
    %v7453 = vld [vmem:[%s7452] sm:$0xff]
    %v7454 = vld [vmem:[%s7452 + $0x8] sm:$0xff]
    %v7455 = vld [vmem:[%s7452 + $0x10] sm:$0xff]
    %v7456 = vld [vmem:[%s7452 + $0x18] sm:$0xff]
    %v7457 = vld [vmem:[%s7452 + $0x20] sm:$0xff]
    %v7458 = vld [vmem:[%s7452 + $0x28] sm:$0xff]
    %v7459 = vld [vmem:[%s7452 + $0x30] sm:$0xff]
    %v7460 = vld [vmem:[%s7452 + $0x38] sm:$0xff]
    %v7461 = vld [vmem:[%s7452 + $0x40] sm:$0xff]
    %v7462 = vld [vmem:[%s7452 + $0x48] sm:$0xff]
    %v7463 = vld [vmem:[%s7452 + $0x50] sm:$0xff]
    %v7464 = vld [vmem:[%s7452 + $0x58] sm:$0xff]
    %v7465 = vld [vmem:[%s7452 + $0x60] sm:$0xff]
    %v7466 = vld [vmem:[%s7452 + $0x68] sm:$0xff]
    %v7467 = vld [vmem:[%s7452 + $0x70] sm:$0xff]
    %v7468 = vld [vmem:[%s7452 + $0x78] sm:$0xff]
    %v7469 = vld [vmem:[%s7452 + $0x80] sm:$0xff]
    %v7470 = vld [vmem:[%s7452 + $0x88] sm:$0xff]
    %v7471 = vld [vmem:[%s7452 + $0x90] sm:$0xff]
    %v7472 = vld [vmem:[%s7452 + $0x98] sm:$0xff]
    %v7473 = vld [vmem:[%s7452 + $0xa0] sm:$0xff]
    %v7474 = vld [vmem:[%s7452 + $0xa8] sm:$0xff]
    %v7475 = vld [vmem:[%s7452 + $0xb0] sm:$0xff]
    %v7476 = vld [vmem:[%s7452 + $0xb8] sm:$0xff]
    %v7477 = vld [vmem:[%s7452 + $0xc0] sm:$0xff]
    %v7478 = vld [vmem:[%s7452 + $0xc8] sm:$0xff]
    %v7479 = vld [vmem:[%s7452 + $0xd0] sm:$0xff]
    %v7480 = vld [vmem:[%s7452 + $0xd8] sm:$0xff]
    %v7481 = vld [vmem:[%s7452 + $0xe0] sm:$0xff]
    %v7482 = vld [vmem:[%s7452 + $0xe8] sm:$0xff]
    %v7483 = vld [vmem:[%s7452 + $0xf0] sm:$0xff]
    %v7484 = vld [vmem:[%s7452 + $0xf8] sm:$0xff]
    %v7517 = vunpack.c.l.b16 %v7453
    %v7518 = vunpack.c.h.b16 %v7453
    %v7519 = vunpack.c.l.b16 %v7454
    %v7520 = vunpack.c.h.b16 %v7454
    %v7521 = vunpack.c.l.b16 %v7455
    %v7522 = vunpack.c.h.b16 %v7455
    %v7523 = vunpack.c.l.b16 %v7456
    %v7524 = vunpack.c.h.b16 %v7456
    %v7525 = vunpack.c.l.b16 %v7457
    %v7526 = vunpack.c.h.b16 %v7457
    %v7527 = vunpack.c.l.b16 %v7458
    %v7528 = vunpack.c.h.b16 %v7458
    %v7529 = vunpack.c.l.b16 %v7459
    %v7530 = vunpack.c.h.b16 %v7459
    %v7531 = vunpack.c.l.b16 %v7460
    %v7532 = vunpack.c.h.b16 %v7460
    %v7533 = vunpack.c.l.b16 %v7461
    %v7534 = vunpack.c.h.b16 %v7461
    %v7535 = vunpack.c.l.b16 %v7462
    %v7536 = vunpack.c.h.b16 %v7462
    %v7537 = vunpack.c.l.b16 %v7463
    %v7538 = vunpack.c.h.b16 %v7463
    %v7539 = vunpack.c.l.b16 %v7464
    %v7540 = vunpack.c.h.b16 %v7464
    %v7541 = vunpack.c.l.b16 %v7465
    %v7542 = vunpack.c.h.b16 %v7465
    %v7543 = vunpack.c.l.b16 %v7466
    %v7544 = vunpack.c.h.b16 %v7466
    %v7545 = vunpack.c.l.b16 %v7467
    %v7546 = vunpack.c.h.b16 %v7467
    %v7547 = vunpack.c.l.b16 %v7468
    %v7548 = vunpack.c.h.b16 %v7468
    %v7549 = vunpack.c.l.b16 %v7469
    %v7550 = vunpack.c.h.b16 %v7469
    %v7551 = vunpack.c.l.b16 %v7470
    %v7552 = vunpack.c.h.b16 %v7470
    %v7553 = vunpack.c.l.b16 %v7471
    %v7554 = vunpack.c.h.b16 %v7471
    %v7555 = vunpack.c.l.b16 %v7472
    %v7556 = vunpack.c.h.b16 %v7472
    %v7557 = vunpack.c.l.b16 %v7473
    %v7558 = vunpack.c.h.b16 %v7473
    %v7559 = vunpack.c.l.b16 %v7474
    %v7560 = vunpack.c.h.b16 %v7474
    %v7561 = vunpack.c.l.b16 %v7475
    %v7562 = vunpack.c.h.b16 %v7475
    %v7563 = vunpack.c.l.b16 %v7476
    %v7564 = vunpack.c.h.b16 %v7476
    %v7565 = vunpack.c.l.b16 %v7477
    %v7566 = vunpack.c.h.b16 %v7477
    %v7567 = vunpack.c.l.b16 %v7478
    %v7568 = vunpack.c.h.b16 %v7478
    %v7569 = vunpack.c.l.b16 %v7479
    %v7570 = vunpack.c.h.b16 %v7479
    %v7571 = vunpack.c.l.b16 %v7480
    %v7572 = vunpack.c.h.b16 %v7480
    %v7573 = vunpack.c.l.b16 %v7481
    %v7574 = vunpack.c.h.b16 %v7481
    %v7575 = vunpack.c.l.b16 %v7482
    %v7576 = vunpack.c.h.b16 %v7482
    %v7577 = vunpack.c.l.b16 %v7483
    %v7578 = vunpack.c.h.b16 %v7483
    %v7579 = vunpack.c.l.b16 %v7484
    %v7580 = vunpack.c.h.b16 %v7484
    %v7581 = vpack.c.b16 %v7519, %v7517
    %v7582 = vpack.c.b16 %v7520, %v7518
    %v7583 = vpack.c.b16 %v7523, %v7521
    %v7584 = vpack.c.b16 %v7524, %v7522
    %v7585 = vpack.c.b16 %v7527, %v7525
    %v7586 = vpack.c.b16 %v7528, %v7526
    %v7587 = vpack.c.b16 %v7531, %v7529
    %v7588 = vpack.c.b16 %v7532, %v7530
    %v7589 = vpack.c.b16 %v7535, %v7533
    %v7590 = vpack.c.b16 %v7536, %v7534
    %v7591 = vpack.c.b16 %v7539, %v7537
    %v7592 = vpack.c.b16 %v7540, %v7538
    %v7593 = vpack.c.b16 %v7543, %v7541
    %v7594 = vpack.c.b16 %v7544, %v7542
    %v7595 = vpack.c.b16 %v7547, %v7545
    %v7596 = vpack.c.b16 %v7548, %v7546
    %v7597 = vpack.c.b16 %v7551, %v7549
    %v7598 = vpack.c.b16 %v7552, %v7550
    %v7599 = vpack.c.b16 %v7555, %v7553
    %v7600 = vpack.c.b16 %v7556, %v7554
    %v7601 = vpack.c.b16 %v7559, %v7557
    %v7602 = vpack.c.b16 %v7560, %v7558
    %v7603 = vpack.c.b16 %v7563, %v7561
    %v7604 = vpack.c.b16 %v7564, %v7562
    %v7605 = vpack.c.b16 %v7567, %v7565
    %v7606 = vpack.c.b16 %v7568, %v7566
    %v7607 = vpack.c.b16 %v7571, %v7569
    %v7608 = vpack.c.b16 %v7572, %v7570
    %v7609 = vpack.c.b16 %v7575, %v7573
    %v7610 = vpack.c.b16 %v7576, %v7574
    %v7611 = vpack.c.b16 %v7579, %v7577
    %v7612 = vpack.c.b16 %v7580, %v7578
    %7645 = vmatprep.subr.bf16.mxu0 %v7582
    %7646 = vmatpush1.bf16.msra.mxu0 %v7581
    %7647 = vmatprep.subr.bf16.mxu0 %v7584
    %7648 = vmatpush1.bf16.msra.mxu0 %v7583
    %7649 = vmatprep.subr.bf16.mxu0 %v7586
    %7650 = vmatpush1.bf16.msra.mxu0 %v7585
    %7651 = vmatprep.subr.bf16.mxu0 %v7588
    %7652 = vmatpush1.bf16.msra.mxu0 %v7587
    %7653 = vmatprep.subr.bf16.mxu0 %v7590
    %7654 = vmatpush1.bf16.msra.mxu0 %v7589
    %7655 = vmatprep.subr.bf16.mxu0 %v7592
    %7656 = vmatpush1.bf16.msra.mxu0 %v7591
    %7657 = vmatprep.subr.bf16.mxu0 %v7594
    %7658 = vmatpush1.bf16.msra.mxu0 %v7593
    %7659 = vmatprep.subr.bf16.mxu0 %v7596
    %7660 = vmatpush1.bf16.msra.mxu0 %v7595
    %7661 = vmatprep.subr.bf16.mxu0 %v7598
    %7662 = vmatpush1.bf16.msra.mxu0 %v7597
    %7663 = vmatprep.subr.bf16.mxu0 %v7600
    %7664 = vmatpush1.bf16.msra.mxu0 %v7599
    %7665 = vmatprep.subr.bf16.mxu0 %v7602
    %7666 = vmatpush1.bf16.msra.mxu0 %v7601
    %7667 = vmatprep.subr.bf16.mxu0 %v7604
    %7668 = vmatpush1.bf16.msra.mxu0 %v7603
    %7669 = vmatprep.subr.bf16.mxu0 %v7606
    %7670 = vmatpush1.bf16.msra.mxu0 %v7605
    %7671 = vmatprep.subr.bf16.mxu0 %v7608
    %7672 = vmatpush1.bf16.msra.mxu0 %v7607
    %7673 = vmatprep.subr.bf16.mxu0 %v7610
    %7674 = vmatpush1.bf16.msra.mxu0 %v7609
    %7675 = vmatprep.subr.bf16.mxu0 %v7612
    %7676 = vmatpush1.bf16.msra.mxu0 %v7611
    %7677 = vmatprep.mubr.bf16.mxu0 %v7451
    %7678 = vmatmul.mubr.bf16.gmra.mrb[0].mxu0 %v7450
    %v7679 = vpop.f32.mrb[0].mxu0
    %v7680 = vadd.f32 0.0, %v7679
    %v7681 = vpop.f32.mrb[0].mxu0
    %v7682 = vadd.f32 0.0, %v7681
    %v7683 = vpop.f32.mrb[0].mxu0
    %v7684 = vpop.f32.mrb[0].mxu0
    %7685 = vdwg.mxu0
    %v7718 = vunpack.c.l.b16 %v7342
    %v7719 = vunpack.c.h.b16 %v7342
    %v7720 = vunpack.c.l.b16 %v7343
    %v7721 = vunpack.c.h.b16 %v7343
    %v7722 = vunpack.c.l.b16 %v7344
    %v7723 = vunpack.c.h.b16 %v7344
    %v7724 = vunpack.c.l.b16 %v7345
    %v7725 = vunpack.c.h.b16 %v7345
    %v7726 = vunpack.c.l.b16 %v7346
    %v7727 = vunpack.c.h.b16 %v7346
    %v7728 = vunpack.c.l.b16 %v7347
    %v7729 = vunpack.c.h.b16 %v7347
    %v7730 = vunpack.c.l.b16 %v7348
    %v7731 = vunpack.c.h.b16 %v7348
    %v7732 = vunpack.c.l.b16 %v7349
    %v7733 = vunpack.c.h.b16 %v7349
    %v7734 = vunpack.c.l.b16 %v7350
    %v7735 = vunpack.c.h.b16 %v7350
    %v7736 = vunpack.c.l.b16 %v7351
    %v7737 = vunpack.c.h.b16 %v7351
    %v7738 = vunpack.c.l.b16 %v7352
    %v7739 = vunpack.c.h.b16 %v7352
    %v7740 = vunpack.c.l.b16 %v7353
    %v7741 = vunpack.c.h.b16 %v7353
    %v7742 = vunpack.c.l.b16 %v7354
    %v7743 = vunpack.c.h.b16 %v7354
    %v7744 = vunpack.c.l.b16 %v7355
    %v7745 = vunpack.c.h.b16 %v7355
    %v7746 = vunpack.c.l.b16 %v7356
    %v7747 = vunpack.c.h.b16 %v7356
    %v7748 = vunpack.c.l.b16 %v7357
    %v7749 = vunpack.c.h.b16 %v7357
    %v7750 = vunpack.c.l.b16 %v7358
    %v7751 = vunpack.c.h.b16 %v7358
    %v7752 = vunpack.c.l.b16 %v7359
    %v7753 = vunpack.c.h.b16 %v7359
    %v7754 = vunpack.c.l.b16 %v7360
    %v7755 = vunpack.c.h.b16 %v7360
    %v7756 = vunpack.c.l.b16 %v7361
    %v7757 = vunpack.c.h.b16 %v7361
    %v7758 = vunpack.c.l.b16 %v7362
    %v7759 = vunpack.c.h.b16 %v7362
    %v7760 = vunpack.c.l.b16 %v7363
    %v7761 = vunpack.c.h.b16 %v7363
    %v7762 = vunpack.c.l.b16 %v7364
    %v7763 = vunpack.c.h.b16 %v7364
    %v7764 = vunpack.c.l.b16 %v7365
    %v7765 = vunpack.c.h.b16 %v7365
    %v7766 = vunpack.c.l.b16 %v7366
    %v7767 = vunpack.c.h.b16 %v7366
    %v7768 = vunpack.c.l.b16 %v7367
    %v7769 = vunpack.c.h.b16 %v7367
    %v7770 = vunpack.c.l.b16 %v7368
    %v7771 = vunpack.c.h.b16 %v7368
    %v7772 = vunpack.c.l.b16 %v7369
    %v7773 = vunpack.c.h.b16 %v7369
    %v7774 = vunpack.c.l.b16 %v7370
    %v7775 = vunpack.c.h.b16 %v7370
    %v7776 = vunpack.c.l.b16 %v7371
    %v7777 = vunpack.c.h.b16 %v7371
    %v7778 = vunpack.c.l.b16 %v7372
    %v7779 = vunpack.c.h.b16 %v7372
    %v7780 = vunpack.c.l.b16 %v7373
    %v7781 = vunpack.c.h.b16 %v7373
    %v7782 = vpack.c.b16 %v7720, %v7718
    %v7783 = vpack.c.b16 %v7721, %v7719
    %v7784 = vpack.c.b16 %v7724, %v7722
    %v7785 = vpack.c.b16 %v7725, %v7723
    %v7786 = vpack.c.b16 %v7728, %v7726
    %v7787 = vpack.c.b16 %v7729, %v7727
    %v7788 = vpack.c.b16 %v7732, %v7730
    %v7789 = vpack.c.b16 %v7733, %v7731
    %v7790 = vpack.c.b16 %v7736, %v7734
    %v7791 = vpack.c.b16 %v7737, %v7735
    %v7792 = vpack.c.b16 %v7740, %v7738
    %v7793 = vpack.c.b16 %v7741, %v7739
    %v7794 = vpack.c.b16 %v7744, %v7742
    %v7795 = vpack.c.b16 %v7745, %v7743
    %v7796 = vpack.c.b16 %v7748, %v7746
    %v7797 = vpack.c.b16 %v7749, %v7747
    %v7798 = vpack.c.b16 %v7752, %v7750
    %v7799 = vpack.c.b16 %v7753, %v7751
    %v7800 = vpack.c.b16 %v7756, %v7754
    %v7801 = vpack.c.b16 %v7757, %v7755
    %v7802 = vpack.c.b16 %v7760, %v7758
    %v7803 = vpack.c.b16 %v7761, %v7759
    %v7804 = vpack.c.b16 %v7764, %v7762
    %v7805 = vpack.c.b16 %v7765, %v7763
    %v7806 = vpack.c.b16 %v7768, %v7766
    %v7807 = vpack.c.b16 %v7769, %v7767
    %v7808 = vpack.c.b16 %v7772, %v7770
    %v7809 = vpack.c.b16 %v7773, %v7771
    %v7810 = vpack.c.b16 %v7776, %v7774
    %v7811 = vpack.c.b16 %v7777, %v7775
    %v7812 = vpack.c.b16 %v7780, %v7778
    %v7813 = vpack.c.b16 %v7781, %v7779
    %7846 = vmatprep.subr.bf16.mxu0 %v7783
    %7847 = vmatpush1.bf16.msra.mxu0 %v7782
    %7848 = vmatprep.subr.bf16.mxu0 %v7785
    %7849 = vmatpush1.bf16.msra.mxu0 %v7784
    %7850 = vmatprep.subr.bf16.mxu0 %v7787
    %7851 = vmatpush1.bf16.msra.mxu0 %v7786
    %7852 = vmatprep.subr.bf16.mxu0 %v7789
    %7853 = vmatpush1.bf16.msra.mxu0 %v7788
    %7854 = vmatprep.subr.bf16.mxu0 %v7791
    %7855 = vmatpush1.bf16.msra.mxu0 %v7790
    %7856 = vmatprep.subr.bf16.mxu0 %v7793
    %7857 = vmatpush1.bf16.msra.mxu0 %v7792
    %7858 = vmatprep.subr.bf16.mxu0 %v7795
    %7859 = vmatpush1.bf16.msra.mxu0 %v7794
    %7860 = vmatprep.subr.bf16.mxu0 %v7797
    %7861 = vmatpush1.bf16.msra.mxu0 %v7796
    %7862 = vmatprep.subr.bf16.mxu0 %v7799
    %7863 = vmatpush1.bf16.msra.mxu0 %v7798
    %7864 = vmatprep.subr.bf16.mxu0 %v7801
    %7865 = vmatpush1.bf16.msra.mxu0 %v7800
    %7866 = vmatprep.subr.bf16.mxu0 %v7803
    %7867 = vmatpush1.bf16.msra.mxu0 %v7802
    %7868 = vmatprep.subr.bf16.mxu0 %v7805
    %7869 = vmatpush1.bf16.msra.mxu0 %v7804
    %7870 = vmatprep.subr.bf16.mxu0 %v7807
    %7871 = vmatpush1.bf16.msra.mxu0 %v7806
    %7872 = vmatprep.subr.bf16.mxu0 %v7809
    %7873 = vmatpush1.bf16.msra.mxu0 %v7808
    %7874 = vmatprep.subr.bf16.mxu0 %v7811
    %7875 = vmatpush1.bf16.msra.mxu0 %v7810
    %7876 = vmatprep.subr.bf16.mxu0 %v7813
    %7877 = vmatpush1.bf16.msra.mxu0 %v7812
    %7878 = vmatprep.mubr.bf16.mxu0 %v7341
    %7879 = vmatmul.mubr.bf16.gmra.mrb[0].mxu0 %v7340
    %v7880 = vpop.f32.mrb[0].mxu0
    %v7881 = vadd.f32 %v7680, %v7880
    %v7882 = vpop.f32.mrb[0].mxu0
    %v7883 = vadd.f32 %v7682, %v7882
    %v7884 = vpop.f32.mrb[0].mxu0
    %v7885 = vpop.f32.mrb[0].mxu0
    %7886 = vdwg.mxu0
    %s7887 = scalar_lea.vmem [#allocation40], 16
    %v7888 = vld [vmem:[%s7887] sm:$0xff]
    %v7890 = vsel %vm5502, %v7888, 0
    %7892 = vmatprep.subr.mxu0 %v7262
    %7893 = vmatpush1.msra.mxu0 %v7261
    %7894 = vmatprep.subr.mxu0 %v7264
    %7895 = vmatpush1.msra.mxu0 %v7263
    %7896 = vmatprep.subr.mxu0 0.0
    %7897 = vmatpush1.msra.mxu0 0.0
    %7898 = vmatprep.subr.mxu0 0.0
    %7899 = vmatpush1.msra.mxu0 0.0
    %7900 = vmatprep.subr.mxu0 0.0
    %7901 = vmatpush1.msra.mxu0 0.0
    %7902 = vmatprep.subr.mxu0 0.0
    %7903 = vmatpush1.msra.mxu0 0.0
    %7904 = vmatprep.subr.mxu0 0.0
    %7905 = vmatpush1.msra.mxu0 0.0
    %7906 = vmatprep.subr.mxu0 0.0
    %7907 = vmatpush1.msra.mxu0 0.0
    %7908 = vmatprep.subr.mxu0 0.0
    %7909 = vmatpush1.msra.mxu0 0.0
    %7910 = vmatprep.subr.mxu0 0.0
    %7911 = vmatpush1.msra.mxu0 0.0
    %7912 = vmatprep.subr.mxu0 0.0
    %7913 = vmatpush1.msra.mxu0 0.0
    %7914 = vmatprep.subr.mxu0 0.0
    %7915 = vmatpush1.msra.mxu0 0.0
    %7916 = vmatprep.subr.mxu0 0.0
    %7917 = vmatpush1.msra.mxu0 0.0
    %7918 = vmatprep.subr.mxu0 0.0
    %7919 = vmatpush1.msra.mxu0 0.0
    %7920 = vmatprep.subr.mxu0 0.0
    %7921 = vmatpush1.msra.mxu0 0.0
    %7922 = vmatprep.subr.mxu0 0.0
    %7923 = vmatpush1.msra.mxu0 0.0
    %7924 = vmatprep.subr.mxu0 0.0
    %7925 = vmatpush1.msra.mxu0 0.0
    %7926 = vmatprep.subr.mxu0 0.0
    %7927 = vmatpush1.msra.mxu0 0.0
    %7928 = vmatprep.subr.mxu0 0.0
    %7929 = vmatpush1.msra.mxu0 0.0
    %7930 = vmatprep.subr.mxu0 0.0
    %7931 = vmatpush1.msra.mxu0 0.0
    %7932 = vmatprep.subr.mxu0 0.0
    %7933 = vmatpush1.msra.mxu0 0.0
    %7934 = vmatprep.subr.mxu0 0.0
    %7935 = vmatpush1.msra.mxu0 0.0
    %7936 = vmatprep.subr.mxu0 0.0
    %7937 = vmatpush1.msra.mxu0 0.0
    %7938 = vmatprep.subr.mxu0 0.0
    %7939 = vmatpush1.msra.mxu0 0.0
    %7940 = vmatprep.subr.mxu0 0.0
    %7941 = vmatpush1.msra.mxu0 0.0
    %7942 = vmatprep.subr.mxu0 0.0
    %7943 = vmatpush1.msra.mxu0 0.0
    %7944 = vmatprep.subr.mxu0 0.0
    %7945 = vmatpush1.msra.mxu0 0.0
    %7946 = vmatprep.subr.mxu0 0.0
    %7947 = vmatpush1.msra.mxu0 0.0
    %7948 = vmatprep.subr.mxu0 0.0
    %7949 = vmatpush1.msra.mxu0 0.0
    %7950 = vmatprep.subr.mxu0 0.0
    %7951 = vmatpush1.msra.mxu0 0.0
    %7952 = vmatprep.subr.mxu0 0.0
    %7953 = vmatpush1.msra.mxu0 0.0
    %7954 = vmatprep.subr.mxu0 0.0
    %7955 = vmatpush1.msra.mxu0 0.0
    %7956 = vmatprep.mubr.f32.mxu0 0.0
    %7957 = vmatmul.mubr.f32.gmra.mrb[0].mxu0 %v7890
    %v7958 = vpop.f32.mrb[0].mxu0
    %v7959 = vadd.f32 0.0, %v7958
    %v7960 = vpop.f32.mrb[0].mxu0
    %v7961 = vadd.f32 0.0, %v7960
    %7962 = vdwg.mxu0
    %v7963 = vpack.c.bf16 %v7959, %v7959
    %v7964 = vpack.c.bf16 %v7961, %v7961
    %s7965 = scalar_lea.vmem [#allocation38], 512
    %v7966 = vld [vmem:[%s7965] sm:$0xff]
    %v7967 = vld [vmem:[%s7965 + $0x8] sm:$0xff]
    %v7968 = vld [vmem:[%s7965 + $0x10] sm:$0xff]
    %v7969 = vld [vmem:[%s7965 + $0x18] sm:$0xff]
    %v7970 = vld [vmem:[%s7965 + $0x20] sm:$0xff]
    %v7971 = vld [vmem:[%s7965 + $0x28] sm:$0xff]
    %v7972 = vld [vmem:[%s7965 + $0x30] sm:$0xff]
    %v7973 = vld [vmem:[%s7965 + $0x38] sm:$0xff]
    %v7974 = vld [vmem:[%s7965 + $0x40] sm:$0xff]
    %v7975 = vld [vmem:[%s7965 + $0x48] sm:$0xff]
    %v7976 = vld [vmem:[%s7965 + $0x50] sm:$0xff]
    %v7977 = vld [vmem:[%s7965 + $0x58] sm:$0xff]
    %v7978 = vld [vmem:[%s7965 + $0x60] sm:$0xff]
    %v7979 = vld [vmem:[%s7965 + $0x68] sm:$0xff]
    %v7980 = vld [vmem:[%s7965 + $0x70] sm:$0xff]
    %v7981 = vld [vmem:[%s7965 + $0x78] sm:$0xff]
    %v7982 = vld [vmem:[%s7965 + $0x80] sm:$0xff]
    %v7983 = vld [vmem:[%s7965 + $0x88] sm:$0xff]
    %v7984 = vld [vmem:[%s7965 + $0x90] sm:$0xff]
    %v7985 = vld [vmem:[%s7965 + $0x98] sm:$0xff]
    %v7986 = vld [vmem:[%s7965 + $0xa0] sm:$0xff]
    %v7987 = vld [vmem:[%s7965 + $0xa8] sm:$0xff]
    %v7988 = vld [vmem:[%s7965 + $0xb0] sm:$0xff]
    %v7989 = vld [vmem:[%s7965 + $0xb8] sm:$0xff]
    %v7990 = vld [vmem:[%s7965 + $0xc0] sm:$0xff]
    %v7991 = vld [vmem:[%s7965 + $0xc8] sm:$0xff]
    %v7992 = vld [vmem:[%s7965 + $0xd0] sm:$0xff]
    %v7993 = vld [vmem:[%s7965 + $0xd8] sm:$0xff]
    %v7994 = vld [vmem:[%s7965 + $0xe0] sm:$0xff]
    %v7995 = vld [vmem:[%s7965 + $0xe8] sm:$0xff]
    %v7996 = vld [vmem:[%s7965 + $0xf0] sm:$0xff]
    %v7997 = vld [vmem:[%s7965 + $0xf8] sm:$0xff]
    %v8030 = vunpack.c.l.b16 %v7966
    %v8031 = vunpack.c.h.b16 %v7966
    %v8032 = vunpack.c.l.b16 %v7967
    %v8033 = vunpack.c.h.b16 %v7967
    %v8034 = vunpack.c.l.b16 %v7968
    %v8035 = vunpack.c.h.b16 %v7968
    %v8036 = vunpack.c.l.b16 %v7969
    %v8037 = vunpack.c.h.b16 %v7969
    %v8038 = vunpack.c.l.b16 %v7970
    %v8039 = vunpack.c.h.b16 %v7970
    %v8040 = vunpack.c.l.b16 %v7971
    %v8041 = vunpack.c.h.b16 %v7971
    %v8042 = vunpack.c.l.b16 %v7972
    %v8043 = vunpack.c.h.b16 %v7972
    %v8044 = vunpack.c.l.b16 %v7973
    %v8045 = vunpack.c.h.b16 %v7973
    %v8046 = vunpack.c.l.b16 %v7974
    %v8047 = vunpack.c.h.b16 %v7974
    %v8048 = vunpack.c.l.b16 %v7975
    %v8049 = vunpack.c.h.b16 %v7975
    %v8050 = vunpack.c.l.b16 %v7976
    %v8051 = vunpack.c.h.b16 %v7976
    %v8052 = vunpack.c.l.b16 %v7977
    %v8053 = vunpack.c.h.b16 %v7977
    %v8054 = vunpack.c.l.b16 %v7978
    %v8055 = vunpack.c.h.b16 %v7978
    %v8056 = vunpack.c.l.b16 %v7979
    %v8057 = vunpack.c.h.b16 %v7979
    %v8058 = vunpack.c.l.b16 %v7980
    %v8059 = vunpack.c.h.b16 %v7980
    %v8060 = vunpack.c.l.b16 %v7981
    %v8061 = vunpack.c.h.b16 %v7981
    %v8062 = vunpack.c.l.b16 %v7982
    %v8063 = vunpack.c.h.b16 %v7982
    %v8064 = vunpack.c.l.b16 %v7983
    %v8065 = vunpack.c.h.b16 %v7983
    %v8066 = vunpack.c.l.b16 %v7984
    %v8067 = vunpack.c.h.b16 %v7984
    %v8068 = vunpack.c.l.b16 %v7985
    %v8069 = vunpack.c.h.b16 %v7985
    %v8070 = vunpack.c.l.b16 %v7986
    %v8071 = vunpack.c.h.b16 %v7986
    %v8072 = vunpack.c.l.b16 %v7987
    %v8073 = vunpack.c.h.b16 %v7987
    %v8074 = vunpack.c.l.b16 %v7988
    %v8075 = vunpack.c.h.b16 %v7988
    %v8076 = vunpack.c.l.b16 %v7989
    %v8077 = vunpack.c.h.b16 %v7989
    %v8078 = vunpack.c.l.b16 %v7990
    %v8079 = vunpack.c.h.b16 %v7990
    %v8080 = vunpack.c.l.b16 %v7991
    %v8081 = vunpack.c.h.b16 %v7991
    %v8082 = vunpack.c.l.b16 %v7992
    %v8083 = vunpack.c.h.b16 %v7992
    %v8084 = vunpack.c.l.b16 %v7993
    %v8085 = vunpack.c.h.b16 %v7993
    %v8086 = vunpack.c.l.b16 %v7994
    %v8087 = vunpack.c.h.b16 %v7994
    %v8088 = vunpack.c.l.b16 %v7995
    %v8089 = vunpack.c.h.b16 %v7995
    %v8090 = vunpack.c.l.b16 %v7996
    %v8091 = vunpack.c.h.b16 %v7996
    %v8092 = vunpack.c.l.b16 %v7997
    %v8093 = vunpack.c.h.b16 %v7997
    %v8094 = vpack.c.b16 %v8032, %v8030
    %v8095 = vpack.c.b16 %v8033, %v8031
    %v8096 = vpack.c.b16 %v8036, %v8034
    %v8097 = vpack.c.b16 %v8037, %v8035
    %v8098 = vpack.c.b16 %v8040, %v8038
    %v8099 = vpack.c.b16 %v8041, %v8039
    %v8100 = vpack.c.b16 %v8044, %v8042
    %v8101 = vpack.c.b16 %v8045, %v8043
    %v8102 = vpack.c.b16 %v8048, %v8046
    %v8103 = vpack.c.b16 %v8049, %v8047
    %v8104 = vpack.c.b16 %v8052, %v8050
    %v8105 = vpack.c.b16 %v8053, %v8051
    %v8106 = vpack.c.b16 %v8056, %v8054
    %v8107 = vpack.c.b16 %v8057, %v8055
    %v8108 = vpack.c.b16 %v8060, %v8058
    %v8109 = vpack.c.b16 %v8061, %v8059
    %v8110 = vpack.c.b16 %v8064, %v8062
    %v8111 = vpack.c.b16 %v8065, %v8063
    %v8112 = vpack.c.b16 %v8068, %v8066
    %v8113 = vpack.c.b16 %v8069, %v8067
    %v8114 = vpack.c.b16 %v8072, %v8070
    %v8115 = vpack.c.b16 %v8073, %v8071
    %v8116 = vpack.c.b16 %v8076, %v8074
    %v8117 = vpack.c.b16 %v8077, %v8075
    %v8118 = vpack.c.b16 %v8080, %v8078
    %v8119 = vpack.c.b16 %v8081, %v8079
    %v8120 = vpack.c.b16 %v8084, %v8082
    %v8121 = vpack.c.b16 %v8085, %v8083
    %v8122 = vpack.c.b16 %v8088, %v8086
    %v8123 = vpack.c.b16 %v8089, %v8087
    %v8124 = vpack.c.b16 %v8092, %v8090
    %v8125 = vpack.c.b16 %v8093, %v8091
    %8158 = vmatprep.subr.bf16.mxu0 %v8095
    %8159 = vmatpush1.bf16.msra.mxu0 %v8094
    %8160 = vmatprep.subr.bf16.mxu0 %v8097
    %8161 = vmatpush1.bf16.msra.mxu0 %v8096
    %8162 = vmatprep.subr.bf16.mxu0 %v8099
    %8163 = vmatpush1.bf16.msra.mxu0 %v8098
    %8164 = vmatprep.subr.bf16.mxu0 %v8101
    %8165 = vmatpush1.bf16.msra.mxu0 %v8100
    %8166 = vmatprep.subr.bf16.mxu0 %v8103
    %8167 = vmatpush1.bf16.msra.mxu0 %v8102
    %8168 = vmatprep.subr.bf16.mxu0 %v8105
    %8169 = vmatpush1.bf16.msra.mxu0 %v8104
    %8170 = vmatprep.subr.bf16.mxu0 %v8107
    %8171 = vmatpush1.bf16.msra.mxu0 %v8106
    %8172 = vmatprep.subr.bf16.mxu0 %v8109
    %8173 = vmatpush1.bf16.msra.mxu0 %v8108
    %8174 = vmatprep.subr.bf16.mxu0 %v8111
    %8175 = vmatpush1.bf16.msra.mxu0 %v8110
    %8176 = vmatprep.subr.bf16.mxu0 %v8113
    %8177 = vmatpush1.bf16.msra.mxu0 %v8112
    %8178 = vmatprep.subr.bf16.mxu0 %v8115
    %8179 = vmatpush1.bf16.msra.mxu0 %v8114
    %8180 = vmatprep.subr.bf16.mxu0 %v8117
    %8181 = vmatpush1.bf16.msra.mxu0 %v8116
    %8182 = vmatprep.subr.bf16.mxu0 %v8119
    %8183 = vmatpush1.bf16.msra.mxu0 %v8118
    %8184 = vmatprep.subr.bf16.mxu0 %v8121
    %8185 = vmatpush1.bf16.msra.mxu0 %v8120
    %8186 = vmatprep.subr.bf16.mxu0 %v8123
    %8187 = vmatpush1.bf16.msra.mxu0 %v8122
    %8188 = vmatprep.subr.bf16.mxu0 %v8125
    %8189 = vmatpush1.bf16.msra.mxu0 %v8124
    %8190 = vmatprep.mubr.bf16.mxu0 %v7964
    %8191 = vmatmul.mubr.bf16.gmra.mrb[0].mxu0 %v7963
    %v8192 = vpop.f32.mrb[0].mxu0
    %v8193 = vadd.f32 0.0, %v8192
    %v8194 = vpop.f32.mrb[0].mxu0
    %v8195 = vadd.f32 0.0, %v8194
    %v8196 = vpop.f32.mrb[0].mxu0
    %v8197 = vpop.f32.mrb[0].mxu0
    %8198 = vdwg.mxu0
    %v8199 = vadd.f32 %v7881, %v8193
    %v8200 = vadd.f32 %v7883, %v8195
    %v8201 = vld [vmem:[#allocation50] sm:$0xff]
    %v8202 = vld [vmem:[#allocation50 + $0x8] sm:$0xff]
    %v8203 = vld [vmem:[#allocation50 + $0x10] sm:$0xff]
    %v8204 = vld [vmem:[#allocation50 + $0x18] sm:$0xff]
    %v8205 = vld [vmem:[#allocation50 + $0x20] sm:$0xff]
    %v8206 = vld [vmem:[#allocation50 + $0x28] sm:$0xff]
    %v8207 = vld [vmem:[#allocation50 + $0x30] sm:$0xff]
    %v8208 = vld [vmem:[#allocation50 + $0x38] sm:$0xff]
    %v8209 = vld [vmem:[#allocation50 + $0x40] sm:$0xff]
    %v8210 = vld [vmem:[#allocation50 + $0x48] sm:$0xff]
    %v8211 = vld [vmem:[#allocation50 + $0x50] sm:$0xff]
    %v8212 = vld [vmem:[#allocation50 + $0x58] sm:$0xff]
    %v8213 = vld [vmem:[#allocation50 + $0x60] sm:$0xff]
    %v8214 = vld [vmem:[#allocation50 + $0x68] sm:$0xff]
    %v8215 = vld [vmem:[#allocation50 + $0x70] sm:$0xff]
    %v8216 = vld [vmem:[#allocation50 + $0x78] sm:$0xff]
    %v8217 = vld [vmem:[#allocation50 + $0x80] sm:$0xff]
    %v8218 = vld [vmem:[#allocation50 + $0x88] sm:$0xff]
    %v8219 = vld [vmem:[#allocation50 + $0x90] sm:$0xff]
    %v8220 = vld [vmem:[#allocation50 + $0x98] sm:$0xff]
    %v8221 = vld [vmem:[#allocation50 + $0xa0] sm:$0xff]
    %v8222 = vld [vmem:[#allocation50 + $0xa8] sm:$0xff]
    %v8223 = vld [vmem:[#allocation50 + $0xb0] sm:$0xff]
    %v8224 = vld [vmem:[#allocation50 + $0xb8] sm:$0xff]
    %v8225 = vld [vmem:[#allocation50 + $0xc0] sm:$0xff]
    %v8226 = vld [vmem:[#allocation50 + $0xc8] sm:$0xff]
    %v8227 = vld [vmem:[#allocation50 + $0xd0] sm:$0xff]
    %v8228 = vld [vmem:[#allocation50 + $0xd8] sm:$0xff]
    %v8229 = vld [vmem:[#allocation50 + $0xe0] sm:$0xff]
    %v8230 = vld [vmem:[#allocation50 + $0xe8] sm:$0xff]
    %v8231 = vld [vmem:[#allocation50 + $0xf0] sm:$0xff]
    %v8232 = vld [vmem:[#allocation50 + $0xf8] sm:$0xff]
    %v8233 = vld [vmem:[#allocation50 + $0x100] sm:$0xff]
    %v8234 = vld [vmem:[#allocation50 + $0x108] sm:$0xff]
    %v8235 = vld [vmem:[#allocation50 + $0x110] sm:$0xff]
    %v8236 = vld [vmem:[#allocation50 + $0x118] sm:$0xff]
    %v8237 = vld [vmem:[#allocation50 + $0x120] sm:$0xff]
    %v8238 = vld [vmem:[#allocation50 + $0x128] sm:$0xff]
    %v8239 = vld [vmem:[#allocation50 + $0x130] sm:$0xff]
    %v8240 = vld [vmem:[#allocation50 + $0x138] sm:$0xff]
    %v8241 = vld [vmem:[#allocation50 + $0x140] sm:$0xff]
    %v8242 = vld [vmem:[#allocation50 + $0x148] sm:$0xff]
    %v8243 = vld [vmem:[#allocation50 + $0x150] sm:$0xff]
    %v8244 = vld [vmem:[#allocation50 + $0x158] sm:$0xff]
    %v8245 = vld [vmem:[#allocation50 + $0x160] sm:$0xff]
    %v8246 = vld [vmem:[#allocation50 + $0x168] sm:$0xff]
    %v8247 = vld [vmem:[#allocation50 + $0x170] sm:$0xff]
    %v8248 = vld [vmem:[#allocation50 + $0x178] sm:$0xff]
    %v8249 = vld [vmem:[#allocation50 + $0x180] sm:$0xff]
    %v8250 = vld [vmem:[#allocation50 + $0x188] sm:$0xff]
    %v8251 = vld [vmem:[#allocation50 + $0x190] sm:$0xff]
    %v8252 = vld [vmem:[#allocation50 + $0x198] sm:$0xff]
    %v8253 = vld [vmem:[#allocation50 + $0x1a0] sm:$0xff]
    %v8254 = vld [vmem:[#allocation50 + $0x1a8] sm:$0xff]
    %v8255 = vld [vmem:[#allocation50 + $0x1b0] sm:$0xff]
    %v8256 = vld [vmem:[#allocation50 + $0x1b8] sm:$0xff]
    %v8257 = vld [vmem:[#allocation50 + $0x1c0] sm:$0xff]
    %v8258 = vld [vmem:[#allocation50 + $0x1c8] sm:$0xff]
    %v8259 = vld [vmem:[#allocation50 + $0x1d0] sm:$0xff]
    %v8260 = vld [vmem:[#allocation50 + $0x1d8] sm:$0xff]
    %v8261 = vld [vmem:[#allocation50 + $0x1e0] sm:$0xff]
    %v8262 = vld [vmem:[#allocation50 + $0x1e8] sm:$0xff]
    %v8263 = vld [vmem:[#allocation50 + $0x1f0] sm:$0xff]
    %v8264 = vld [vmem:[#allocation50 + $0x1f8] sm:$0xff]
    %v8265 = vrot.slane %v8199, 4
    %v8266 = vadd.f32 %v8199, %v8265
    %v8267 = vrot.slane %v8266, 2
    %v8268 = vadd.f32 %v8266, %v8267
    %v8269 = vrot.slane %v8268, 1
    %v8270 = vadd.f32 %v8268, %v8269
    %v8271 = vrot.slane %v8200, 4
    %v8272 = vadd.f32 %v8200, %v8271
    %v8273 = vrot.slane %v8272, 2
    %v8274 = vadd.f32 %v8272, %v8273
    %v8275 = vrot.slane %v8274, 1
    %v8276 = vadd.f32 %v8274, %v8275
    %8277 = vmatprep.subr.mxu0 %v8202
    %8278 = vmatpush1.msra.mxu0 %v8201
    %8279 = vmatprep.subr.mxu0 %v8204
    %8280 = vmatpush1.msra.mxu0 %v8203
    %8281 = vmatprep.subr.mxu0 %v8206
    %8282 = vmatpush1.msra.mxu0 %v8205
    %8283 = vmatprep.subr.mxu0 %v8208
    %8284 = vmatpush1.msra.mxu0 %v8207
    %8285 = vmatprep.subr.mxu0 %v8210
    %8286 = vmatpush1.msra.mxu0 %v8209
    %8287 = vmatprep.subr.mxu0 %v8212
    %8288 = vmatpush1.msra.mxu0 %v8211
    %8289 = vmatprep.subr.mxu0 %v8214
    %8290 = vmatpush1.msra.mxu0 %v8213
    %8291 = vmatprep.subr.mxu0 %v8216
    %8292 = vmatpush1.msra.mxu0 %v8215
    %8293 = vmatprep.subr.mxu0 %v8218
    %8294 = vmatpush1.msra.mxu0 %v8217
    %8295 = vmatprep.subr.mxu0 %v8220
    %8296 = vmatpush1.msra.mxu0 %v8219
    %8297 = vmatprep.subr.mxu0 %v8222
    %8298 = vmatpush1.msra.mxu0 %v8221
    %8299 = vmatprep.subr.mxu0 %v8224
    %8300 = vmatpush1.msra.mxu0 %v8223
    %8301 = vmatprep.subr.mxu0 %v8226
    %8302 = vmatpush1.msra.mxu0 %v8225
    %8303 = vmatprep.subr.mxu0 %v8228
    %8304 = vmatpush1.msra.mxu0 %v8227
    %8305 = vmatprep.subr.mxu0 %v8230
    %8306 = vmatpush1.msra.mxu0 %v8229
    %8307 = vmatprep.subr.mxu0 %v8232
    %8308 = vmatpush1.msra.mxu0 %v8231
    %8309 = vmatprep.subr.mxu0 %v8234
    %8310 = vmatpush1.msra.mxu0 %v8233
    %8311 = vmatprep.subr.mxu0 %v8236
    %8312 = vmatpush1.msra.mxu0 %v8235
    %8313 = vmatprep.subr.mxu0 %v8238
    %8314 = vmatpush1.msra.mxu0 %v8237
    %8315 = vmatprep.subr.mxu0 %v8240
    %8316 = vmatpush1.msra.mxu0 %v8239
    %8317 = vmatprep.subr.mxu0 %v8242
    %8318 = vmatpush1.msra.mxu0 %v8241
    %8319 = vmatprep.subr.mxu0 %v8244
    %8320 = vmatpush1.msra.mxu0 %v8243
    %8321 = vmatprep.subr.mxu0 %v8246
    %8322 = vmatpush1.msra.mxu0 %v8245
    %8323 = vmatprep.subr.mxu0 %v8248
    %8324 = vmatpush1.msra.mxu0 %v8247
    %8325 = vmatprep.subr.mxu0 %v8250
    %8326 = vmatpush1.msra.mxu0 %v8249
    %8327 = vmatprep.subr.mxu0 %v8252
    %8328 = vmatpush1.msra.mxu0 %v8251
    %8329 = vmatprep.subr.mxu0 %v8254
    %8330 = vmatpush1.msra.mxu0 %v8253
    %8331 = vmatprep.subr.mxu0 %v8256
    %8332 = vmatpush1.msra.mxu0 %v8255
    %8333 = vmatprep.subr.mxu0 %v8258
    %8334 = vmatpush1.msra.mxu0 %v8257
    %8335 = vmatprep.subr.mxu0 %v8260
    %8336 = vmatpush1.msra.mxu0 %v8259
    %8337 = vmatprep.subr.mxu0 %v8262
    %8338 = vmatpush1.msra.mxu0 %v8261
    %8339 = vmatprep.subr.mxu0 %v8264
    %8340 = vmatpush1.msra.mxu0 %v8263
    %8341 = vmatprep.mubr.f32.mxu0 %v8276
    %8342 = vmatmul.mubr.f32.gmra.mrb[0].mxu0 %v8270
    %v8343 = vpop.f32.mrb[0].mxu0
    %v8344 = vadd.f32 0.0, %v8343
    %v8345 = vpop.f32.mrb[0].mxu0
    %v8346 = vadd.f32 0.0, %v8345
    %8347 = vdwg.mxu0
    %v8348 = vlaneseq
    %v8349 = vshrl.u32 %v8348, 7
    %v8350 = vsub.s32 0, %v8349
    %v8351 = vrot.slane %v8344, %v8350
    %v8352 = vlaneseq
    %v8353 = vshrl.u32 %v8352, 7
    %v8354 = vsub.s32 0, %v8353
    %v8355 = vrot.slane %v8346, %v8354
    %v8356 = vsub.f32 %v8199, %v8351
    %v8357 = vsub.f32 %v8200, %v8355
    %v8358 = vmul.f32 %v8356, %v8356
    %v8359 = vmul.f32 %v8357, %v8357
    %v8360 = vrot.slane %v8358, 4
    %v8361 = vadd.f32 %v8358, %v8360
    %v8362 = vrot.slane %v8361, 2
    %v8363 = vadd.f32 %v8361, %v8362
    %v8364 = vrot.slane %v8363, 1
    %v8365 = vadd.f32 %v8363, %v8364
    %v8366 = vrot.slane %v8359, 4
    %v8367 = vadd.f32 %v8359, %v8366
    %v8368 = vrot.slane %v8367, 2
    %v8369 = vadd.f32 %v8367, %v8368
    %v8370 = vrot.slane %v8369, 1
    %v8371 = vadd.f32 %v8369, %v8370
    %8372 = vmatprep.subr.mxu0 %v8202
    %8373 = vmatpush1.msra.mxu0 %v8201
    %8374 = vmatprep.subr.mxu0 %v8204
    %8375 = vmatpush1.msra.mxu0 %v8203
    %8376 = vmatprep.subr.mxu0 %v8206
    %8377 = vmatpush1.msra.mxu0 %v8205
    %8378 = vmatprep.subr.mxu0 %v8208
    %8379 = vmatpush1.msra.mxu0 %v8207
    %8380 = vmatprep.subr.mxu0 %v8210
    %8381 = vmatpush1.msra.mxu0 %v8209
    %8382 = vmatprep.subr.mxu0 %v8212
    %8383 = vmatpush1.msra.mxu0 %v8211
    %8384 = vmatprep.subr.mxu0 %v8214
    %8385 = vmatpush1.msra.mxu0 %v8213
    %8386 = vmatprep.subr.mxu0 %v8216
    %8387 = vmatpush1.msra.mxu0 %v8215
    %8388 = vmatprep.subr.mxu0 %v8218
    %8389 = vmatpush1.msra.mxu0 %v8217
    %8390 = vmatprep.subr.mxu0 %v8220
    %8391 = vmatpush1.msra.mxu0 %v8219
    %8392 = vmatprep.subr.mxu0 %v8222
    %8393 = vmatpush1.msra.mxu0 %v8221
    %8394 = vmatprep.subr.mxu0 %v8224
    %8395 = vmatpush1.msra.mxu0 %v8223
    %8396 = vmatprep.subr.mxu0 %v8226
    %8397 = vmatpush1.msra.mxu0 %v8225
    %8398 = vmatprep.subr.mxu0 %v8228
    %8399 = vmatpush1.msra.mxu0 %v8227
    %8400 = vmatprep.subr.mxu0 %v8230
    %8401 = vmatpush1.msra.mxu0 %v8229
    %8402 = vmatprep.subr.mxu0 %v8232
    %8403 = vmatpush1.msra.mxu0 %v8231
    %8404 = vmatprep.subr.mxu0 %v8234
    %8405 = vmatpush1.msra.mxu0 %v8233
    %8406 = vmatprep.subr.mxu0 %v8236
    %8407 = vmatpush1.msra.mxu0 %v8235
    %8408 = vmatprep.subr.mxu0 %v8238
    %8409 = vmatpush1.msra.mxu0 %v8237
    %8410 = vmatprep.subr.mxu0 %v8240
    %8411 = vmatpush1.msra.mxu0 %v8239
    %8412 = vmatprep.subr.mxu0 %v8242
    %8413 = vmatpush1.msra.mxu0 %v8241
    %8414 = vmatprep.subr.mxu0 %v8244
    %8415 = vmatpush1.msra.mxu0 %v8243
    %8416 = vmatprep.subr.mxu0 %v8246
    %8417 = vmatpush1.msra.mxu0 %v8245
    %8418 = vmatprep.subr.mxu0 %v8248
    %8419 = vmatpush1.msra.mxu0 %v8247
    %8420 = vmatprep.subr.mxu0 %v8250
    %8421 = vmatpush1.msra.mxu0 %v8249
    %8422 = vmatprep.subr.mxu0 %v8252
    %8423 = vmatpush1.msra.mxu0 %v8251
    %8424 = vmatprep.subr.mxu0 %v8254
    %8425 = vmatpush1.msra.mxu0 %v8253
    %8426 = vmatprep.subr.mxu0 %v8256
    %8427 = vmatpush1.msra.mxu0 %v8255
    %8428 = vmatprep.subr.mxu0 %v8258
    %8429 = vmatpush1.msra.mxu0 %v8257
    %8430 = vmatprep.subr.mxu0 %v8260
    %8431 = vmatpush1.msra.mxu0 %v8259
    %8432 = vmatprep.subr.mxu0 %v8262
    %8433 = vmatpush1.msra.mxu0 %v8261
    %8434 = vmatprep.subr.mxu0 %v8264
    %8435 = vmatpush1.msra.mxu0 %v8263
    %8436 = vmatprep.mubr.f32.mxu0 %v8371
    %8437 = vmatmul.mubr.f32.gmra.mrb[0].mxu0 %v8365
    %v8438 = vpop.f32.mrb[0].mxu0
    %v8439 = vadd.f32 1e-05, %v8438
    %v8440 = vpop.f32.mrb[0].mxu0
    %v8441 = vadd.f32 1e-05, %v8440
    %8442 = vdwg.mxu0
    %v8443 = vrsqrt.pop %v8439
    %v8444 = vrsqrt.pop %v8441
    %v8445 = vld [vmem:[#allocation34] sm:$0x3]
    %v8447 = vlaneseq
    %v8448 = vshrl.u32 %v8447, 7
    %v8449 = vsub.s32 0, %v8448
    %v8450 = vrot.slane %v8445, %v8449
    %v8451 = vlaneseq
    %v8452 = vshrl.u32 %v8451, 7
    %v8453 = vsub.s32 1, %v8452
    %v8454 = vrot.slane %v8445, %v8453
    %v8457 = vmul.f32 %v8443, %v8450
    %v8458 = vmul.f32 %v8444, %v8454
    %v8459 = vlaneseq
    %v8460 = vshrl.u32 %v8459, 7
    %v8461 = vsub.s32 0, %v8460
    %v8462 = vrot.slane %v8457, %v8461
    %v8463 = vlaneseq
    %v8464 = vshrl.u32 %v8463, 7
    %v8465 = vsub.s32 0, %v8464
    %v8466 = vrot.slane %v8458, %v8465
    %v8467 = vmul.f32 %v8356, %v8462
    %v8468 = vmul.f32 %v8357, %v8466
    %v8469 = vld [vmem:[#allocation32] sm:$0x3]
    %v8471 = vlaneseq
    %v8472 = vshrl.u32 %v8471, 7
    %v8473 = vsub.s32 0, %v8472
    %v8474 = vrot.slane %v8469, %v8473
    %v8475 = vlaneseq
    %v8476 = vshrl.u32 %v8475, 7
    %v8477 = vsub.s32 1, %v8476
    %v8478 = vrot.slane %v8469, %v8477
    %v8481 = vadd.f32 %v8467, %v8474
    %v8482 = vadd.f32 %v8468, %v8478
    %v8483 = vmax.f32 %v8481, 0.0
    %v8484 = vmax.f32 %v8482, 0.0
    %v8485 = vld [vmem:[#allocation43] sm:$0xff]
    %vm8486 = vcmask 64512
    %v8488 = vsel %vm8486, %v8485, 0
    %8490 = vmatprep.subr.mxu0 %v8484
    %8491 = vmatpush1.msra.mxu0 %v8483
    %8492 = vmatprep.subr.mxu0 0.0
    %8493 = vmatpush1.msra.mxu0 0.0
    %8494 = vmatprep.subr.mxu0 0.0
    %8495 = vmatpush1.msra.mxu0 0.0
    %8496 = vmatprep.subr.mxu0 0.0
    %8497 = vmatpush1.msra.mxu0 0.0
    %8498 = vmatprep.subr.mxu0 0.0
    %8499 = vmatpush1.msra.mxu0 0.0
    %8500 = vmatprep.subr.mxu0 0.0
    %8501 = vmatpush1.msra.mxu0 0.0
    %8502 = vmatprep.subr.mxu0 0.0
    %8503 = vmatpush1.msra.mxu0 0.0
    %8504 = vmatprep.subr.mxu0 0.0
    %8505 = vmatpush1.msra.mxu0 0.0
    %8506 = vmatprep.subr.mxu0 0.0
    %8507 = vmatpush1.msra.mxu0 0.0
    %8508 = vmatprep.subr.mxu0 0.0
    %8509 = vmatpush1.msra.mxu0 0.0
    %8510 = vmatprep.subr.mxu0 0.0
    %8511 = vmatpush1.msra.mxu0 0.0
    %8512 = vmatprep.subr.mxu0 0.0
    %8513 = vmatpush1.msra.mxu0 0.0
    %8514 = vmatprep.subr.mxu0 0.0
    %8515 = vmatpush1.msra.mxu0 0.0
    %8516 = vmatprep.subr.mxu0 0.0
    %8517 = vmatpush1.msra.mxu0 0.0
    %8518 = vmatprep.subr.mxu0 0.0
    %8519 = vmatpush1.msra.mxu0 0.0
    %8520 = vmatprep.subr.mxu0 0.0
    %8521 = vmatpush1.msra.mxu0 0.0
    %8522 = vmatprep.subr.mxu0 0.0
    %8523 = vmatpush1.msra.mxu0 0.0
    %8524 = vmatprep.subr.mxu0 0.0
    %8525 = vmatpush1.msra.mxu0 0.0
    %8526 = vmatprep.subr.mxu0 0.0
    %8527 = vmatpush1.msra.mxu0 0.0
    %8528 = vmatprep.subr.mxu0 0.0
    %8529 = vmatpush1.msra.mxu0 0.0
    %8530 = vmatprep.subr.mxu0 0.0
    %8531 = vmatpush1.msra.mxu0 0.0
    %8532 = vmatprep.subr.mxu0 0.0
    %8533 = vmatpush1.msra.mxu0 0.0
    %8534 = vmatprep.subr.mxu0 0.0
    %8535 = vmatpush1.msra.mxu0 0.0
    %8536 = vmatprep.subr.mxu0 0.0
    %8537 = vmatpush1.msra.mxu0 0.0
    %8538 = vmatprep.subr.mxu0 0.0
    %8539 = vmatpush1.msra.mxu0 0.0
    %8540 = vmatprep.subr.mxu0 0.0
    %8541 = vmatpush1.msra.mxu0 0.0
    %8542 = vmatprep.subr.mxu0 0.0
    %8543 = vmatpush1.msra.mxu0 0.0
    %8544 = vmatprep.subr.mxu0 0.0
    %8545 = vmatpush1.msra.mxu0 0.0
    %8546 = vmatprep.subr.mxu0 0.0
    %8547 = vmatpush1.msra.mxu0 0.0
    %8548 = vmatprep.subr.mxu0 0.0
    %8549 = vmatpush1.msra.mxu0 0.0
    %8550 = vmatprep.subr.mxu0 0.0
    %8551 = vmatpush1.msra.mxu0 0.0
    %8552 = vmatprep.subr.mxu0 0.0
    %8553 = vmatpush1.msra.mxu0 0.0
    %8554 = vmatprep.mubr.f32.mxu0 0.0
    %8555 = vmatmul.mubr.f32.gmra.mrb[0].mxu0 %v8488
    %v8556 = vpop.f32.mrb[0].mxu0
    %v8557 = vadd.f32 0.0, %v8556
    %v8558 = vpop.f32.mrb[0].mxu0
    %v8559 = vadd.f32 0.0, %v8558
    %8560 = vdwg.mxu0
    %v8561 = vpack.c.bf16 %v8557, %v8557
    %v8562 = vpack.c.bf16 %v8559, %v8559
    %v8563 = vld [vmem:[#allocation41] sm:$0xff]
    %v8564 = vld [vmem:[#allocation41 + $0x8] sm:$0xff]
    %v8565 = vld [vmem:[#allocation41 + $0x10] sm:$0xff]
    %v8566 = vld [vmem:[#allocation41 + $0x18] sm:$0xff]
    %v8567 = vld [vmem:[#allocation41 + $0x20] sm:$0xff]
    %v8568 = vld [vmem:[#allocation41 + $0x28] sm:$0xff]
    %v8569 = vld [vmem:[#allocation41 + $0x30] sm:$0xff]
    %v8570 = vld [vmem:[#allocation41 + $0x38] sm:$0xff]
    %v8571 = vld [vmem:[#allocation41 + $0x40] sm:$0xff]
    %v8572 = vld [vmem:[#allocation41 + $0x48] sm:$0xff]
    %v8573 = vld [vmem:[#allocation41 + $0x50] sm:$0xff]
    %v8574 = vld [vmem:[#allocation41 + $0x58] sm:$0xff]
    %v8575 = vld [vmem:[#allocation41 + $0x60] sm:$0xff]
    %v8576 = vld [vmem:[#allocation41 + $0x68] sm:$0xff]
    %v8577 = vld [vmem:[#allocation41 + $0x70] sm:$0xff]
    %v8578 = vld [vmem:[#allocation41 + $0x78] sm:$0xff]
    %v8579 = vld [vmem:[#allocation41 + $0x80] sm:$0xff]
    %v8580 = vld [vmem:[#allocation41 + $0x88] sm:$0xff]
    %v8581 = vld [vmem:[#allocation41 + $0x90] sm:$0xff]
    %v8582 = vld [vmem:[#allocation41 + $0x98] sm:$0xff]
    %v8583 = vld [vmem:[#allocation41 + $0xa0] sm:$0xff]
    %v8584 = vld [vmem:[#allocation41 + $0xa8] sm:$0xff]
    %v8585 = vld [vmem:[#allocation41 + $0xb0] sm:$0xff]
    %v8586 = vld [vmem:[#allocation41 + $0xb8] sm:$0xff]
    %v8587 = vld [vmem:[#allocation41 + $0xc0] sm:$0xff]
    %v8588 = vld [vmem:[#allocation41 + $0xc8] sm:$0xff]
    %v8589 = vld [vmem:[#allocation41 + $0xd0] sm:$0xff]
    %v8590 = vld [vmem:[#allocation41 + $0xd8] sm:$0xff]
    %v8591 = vld [vmem:[#allocation41 + $0xe0] sm:$0xff]
    %v8592 = vld [vmem:[#allocation41 + $0xe8] sm:$0xff]
    %v8593 = vld [vmem:[#allocation41 + $0xf0] sm:$0xff]
    %v8594 = vld [vmem:[#allocation41 + $0xf8] sm:$0xff]
    %s8595 = scalar_lea.vmem [#allocation43], 8
    %v8596 = vld [vmem:[%s8595] sm:$0xff]
    %v8598 = vsel %vm8486, %v8596, 0
    %8600 = vmatprep.subr.mxu0 %v8484
    %8601 = vmatpush1.msra.mxu0 %v8483
    %8602 = vmatprep.subr.mxu0 0.0
    %8603 = vmatpush1.msra.mxu0 0.0
    %8604 = vmatprep.subr.mxu0 0.0
    %8605 = vmatpush1.msra.mxu0 0.0
    %8606 = vmatprep.subr.mxu0 0.0
    %8607 = vmatpush1.msra.mxu0 0.0
    %8608 = vmatprep.subr.mxu0 0.0
    %8609 = vmatpush1.msra.mxu0 0.0
    %8610 = vmatprep.subr.mxu0 0.0
    %8611 = vmatpush1.msra.mxu0 0.0
    %8612 = vmatprep.subr.mxu0 0.0
    %8613 = vmatpush1.msra.mxu0 0.0
    %8614 = vmatprep.subr.mxu0 0.0
    %8615 = vmatpush1.msra.mxu0 0.0
    %8616 = vmatprep.subr.mxu0 0.0
    %8617 = vmatpush1.msra.mxu0 0.0
    %8618 = vmatprep.subr.mxu0 0.0
    %8619 = vmatpush1.msra.mxu0 0.0
    %8620 = vmatprep.subr.mxu0 0.0
    %8621 = vmatpush1.msra.mxu0 0.0
    %8622 = vmatprep.subr.mxu0 0.0
    %8623 = vmatpush1.msra.mxu0 0.0
    %8624 = vmatprep.subr.mxu0 0.0
    %8625 = vmatpush1.msra.mxu0 0.0
    %8626 = vmatprep.subr.mxu0 0.0
    %8627 = vmatpush1.msra.mxu0 0.0
    %8628 = vmatprep.subr.mxu0 0.0
    %8629 = vmatpush1.msra.mxu0 0.0
    %8630 = vmatprep.subr.mxu0 0.0
    %8631 = vmatpush1.msra.mxu0 0.0
    %8632 = vmatprep.subr.mxu0 0.0
    %8633 = vmatpush1.msra.mxu0 0.0
    %8634 = vmatprep.subr.mxu0 0.0
    %8635 = vmatpush1.msra.mxu0 0.0
    %8636 = vmatprep.subr.mxu0 0.0
    %8637 = vmatpush1.msra.mxu0 0.0
    %8638 = vmatprep.subr.mxu0 0.0
    %8639 = vmatpush1.msra.mxu0 0.0
    %8640 = vmatprep.subr.mxu0 0.0
    %8641 = vmatpush1.msra.mxu0 0.0
    %8642 = vmatprep.subr.mxu0 0.0
    %8643 = vmatpush1.msra.mxu0 0.0
    %8644 = vmatprep.subr.mxu0 0.0
    %8645 = vmatpush1.msra.mxu0 0.0
    %8646 = vmatprep.subr.mxu0 0.0
    %8647 = vmatpush1.msra.mxu0 0.0
    %8648 = vmatprep.subr.mxu0 0.0
    %8649 = vmatpush1.msra.mxu0 0.0
    %8650 = vmatprep.subr.mxu0 0.0
    %8651 = vmatpush1.msra.mxu0 0.0
    %8652 = vmatprep.subr.mxu0 0.0
    %8653 = vmatpush1.msra.mxu0 0.0
    %8654 = vmatprep.subr.mxu0 0.0
    %8655 = vmatpush1.msra.mxu0 0.0
    %8656 = vmatprep.subr.mxu0 0.0
    %8657 = vmatpush1.msra.mxu0 0.0
    %8658 = vmatprep.subr.mxu0 0.0
    %8659 = vmatpush1.msra.mxu0 0.0
    %8660 = vmatprep.subr.mxu0 0.0
    %8661 = vmatpush1.msra.mxu0 0.0
    %8662 = vmatprep.subr.mxu0 0.0
    %8663 = vmatpush1.msra.mxu0 0.0
    %8664 = vmatprep.mubr.f32.mxu0 0.0
    %8665 = vmatmul.mubr.f32.gmra.mrb[0].mxu0 %v8598
    %v8666 = vpop.f32.mrb[0].mxu0
    %v8667 = vadd.f32 0.0, %v8666
    %v8668 = vpop.f32.mrb[0].mxu0
    %v8669 = vadd.f32 0.0, %v8668
    %8670 = vdwg.mxu0
    %v8671 = vpack.c.bf16 %v8667, %v8667
    %v8672 = vpack.c.bf16 %v8669, %v8669
    %s8673 = scalar_lea.vmem [#allocation41], 256
    %v8674 = vld [vmem:[%s8673] sm:$0xff]
    %v8675 = vld [vmem:[%s8673 + $0x8] sm:$0xff]
    %v8676 = vld [vmem:[%s8673 + $0x10] sm:$0xff]
    %v8677 = vld [vmem:[%s8673 + $0x18] sm:$0xff]
    %v8678 = vld [vmem:[%s8673 + $0x20] sm:$0xff]
    %v8679 = vld [vmem:[%s8673 + $0x28] sm:$0xff]
    %v8680 = vld [vmem:[%s8673 + $0x30] sm:$0xff]
    %v8681 = vld [vmem:[%s8673 + $0x38] sm:$0xff]
    %v8682 = vld [vmem:[%s8673 + $0x40] sm:$0xff]
    %v8683 = vld [vmem:[%s8673 + $0x48] sm:$0xff]
    %v8684 = vld [vmem:[%s8673 + $0x50] sm:$0xff]
    %v8685 = vld [vmem:[%s8673 + $0x58] sm:$0xff]
    %v8686 = vld [vmem:[%s8673 + $0x60] sm:$0xff]
    %v8687 = vld [vmem:[%s8673 + $0x68] sm:$0xff]
    %v8688 = vld [vmem:[%s8673 + $0x70] sm:$0xff]
    %v8689 = vld [vmem:[%s8673 + $0x78] sm:$0xff]
    %v8690 = vld [vmem:[%s8673 + $0x80] sm:$0xff]
    %v8691 = vld [vmem:[%s8673 + $0x88] sm:$0xff]
    %v8692 = vld [vmem:[%s8673 + $0x90] sm:$0xff]
    %v8693 = vld [vmem:[%s8673 + $0x98] sm:$0xff]
    %v8694 = vld [vmem:[%s8673 + $0xa0] sm:$0xff]
    %v8695 = vld [vmem:[%s8673 + $0xa8] sm:$0xff]
    %v8696 = vld [vmem:[%s8673 + $0xb0] sm:$0xff]
    %v8697 = vld [vmem:[%s8673 + $0xb8] sm:$0xff]
    %v8698 = vld [vmem:[%s8673 + $0xc0] sm:$0xff]
    %v8699 = vld [vmem:[%s8673 + $0xc8] sm:$0xff]
    %v8700 = vld [vmem:[%s8673 + $0xd0] sm:$0xff]
    %v8701 = vld [vmem:[%s8673 + $0xd8] sm:$0xff]
    %v8702 = vld [vmem:[%s8673 + $0xe0] sm:$0xff]
    %v8703 = vld [vmem:[%s8673 + $0xe8] sm:$0xff]
    %v8704 = vld [vmem:[%s8673 + $0xf0] sm:$0xff]
    %v8705 = vld [vmem:[%s8673 + $0xf8] sm:$0xff]
    %v8738 = vunpack.c.l.b16 %v8674
    %v8739 = vunpack.c.h.b16 %v8674
    %v8740 = vunpack.c.l.b16 %v8675
    %v8741 = vunpack.c.h.b16 %v8675
    %v8742 = vunpack.c.l.b16 %v8676
    %v8743 = vunpack.c.h.b16 %v8676
    %v8744 = vunpack.c.l.b16 %v8677
    %v8745 = vunpack.c.h.b16 %v8677
    %v8746 = vunpack.c.l.b16 %v8678
    %v8747 = vunpack.c.h.b16 %v8678
    %v8748 = vunpack.c.l.b16 %v8679
    %v8749 = vunpack.c.h.b16 %v8679
    %v8750 = vunpack.c.l.b16 %v8680
    %v8751 = vunpack.c.h.b16 %v8680
    %v8752 = vunpack.c.l.b16 %v8681
    %v8753 = vunpack.c.h.b16 %v8681
    %v8754 = vunpack.c.l.b16 %v8682
    %v8755 = vunpack.c.h.b16 %v8682
    %v8756 = vunpack.c.l.b16 %v8683
    %v8757 = vunpack.c.h.b16 %v8683
    %v8758 = vunpack.c.l.b16 %v8684
    %v8759 = vunpack.c.h.b16 %v8684
    %v8760 = vunpack.c.l.b16 %v8685
    %v8761 = vunpack.c.h.b16 %v8685
    %v8762 = vunpack.c.l.b16 %v8686
    %v8763 = vunpack.c.h.b16 %v8686
    %v8764 = vunpack.c.l.b16 %v8687
    %v8765 = vunpack.c.h.b16 %v8687
    %v8766 = vunpack.c.l.b16 %v8688
    %v8767 = vunpack.c.h.b16 %v8688
    %v8768 = vunpack.c.l.b16 %v8689
    %v8769 = vunpack.c.h.b16 %v8689
    %v8770 = vunpack.c.l.b16 %v8690
    %v8771 = vunpack.c.h.b16 %v8690
    %v8772 = vunpack.c.l.b16 %v8691
    %v8773 = vunpack.c.h.b16 %v8691
    %v8774 = vunpack.c.l.b16 %v8692
    %v8775 = vunpack.c.h.b16 %v8692
    %v8776 = vunpack.c.l.b16 %v8693
    %v8777 = vunpack.c.h.b16 %v8693
    %v8778 = vunpack.c.l.b16 %v8694
    %v8779 = vunpack.c.h.b16 %v8694
    %v8780 = vunpack.c.l.b16 %v8695
    %v8781 = vunpack.c.h.b16 %v8695
    %v8782 = vunpack.c.l.b16 %v8696
    %v8783 = vunpack.c.h.b16 %v8696
    %v8784 = vunpack.c.l.b16 %v8697
    %v8785 = vunpack.c.h.b16 %v8697
    %v8786 = vunpack.c.l.b16 %v8698
    %v8787 = vunpack.c.h.b16 %v8698
    %v8788 = vunpack.c.l.b16 %v8699
    %v8789 = vunpack.c.h.b16 %v8699
    %v8790 = vunpack.c.l.b16 %v8700
    %v8791 = vunpack.c.h.b16 %v8700
    %v8792 = vunpack.c.l.b16 %v8701
    %v8793 = vunpack.c.h.b16 %v8701
    %v8794 = vunpack.c.l.b16 %v8702
    %v8795 = vunpack.c.h.b16 %v8702
    %v8796 = vunpack.c.l.b16 %v8703
    %v8797 = vunpack.c.h.b16 %v8703
    %v8798 = vunpack.c.l.b16 %v8704
    %v8799 = vunpack.c.h.b16 %v8704
    %v8800 = vunpack.c.l.b16 %v8705
    %v8801 = vunpack.c.h.b16 %v8705
    %v8802 = vpack.c.b16 %v8740, %v8738
    %v8803 = vpack.c.b16 %v8741, %v8739
    %v8804 = vpack.c.b16 %v8744, %v8742
    %v8805 = vpack.c.b16 %v8745, %v8743
    %v8806 = vpack.c.b16 %v8748, %v8746
    %v8807 = vpack.c.b16 %v8749, %v8747
    %v8808 = vpack.c.b16 %v8752, %v8750
    %v8809 = vpack.c.b16 %v8753, %v8751
    %v8810 = vpack.c.b16 %v8756, %v8754
    %v8811 = vpack.c.b16 %v8757, %v8755
    %v8812 = vpack.c.b16 %v8760, %v8758
    %v8813 = vpack.c.b16 %v8761, %v8759
    %v8814 = vpack.c.b16 %v8764, %v8762
    %v8815 = vpack.c.b16 %v8765, %v8763
    %v8816 = vpack.c.b16 %v8768, %v8766
    %v8817 = vpack.c.b16 %v8769, %v8767
    %v8818 = vpack.c.b16 %v8772, %v8770
    %v8819 = vpack.c.b16 %v8773, %v8771
    %v8820 = vpack.c.b16 %v8776, %v8774
    %v8821 = vpack.c.b16 %v8777, %v8775
    %v8822 = vpack.c.b16 %v8780, %v8778
    %v8823 = vpack.c.b16 %v8781, %v8779
    %v8824 = vpack.c.b16 %v8784, %v8782
    %v8825 = vpack.c.b16 %v8785, %v8783
    %v8826 = vpack.c.b16 %v8788, %v8786
    %v8827 = vpack.c.b16 %v8789, %v8787
    %v8828 = vpack.c.b16 %v8792, %v8790
    %v8829 = vpack.c.b16 %v8793, %v8791
    %v8830 = vpack.c.b16 %v8796, %v8794
    %v8831 = vpack.c.b16 %v8797, %v8795
    %v8832 = vpack.c.b16 %v8800, %v8798
    %v8833 = vpack.c.b16 %v8801, %v8799
    %8866 = vmatprep.subr.bf16.mxu0 %v8803
    %8867 = vmatpush1.bf16.msra.mxu0 %v8802
    %8868 = vmatprep.subr.bf16.mxu0 %v8805
    %8869 = vmatpush1.bf16.msra.mxu0 %v8804
    %8870 = vmatprep.subr.bf16.mxu0 %v8807
    %8871 = vmatpush1.bf16.msra.mxu0 %v8806
    %8872 = vmatprep.subr.bf16.mxu0 %v8809
    %8873 = vmatpush1.bf16.msra.mxu0 %v8808
    %8874 = vmatprep.subr.bf16.mxu0 %v8811
    %8875 = vmatpush1.bf16.msra.mxu0 %v8810
    %8876 = vmatprep.subr.bf16.mxu0 %v8813
    %8877 = vmatpush1.bf16.msra.mxu0 %v8812
    %8878 = vmatprep.subr.bf16.mxu0 %v8815
    %8879 = vmatpush1.bf16.msra.mxu0 %v8814
    %8880 = vmatprep.subr.bf16.mxu0 %v8817
    %8881 = vmatpush1.bf16.msra.mxu0 %v8816
    %8882 = vmatprep.subr.bf16.mxu0 %v8819
    %8883 = vmatpush1.bf16.msra.mxu0 %v8818
    %8884 = vmatprep.subr.bf16.mxu0 %v8821
    %8885 = vmatpush1.bf16.msra.mxu0 %v8820
    %8886 = vmatprep.subr.bf16.mxu0 %v8823
    %8887 = vmatpush1.bf16.msra.mxu0 %v8822
    %8888 = vmatprep.subr.bf16.mxu0 %v8825
    %8889 = vmatpush1.bf16.msra.mxu0 %v8824
    %8890 = vmatprep.subr.bf16.mxu0 %v8827
    %8891 = vmatpush1.bf16.msra.mxu0 %v8826
    %8892 = vmatprep.subr.bf16.mxu0 %v8829
    %8893 = vmatpush1.bf16.msra.mxu0 %v8828
    %8894 = vmatprep.subr.bf16.mxu0 %v8831
    %8895 = vmatpush1.bf16.msra.mxu0 %v8830
    %8896 = vmatprep.subr.bf16.mxu0 %v8833
    %8897 = vmatpush1.bf16.msra.mxu0 %v8832
    %8898 = vmatprep.mubr.bf16.mxu0 %v8672
    %8899 = vmatmul.mubr.bf16.gmra.mrb[0].mxu0 %v8671
    %v8900 = vpop.f32.mrb[0].mxu0
    %v8901 = vadd.f32 0.0, %v8900
    %v8902 = vpop.f32.mrb[0].mxu0
    %v8903 = vadd.f32 0.0, %v8902
    %v8904 = vpop.f32.mrb[0].mxu0
    %v8905 = vpop.f32.mrb[0].mxu0
    %8906 = vdwg.mxu0
    %v8939 = vunpack.c.l.b16 %v8563
    %v8940 = vunpack.c.h.b16 %v8563
    %v8941 = vunpack.c.l.b16 %v8564
    %v8942 = vunpack.c.h.b16 %v8564
    %v8943 = vunpack.c.l.b16 %v8565
    %v8944 = vunpack.c.h.b16 %v8565
    %v8945 = vunpack.c.l.b16 %v8566
    %v8946 = vunpack.c.h.b16 %v8566
    %v8947 = vunpack.c.l.b16 %v8567
    %v8948 = vunpack.c.h.b16 %v8567
    %v8949 = vunpack.c.l.b16 %v8568
    %v8950 = vunpack.c.h.b16 %v8568
    %v8951 = vunpack.c.l.b16 %v8569
    %v8952 = vunpack.c.h.b16 %v8569
    %v8953 = vunpack.c.l.b16 %v8570
    %v8954 = vunpack.c.h.b16 %v8570
    %v8955 = vunpack.c.l.b16 %v8571
    %v8956 = vunpack.c.h.b16 %v8571
    %v8957 = vunpack.c.l.b16 %v8572
    %v8958 = vunpack.c.h.b16 %v8572
    %v8959 = vunpack.c.l.b16 %v8573
    %v8960 = vunpack.c.h.b16 %v8573
    %v8961 = vunpack.c.l.b16 %v8574
    %v8962 = vunpack.c.h.b16 %v8574
    %v8963 = vunpack.c.l.b16 %v8575
    %v8964 = vunpack.c.h.b16 %v8575
    %v8965 = vunpack.c.l.b16 %v8576
    %v8966 = vunpack.c.h.b16 %v8576
    %v8967 = vunpack.c.l.b16 %v8577
    %v8968 = vunpack.c.h.b16 %v8577
    %v8969 = vunpack.c.l.b16 %v8578
    %v8970 = vunpack.c.h.b16 %v8578
    %v8971 = vunpack.c.l.b16 %v8579
    %v8972 = vunpack.c.h.b16 %v8579
    %v8973 = vunpack.c.l.b16 %v8580
    %v8974 = vunpack.c.h.b16 %v8580
    %v8975 = vunpack.c.l.b16 %v8581
    %v8976 = vunpack.c.h.b16 %v8581
    %v8977 = vunpack.c.l.b16 %v8582
    %v8978 = vunpack.c.h.b16 %v8582
    %v8979 = vunpack.c.l.b16 %v8583
    %v8980 = vunpack.c.h.b16 %v8583
    %v8981 = vunpack.c.l.b16 %v8584
    %v8982 = vunpack.c.h.b16 %v8584
    %v8983 = vunpack.c.l.b16 %v8585
    %v8984 = vunpack.c.h.b16 %v8585
    %v8985 = vunpack.c.l.b16 %v8586
    %v8986 = vunpack.c.h.b16 %v8586
    %v8987 = vunpack.c.l.b16 %v8587
    %v8988 = vunpack.c.h.b16 %v8587
    %v8989 = vunpack.c.l.b16 %v8588
    %v8990 = vunpack.c.h.b16 %v8588
    %v8991 = vunpack.c.l.b16 %v8589
    %v8992 = vunpack.c.h.b16 %v8589
    %v8993 = vunpack.c.l.b16 %v8590
    %v8994 = vunpack.c.h.b16 %v8590
    %v8995 = vunpack.c.l.b16 %v8591
    %v8996 = vunpack.c.h.b16 %v8591
    %v8997 = vunpack.c.l.b16 %v8592
    %v8998 = vunpack.c.h.b16 %v8592
    %v8999 = vunpack.c.l.b16 %v8593
    %v9000 = vunpack.c.h.b16 %v8593
    %v9001 = vunpack.c.l.b16 %v8594
    %v9002 = vunpack.c.h.b16 %v8594
    %v9003 = vpack.c.b16 %v8941, %v8939
    %v9004 = vpack.c.b16 %v8942, %v8940
    %v9005 = vpack.c.b16 %v8945, %v8943
    %v9006 = vpack.c.b16 %v8946, %v8944
    %v9007 = vpack.c.b16 %v8949, %v8947
    %v9008 = vpack.c.b16 %v8950, %v8948
    %v9009 = vpack.c.b16 %v8953, %v8951
    %v9010 = vpack.c.b16 %v8954, %v8952
    %v9011 = vpack.c.b16 %v8957, %v8955
    %v9012 = vpack.c.b16 %v8958, %v8956
    %v9013 = vpack.c.b16 %v8961, %v8959
    %v9014 = vpack.c.b16 %v8962, %v8960
    %v9015 = vpack.c.b16 %v8965, %v8963
    %v9016 = vpack.c.b16 %v8966, %v8964
    %v9017 = vpack.c.b16 %v8969, %v8967
    %v9018 = vpack.c.b16 %v8970, %v8968
    %v9019 = vpack.c.b16 %v8973, %v8971
    %v9020 = vpack.c.b16 %v8974, %v8972
    %v9021 = vpack.c.b16 %v8977, %v8975
    %v9022 = vpack.c.b16 %v8978, %v8976
    %v9023 = vpack.c.b16 %v8981, %v8979
    %v9024 = vpack.c.b16 %v8982, %v8980
    %v9025 = vpack.c.b16 %v8985, %v8983
    %v9026 = vpack.c.b16 %v8986, %v8984
    %v9027 = vpack.c.b16 %v8989, %v8987
    %v9028 = vpack.c.b16 %v8990, %v8988
    %v9029 = vpack.c.b16 %v8993, %v8991
    %v9030 = vpack.c.b16 %v8994, %v8992
    %v9031 = vpack.c.b16 %v8997, %v8995
    %v9032 = vpack.c.b16 %v8998, %v8996
    %v9033 = vpack.c.b16 %v9001, %v8999
    %v9034 = vpack.c.b16 %v9002, %v9000
    %9067 = vmatprep.subr.bf16.mxu0 %v9004
    %9068 = vmatpush1.bf16.msra.mxu0 %v9003
    %9069 = vmatprep.subr.bf16.mxu0 %v9006
    %9070 = vmatpush1.bf16.msra.mxu0 %v9005
    %9071 = vmatprep.subr.bf16.mxu0 %v9008
    %9072 = vmatpush1.bf16.msra.mxu0 %v9007
    %9073 = vmatprep.subr.bf16.mxu0 %v9010
    %9074 = vmatpush1.bf16.msra.mxu0 %v9009
    %9075 = vmatprep.subr.bf16.mxu0 %v9012
    %9076 = vmatpush1.bf16.msra.mxu0 %v9011
    %9077 = vmatprep.subr.bf16.mxu0 %v9014
    %9078 = vmatpush1.bf16.msra.mxu0 %v9013
    %9079 = vmatprep.subr.bf16.mxu0 %v9016
    %9080 = vmatpush1.bf16.msra.mxu0 %v9015
    %9081 = vmatprep.subr.bf16.mxu0 %v9018
    %9082 = vmatpush1.bf16.msra.mxu0 %v9017
    %9083 = vmatprep.subr.bf16.mxu0 %v9020
    %9084 = vmatpush1.bf16.msra.mxu0 %v9019
    %9085 = vmatprep.subr.bf16.mxu0 %v9022
    %9086 = vmatpush1.bf16.msra.mxu0 %v9021
    %9087 = vmatprep.subr.bf16.mxu0 %v9024
    %9088 = vmatpush1.bf16.msra.mxu0 %v9023
    %9089 = vmatprep.subr.bf16.mxu0 %v9026
    %9090 = vmatpush1.bf16.msra.mxu0 %v9025
    %9091 = vmatprep.subr.bf16.mxu0 %v9028
    %9092 = vmatpush1.bf16.msra.mxu0 %v9027
    %9093 = vmatprep.subr.bf16.mxu0 %v9030
    %9094 = vmatpush1.bf16.msra.mxu0 %v9029
    %9095 = vmatprep.subr.bf16.mxu0 %v9032
    %9096 = vmatpush1.bf16.msra.mxu0 %v9031
    %9097 = vmatprep.subr.bf16.mxu0 %v9034
    %9098 = vmatpush1.bf16.msra.mxu0 %v9033
    %9099 = vmatprep.mubr.bf16.mxu0 %v8562
    %9100 = vmatmul.mubr.bf16.gmra.mrb[0].mxu0 %v8561
    %v9101 = vpop.f32.mrb[0].mxu0
    %v9102 = vadd.f32 %v8901, %v9101
    %v9103 = vpop.f32.mrb[0].mxu0
    %v9104 = vadd.f32 %v8903, %v9103
    %v9105 = vpop.f32.mrb[0].mxu0
    %v9106 = vpop.f32.mrb[0].mxu0
    %9107 = vdwg.mxu0
    %s9108 = scalar_lea.vmem [#allocation43], 16
    %v9109 = vld [vmem:[%s9108] sm:$0xff]
    %v9111 = vsel %vm8486, %v9109, 0
    %9113 = vmatprep.subr.mxu0 %v8484
    %9114 = vmatpush1.msra.mxu0 %v8483
    %9115 = vmatprep.subr.mxu0 0.0
    %9116 = vmatpush1.msra.mxu0 0.0
    %9117 = vmatprep.subr.mxu0 0.0
    %9118 = vmatpush1.msra.mxu0 0.0
    %9119 = vmatprep.subr.mxu0 0.0
    %9120 = vmatpush1.msra.mxu0 0.0
    %9121 = vmatprep.subr.mxu0 0.0
    %9122 = vmatpush1.msra.mxu0 0.0
    %9123 = vmatprep.subr.mxu0 0.0
    %9124 = vmatpush1.msra.mxu0 0.0
    %9125 = vmatprep.subr.mxu0 0.0
    %9126 = vmatpush1.msra.mxu0 0.0
    %9127 = vmatprep.subr.mxu0 0.0
    %9128 = vmatpush1.msra.mxu0 0.0
    %9129 = vmatprep.subr.mxu0 0.0
    %9130 = vmatpush1.msra.mxu0 0.0
    %9131 = vmatprep.subr.mxu0 0.0
    %9132 = vmatpush1.msra.mxu0 0.0
    %9133 = vmatprep.subr.mxu0 0.0
    %9134 = vmatpush1.msra.mxu0 0.0
    %9135 = vmatprep.subr.mxu0 0.0
    %9136 = vmatpush1.msra.mxu0 0.0
    %9137 = vmatprep.subr.mxu0 0.0
    %9138 = vmatpush1.msra.mxu0 0.0
    %9139 = vmatprep.subr.mxu0 0.0
    %9140 = vmatpush1.msra.mxu0 0.0
    %9141 = vmatprep.subr.mxu0 0.0
    %9142 = vmatpush1.msra.mxu0 0.0
    %9143 = vmatprep.subr.mxu0 0.0
    %9144 = vmatpush1.msra.mxu0 0.0
    %9145 = vmatprep.subr.mxu0 0.0
    %9146 = vmatpush1.msra.mxu0 0.0
    %9147 = vmatprep.subr.mxu0 0.0
    %9148 = vmatpush1.msra.mxu0 0.0
    %9149 = vmatprep.subr.mxu0 0.0
    %9150 = vmatpush1.msra.mxu0 0.0
    %9151 = vmatprep.subr.mxu0 0.0
    %9152 = vmatpush1.msra.mxu0 0.0
    %9153 = vmatprep.subr.mxu0 0.0
    %9154 = vmatpush1.msra.mxu0 0.0
    %9155 = vmatprep.subr.mxu0 0.0
    %9156 = vmatpush1.msra.mxu0 0.0
    %9157 = vmatprep.subr.mxu0 0.0
    %9158 = vmatpush1.msra.mxu0 0.0
    %9159 = vmatprep.subr.mxu0 0.0
    %9160 = vmatpush1.msra.mxu0 0.0
    %9161 = vmatprep.subr.mxu0 0.0
    %9162 = vmatpush1.msra.mxu0 0.0
    %9163 = vmatprep.subr.mxu0 0.0
    %9164 = vmatpush1.msra.mxu0 0.0
    %9165 = vmatprep.subr.mxu0 0.0
    %9166 = vmatpush1.msra.mxu0 0.0
    %9167 = vmatprep.subr.mxu0 0.0
    %9168 = vmatpush1.msra.mxu0 0.0
    %9169 = vmatprep.subr.mxu0 0.0
    %9170 = vmatpush1.msra.mxu0 0.0
    %9171 = vmatprep.subr.mxu0 0.0
    %9172 = vmatpush1.msra.mxu0 0.0
    %9173 = vmatprep.subr.mxu0 0.0
    %9174 = vmatpush1.msra.mxu0 0.0
    %9175 = vmatprep.subr.mxu0 0.0
    %9176 = vmatpush1.msra.mxu0 0.0
    %9177 = vmatprep.mubr.f32.mxu0 0.0
    %9178 = vmatmul.mubr.f32.gmra.mrb[0].mxu0 %v9111
    %v9179 = vpop.f32.mrb[0].mxu0
    %v9180 = vadd.f32 0.0, %v9179
    %v9181 = vpop.f32.mrb[0].mxu0
    %v9182 = vadd.f32 0.0, %v9181
    %9183 = vdwg.mxu0
    %v9184 = vpack.c.bf16 %v9180, %v9180
    %v9185 = vpack.c.bf16 %v9182, %v9182
    %s9186 = scalar_lea.vmem [#allocation41], 512
    %v9187 = vld [vmem:[%s9186] sm:$0xff]
    %v9188 = vld [vmem:[%s9186 + $0x8] sm:$0xff]
    %v9189 = vld [vmem:[%s9186 + $0x10] sm:$0xff]
    %v9190 = vld [vmem:[%s9186 + $0x18] sm:$0xff]
    %v9191 = vld [vmem:[%s9186 + $0x20] sm:$0xff]
    %v9192 = vld [vmem:[%s9186 + $0x28] sm:$0xff]
    %v9193 = vld [vmem:[%s9186 + $0x30] sm:$0xff]
    %v9194 = vld [vmem:[%s9186 + $0x38] sm:$0xff]
    %v9195 = vld [vmem:[%s9186 + $0x40] sm:$0xff]
    %v9196 = vld [vmem:[%s9186 + $0x48] sm:$0xff]
    %v9197 = vld [vmem:[%s9186 + $0x50] sm:$0xff]
    %v9198 = vld [vmem:[%s9186 + $0x58] sm:$0xff]
    %v9199 = vld [vmem:[%s9186 + $0x60] sm:$0xff]
    %v9200 = vld [vmem:[%s9186 + $0x68] sm:$0xff]
    %v9201 = vld [vmem:[%s9186 + $0x70] sm:$0xff]
    %v9202 = vld [vmem:[%s9186 + $0x78] sm:$0xff]
    %v9203 = vld [vmem:[%s9186 + $0x80] sm:$0xff]
    %v9204 = vld [vmem:[%s9186 + $0x88] sm:$0xff]
    %v9205 = vld [vmem:[%s9186 + $0x90] sm:$0xff]
    %v9206 = vld [vmem:[%s9186 + $0x98] sm:$0xff]
    %v9207 = vld [vmem:[%s9186 + $0xa0] sm:$0xff]
    %v9208 = vld [vmem:[%s9186 + $0xa8] sm:$0xff]
    %v9209 = vld [vmem:[%s9186 + $0xb0] sm:$0xff]
    %v9210 = vld [vmem:[%s9186 + $0xb8] sm:$0xff]
    %v9211 = vld [vmem:[%s9186 + $0xc0] sm:$0xff]
    %v9212 = vld [vmem:[%s9186 + $0xc8] sm:$0xff]
    %v9213 = vld [vmem:[%s9186 + $0xd0] sm:$0xff]
    %v9214 = vld [vmem:[%s9186 + $0xd8] sm:$0xff]
    %v9215 = vld [vmem:[%s9186 + $0xe0] sm:$0xff]
    %v9216 = vld [vmem:[%s9186 + $0xe8] sm:$0xff]
    %v9217 = vld [vmem:[%s9186 + $0xf0] sm:$0xff]
    %v9218 = vld [vmem:[%s9186 + $0xf8] sm:$0xff]
    %v9251 = vunpack.c.l.b16 %v9187
    %v9252 = vunpack.c.h.b16 %v9187
    %v9253 = vunpack.c.l.b16 %v9188
    %v9254 = vunpack.c.h.b16 %v9188
    %v9255 = vunpack.c.l.b16 %v9189
    %v9256 = vunpack.c.h.b16 %v9189
    %v9257 = vunpack.c.l.b16 %v9190
    %v9258 = vunpack.c.h.b16 %v9190
    %v9259 = vunpack.c.l.b16 %v9191
    %v9260 = vunpack.c.h.b16 %v9191
    %v9261 = vunpack.c.l.b16 %v9192
    %v9262 = vunpack.c.h.b16 %v9192
    %v9263 = vunpack.c.l.b16 %v9193
    %v9264 = vunpack.c.h.b16 %v9193
    %v9265 = vunpack.c.l.b16 %v9194
    %v9266 = vunpack.c.h.b16 %v9194
    %v9267 = vunpack.c.l.b16 %v9195
    %v9268 = vunpack.c.h.b16 %v9195
    %v9269 = vunpack.c.l.b16 %v9196
    %v9270 = vunpack.c.h.b16 %v9196
    %v9271 = vunpack.c.l.b16 %v9197
    %v9272 = vunpack.c.h.b16 %v9197
    %v9273 = vunpack.c.l.b16 %v9198
    %v9274 = vunpack.c.h.b16 %v9198
    %v9275 = vunpack.c.l.b16 %v9199
    %v9276 = vunpack.c.h.b16 %v9199
    %v9277 = vunpack.c.l.b16 %v9200
    %v9278 = vunpack.c.h.b16 %v9200
    %v9279 = vunpack.c.l.b16 %v9201
    %v9280 = vunpack.c.h.b16 %v9201
    %v9281 = vunpack.c.l.b16 %v9202
    %v9282 = vunpack.c.h.b16 %v9202
    %v9283 = vunpack.c.l.b16 %v9203
    %v9284 = vunpack.c.h.b16 %v9203
    %v9285 = vunpack.c.l.b16 %v9204
    %v9286 = vunpack.c.h.b16 %v9204
    %v9287 = vunpack.c.l.b16 %v9205
    %v9288 = vunpack.c.h.b16 %v9205
    %v9289 = vunpack.c.l.b16 %v9206
    %v9290 = vunpack.c.h.b16 %v9206
    %v9291 = vunpack.c.l.b16 %v9207
    %v9292 = vunpack.c.h.b16 %v9207
    %v9293 = vunpack.c.l.b16 %v9208
    %v9294 = vunpack.c.h.b16 %v9208
    %v9295 = vunpack.c.l.b16 %v9209
    %v9296 = vunpack.c.h.b16 %v9209
    %v9297 = vunpack.c.l.b16 %v9210
    %v9298 = vunpack.c.h.b16 %v9210
    %v9299 = vunpack.c.l.b16 %v9211
    %v9300 = vunpack.c.h.b16 %v9211
    %v9301 = vunpack.c.l.b16 %v9212
    %v9302 = vunpack.c.h.b16 %v9212
    %v9303 = vunpack.c.l.b16 %v9213
    %v9304 = vunpack.c.h.b16 %v9213
    %v9305 = vunpack.c.l.b16 %v9214
    %v9306 = vunpack.c.h.b16 %v9214
    %v9307 = vunpack.c.l.b16 %v9215
    %v9308 = vunpack.c.h.b16 %v9215
    %v9309 = vunpack.c.l.b16 %v9216
    %v9310 = vunpack.c.h.b16 %v9216
    %v9311 = vunpack.c.l.b16 %v9217
    %v9312 = vunpack.c.h.b16 %v9217
    %v9313 = vunpack.c.l.b16 %v9218
    %v9314 = vunpack.c.h.b16 %v9218
    %v9315 = vpack.c.b16 %v9253, %v9251
    %v9316 = vpack.c.b16 %v9254, %v9252
    %v9317 = vpack.c.b16 %v9257, %v9255
    %v9318 = vpack.c.b16 %v9258, %v9256
    %v9319 = vpack.c.b16 %v9261, %v9259
    %v9320 = vpack.c.b16 %v9262, %v9260
    %v9321 = vpack.c.b16 %v9265, %v9263
    %v9322 = vpack.c.b16 %v9266, %v9264
    %v9323 = vpack.c.b16 %v9269, %v9267
    %v9324 = vpack.c.b16 %v9270, %v9268
    %v9325 = vpack.c.b16 %v9273, %v9271
    %v9326 = vpack.c.b16 %v9274, %v9272
    %v9327 = vpack.c.b16 %v9277, %v9275
    %v9328 = vpack.c.b16 %v9278, %v9276
    %v9329 = vpack.c.b16 %v9281, %v9279
    %v9330 = vpack.c.b16 %v9282, %v9280
    %v9331 = vpack.c.b16 %v9285, %v9283
    %v9332 = vpack.c.b16 %v9286, %v9284
    %v9333 = vpack.c.b16 %v9289, %v9287
    %v9334 = vpack.c.b16 %v9290, %v9288
    %v9335 = vpack.c.b16 %v9293, %v9291
    %v9336 = vpack.c.b16 %v9294, %v9292
    %v9337 = vpack.c.b16 %v9297, %v9295
    %v9338 = vpack.c.b16 %v9298, %v9296
    %v9339 = vpack.c.b16 %v9301, %v9299
    %v9340 = vpack.c.b16 %v9302, %v9300
    %v9341 = vpack.c.b16 %v9305, %v9303
    %v9342 = vpack.c.b16 %v9306, %v9304
    %v9343 = vpack.c.b16 %v9309, %v9307
    %v9344 = vpack.c.b16 %v9310, %v9308
    %v9345 = vpack.c.b16 %v9313, %v9311
    %v9346 = vpack.c.b16 %v9314, %v9312
    %9379 = vmatprep.subr.bf16.mxu0 %v9316
    %9380 = vmatpush1.bf16.msra.mxu0 %v9315
    %9381 = vmatprep.subr.bf16.mxu0 %v9318
    %9382 = vmatpush1.bf16.msra.mxu0 %v9317
    %9383 = vmatprep.subr.bf16.mxu0 %v9320
    %9384 = vmatpush1.bf16.msra.mxu0 %v9319
    %9385 = vmatprep.subr.bf16.mxu0 %v9322
    %9386 = vmatpush1.bf16.msra.mxu0 %v9321
    %9387 = vmatprep.subr.bf16.mxu0 %v9324
    %9388 = vmatpush1.bf16.msra.mxu0 %v9323
    %9389 = vmatprep.subr.bf16.mxu0 %v9326
    %9390 = vmatpush1.bf16.msra.mxu0 %v9325
    %9391 = vmatprep.subr.bf16.mxu0 %v9328
    %9392 = vmatpush1.bf16.msra.mxu0 %v9327
    %9393 = vmatprep.subr.bf16.mxu0 %v9330
    %9394 = vmatpush1.bf16.msra.mxu0 %v9329
    %9395 = vmatprep.subr.bf16.mxu0 %v9332
    %9396 = vmatpush1.bf16.msra.mxu0 %v9331
    %9397 = vmatprep.subr.bf16.mxu0 %v9334
    %9398 = vmatpush1.bf16.msra.mxu0 %v9333
    %9399 = vmatprep.subr.bf16.mxu0 %v9336
    %9400 = vmatpush1.bf16.msra.mxu0 %v9335
    %9401 = vmatprep.subr.bf16.mxu0 %v9338
    %9402 = vmatpush1.bf16.msra.mxu0 %v9337
    %9403 = vmatprep.subr.bf16.mxu0 %v9340
    %9404 = vmatpush1.bf16.msra.mxu0 %v9339
    %9405 = vmatprep.subr.bf16.mxu0 %v9342
    %9406 = vmatpush1.bf16.msra.mxu0 %v9341
    %9407 = vmatprep.subr.bf16.mxu0 %v9344
    %9408 = vmatpush1.bf16.msra.mxu0 %v9343
    %9409 = vmatprep.subr.bf16.mxu0 %v9346
    %9410 = vmatpush1.bf16.msra.mxu0 %v9345
    %9411 = vmatprep.mubr.bf16.mxu0 %v9185
    %9412 = vmatmul.mubr.bf16.gmra.mrb[0].mxu0 %v9184
    %v9413 = vpop.f32.mrb[0].mxu0
    %v9414 = vadd.f32 0.0, %v9413
    %v9415 = vpop.f32.mrb[0].mxu0
    %v9416 = vadd.f32 0.0, %v9415
    %v9417 = vpop.f32.mrb[0].mxu0
    %v9418 = vpop.f32.mrb[0].mxu0
    %9419 = vdwg.mxu0
    %v9420 = vadd.f32 %v9102, %v9414
    %v9421 = vadd.f32 %v9104, %v9416
    %v9422 = vrot.slane %v9420, 4
    %v9423 = vadd.f32 %v9420, %v9422
    %v9424 = vrot.slane %v9423, 2
    %v9425 = vadd.f32 %v9423, %v9424
    %v9426 = vrot.slane %v9425, 1
    %v9427 = vadd.f32 %v9425, %v9426
    %v9428 = vrot.slane %v9421, 4
    %v9429 = vadd.f32 %v9421, %v9428
    %v9430 = vrot.slane %v9429, 2
    %v9431 = vadd.f32 %v9429, %v9430
    %v9432 = vrot.slane %v9431, 1
    %v9433 = vadd.f32 %v9431, %v9432
    %9434 = vmatprep.subr.mxu0 %v8202
    %9435 = vmatpush1.msra.mxu0 %v8201
    %9436 = vmatprep.subr.mxu0 %v8204
    %9437 = vmatpush1.msra.mxu0 %v8203
    %9438 = vmatprep.subr.mxu0 %v8206
    %9439 = vmatpush1.msra.mxu0 %v8205
    %9440 = vmatprep.subr.mxu0 %v8208
    %9441 = vmatpush1.msra.mxu0 %v8207
    %9442 = vmatprep.subr.mxu0 %v8210
    %9443 = vmatpush1.msra.mxu0 %v8209
    %9444 = vmatprep.subr.mxu0 %v8212
    %9445 = vmatpush1.msra.mxu0 %v8211
    %9446 = vmatprep.subr.mxu0 %v8214
    %9447 = vmatpush1.msra.mxu0 %v8213
    %9448 = vmatprep.subr.mxu0 %v8216
    %9449 = vmatpush1.msra.mxu0 %v8215
    %9450 = vmatprep.subr.mxu0 %v8218
    %9451 = vmatpush1.msra.mxu0 %v8217
    %9452 = vmatprep.subr.mxu0 %v8220
    %9453 = vmatpush1.msra.mxu0 %v8219
    %9454 = vmatprep.subr.mxu0 %v8222
    %9455 = vmatpush1.msra.mxu0 %v8221
    %9456 = vmatprep.subr.mxu0 %v8224
    %9457 = vmatpush1.msra.mxu0 %v8223
    %9458 = vmatprep.subr.mxu0 %v8226
    %9459 = vmatpush1.msra.mxu0 %v8225
    %9460 = vmatprep.subr.mxu0 %v8228
    %9461 = vmatpush1.msra.mxu0 %v8227
    %9462 = vmatprep.subr.mxu0 %v8230
    %9463 = vmatpush1.msra.mxu0 %v8229
    %9464 = vmatprep.subr.mxu0 %v8232
    %9465 = vmatpush1.msra.mxu0 %v8231
    %9466 = vmatprep.subr.mxu0 %v8234
    %9467 = vmatpush1.msra.mxu0 %v8233
    %9468 = vmatprep.subr.mxu0 %v8236
    %9469 = vmatpush1.msra.mxu0 %v8235
    %9470 = vmatprep.subr.mxu0 %v8238
    %9471 = vmatpush1.msra.mxu0 %v8237
    %9472 = vmatprep.subr.mxu0 %v8240
    %9473 = vmatpush1.msra.mxu0 %v8239
    %9474 = vmatprep.subr.mxu0 %v8242
    %9475 = vmatpush1.msra.mxu0 %v8241
    %9476 = vmatprep.subr.mxu0 %v8244
    %9477 = vmatpush1.msra.mxu0 %v8243
    %9478 = vmatprep.subr.mxu0 %v8246
    %9479 = vmatpush1.msra.mxu0 %v8245
    %9480 = vmatprep.subr.mxu0 %v8248
    %9481 = vmatpush1.msra.mxu0 %v8247
    %9482 = vmatprep.subr.mxu0 %v8250
    %9483 = vmatpush1.msra.mxu0 %v8249
    %9484 = vmatprep.subr.mxu0 %v8252
    %9485 = vmatpush1.msra.mxu0 %v8251
    %9486 = vmatprep.subr.mxu0 %v8254
    %9487 = vmatpush1.msra.mxu0 %v8253
    %9488 = vmatprep.subr.mxu0 %v8256
    %9489 = vmatpush1.msra.mxu0 %v8255
    %9490 = vmatprep.subr.mxu0 %v8258
    %9491 = vmatpush1.msra.mxu0 %v8257
    %9492 = vmatprep.subr.mxu0 %v8260
    %9493 = vmatpush1.msra.mxu0 %v8259
    %9494 = vmatprep.subr.mxu0 %v8262
    %9495 = vmatpush1.msra.mxu0 %v8261
    %9496 = vmatprep.subr.mxu0 %v8264
    %9497 = vmatpush1.msra.mxu0 %v8263
    %9498 = vmatprep.mubr.f32.mxu0 %v9433
    %9499 = vmatmul.mubr.f32.gmra.mrb[0].mxu0 %v9427
    %v9500 = vpop.f32.mrb[0].mxu0
    %v9501 = vadd.f32 0.0, %v9500
    %v9502 = vpop.f32.mrb[0].mxu0
    %v9503 = vadd.f32 0.0, %v9502
    %9504 = vdwg.mxu0
    %v9505 = vlaneseq
    %v9506 = vshrl.u32 %v9505, 7
    %v9507 = vsub.s32 0, %v9506
    %v9508 = vrot.slane %v9501, %v9507
    %v9509 = vlaneseq
    %v9510 = vshrl.u32 %v9509, 7
    %v9511 = vsub.s32 0, %v9510
    %v9512 = vrot.slane %v9503, %v9511
    %v9513 = vsub.f32 %v9420, %v9508
    %v9514 = vsub.f32 %v9421, %v9512
    %v9515 = vmul.f32 %v9513, %v9513
    %v9516 = vmul.f32 %v9514, %v9514
    %v9517 = vrot.slane %v9515, 4
    %v9518 = vadd.f32 %v9515, %v9517
    %v9519 = vrot.slane %v9518, 2
    %v9520 = vadd.f32 %v9518, %v9519
    %v9521 = vrot.slane %v9520, 1
    %v9522 = vadd.f32 %v9520, %v9521
    %v9523 = vrot.slane %v9516, 4
    %v9524 = vadd.f32 %v9516, %v9523
    %v9525 = vrot.slane %v9524, 2
    %v9526 = vadd.f32 %v9524, %v9525
    %v9527 = vrot.slane %v9526, 1
    %v9528 = vadd.f32 %v9526, %v9527
    %9529 = vmatprep.subr.mxu0 %v8202
    %9530 = vmatpush1.msra.mxu0 %v8201
    %9531 = vmatprep.subr.mxu0 %v8204
    %9532 = vmatpush1.msra.mxu0 %v8203
    %9533 = vmatprep.subr.mxu0 %v8206
    %9534 = vmatpush1.msra.mxu0 %v8205
    %9535 = vmatprep.subr.mxu0 %v8208
    %9536 = vmatpush1.msra.mxu0 %v8207
    %9537 = vmatprep.subr.mxu0 %v8210
    %9538 = vmatpush1.msra.mxu0 %v8209
    %9539 = vmatprep.subr.mxu0 %v8212
    %9540 = vmatpush1.msra.mxu0 %v8211
    %9541 = vmatprep.subr.mxu0 %v8214
    %9542 = vmatpush1.msra.mxu0 %v8213
    %9543 = vmatprep.subr.mxu0 %v8216
    %9544 = vmatpush1.msra.mxu0 %v8215
    %9545 = vmatprep.subr.mxu0 %v8218
    %9546 = vmatpush1.msra.mxu0 %v8217
    %9547 = vmatprep.subr.mxu0 %v8220
    %9548 = vmatpush1.msra.mxu0 %v8219
    %9549 = vmatprep.subr.mxu0 %v8222
    %9550 = vmatpush1.msra.mxu0 %v8221
    %9551 = vmatprep.subr.mxu0 %v8224
    %9552 = vmatpush1.msra.mxu0 %v8223
    %9553 = vmatprep.subr.mxu0 %v8226
    %9554 = vmatpush1.msra.mxu0 %v8225
    %9555 = vmatprep.subr.mxu0 %v8228
    %9556 = vmatpush1.msra.mxu0 %v8227
    %9557 = vmatprep.subr.mxu0 %v8230
    %9558 = vmatpush1.msra.mxu0 %v8229
    %9559 = vmatprep.subr.mxu0 %v8232
    %9560 = vmatpush1.msra.mxu0 %v8231
    %9561 = vmatprep.subr.mxu0 %v8234
    %9562 = vmatpush1.msra.mxu0 %v8233
    %9563 = vmatprep.subr.mxu0 %v8236
    %9564 = vmatpush1.msra.mxu0 %v8235
    %9565 = vmatprep.subr.mxu0 %v8238
    %9566 = vmatpush1.msra.mxu0 %v8237
    %9567 = vmatprep.subr.mxu0 %v8240
    %9568 = vmatpush1.msra.mxu0 %v8239
    %9569 = vmatprep.subr.mxu0 %v8242
    %9570 = vmatpush1.msra.mxu0 %v8241
    %9571 = vmatprep.subr.mxu0 %v8244
    %9572 = vmatpush1.msra.mxu0 %v8243
    %9573 = vmatprep.subr.mxu0 %v8246
    %9574 = vmatpush1.msra.mxu0 %v8245
    %9575 = vmatprep.subr.mxu0 %v8248
    %9576 = vmatpush1.msra.mxu0 %v8247
    %9577 = vmatprep.subr.mxu0 %v8250
    %9578 = vmatpush1.msra.mxu0 %v8249
    %9579 = vmatprep.subr.mxu0 %v8252
    %9580 = vmatpush1.msra.mxu0 %v8251
    %9581 = vmatprep.subr.mxu0 %v8254
    %9582 = vmatpush1.msra.mxu0 %v8253
    %9583 = vmatprep.subr.mxu0 %v8256
    %9584 = vmatpush1.msra.mxu0 %v8255
    %9585 = vmatprep.subr.mxu0 %v8258
    %9586 = vmatpush1.msra.mxu0 %v8257
    %9587 = vmatprep.subr.mxu0 %v8260
    %9588 = vmatpush1.msra.mxu0 %v8259
    %9589 = vmatprep.subr.mxu0 %v8262
    %9590 = vmatpush1.msra.mxu0 %v8261
    %9591 = vmatprep.subr.mxu0 %v8264
    %9592 = vmatpush1.msra.mxu0 %v8263
    %9593 = vmatprep.mubr.f32.mxu0 %v9528
    %9594 = vmatmul.mubr.f32.gmra.mrb[0].mxu0 %v9522
    %v9595 = vpop.f32.mrb[0].mxu0
    %v9596 = vadd.f32 1e-05, %v9595
    %v9597 = vpop.f32.mrb[0].mxu0
    %v9598 = vadd.f32 1e-05, %v9597
    %9599 = vdwg.mxu0
    %v9600 = vrsqrt.pop %v9596
    %v9601 = vrsqrt.pop %v9598
    %v9602 = vld [vmem:[#allocation37] sm:$0x3]
    %v9604 = vlaneseq
    %v9605 = vshrl.u32 %v9604, 7
    %v9606 = vsub.s32 0, %v9605
    %v9607 = vrot.slane %v9602, %v9606
    %v9608 = vlaneseq
    %v9609 = vshrl.u32 %v9608, 7
    %v9610 = vsub.s32 1, %v9609
    %v9611 = vrot.slane %v9602, %v9610
    %v9614 = vmul.f32 %v9600, %v9607
    %v9615 = vmul.f32 %v9601, %v9611
    %v9616 = vlaneseq
    %v9617 = vshrl.u32 %v9616, 7
    %v9618 = vsub.s32 0, %v9617
    %v9619 = vrot.slane %v9614, %v9618
    %v9620 = vlaneseq
    %v9621 = vshrl.u32 %v9620, 7
    %v9622 = vsub.s32 0, %v9621
    %v9623 = vrot.slane %v9615, %v9622
    %v9624 = vmul.f32 %v9513, %v9619
    %v9625 = vmul.f32 %v9514, %v9623
    %v9626 = vld [vmem:[#allocation35] sm:$0x3]
    %v9628 = vlaneseq
    %v9629 = vshrl.u32 %v9628, 7
    %v9630 = vsub.s32 0, %v9629
    %v9631 = vrot.slane %v9626, %v9630
    %v9632 = vlaneseq
    %v9633 = vshrl.u32 %v9632, 7
    %v9634 = vsub.s32 1, %v9633
    %v9635 = vrot.slane %v9626, %v9634
    %v9638 = vadd.f32 %v9624, %v9631
    %v9639 = vadd.f32 %v9625, %v9635
    %v9640 = vld [vmem:[%s61] sm:$0xff]
    %v9642 = vsel %vm5502, %v9640, 0
    %9644 = vmatprep.subr.mxu0 %v7262
    %9645 = vmatpush1.msra.mxu0 %v7261
    %9646 = vmatprep.subr.mxu0 %v7264
    %9647 = vmatpush1.msra.mxu0 %v7263
    %9648 = vmatprep.subr.mxu0 0.0
    %9649 = vmatpush1.msra.mxu0 0.0
    %9650 = vmatprep.subr.mxu0 0.0
    %9651 = vmatpush1.msra.mxu0 0.0
    %9652 = vmatprep.subr.mxu0 0.0
    %9653 = vmatpush1.msra.mxu0 0.0
    %9654 = vmatprep.subr.mxu0 0.0
    %9655 = vmatpush1.msra.mxu0 0.0
    %9656 = vmatprep.subr.mxu0 0.0
    %9657 = vmatpush1.msra.mxu0 0.0
    %9658 = vmatprep.subr.mxu0 0.0
    %9659 = vmatpush1.msra.mxu0 0.0
    %9660 = vmatprep.subr.mxu0 0.0
    %9661 = vmatpush1.msra.mxu0 0.0
    %9662 = vmatprep.subr.mxu0 0.0
    %9663 = vmatpush1.msra.mxu0 0.0
    %9664 = vmatprep.subr.mxu0 0.0
    %9665 = vmatpush1.msra.mxu0 0.0
    %9666 = vmatprep.subr.mxu0 0.0
    %9667 = vmatpush1.msra.mxu0 0.0
    %9668 = vmatprep.subr.mxu0 0.0
    %9669 = vmatpush1.msra.mxu0 0.0
    %9670 = vmatprep.subr.mxu0 0.0
    %9671 = vmatpush1.msra.mxu0 0.0
    %9672 = vmatprep.subr.mxu0 0.0
    %9673 = vmatpush1.msra.mxu0 0.0
    %9674 = vmatprep.subr.mxu0 0.0
    %9675 = vmatpush1.msra.mxu0 0.0
    %9676 = vmatprep.subr.mxu0 0.0
    %9677 = vmatpush1.msra.mxu0 0.0
    %9678 = vmatprep.subr.mxu0 0.0
    %9679 = vmatpush1.msra.mxu0 0.0
    %9680 = vmatprep.subr.mxu0 0.0
    %9681 = vmatpush1.msra.mxu0 0.0
    %9682 = vmatprep.subr.mxu0 0.0
    %9683 = vmatpush1.msra.mxu0 0.0
    %9684 = vmatprep.subr.mxu0 0.0
    %9685 = vmatpush1.msra.mxu0 0.0
    %9686 = vmatprep.subr.mxu0 0.0
    %9687 = vmatpush1.msra.mxu0 0.0
    %9688 = vmatprep.subr.mxu0 0.0
    %9689 = vmatpush1.msra.mxu0 0.0
    %9690 = vmatprep.subr.mxu0 0.0
    %9691 = vmatpush1.msra.mxu0 0.0
    %9692 = vmatprep.subr.mxu0 0.0
    %9693 = vmatpush1.msra.mxu0 0.0
    %9694 = vmatprep.subr.mxu0 0.0
    %9695 = vmatpush1.msra.mxu0 0.0
    %9696 = vmatprep.subr.mxu0 0.0
    %9697 = vmatpush1.msra.mxu0 0.0
    %9698 = vmatprep.subr.mxu0 0.0
    %9699 = vmatpush1.msra.mxu0 0.0
    %9700 = vmatprep.subr.mxu0 0.0
    %9701 = vmatpush1.msra.mxu0 0.0
    %9702 = vmatprep.subr.mxu0 0.0
    %9703 = vmatpush1.msra.mxu0 0.0
    %9704 = vmatprep.subr.mxu0 0.0
    %9705 = vmatpush1.msra.mxu0 0.0
    %9706 = vmatprep.subr.mxu0 0.0
    %9707 = vmatpush1.msra.mxu0 0.0
    %9708 = vmatprep.mubr.f32.mxu0 0.0
    %9709 = vmatmul.mubr.f32.gmra.mrb[0].mxu0 %v9642
    %v9710 = vpop.f32.mrb[0].mxu0
    %v9711 = vadd.f32 0.0, %v9710
    %v9712 = vpop.f32.mrb[0].mxu0
    %v9713 = vadd.f32 0.0, %v9712
    %9714 = vdwg.mxu0
    %v9715 = vpack.c.bf16 %v9711, %v9711
    %v9716 = vpack.c.bf16 %v9713, %v9713
    %v9717 = vld [vmem:[#allocation44] sm:$0xff]
    %v9718 = vld [vmem:[#allocation44 + $0x8] sm:$0xff]
    %v9719 = vld [vmem:[#allocation44 + $0x10] sm:$0xff]
    %v9720 = vld [vmem:[#allocation44 + $0x18] sm:$0xff]
    %v9721 = vld [vmem:[#allocation44 + $0x20] sm:$0xff]
    %v9722 = vld [vmem:[#allocation44 + $0x28] sm:$0xff]
    %v9723 = vld [vmem:[#allocation44 + $0x30] sm:$0xff]
    %v9724 = vld [vmem:[#allocation44 + $0x38] sm:$0xff]
    %v9725 = vld [vmem:[#allocation44 + $0x40] sm:$0xff]
    %v9726 = vld [vmem:[#allocation44 + $0x48] sm:$0xff]
    %v9727 = vld [vmem:[#allocation44 + $0x50] sm:$0xff]
    %v9728 = vld [vmem:[#allocation44 + $0x58] sm:$0xff]
    %v9729 = vld [vmem:[#allocation44 + $0x60] sm:$0xff]
    %v9730 = vld [vmem:[#allocation44 + $0x68] sm:$0xff]
    %v9731 = vld [vmem:[#allocation44 + $0x70] sm:$0xff]
    %v9732 = vld [vmem:[#allocation44 + $0x78] sm:$0xff]
    %v9733 = vld [vmem:[#allocation44 + $0x80] sm:$0xff]
    %v9734 = vld [vmem:[#allocation44 + $0x88] sm:$0xff]
    %v9735 = vld [vmem:[#allocation44 + $0x90] sm:$0xff]
    %v9736 = vld [vmem:[#allocation44 + $0x98] sm:$0xff]
    %v9737 = vld [vmem:[#allocation44 + $0xa0] sm:$0xff]
    %v9738 = vld [vmem:[#allocation44 + $0xa8] sm:$0xff]
    %v9739 = vld [vmem:[#allocation44 + $0xb0] sm:$0xff]
    %v9740 = vld [vmem:[#allocation44 + $0xb8] sm:$0xff]
    %v9741 = vld [vmem:[#allocation44 + $0xc0] sm:$0xff]
    %v9742 = vld [vmem:[#allocation44 + $0xc8] sm:$0xff]
    %v9743 = vld [vmem:[#allocation44 + $0xd0] sm:$0xff]
    %v9744 = vld [vmem:[#allocation44 + $0xd8] sm:$0xff]
    %v9745 = vld [vmem:[#allocation44 + $0xe0] sm:$0xff]
    %v9746 = vld [vmem:[#allocation44 + $0xe8] sm:$0xff]
    %v9747 = vld [vmem:[#allocation44 + $0xf0] sm:$0xff]
    %v9748 = vld [vmem:[#allocation44 + $0xf8] sm:$0xff]
    %v9781 = vunpack.c.l.b16 %v9717
    %v9782 = vunpack.c.h.b16 %v9717
    %v9783 = vunpack.c.l.b16 %v9718
    %v9784 = vunpack.c.h.b16 %v9718
    %v9785 = vunpack.c.l.b16 %v9719
    %v9786 = vunpack.c.h.b16 %v9719
    %v9787 = vunpack.c.l.b16 %v9720
    %v9788 = vunpack.c.h.b16 %v9720
    %v9789 = vunpack.c.l.b16 %v9721
    %v9790 = vunpack.c.h.b16 %v9721
    %v9791 = vunpack.c.l.b16 %v9722
    %v9792 = vunpack.c.h.b16 %v9722
    %v9793 = vunpack.c.l.b16 %v9723
    %v9794 = vunpack.c.h.b16 %v9723
    %v9795 = vunpack.c.l.b16 %v9724
    %v9796 = vunpack.c.h.b16 %v9724
    %v9797 = vunpack.c.l.b16 %v9725
    %v9798 = vunpack.c.h.b16 %v9725
    %v9799 = vunpack.c.l.b16 %v9726
    %v9800 = vunpack.c.h.b16 %v9726
    %v9801 = vunpack.c.l.b16 %v9727
    %v9802 = vunpack.c.h.b16 %v9727
    %v9803 = vunpack.c.l.b16 %v9728
    %v9804 = vunpack.c.h.b16 %v9728
    %v9805 = vunpack.c.l.b16 %v9729
    %v9806 = vunpack.c.h.b16 %v9729
    %v9807 = vunpack.c.l.b16 %v9730
    %v9808 = vunpack.c.h.b16 %v9730
    %v9809 = vunpack.c.l.b16 %v9731
    %v9810 = vunpack.c.h.b16 %v9731
    %v9811 = vunpack.c.l.b16 %v9732
    %v9812 = vunpack.c.h.b16 %v9732
    %v9813 = vunpack.c.l.b16 %v9733
    %v9814 = vunpack.c.h.b16 %v9733
    %v9815 = vunpack.c.l.b16 %v9734
    %v9816 = vunpack.c.h.b16 %v9734
    %v9817 = vunpack.c.l.b16 %v9735
    %v9818 = vunpack.c.h.b16 %v9735
    %v9819 = vunpack.c.l.b16 %v9736
    %v9820 = vunpack.c.h.b16 %v9736
    %v9821 = vunpack.c.l.b16 %v9737
    %v9822 = vunpack.c.h.b16 %v9737
    %v9823 = vunpack.c.l.b16 %v9738
    %v9824 = vunpack.c.h.b16 %v9738
    %v9825 = vunpack.c.l.b16 %v9739
    %v9826 = vunpack.c.h.b16 %v9739
    %v9827 = vunpack.c.l.b16 %v9740
    %v9828 = vunpack.c.h.b16 %v9740
    %v9829 = vunpack.c.l.b16 %v9741
    %v9830 = vunpack.c.h.b16 %v9741
    %v9831 = vunpack.c.l.b16 %v9742
    %v9832 = vunpack.c.h.b16 %v9742
    %v9833 = vunpack.c.l.b16 %v9743
    %v9834 = vunpack.c.h.b16 %v9743
    %v9835 = vunpack.c.l.b16 %v9744
    %v9836 = vunpack.c.h.b16 %v9744
    %v9837 = vunpack.c.l.b16 %v9745
    %v9838 = vunpack.c.h.b16 %v9745
    %v9839 = vunpack.c.l.b16 %v9746
    %v9840 = vunpack.c.h.b16 %v9746
    %v9841 = vunpack.c.l.b16 %v9747
    %v9842 = vunpack.c.h.b16 %v9747
    %v9843 = vunpack.c.l.b16 %v9748
    %v9844 = vunpack.c.h.b16 %v9748
    %v9845 = vpack.c.b16 %v9783, %v9781
    %v9846 = vpack.c.b16 %v9784, %v9782
    %v9847 = vpack.c.b16 %v9787, %v9785
    %v9848 = vpack.c.b16 %v9788, %v9786
    %v9849 = vpack.c.b16 %v9791, %v9789
    %v9850 = vpack.c.b16 %v9792, %v9790
    %v9851 = vpack.c.b16 %v9795, %v9793
    %v9852 = vpack.c.b16 %v9796, %v9794
    %v9853 = vpack.c.b16 %v9799, %v9797
    %v9854 = vpack.c.b16 %v9800, %v9798
    %v9855 = vpack.c.b16 %v9803, %v9801
    %v9856 = vpack.c.b16 %v9804, %v9802
    %v9857 = vpack.c.b16 %v9807, %v9805
    %v9858 = vpack.c.b16 %v9808, %v9806
    %v9859 = vpack.c.b16 %v9811, %v9809
    %v9860 = vpack.c.b16 %v9812, %v9810
    %v9861 = vpack.c.b16 %v9815, %v9813
    %v9862 = vpack.c.b16 %v9816, %v9814
    %v9863 = vpack.c.b16 %v9819, %v9817
    %v9864 = vpack.c.b16 %v9820, %v9818
    %v9865 = vpack.c.b16 %v9823, %v9821
    %v9866 = vpack.c.b16 %v9824, %v9822
    %v9867 = vpack.c.b16 %v9827, %v9825
    %v9868 = vpack.c.b16 %v9828, %v9826
    %v9869 = vpack.c.b16 %v9831, %v9829
    %v9870 = vpack.c.b16 %v9832, %v9830
    %v9871 = vpack.c.b16 %v9835, %v9833
    %v9872 = vpack.c.b16 %v9836, %v9834
    %v9873 = vpack.c.b16 %v9839, %v9837
    %v9874 = vpack.c.b16 %v9840, %v9838
    %v9875 = vpack.c.b16 %v9843, %v9841
    %v9876 = vpack.c.b16 %v9844, %v9842
    %9909 = vmatprep.subr.bf16.mxu0 %v9846
    %9910 = vmatpush1.bf16.msra.mxu0 %v9845
    %9911 = vmatprep.subr.bf16.mxu0 %v9848
    %9912 = vmatpush1.bf16.msra.mxu0 %v9847
    %9913 = vmatprep.subr.bf16.mxu0 %v9850
    %9914 = vmatpush1.bf16.msra.mxu0 %v9849
    %9915 = vmatprep.subr.bf16.mxu0 %v9852
    %9916 = vmatpush1.bf16.msra.mxu0 %v9851
    %9917 = vmatprep.subr.bf16.mxu0 %v9854
    %9918 = vmatpush1.bf16.msra.mxu0 %v9853
    %9919 = vmatprep.subr.bf16.mxu0 %v9856
    %9920 = vmatpush1.bf16.msra.mxu0 %v9855
    %9921 = vmatprep.subr.bf16.mxu0 %v9858
    %9922 = vmatpush1.bf16.msra.mxu0 %v9857
    %9923 = vmatprep.subr.bf16.mxu0 %v9860
    %9924 = vmatpush1.bf16.msra.mxu0 %v9859
    %9925 = vmatprep.subr.bf16.mxu0 %v9862
    %9926 = vmatpush1.bf16.msra.mxu0 %v9861
    %9927 = vmatprep.subr.bf16.mxu0 %v9864
    %9928 = vmatpush1.bf16.msra.mxu0 %v9863
    %9929 = vmatprep.subr.bf16.mxu0 %v9866
    %9930 = vmatpush1.bf16.msra.mxu0 %v9865
    %9931 = vmatprep.subr.bf16.mxu0 %v9868
    %9932 = vmatpush1.bf16.msra.mxu0 %v9867
    %9933 = vmatprep.subr.bf16.mxu0 %v9870
    %9934 = vmatpush1.bf16.msra.mxu0 %v9869
    %9935 = vmatprep.subr.bf16.mxu0 %v9872
    %9936 = vmatpush1.bf16.msra.mxu0 %v9871
    %9937 = vmatprep.subr.bf16.mxu0 %v9874
    %9938 = vmatpush1.bf16.msra.mxu0 %v9873
    %9939 = vmatprep.subr.bf16.mxu0 %v9876
    %9940 = vmatpush1.bf16.msra.mxu0 %v9875
    %9941 = vmatprep.mubr.bf16.mxu0 %v9716
    %9942 = vmatmul.mubr.bf16.gmra.mrb[0].mxu0 %v9715
    %v9943 = vpop.f32.mrb[0].mxu0
    %v9944 = vadd.f32 0.0, %v9943
    %v9945 = vpop.f32.mrb[0].mxu0
    %v9946 = vadd.f32 0.0, %v9945
    %v9947 = vpop.f32.mrb[0].mxu0
    %v9948 = vpop.f32.mrb[0].mxu0
    %9949 = vdwg.mxu0
    %v9950 = vrot.slane %v9944, 4
    %v9951 = vadd.f32 %v9944, %v9950
    %v9952 = vrot.slane %v9951, 2
    %v9953 = vadd.f32 %v9951, %v9952
    %v9954 = vrot.slane %v9953, 1
    %v9955 = vadd.f32 %v9953, %v9954
    %v9956 = vrot.slane %v9946, 4
    %v9957 = vadd.f32 %v9946, %v9956
    %v9958 = vrot.slane %v9957, 2
    %v9959 = vadd.f32 %v9957, %v9958
    %v9960 = vrot.slane %v9959, 1
    %v9961 = vadd.f32 %v9959, %v9960
    %9962 = vmatprep.subr.mxu0 %v8202
    %9963 = vmatpush1.msra.mxu0 %v8201
    %9964 = vmatprep.subr.mxu0 %v8204
    %9965 = vmatpush1.msra.mxu0 %v8203
    %9966 = vmatprep.subr.mxu0 %v8206
    %9967 = vmatpush1.msra.mxu0 %v8205
    %9968 = vmatprep.subr.mxu0 %v8208
    %9969 = vmatpush1.msra.mxu0 %v8207
    %9970 = vmatprep.subr.mxu0 %v8210
    %9971 = vmatpush1.msra.mxu0 %v8209
    %9972 = vmatprep.subr.mxu0 %v8212
    %9973 = vmatpush1.msra.mxu0 %v8211
    %9974 = vmatprep.subr.mxu0 %v8214
    %9975 = vmatpush1.msra.mxu0 %v8213
    %9976 = vmatprep.subr.mxu0 %v8216
    %9977 = vmatpush1.msra.mxu0 %v8215
    %9978 = vmatprep.subr.mxu0 %v8218
    %9979 = vmatpush1.msra.mxu0 %v8217
    %9980 = vmatprep.subr.mxu0 %v8220
    %9981 = vmatpush1.msra.mxu0 %v8219
    %9982 = vmatprep.subr.mxu0 %v8222
    %9983 = vmatpush1.msra.mxu0 %v8221
    %9984 = vmatprep.subr.mxu0 %v8224
    %9985 = vmatpush1.msra.mxu0 %v8223
    %9986 = vmatprep.subr.mxu0 %v8226
    %9987 = vmatpush1.msra.mxu0 %v8225
    %9988 = vmatprep.subr.mxu0 %v8228
    %9989 = vmatpush1.msra.mxu0 %v8227
    %9990 = vmatprep.subr.mxu0 %v8230
    %9991 = vmatpush1.msra.mxu0 %v8229
    %9992 = vmatprep.subr.mxu0 %v8232
    %9993 = vmatpush1.msra.mxu0 %v8231
    %9994 = vmatprep.subr.mxu0 %v8234
    %9995 = vmatpush1.msra.mxu0 %v8233
    %9996 = vmatprep.subr.mxu0 %v8236
    %9997 = vmatpush1.msra.mxu0 %v8235
    %9998 = vmatprep.subr.mxu0 %v8238
    %9999 = vmatpush1.msra.mxu0 %v8237
    %10000 = vmatprep.subr.mxu0 %v8240
    %10001 = vmatpush1.msra.mxu0 %v8239
    %10002 = vmatprep.subr.mxu0 %v8242
    %10003 = vmatpush1.msra.mxu0 %v8241
    %10004 = vmatprep.subr.mxu0 %v8244
    %10005 = vmatpush1.msra.mxu0 %v8243
    %10006 = vmatprep.subr.mxu0 %v8246
    %10007 = vmatpush1.msra.mxu0 %v8245
    %10008 = vmatprep.subr.mxu0 %v8248
    %10009 = vmatpush1.msra.mxu0 %v8247
    %10010 = vmatprep.subr.mxu0 %v8250
    %10011 = vmatpush1.msra.mxu0 %v8249
    %10012 = vmatprep.subr.mxu0 %v8252
    %10013 = vmatpush1.msra.mxu0 %v8251
    %10014 = vmatprep.subr.mxu0 %v8254
    %10015 = vmatpush1.msra.mxu0 %v8253
    %10016 = vmatprep.subr.mxu0 %v8256
    %10017 = vmatpush1.msra.mxu0 %v8255
    %10018 = vmatprep.subr.mxu0 %v8258
    %10019 = vmatpush1.msra.mxu0 %v8257
    %10020 = vmatprep.subr.mxu0 %v8260
    %10021 = vmatpush1.msra.mxu0 %v8259
    %10022 = vmatprep.subr.mxu0 %v8262
    %10023 = vmatpush1.msra.mxu0 %v8261
    %10024 = vmatprep.subr.mxu0 %v8264
    %10025 = vmatpush1.msra.mxu0 %v8263
    %10026 = vmatprep.mubr.f32.mxu0 %v9961
    %10027 = vmatmul.mubr.f32.gmra.mrb[0].mxu0 %v9955
    %v10028 = vpop.f32.mrb[0].mxu0
    %v10029 = vadd.f32 0.0, %v10028
    %v10030 = vpop.f32.mrb[0].mxu0
    %v10031 = vadd.f32 0.0, %v10030
    %10032 = vdwg.mxu0
    %v10033 = vlaneseq
    %v10034 = vshrl.u32 %v10033, 7
    %v10035 = vsub.s32 0, %v10034
    %v10036 = vrot.slane %v10029, %v10035
    %v10037 = vlaneseq
    %v10038 = vshrl.u32 %v10037, 7
    %v10039 = vsub.s32 0, %v10038
    %v10040 = vrot.slane %v10031, %v10039
    %v10041 = vsub.f32 %v9944, %v10036
    %v10042 = vsub.f32 %v9946, %v10040
    %v10043 = vmul.f32 %v10041, %v10041
    %v10044 = vmul.f32 %v10042, %v10042
    %v10045 = vrot.slane %v10043, 4
    %v10046 = vadd.f32 %v10043, %v10045
    %v10047 = vrot.slane %v10046, 2
    %v10048 = vadd.f32 %v10046, %v10047
    %v10049 = vrot.slane %v10048, 1
    %v10050 = vadd.f32 %v10048, %v10049
    %v10051 = vrot.slane %v10044, 4
    %v10052 = vadd.f32 %v10044, %v10051
    %v10053 = vrot.slane %v10052, 2
    %v10054 = vadd.f32 %v10052, %v10053
    %v10055 = vrot.slane %v10054, 1
    %v10056 = vadd.f32 %v10054, %v10055
    %10057 = vmatprep.subr.mxu0 %v8202
    %10058 = vmatpush1.msra.mxu0 %v8201
    %10059 = vmatprep.subr.mxu0 %v8204
    %10060 = vmatpush1.msra.mxu0 %v8203
    %10061 = vmatprep.subr.mxu0 %v8206
    %10062 = vmatpush1.msra.mxu0 %v8205
    %10063 = vmatprep.subr.mxu0 %v8208
    %10064 = vmatpush1.msra.mxu0 %v8207
    %10065 = vmatprep.subr.mxu0 %v8210
    %10066 = vmatpush1.msra.mxu0 %v8209
    %10067 = vmatprep.subr.mxu0 %v8212
    %10068 = vmatpush1.msra.mxu0 %v8211
    %10069 = vmatprep.subr.mxu0 %v8214
    %10070 = vmatpush1.msra.mxu0 %v8213
    %10071 = vmatprep.subr.mxu0 %v8216
    %10072 = vmatpush1.msra.mxu0 %v8215
    %10073 = vmatprep.subr.mxu0 %v8218
    %10074 = vmatpush1.msra.mxu0 %v8217
    %10075 = vmatprep.subr.mxu0 %v8220
    %10076 = vmatpush1.msra.mxu0 %v8219
    %10077 = vmatprep.subr.mxu0 %v8222
    %10078 = vmatpush1.msra.mxu0 %v8221
    %10079 = vmatprep.subr.mxu0 %v8224
    %10080 = vmatpush1.msra.mxu0 %v8223
    %10081 = vmatprep.subr.mxu0 %v8226
    %10082 = vmatpush1.msra.mxu0 %v8225
    %10083 = vmatprep.subr.mxu0 %v8228
    %10084 = vmatpush1.msra.mxu0 %v8227
    %10085 = vmatprep.subr.mxu0 %v8230
    %10086 = vmatpush1.msra.mxu0 %v8229
    %10087 = vmatprep.subr.mxu0 %v8232
    %10088 = vmatpush1.msra.mxu0 %v8231
    %10089 = vmatprep.subr.mxu0 %v8234
    %10090 = vmatpush1.msra.mxu0 %v8233
    %10091 = vmatprep.subr.mxu0 %v8236
    %10092 = vmatpush1.msra.mxu0 %v8235
    %10093 = vmatprep.subr.mxu0 %v8238
    %10094 = vmatpush1.msra.mxu0 %v8237
    %10095 = vmatprep.subr.mxu0 %v8240
    %10096 = vmatpush1.msra.mxu0 %v8239
    %10097 = vmatprep.subr.mxu0 %v8242
    %10098 = vmatpush1.msra.mxu0 %v8241
    %10099 = vmatprep.subr.mxu0 %v8244
    %10100 = vmatpush1.msra.mxu0 %v8243
    %10101 = vmatprep.subr.mxu0 %v8246
    %10102 = vmatpush1.msra.mxu0 %v8245
    %10103 = vmatprep.subr.mxu0 %v8248
    %10104 = vmatpush1.msra.mxu0 %v8247
    %10105 = vmatprep.subr.mxu0 %v8250
    %10106 = vmatpush1.msra.mxu0 %v8249
    %10107 = vmatprep.subr.mxu0 %v8252
    %10108 = vmatpush1.msra.mxu0 %v8251
    %10109 = vmatprep.subr.mxu0 %v8254
    %10110 = vmatpush1.msra.mxu0 %v8253
    %10111 = vmatprep.subr.mxu0 %v8256
    %10112 = vmatpush1.msra.mxu0 %v8255
    %10113 = vmatprep.subr.mxu0 %v8258
    %10114 = vmatpush1.msra.mxu0 %v8257
    %10115 = vmatprep.subr.mxu0 %v8260
    %10116 = vmatpush1.msra.mxu0 %v8259
    %10117 = vmatprep.subr.mxu0 %v8262
    %10118 = vmatpush1.msra.mxu0 %v8261
    %10119 = vmatprep.subr.mxu0 %v8264
    %10120 = vmatpush1.msra.mxu0 %v8263
    %10121 = vmatprep.mubr.f32.mxu0 %v10056
    %10122 = vmatmul.mubr.f32.gmra.mrb[0].mxu0 %v10050
    %v10123 = vpop.f32.mrb[0].mxu0
    %v10124 = vadd.f32 1e-05, %v10123
    %v10125 = vpop.f32.mrb[0].mxu0
    %v10126 = vadd.f32 1e-05, %v10125
    %10127 = vdwg.mxu0
    %v10128 = vrsqrt.pop %v10124
    %v10129 = vrsqrt.pop %v10126
    %v10130 = vld [vmem:[#allocation47] sm:$0x3]
    %v10132 = vlaneseq
    %v10133 = vshrl.u32 %v10132, 7
    %v10134 = vsub.s32 0, %v10133
    %v10135 = vrot.slane %v10130, %v10134
    %v10136 = vlaneseq
    %v10137 = vshrl.u32 %v10136, 7
    %v10138 = vsub.s32 1, %v10137
    %v10139 = vrot.slane %v10130, %v10138
    %v10142 = vmul.f32 %v10128, %v10135
    %v10143 = vmul.f32 %v10129, %v10139
    %v10144 = vlaneseq
    %v10145 = vshrl.u32 %v10144, 7
    %v10146 = vsub.s32 0, %v10145
    %v10147 = vrot.slane %v10142, %v10146
    %v10148 = vlaneseq
    %v10149 = vshrl.u32 %v10148, 7
    %v10150 = vsub.s32 0, %v10149
    %v10151 = vrot.slane %v10143, %v10150
    %v10152 = vmul.f32 %v10041, %v10147
    %v10153 = vmul.f32 %v10042, %v10151
    %v10154 = vld [vmem:[#allocation46] sm:$0x3]
    %v10156 = vlaneseq
    %v10157 = vshrl.u32 %v10156, 7
    %v10158 = vsub.s32 0, %v10157
    %v10159 = vrot.slane %v10154, %v10158
    %v10160 = vlaneseq
    %v10161 = vshrl.u32 %v10160, 7
    %v10162 = vsub.s32 1, %v10161
    %v10163 = vrot.slane %v10154, %v10162
    %v10166 = vadd.f32 %v10152, %v10159
    %v10167 = vadd.f32 %v10153, %v10163
    %v10168 = vadd.f32 %v9638, %v10166
    %v10169 = vadd.f32 %v9639, %v10167
    %v10170 = vmax.f32 %v10168, 0.0
    %v10171 = vmax.f32 %v10169, 0.0
    %v10172 = vld [vmem:[%s79] sm:$0x3]
    %v10174 = vsel %vm8486, %v10172, 0
    %10176 = vmatprep.subr.mxu0 %v10171
    %10177 = vmatpush1.msra.mxu0 %v10170
    %10178 = vmatprep.subr.mxu0 0.0
    %10179 = vmatpush1.msra.mxu0 0.0
    %10180 = vmatprep.subr.mxu0 0.0
    %10181 = vmatpush1.msra.mxu0 0.0
    %10182 = vmatprep.subr.mxu0 0.0
    %10183 = vmatpush1.msra.mxu0 0.0
    %10184 = vmatprep.subr.mxu0 0.0
    %10185 = vmatpush1.msra.mxu0 0.0
    %10186 = vmatprep.subr.mxu0 0.0
    %10187 = vmatpush1.msra.mxu0 0.0
    %10188 = vmatprep.subr.mxu0 0.0
    %10189 = vmatpush1.msra.mxu0 0.0
    %10190 = vmatprep.subr.mxu0 0.0
    %10191 = vmatpush1.msra.mxu0 0.0
    %10192 = vmatprep.subr.mxu0 0.0
    %10193 = vmatpush1.msra.mxu0 0.0
    %10194 = vmatprep.subr.mxu0 0.0
    %10195 = vmatpush1.msra.mxu0 0.0
    %10196 = vmatprep.subr.mxu0 0.0
    %10197 = vmatpush1.msra.mxu0 0.0
    %10198 = vmatprep.subr.mxu0 0.0
    %10199 = vmatpush1.msra.mxu0 0.0
    %10200 = vmatprep.subr.mxu0 0.0
    %10201 = vmatpush1.msra.mxu0 0.0
    %10202 = vmatprep.subr.mxu0 0.0
    %10203 = vmatpush1.msra.mxu0 0.0
    %10204 = vmatprep.subr.mxu0 0.0
    %10205 = vmatpush1.msra.mxu0 0.0
    %10206 = vmatprep.subr.mxu0 0.0
    %10207 = vmatpush1.msra.mxu0 0.0
    %10208 = vmatprep.subr.mxu0 0.0
    %10209 = vmatpush1.msra.mxu0 0.0
    %10210 = vmatprep.subr.mxu0 0.0
    %10211 = vmatpush1.msra.mxu0 0.0
    %10212 = vmatprep.subr.mxu0 0.0
    %10213 = vmatpush1.msra.mxu0 0.0
    %10214 = vmatprep.subr.mxu0 0.0
    %10215 = vmatpush1.msra.mxu0 0.0
    %10216 = vmatprep.subr.mxu0 0.0
    %10217 = vmatpush1.msra.mxu0 0.0
    %10218 = vmatprep.subr.mxu0 0.0
    %10219 = vmatpush1.msra.mxu0 0.0
    %10220 = vmatprep.subr.mxu0 0.0
    %10221 = vmatpush1.msra.mxu0 0.0
    %10222 = vmatprep.subr.mxu0 0.0
    %10223 = vmatpush1.msra.mxu0 0.0
    %10224 = vmatprep.subr.mxu0 0.0
    %10225 = vmatpush1.msra.mxu0 0.0
    %10226 = vmatprep.subr.mxu0 0.0
    %10227 = vmatpush1.msra.mxu0 0.0
    %10228 = vmatprep.subr.mxu0 0.0
    %10229 = vmatpush1.msra.mxu0 0.0
    %10230 = vmatprep.subr.mxu0 0.0
    %10231 = vmatpush1.msra.mxu0 0.0
    %10232 = vmatprep.subr.mxu0 0.0
    %10233 = vmatpush1.msra.mxu0 0.0
    %10234 = vmatprep.subr.mxu0 0.0
    %10235 = vmatpush1.msra.mxu0 0.0
    %10236 = vmatprep.subr.mxu0 0.0
    %10237 = vmatpush1.msra.mxu0 0.0
    %10238 = vmatprep.subr.mxu0 0.0
    %10239 = vmatpush1.msra.mxu0 0.0
    %10240 = vmatprep.mubr.f32.mxu0 0.0
    %10241 = vmatmul.mubr.f32.gmra.mrb[0].mxu0 %v10174
    %v10242 = vpop.f32.mrb[0].mxu0
    %v10243 = vadd.f32 0.0, %v10242
    %v10244 = vpop.f32.mrb[0].mxu0
    %v10245 = vadd.f32 0.0, %v10244
    %10246 = vdwg.mxu0
    %v10247 = vld [vmem:[%s77] sm:$0xff]
    %v10248 = vld [vmem:[%s77 + $0x8] sm:$0xff]
    %v10249 = vld [vmem:[%s77 + $0x10] sm:$0xff]
    %v10250 = vld [vmem:[%s77 + $0x18] sm:$0xff]
    %v10251 = vld [vmem:[%s77 + $0x20] sm:$0xff]
    %v10252 = vld [vmem:[%s77 + $0x28] sm:$0xff]
    %v10253 = vld [vmem:[%s77 + $0x30] sm:$0xff]
    %v10254 = vld [vmem:[%s77 + $0x38] sm:$0xff]
    %v10255 = vld [vmem:[%s77 + $0x40] sm:$0xff]
    %v10256 = vld [vmem:[%s77 + $0x48] sm:$0xff]
    %v10257 = vld [vmem:[%s77 + $0x50] sm:$0xff]
    %v10258 = vld [vmem:[%s77 + $0x58] sm:$0xff]
    %v10259 = vld [vmem:[%s77 + $0x60] sm:$0xff]
    %v10260 = vld [vmem:[%s77 + $0x68] sm:$0xff]
    %v10261 = vld [vmem:[%s77 + $0x70] sm:$0xff]
    %v10262 = vld [vmem:[%s77 + $0x78] sm:$0xff]
    %v10263 = vld [vmem:[%s77 + $0x80] sm:$0xff]
    %v10264 = vld [vmem:[%s77 + $0x88] sm:$0xff]
    %v10265 = vld [vmem:[%s77 + $0x90] sm:$0xff]
    %v10266 = vld [vmem:[%s77 + $0x98] sm:$0xff]
    %v10267 = vld [vmem:[%s77 + $0xa0] sm:$0xff]
    %v10268 = vld [vmem:[%s77 + $0xa8] sm:$0xff]
    %v10269 = vld [vmem:[%s77 + $0xb0] sm:$0xff]
    %v10270 = vld [vmem:[%s77 + $0xb8] sm:$0xff]
    %v10271 = vld [vmem:[%s77 + $0xc0] sm:$0xff]
    %v10272 = vld [vmem:[%s77 + $0xc8] sm:$0xff]
    %v10273 = vld [vmem:[%s77 + $0xd0] sm:$0xff]
    %v10274 = vld [vmem:[%s77 + $0xd8] sm:$0xff]
    %v10275 = vld [vmem:[%s77 + $0xe0] sm:$0xff]
    %v10276 = vld [vmem:[%s77 + $0xe8] sm:$0xff]
    %v10277 = vld [vmem:[%s77 + $0xf0] sm:$0xff]
    %v10278 = vld [vmem:[%s77 + $0xf8] sm:$0xff]
    %10279 = vmatprep.subr.mxu0 0.0
    %10280 = vmatpush1.msra.mxu0 %v10247
    %10281 = vmatprep.subr.mxu0 0.0
    %10282 = vmatpush1.msra.mxu0 %v10248
    %10283 = vmatprep.subr.mxu0 0.0
    %10284 = vmatpush1.msra.mxu0 %v10249
    %10285 = vmatprep.subr.mxu0 0.0
    %10286 = vmatpush1.msra.mxu0 %v10250
    %10287 = vmatprep.subr.mxu0 0.0
    %10288 = vmatpush1.msra.mxu0 %v10251
    %10289 = vmatprep.subr.mxu0 0.0
    %10290 = vmatpush1.msra.mxu0 %v10252
    %10291 = vmatprep.subr.mxu0 0.0
    %10292 = vmatpush1.msra.mxu0 %v10253
    %10293 = vmatprep.subr.mxu0 0.0
    %10294 = vmatpush1.msra.mxu0 %v10254
    %10295 = vmatprep.subr.mxu0 0.0
    %10296 = vmatpush1.msra.mxu0 %v10255
    %10297 = vmatprep.subr.mxu0 0.0
    %10298 = vmatpush1.msra.mxu0 %v10256
    %10299 = vmatprep.subr.mxu0 0.0
    %10300 = vmatpush1.msra.mxu0 %v10257
    %10301 = vmatprep.subr.mxu0 0.0
    %10302 = vmatpush1.msra.mxu0 %v10258
    %10303 = vmatprep.subr.mxu0 0.0
    %10304 = vmatpush1.msra.mxu0 %v10259
    %10305 = vmatprep.subr.mxu0 0.0
    %10306 = vmatpush1.msra.mxu0 %v10260
    %10307 = vmatprep.subr.mxu0 0.0
    %10308 = vmatpush1.msra.mxu0 %v10261
    %10309 = vmatprep.subr.mxu0 0.0
    %10310 = vmatpush1.msra.mxu0 %v10262
    %10311 = vmatprep.subr.mxu0 0.0
    %10312 = vmatpush1.msra.mxu0 %v10263
    %10313 = vmatprep.subr.mxu0 0.0
    %10314 = vmatpush1.msra.mxu0 %v10264
    %10315 = vmatprep.subr.mxu0 0.0
    %10316 = vmatpush1.msra.mxu0 %v10265
    %10317 = vmatprep.subr.mxu0 0.0
    %10318 = vmatpush1.msra.mxu0 %v10266
    %10319 = vmatprep.subr.mxu0 0.0
    %10320 = vmatpush1.msra.mxu0 %v10267
    %10321 = vmatprep.subr.mxu0 0.0
    %10322 = vmatpush1.msra.mxu0 %v10268
    %10323 = vmatprep.subr.mxu0 0.0
    %10324 = vmatpush1.msra.mxu0 %v10269
    %10325 = vmatprep.subr.mxu0 0.0
    %10326 = vmatpush1.msra.mxu0 %v10270
    %10327 = vmatprep.subr.mxu0 0.0
    %10328 = vmatpush1.msra.mxu0 %v10271
    %10329 = vmatprep.subr.mxu0 0.0
    %10330 = vmatpush1.msra.mxu0 %v10272
    %10331 = vmatprep.subr.mxu0 0.0
    %10332 = vmatpush1.msra.mxu0 %v10273
    %10333 = vmatprep.subr.mxu0 0.0
    %10334 = vmatpush1.msra.mxu0 %v10274
    %10335 = vmatprep.subr.mxu0 0.0
    %10336 = vmatpush1.msra.mxu0 %v10275
    %10337 = vmatprep.subr.mxu0 0.0
    %10338 = vmatpush1.msra.mxu0 %v10276
    %10339 = vmatprep.subr.mxu0 0.0
    %10340 = vmatpush1.msra.mxu0 %v10277
    %10341 = vmatprep.subr.mxu0 0.0
    %10342 = vmatpush1.msra.mxu0 %v10278
    %10343 = vmatprep.mubr.f32.mxu0 %v10245
    %10344 = vmatmul.mubr.f32.gmra.mrb[0].mxu0 %v10243
    %v10345 = vpop.f32.mrb[0].mxu0
    %v10346 = vadd.f32 0.0, %v10345
    %v10347 = vpop.f32.mrb[0].mxu0
    %10348 = vdwg.mxu0
    %v10349 = vld [vmem:[%s75] sm:$0xff]
    %v10350 = vld [vmem:[%s75 + $0x8] sm:$0xff]
    %v10351 = vld [vmem:[%s75 + $0x10] sm:$0xff]
    %v10352 = vld [vmem:[%s75 + $0x18] sm:$0xff]
    %v10353 = vld [vmem:[%s75 + $0x20] sm:$0xff]
    %v10354 = vld [vmem:[%s75 + $0x28] sm:$0xff]
    %v10355 = vld [vmem:[%s75 + $0x30] sm:$0xff]
    %v10356 = vld [vmem:[%s75 + $0x38] sm:$0xff]
    %v10357 = vld [vmem:[#allocation53] sm:$0x1]
    %v10359 = vlaneseq
    %v10360 = vshrl.u32 %v10359, 7
    %v10361 = vsub.s32 0, %v10360
    %v10362 = vrot.slane %v10357, %v10361
    %vm10364 = vcmask 523264
    %v10366 = vsel %vm10364, %v10346, 0
    %10368 = vmatprep.subr.mxu0 0.0
    %10369 = vmatpush1.msra.mxu0 %v10349
    %10370 = vmatprep.subr.mxu0 0.0
    %10371 = vmatpush1.msra.mxu0 %v10350
    %10372 = vmatprep.subr.mxu0 0.0
    %10373 = vmatpush1.msra.mxu0 %v10351
    %10374 = vmatprep.subr.mxu0 0.0
    %10375 = vmatpush1.msra.mxu0 %v10352
    %10376 = vmatprep.subr.mxu0 0.0
    %10377 = vmatpush1.msra.mxu0 %v10353
    %10378 = vmatprep.subr.mxu0 0.0
    %10379 = vmatpush1.msra.mxu0 %v10354
    %10380 = vmatprep.subr.mxu0 0.0
    %10381 = vmatpush1.msra.mxu0 %v10355
    %10382 = vmatprep.subr.mxu0 0.0
    %10383 = vmatpush1.msra.mxu0 %v10356
    %10384 = vmatprep.subr.mxu0 0.0
    %10385 = vmatpush1.msra.mxu0 0.0
    %10386 = vmatprep.subr.mxu0 0.0
    %10387 = vmatpush1.msra.mxu0 0.0
    %10388 = vmatprep.subr.mxu0 0.0
    %10389 = vmatpush1.msra.mxu0 0.0
    %10390 = vmatprep.subr.mxu0 0.0
    %10391 = vmatpush1.msra.mxu0 0.0
    %10392 = vmatprep.subr.mxu0 0.0
    %10393 = vmatpush1.msra.mxu0 0.0
    %10394 = vmatprep.subr.mxu0 0.0
    %10395 = vmatpush1.msra.mxu0 0.0
    %10396 = vmatprep.subr.mxu0 0.0
    %10397 = vmatpush1.msra.mxu0 0.0
    %10398 = vmatprep.subr.mxu0 0.0
    %10399 = vmatpush1.msra.mxu0 0.0
    %10400 = vmatprep.subr.mxu0 0.0
    %10401 = vmatpush1.msra.mxu0 0.0
    %10402 = vmatprep.subr.mxu0 0.0
    %10403 = vmatpush1.msra.mxu0 0.0
    %10404 = vmatprep.subr.mxu0 0.0
    %10405 = vmatpush1.msra.mxu0 0.0
    %10406 = vmatprep.subr.mxu0 0.0
    %10407 = vmatpush1.msra.mxu0 0.0
    %10408 = vmatprep.subr.mxu0 0.0
    %10409 = vmatpush1.msra.mxu0 0.0
    %10410 = vmatprep.subr.mxu0 0.0
    %10411 = vmatpush1.msra.mxu0 0.0
    %10412 = vmatprep.subr.mxu0 0.0
    %10413 = vmatpush1.msra.mxu0 0.0
    %10414 = vmatprep.subr.mxu0 0.0
    %10415 = vmatpush1.msra.mxu0 0.0
    %10416 = vmatprep.subr.mxu0 0.0
    %10417 = vmatpush1.msra.mxu0 0.0
    %10418 = vmatprep.subr.mxu0 0.0
    %10419 = vmatpush1.msra.mxu0 0.0
    %10420 = vmatprep.subr.mxu0 0.0
    %10421 = vmatpush1.msra.mxu0 0.0
    %10422 = vmatprep.subr.mxu0 0.0
    %10423 = vmatpush1.msra.mxu0 0.0
    %10424 = vmatprep.subr.mxu0 0.0
    %10425 = vmatpush1.msra.mxu0 0.0
    %10426 = vmatprep.subr.mxu0 0.0
    %10427 = vmatpush1.msra.mxu0 0.0
    %10428 = vmatprep.subr.mxu0 0.0
    %10429 = vmatpush1.msra.mxu0 0.0
    %10430 = vmatprep.subr.mxu0 0.0
    %10431 = vmatpush1.msra.mxu0 0.0
    %10432 = vmatprep.mubr.f32.mxu0 0.0
    %10433 = vmatmul.mubr.f32.gmra.mrb[0].mxu0 %v10366
    %v10434 = vpop.f32.mrb[0].mxu0
    %v10435 = vadd.f32 %v10362, %v10434
    %v10436 = vpop.f32.mrb[0].mxu0
    %10437 = vdwg.mxu0
    %vm10438 = vcmask 74752
    %10439 = vst.msk [vmem:[#allocation55] sm:$0x3] %vm10438, %v10435
    // Predicated region
    $region314: #{_lambda_.1} parent=1 // pred_check
      _
    $region315: #{_lambda_.1} parent=1 // pred_check_branch
      %10441 = sbr.rel (0) target = $region317
    $region316: #{_lambda_.1} parent=1 // pred_region
      %s10443 = ssub.s32 32, 32
      %10444 = vsyncadd [#allocation4], %s10443
      %s10446 = sshll.u32 [#allocation55], 4
      %s10447 = int_to_ptr.vmem [resolvable:$true] %s10446
      %10449 = dma.vmem_to_hbm [thread:$0]  %s10447, 32, %s89, [#allocation4]
    $region317: #{_lambda_.1} parent=1 // pred_fallthru
      _
    // Predicated region
    $region318: #{_lambda_.1} parent=1 // pred_check
      _
    $region319: #{_lambda_.1} parent=1 // pred_check_branch
      %10451 = sbr.rel (0) target = $region321
    $region320: #{_lambda_.1} parent=1 // pred_region
      %10452 = dma.done [#allocation4], 32
    $region321: #{_lambda_.1} parent=1 // pred_fallthru
      _
    %10453 = vsyncpa [#allocation3], 1
    %10454 = vsyncpa [#allocation6], 1
    %10455 = vsyncpa [#allocation9], 1
    %10456 = vsyncpa [#allocation12], 1
    %10457 = vsyncpa [#allocation15], 1
    %10458 = vsyncpa [#allocation18], 1
    %10459 = vsyncpa [#allocation21], 1
    %10460 = vsyncpa [#allocation24], 1
    %10461 = vsyncpa [#allocation27], 1
    %10462 = vsyncpa [#allocation30], 1
    %10463 = vsyncpa [#allocation33], 1
    %10464 = vsyncpa [#allocation36], 1
    %10465 = vsyncpa [#allocation39], 1
    %10466 = vsyncpa [#allocation42], 1
    %10467 = vsyncpa [#allocation45], 1
    %10468 = vsyncpa [#allocation48], 1
    %10469 = vsyncpa [#allocation51], 1
    %10470 = vsyncpa [#allocation54], 1
    %10471 = vsyncpa [#allocation4], 1

</llo_original>
